<compile_context>
chip_gen: v5e
topology: v5e:2x2
jax: 0.10.0
libtpu: 0.0.40
codegen_flags: <defaults>
</compile_context>

<pallas_src>
import jax
import jax.numpy as jnp
from jax.experimental import pallas as pl
from jax.experimental.pallas import tpu as pltpu

H = 64           # hidden_size
IN = 2           # input_size
T = 12           # V (sequence length)
G = 8 * H        # 512: packed gate width (both directions)
SIG = 6 * H      # 384: sigmoid gates (i,f,o for both directions)
OUT_LANES = 128  # lane-dense output block width


# ---------------------------------------------------------------------------
# kernel
# ---------------------------------------------------------------------------
def bilstm_kernel(xf_ref,                    # (T, BT, 2*IN) fused [x_t | x_{T-1-t}], f32
                  wih0_ref,                  # (2*IN, G)   MXU dtype
                  whh0_ref,                  # (2H, G)     block-diag packed, MXU dtype
                  wih1_ref,                  # (4H, G)     stacked [W_A ; W_B], MXU dtype
                  whh1_ref,                  # (2H, G)     block-diag packed, MXU dtype
                  w1_ref,                    # (T, 2H, 4H) permuted Linear1 weight, MXU dtype
                  b1_ref, w2_ref, b2_ref,    # (1,4H), (1,4H), (1,1)  f32
                  out_ref,                   # (BT, 128)   lane-dense; column 0 = result
                  z_ref,                     # (T, BT, G)  f32 scratch (reused layer0/layer1)
                  hs0_ref,                   # (T, BT, 4H) f32 scratch, layer-0 h stored twice
                  acc_ref):                  # (BT, 4H)    f32 scratch (folded Linear1)
    BT = xf_ref.shape[1]
    wdt = whh0_ref.dtype   # MXU operand dtype: bf16 fast path / f32 exact path

    def lstm_cell(z_t, h, c, whh):
        # z_t: precomputed input-to-hidden gates (BT, G); column layout:
        #   [i_f,i_b | f_f,f_b | o_f,o_b | g_f,g_b] each 64 wide.
        gates = z_t + jnp.dot(h.astype(wdt), whh,
                              preferred_element_type=jnp.float32)
        # sigmoid(x) = 0.5*tanh(0.5*x)+0.5: one EUP op for the 384 sigmoid lanes
        # (vs exp + reciprocal); all elementwise math stays f32.
        sig = 0.5 * jnp.tanh(0.5 * gates[:, 0:SIG])
        sig = sig + 0.5
        g_p = jnp.tanh(gates[:, SIG:G])                # 128 lanes
        i_p = sig[:, 0:2 * H]
        f_p = sig[:, 2 * H:4 * H]
        o_p = sig[:, 4 * H:6 * H]
        c_new = f_p * c + i_p * g_p
        h_new = o_p * jnp.tanh(c_new)
        return h_new, c_new

    # ---- layer 0: hoisted input projection (K=4; tiny fixed MXU cost, accepted) ----
    x_all = xf_ref[...].reshape(T * BT, 2 * IN).astype(wdt)
    z_ref[...] = jnp.dot(x_all, wih0_ref[...],
                         preferred_element_type=jnp.float32).reshape(T, BT, G)

    # ---- layer 0: fused fwd/bwd recurrence on lane-packed (BT, 128) state ----
    whh0 = whh0_ref[...]
    h = jnp.zeros((BT, 2 * H), jnp.float32)
    c = jnp.zeros((BT, 2 * H), jnp.float32)
    for s in range(T):
        h, c = lstm_cell(z_ref[s], h, c, whh0)
        # store twice so layer-1's input projection is a single K=256 matmul:
        #   hs0[t, :,   0:128] = layer-0 packed state at step t
        #   hs0[t, :, 128:256] = layer-0 packed state at step T-1-t
        hs0_ref[s, :, 0:2 * H] = h
        hs0_ref[T - 1 - s, :, 2 * H:4 * H] = h

    # ---- layer 1: hoisted input projection, ONE (T*BT, 256) @ (256, 512) matmul ----
    hs_all = hs0_ref[...].reshape(T * BT, 4 * H).astype(wdt)
    z_ref[...] = jnp.dot(hs_all, wih1_ref[...],
                         preferred_element_type=jnp.float32).reshape(T, BT, G)

    # ---- layer 1: fused recurrence; tanh + Linear1 folded into a VMEM accumulator ----
    whh1 = whh1_ref[...]
    h = jnp.zeros((BT, 2 * H), jnp.float32)
    c = jnp.zeros((BT, 2 * H), jnp.float32)
    acc_ref[...] = jnp.zeros((BT, 4 * H), jnp.float32)
    for s in range(T):
        h, c = lstm_cell(z_ref[s], h, c, whh1)
        # accumulate in VMEM (keeps vregs free at BT>=128; MRB in-place accumulate on v7x)
        acc_ref[...] += jnp.dot(jnp.tanh(h).astype(wdt), w1_ref[s],
                                preferred_element_type=jnp.float32)

    # Linear1 bias + ReLU
    h1 = jnp.maximum(acc_ref[...] + b1_ref[...], 0.0)
    # TODO(synk): nn.Dropout is identity in eval mode; training-mode dropout not implemented.
    # Linear2 (out_channel = 1) as a lane reduction; lane-dense (BT, 128) store, col 0 = result.
    y = jnp.sum(h1 * w2_ref[...], axis=-1, keepdims=True) + b2_ref[...]
    out_ref[...] = jnp.broadcast_to(y, (BT, OUT_LANES))


# ---------------------------------------------------------------------------
# glue-side weight packing
# ---------------------------------------------------------------------------
def _gates_T(w):
    """w: (4H, K) PyTorch rows [i,f,g,o] -> (K, 4H) cols [i,f,o,g]."""
    wi, wf, wg, wo = w[0:H], w[H:2 * H], w[2 * H:3 * H], w[3 * H:4 * H]
    return jnp.concatenate([wi, wf, wo, wg], axis=0).T.astype(jnp.float32)


def _interleave(fwd_cols, bwd_cols):
    """(K,4H)+(K,4H) cols [i,f,o,g] -> (K,8H) cols [i_f,i_b,f_f,f_b,o_f,o_b,g_f,g_b]."""
    parts = []
    for gi in range(4):
        parts.append(fwd_cols[:, gi * H:(gi + 1) * H])
        parts.append(bwd_cols[:, gi * H:(gi + 1) * H])
    return jnp.concatenate(parts, axis=1)


def _pack_whh(whh_f, whh_b):
    """Block-diagonal recurrent weight for lane-packed state [h_f | h_b]: (2H, 8H)."""
    wf = _gates_T(whh_f)                      # (H, 4H)
    wb = _gates_T(whh_b)                      # (H, 4H)
    z = jnp.zeros((H, 4 * H), jnp.float32)
    fwd_cols = jnp.concatenate([wf, z], axis=0)   # rows 0:H act on h_f
    bwd_cols = jnp.concatenate([z, wb], axis=0)   # rows H:2H act on h_b
    return _interleave(fwd_cols, bwd_cols)


def _pack_wih0(wih_f, wih_b):
    """Layer-0 input proj for fused per-step input [x_t | x_{T-1-t}]: (2*IN, 8H)."""
    wf = _gates_T(wih_f)                      # (IN, 4H)
    wb = _gates_T(wih_b)                      # (IN, 4H)
    z = jnp.zeros((IN, 4 * H), jnp.float32)
    fwd_cols = jnp.concatenate([wf, z], axis=0)   # rows 0:IN from x_t
    bwd_cols = jnp.concatenate([z, wb], axis=0)   # rows IN:2IN from x_{T-1-t}
    return _interleave(fwd_cols, bwd_cols)


def _pack_wih1(wih_f, wih_b):
    """Layer-1 input proj split into W_A (acts on hs0[t]) and W_B (acts on hs0[T-1-t]).

    hs0[s] = [h0_fwd[time s] | h0_bwd[time T-1-s]] (layer-0 packed state at step s);
    z1[t] = hs0[t] @ W_A + hs0[T-1-t] @ W_B reproduces the PyTorch layer-1 gate
    pre-activations for fwd(time t) in the fwd columns and bwd(time T-1-t) in the bwd ones.
    The kernel stacks [hs0[t] | hs0[T-1-t]] along lanes, so the wrapper stacks [W_A ; W_B]
    vertically into a single K=256 weight.
    """
    w1f = _gates_T(wih_f)                     # (2H, 4H): rows 0:H ~ h0_fwd, H:2H ~ h0_bwd
    w1b = _gates_T(wih_b)                     # (2H, 4H)
    z = jnp.zeros((H, 4 * H), jnp.float32)
    a_fwd = jnp.concatenate([w1f[0:H], z], axis=0)
    a_bwd = jnp.concatenate([z, w1b[H:2 * H]], axis=0)
    w_a = _interleave(a_fwd, a_bwd)
    b_fwd = jnp.concatenate([z, w1f[H:2 * H]], axis=0)
    b_bwd = jnp.concatenate([w1b[0:H], z], axis=0)
    w_b = _interleave(b_fwd, b_bwd)
    return w_a, w_b


def _round_up(n, m):
    return ((n + m - 1) // m) * m


def _const_spec(shape):
    nd = len(shape)
    return pl.BlockSpec(shape, lambda b, _nd=nd: (0,) * _nd)


def _default_max_batch_tile():
    """256 rows fill the 256-deep MXU LHS streaming on v6e/v7x; 128 on older chips."""
    try:
        kind = jax.devices()[0].device_kind.lower()
    except Exception:
        return 256
    if any(v in kind for v in ("v2", "v3", "v4", "v5")):
        return 128
    return 256


def _choose_batch_tiling(B, max_tile):
    """Pick (batch_tile, padded_batch): tile is a multiple of 8, >=2 tiles whenever B>8
    (keeps both v7x TensorCores busy), chosen near ceil(B/ntiles) to minimize padding."""
    b8 = _round_up(B, 8)
    if b8 <= 8:
        return b8, b8
    n_tiles = max(2, pl.cdiv(b8, max_tile))
    bt = min(max_tile, _round_up(pl.cdiv(B, n_tiles), 8))
    return bt, _round_up(b8, bt)


# ---------------------------------------------------------------------------
# wrapper
# ---------------------------------------------------------------------------
def bilstm_forward(x, params, *, use_bf16=True, max_batch_tile=None):
    """x: (B, 24) float32. Returns (B, 1) float32."""
    (wih0, whh0, wih0r, whh0r,
     wih1, whh1, wih1r, whh1r,
     W1, bL1, W2, bL2) = params

    mxu_dt = jnp.bfloat16 if use_bf16 else jnp.float32

    B = x.shape[0]
    if max_batch_tile is None:
        max_batch_tile = _default_max_batch_tile()
    BT, B_pad = _choose_batch_tiling(B, max_batch_tile)

    # PyTorch: x.view(-1, 2, 12).transpose(1, 2) -> (B, T, IN); feed time-major (T, B, IN).
    x_tbf = jnp.transpose(x.reshape(-1, IN, T), (2, 0, 1)).astype(jnp.float32)
    if B_pad != B:
        x_tbf = jnp.pad(x_tbf, ((0, 0), (0, B_pad - B), (0, 0)))
    # fused per-step input [x_t | x_{T-1-t}] so both directions share one projection matmul
    x_fused = jnp.concatenate([x_tbf, x_tbf[::-1]], axis=-1)        # (T, B_pad, 2*IN)

    # packed weights (gate reorder / direction packing done once, outside the kernel);
    # MXU operands cast to bf16 on the fast path (f32 accumulation inside the kernel).
    wih0_p = _pack_wih0(wih0, wih0r).astype(mxu_dt)                 # (2*IN, 8H)
    whh0_p = _pack_whh(whh0, whh0r).astype(mxu_dt)                  # (2H, 8H)
    w_a, w_b = _pack_wih1(wih1, wih1r)
    wih1_p = jnp.concatenate([w_a, w_b], axis=0).astype(mxu_dt)     # (4H, 8H) stacked K=256
    whh1_p = _pack_whh(whh1, whh1r).astype(mxu_dt)                  # (2H, 8H)

    # permuted Linear1 weight: step s multiplies [tanh(h1_fwd[s]) | tanh(h1_bwd[T-1-s])]
    W1T = W1.T.astype(jnp.float32)                                  # (T*2H, 4H)
    w1_perm = jnp.stack(
        [jnp.concatenate(
            [W1T[s * 2 * H: s * 2 * H + H],
             W1T[(T - 1 - s) * 2 * H + H: (T - 1 - s) * 2 * H + 2 * H]], axis=0)
         for s in range(T)], axis=0).astype(mxu_dt)                 # (T, 2H, 4H)

    b1m = bL1.reshape(1, 4 * H).astype(jnp.float32)
    w2m = W2.reshape(1, 4 * H).astype(jnp.float32)
    b2m = bL2.reshape(1, 1).astype(jnp.float32)

    args = (x_fused, wih0_p, whh0_p, wih1_p, whh1_p, w1_perm, b1m, w2m, b2m)

    in_specs = [pl.BlockSpec((T, BT, 2 * IN), lambda b: (0, b, 0))]
    # NOTE: constant-index weight blocks could be single-buffered (pipeline_mode=
    # pl.Buffered(1)) to shave ~1-2 MiB of VMEM; skipped — ample headroom at these tiles.
    in_specs += [_const_spec(a.shape) for a in args[1:]]

    out = pl.pallas_call(
        bilstm_kernel,
        out_shape=jax.ShapeDtypeStruct((B_pad, OUT_LANES), jnp.float32),
        grid=(B_pad // BT,),
        in_specs=in_specs,
        out_specs=pl.BlockSpec((BT, OUT_LANES), lambda b: (b, 0)),
        scratch_shapes=[
            pltpu.VMEM((T, BT, G), jnp.float32),       # Z (layer-0, reused for layer-1)
            pltpu.VMEM((T, BT, 4 * H), jnp.float32),   # layer-0 hidden sequence (stored x2)
            pltpu.VMEM((BT, 4 * H), jnp.float32),      # folded-Linear1 accumulator
        ],
        compiler_params=pltpu.CompilerParams(
            dimension_semantics=("parallel",),
            vmem_limit_bytes=48 * 1024 * 1024),
    )(*args)
    return out[:B, :1]


# ---------------------------------------------------------------------------
# params + pure-JAX reference (mirrors the PyTorch forward, eval mode)
# ---------------------------------------------------------------------------
def init_params(key):
    k = 1.0 / jnp.sqrt(jnp.float32(H))
    keys = jax.random.split(key, 12)

    def u(kk, shape):
        return jax.random.uniform(kk, shape, jnp.float32, -k, k)

    wih0  = u(keys[0], (4 * H, IN))
    whh0  = u(keys[1], (4 * H, H))
    wih0r = u(keys[2], (4 * H, IN))
    whh0r = u(keys[3], (4 * H, H))
    wih1  = u(keys[4], (4 * H, 2 * H))
    whh1  = u(keys[5], (4 * H, H))
    wih1r = u(keys[6], (4 * H, 2 * H))
    whh1r = u(keys[7], (4 * H, H))
    W1  = u(keys[8], (4 * H, T * 2 * H))   # (256, 1536)
    bL1 = u(keys[9], (4 * H,))
    W2  = u(keys[10], (1, 4 * H))          # (1, 256)
    bL2 = u(keys[11], (1,))
    return (wih0, whh0, wih0r, whh0r, wih1, whh1, wih1r, whh1r, W1, bL1, W2, bL2)


def bilstm_reference(x, params):
    (wih0, whh0, wih0r, whh0r,
     wih1, whh1, wih1r, whh1r,
     W1, bL1, W2, bL2) = params
    B = x.shape[0]
    xb = jnp.transpose(x.reshape(-1, IN, T), (0, 2, 1))  # (B, T, 2)

    def run_layer(inp, wihf, whhf, wihb, whhb):
        def direction(w_ih, w_hh, reverse):
            h = jnp.zeros((B, H), jnp.float32)
            c = jnp.zeros((B, H), jnp.float32)
            res = [None] * T
            order = range(T - 1, -1, -1) if reverse else range(T)
            for t in order:
                g = inp[:, t, :] @ w_ih.T + h @ w_hh.T
                i_ = jax.nn.sigmoid(g[:, :H])
                f_ = jax.nn.sigmoid(g[:, H:2 * H])
                g_ = jnp.tanh(g[:, 2 * H:3 * H])
                o_ = jax.nn.sigmoid(g[:, 3 * H:])
                c = f_ * c + i_ * g_
                h = o_ * jnp.tanh(c)
                res[t] = h
            return jnp.stack(res, axis=1)
        return jnp.concatenate([direction(wihf, whhf, False),
                                direction(wihb, whhb, True)], axis=-1)

    o0 = run_layer(xb, wih0, whh0, wih0r, whh0r)
    o1 = run_layer(o0, wih1, whh1, wih1r, whh1r)
    y = jnp.tanh(o1).reshape(B, -1)
    y = jnp.maximum(y @ W1.T + bL1, 0.0)
    return y @ W2.T + bL2


if __name__ == "__main__":
    key = jax.random.PRNGKey(0)
    pkey, xkey = jax.random.split(key)
    params = init_params(pkey)

    # ---- small primary test: B=8, single tile ----
    B = 8
    x = jax.random.normal(xkey, (B, IN * T), dtype=jnp.float32)       # (8, 24)
    ref = jax.block_until_ready(bilstm_reference(x, params))

    # exact path (f32 MXU operands): must match the f32 reference tightly
    out_f32 = jax.block_until_ready(bilstm_forward(x, params, use_bf16=False))
    assert out_f32.shape == (B, 1)
    assert jnp.allclose(out_f32, ref, rtol=1e-3, atol=1e-3), (out_f32, ref)

    # fast path (bf16 MXU operands, f32 accumulate): looser tolerance for bf16 rounding
    out = jax.block_until_ready(bilstm_forward(x, params))
    assert out.shape == (B, 1)
    assert jnp.allclose(out, ref, rtol=2e-2, atol=2e-2), (out, ref)

    # ---- multi-tile / padded-batch path: B=24 -> 2 tiles of 16 rows, 8 padded rows ----
    B2 = 24
    x2 = jax.random.normal(jax.random.PRNGKey(1), (B2, IN * T), dtype=jnp.float32)
    ref2 = jax.block_until_ready(bilstm_reference(x2, params))
    out2 = jax.block_until_ready(bilstm_forward(x2, params))
    assert out2.shape == (B2, 1)
    assert jnp.allclose(out2, ref2, rtol=2e-2, atol=2e-2), (out2, ref2)

    print("KERNEL_OK")
</pallas_src>

<mosaic_0001>
module attributes {stable_mosaic.version = 11 : i64} {
  func.func @bilstm_kernel(%arg0: i32, %arg1: memref<12x8x4xf32, #tpu.memory_space<vmem>>, %arg2: memref<4x512xf32, #tpu.memory_space<vmem>>, %arg3: memref<128x512xf32, #tpu.memory_space<vmem>>, %arg4: memref<256x512xf32, #tpu.memory_space<vmem>>, %arg5: memref<128x512xf32, #tpu.memory_space<vmem>>, %arg6: memref<12x128x256xf32, #tpu.memory_space<vmem>>, %arg7: memref<1x256xf32, #tpu.memory_space<vmem>>, %arg8: memref<1x256xf32, #tpu.memory_space<vmem>>, %arg9: memref<1x1xf32, #tpu.memory_space<vmem>>, %arg10: memref<8x128xf32, #tpu.memory_space<vmem>>, %arg11: memref<12x8x512xf32, #tpu.memory_space<vmem>>, %arg12: memref<12x8x256xf32, #tpu.memory_space<vmem>>, %arg13: memref<8x256xf32, #tpu.memory_space<vmem>>) attributes {dimension_semantics = [#tpu.dimension_semantics<parallel>], iteration_bounds = array<i64: 1>, scalar_prefetch = 0 : i64, scratch_operands = 3 : i64, tpu.core_type = #tpu.core_type<tc>, window_params = [{transform_indices = @transform_0, window_bounds = array<i64: 12, 8, 4>}, {pipeline_mode = #tpu.pipeline_mode<synchronous>, transform_indices = @transform_1, window_bounds = array<i64: 4, 512>}, {pipeline_mode = #tpu.pipeline_mode<synchronous>, transform_indices = @transform_2, window_bounds = array<i64: 128, 512>}, {pipeline_mode = #tpu.pipeline_mode<synchronous>, transform_indices = @transform_3, window_bounds = array<i64: 256, 512>}, {pipeline_mode = #tpu.pipeline_mode<synchronous>, transform_indices = @transform_4, window_bounds = array<i64: 128, 512>}, {pipeline_mode = #tpu.pipeline_mode<synchronous>, transform_indices = @transform_5, window_bounds = array<i64: 12, 128, 256>}, {pipeline_mode = #tpu.pipeline_mode<synchronous>, transform_indices = @transform_6, window_bounds = array<i64: 1, 256>}, {pipeline_mode = #tpu.pipeline_mode<synchronous>, transform_indices = @transform_7, window_bounds = array<i64: 1, 256>}, {pipeline_mode = #tpu.pipeline_mode<synchronous>, transform_indices = @transform_8, window_bounds = array<i64: 1, 1>}, {transform_indices = @transform_9, window_bounds = array<i64: 8, 128>}]} {
    %c0 = arith.constant 0 : index
    %c0_0 = arith.constant 0 : index
    %c0_1 = arith.constant 0 : index
    %0 = vector.load %arg1[%c0, %c0_0, %c0_1] : memref<12x8x4xf32, #tpu.memory_space<vmem>>, vector<12x8x4xf32>
    %1 = vector.shape_cast %0 : vector<12x8x4xf32> to vector<96x4xf32>
    %c0_2 = arith.constant 0 : index
    %c0_3 = arith.constant 0 : index
    %2 = vector.load %arg2[%c0_2, %c0_3] : memref<4x512xf32, #tpu.memory_space<vmem>>, vector<4x512xf32>
    %cst = arith.constant dense<0.000000e+00> : vector<96x512xf32>
    %3 = tpu.matmul %1, %2, %cst {dimension_numbers = #tpu.dot_dimension_numbers<[1], [0], [0], [1], [0, 0, 1, 1], [], []>} : vector<96x4xf32>, vector<4x512xf32>, vector<96x512xf32> -> vector<96x512xf32>
    %4 = vector.shape_cast %3 : vector<96x512xf32> to vector<12x8x512xf32>
    %c0_4 = arith.constant 0 : index
    %c0_5 = arith.constant 0 : index
    %c0_6 = arith.constant 0 : index
    %5 = vector.load %arg11[%c0_4, %c0_5, %c0_6] : memref<12x8x512xf32, #tpu.memory_space<vmem>>, vector<12x8x512xf32>
    tpu.vector_store %arg11[%c0_4, %c0_5, %c0_6], %4 {strides = array<i32>} : memref<12x8x512xf32, #tpu.memory_space<vmem>>, vector<12x8x512xf32>,
    %c0_7 = arith.constant 0 : index
    %c0_8 = arith.constant 0 : index
    %6 = vector.load %arg3[%c0_7, %c0_8] : memref<128x512xf32, #tpu.memory_space<vmem>>, vector<128x512xf32>
    %cst_9 = arith.constant 0.000000e+00 : f32
    %7 = vector.broadcast %cst_9 : f32 to vector<8x128xf32>
    %cst_10 = arith.constant 0.000000e+00 : f32
    %8 = vector.broadcast %cst_10 : f32 to vector<8x128xf32>
    %c0_11 = arith.constant 0 : index
    %c0_12 = arith.constant 0 : index
    %c0_13 = arith.constant 0 : index
    %9 = vector.load %arg11[%c0_11, %c0_12, %c0_13] : memref<12x8x512xf32, #tpu.memory_space<vmem>>, vector<1x8x512xf32>
    %10 = vector.shape_cast %9 : vector<1x8x512xf32> to vector<8x512xf32>
    %cst_14 = arith.constant dense<0.000000e+00> : vector<8x512xf32>
    %11 = tpu.matmul %7, %6, %cst_14 {dimension_numbers = #tpu.dot_dimension_numbers<[1], [0], [0], [1], [0, 0, 1, 1], [], []>} : vector<8x128xf32>, vector<128x512xf32>, vector<8x512xf32> -> vector<8x512xf32>
    %12 = arith.addf %10, %11 : vector<8x512xf32>
    %13 = vector.extract_strided_slice %12 {offsets = [0, 0], sizes = [8, 384], strides = [1, 1]} : vector<8x512xf32> to vector<8x384xf32>
    %cst_15 = arith.constant 5.000000e-01 : f32
    %14 = vector.broadcast %cst_15 : f32 to vector<8x384xf32>
    %15 = arith.mulf %14, %13 : vector<8x384xf32>
    %16 = math.tanh %15 : vector<8x384xf32>
    %cst_16 = arith.constant 5.000000e-01 : f32
    %17 = vector.broadcast %cst_16 : f32 to vector<8x384xf32>
    %18 = arith.mulf %17, %16 : vector<8x384xf32>
    %cst_17 = arith.constant 5.000000e-01 : f32
    %19 = vector.broadcast %cst_17 : f32 to vector<8x384xf32>
    %20 = arith.addf %18, %19 : vector<8x384xf32>
    %21 = vector.extract_strided_slice %12 {offsets = [0, 384], sizes = [8, 128], strides = [1, 1]} : vector<8x512xf32> to vector<8x128xf32>
    %22 = math.tanh %21 : vector<8x128xf32>
    %23 = vector.extract_strided_slice %20 {offsets = [0, 0], sizes = [8, 128], strides = [1, 1]} : vector<8x384xf32> to vector<8x128xf32>
    %24 = vector.extract_strided_slice %20 {offsets = [0, 128], sizes = [8, 128], strides = [1, 1]} : vector<8x384xf32> to vector<8x128xf32>
    %25 = vector.extract_strided_slice %20 {offsets = [0, 256], sizes = [8, 128], strides = [1, 1]} : vector<8x384xf32> to vector<8x128xf32>
    %26 = arith.mulf %24, %8 : vector<8x128xf32>
    %27 = arith.mulf %23, %22 : vector<8x128xf32>
    %28 = arith.addf %26, %27 : vector<8x128xf32>
    %29 = math.tanh %28 : vector<8x128xf32>
    %30 = arith.mulf %25, %29 : vector<8x128xf32>
    %c0_18 = arith.constant 0 : index
    %c0_19 = arith.constant 0 : index
    %c0_20 = arith.constant 0 : index
    %31 = vector.load %arg12[%c0_18, %c0_19, %c0_20] : memref<12x8x256xf32, #tpu.memory_space<vmem>>, vector<1x8x128xf32>
    %32 = vector.shape_cast %31 : vector<1x8x128xf32> to vector<8x128xf32>
    %33 = vector.shape_cast %30 : vector<8x128xf32> to vector<1x8x128xf32>
    tpu.vector_store %arg12[%c0_18, %c0_19, %c0_20], %33 {strides = array<i32>} : memref<12x8x256xf32, #tpu.memory_space<vmem>>, vector<1x8x128xf32>,
    %c11 = arith.constant 11 : index
    %c0_21 = arith.constant 0 : index
    %c128 = arith.constant 128 : index
    %34 = vector.load %arg12[%c11, %c0_21, %c128] : memref<12x8x256xf32, #tpu.memory_space<vmem>>, vector<1x8x128xf32>
    %35 = vector.shape_cast %34 : vector<1x8x128xf32> to vector<8x128xf32>
    %36 = vector.shape_cast %30 : vector<8x128xf32> to vector<1x8x128xf32>
    tpu.vector_store %arg12[%c11, %c0_21, %c128], %36 {strides = array<i32>} : memref<12x8x256xf32, #tpu.memory_space<vmem>>, vector<1x8x128xf32>,
    %c1 = arith.constant 1 : index
    %c0_22 = arith.constant 0 : index
    %c0_23 = arith.constant 0 : index
    %37 = vector.load %arg11[%c1, %c0_22, %c0_23] : memref<12x8x512xf32, #tpu.memory_space<vmem>>, vector<1x8x512xf32>
    %38 = vector.shape_cast %37 : vector<1x8x512xf32> to vector<8x512xf32>
    %cst_24 = arith.constant dense<0.000000e+00> : vector<8x512xf32>
    %39 = tpu.matmul %30, %6, %cst_24 {dimension_numbers = #tpu.dot_dimension_numbers<[1], [0], [0], [1], [0, 0, 1, 1], [], []>} : vector<8x128xf32>, vector<128x512xf32>, vector<8x512xf32> -> vector<8x512xf32>
    %40 = arith.addf %38, %39 : vector<8x512xf32>
    %41 = vector.extract_strided_slice %40 {offsets = [0, 0], sizes = [8, 384], strides = [1, 1]} : vector<8x512xf32> to vector<8x384xf32>
    %cst_25 = arith.constant 5.000000e-01 : f32
    %42 = vector.broadcast %cst_25 : f32 to vector<8x384xf32>
    %43 = arith.mulf %42, %41 : vector<8x384xf32>
    %44 = math.tanh %43 : vector<8x384xf32>
    %cst_26 = arith.constant 5.000000e-01 : f32
    %45 = vector.broadcast %cst_26 : f32 to vector<8x384xf32>
    %46 = arith.mulf %45, %44 : vector<8x384xf32>
    %cst_27 = arith.constant 5.000000e-01 : f32
    %47 = vector.broadcast %cst_27 : f32 to vector<8x384xf32>
    %48 = arith.addf %46, %47 : vector<8x384xf32>
    %49 = vector.extract_strided_slice %40 {offsets = [0, 384], sizes = [8, 128], strides = [1, 1]} : vector<8x512xf32> to vector<8x128xf32>
    %50 = math.tanh %49 : vector<8x128xf32>
    %51 = vector.extract_strided_slice %48 {offsets = [0, 0], sizes = [8, 128], strides = [1, 1]} : vector<8x384xf32> to vector<8x128xf32>
    %52 = vector.extract_strided_slice %48 {offsets = [0, 128], sizes = [8, 128], strides = [1, 1]} : vector<8x384xf32> to vector<8x128xf32>
    %53 = vector.extract_strided_slice %48 {offsets = [0, 256], sizes = [8, 128], strides = [1, 1]} : vector<8x384xf32> to vector<8x128xf32>
    %54 = arith.mulf %52, %28 : vector<8x128xf32>
    %55 = arith.mulf %51, %50 : vector<8x128xf32>
    %56 = arith.addf %54, %55 : vector<8x128xf32>
    %57 = math.tanh %56 : vector<8x128xf32>
    %58 = arith.mulf %53, %57 : vector<8x128xf32>
    %c1_28 = arith.constant 1 : index
    %c0_29 = arith.constant 0 : index
    %c0_30 = arith.constant 0 : index
    %59 = vector.load %arg12[%c1_28, %c0_29, %c0_30] : memref<12x8x256xf32, #tpu.memory_space<vmem>>, vector<1x8x128xf32>
    %60 = vector.shape_cast %59 : vector<1x8x128xf32> to vector<8x128xf32>
    %61 = vector.shape_cast %58 : vector<8x128xf32> to vector<1x8x128xf32>
    tpu.vector_store %arg12[%c1_28, %c0_29, %c0_30], %61 {strides = array<i32>} : memref<12x8x256xf32, #tpu.memory_space<vmem>>, vector<1x8x128xf32>,
    %c10 = arith.constant 10 : index
    %c0_31 = arith.constant 0 : index
    %c128_32 = arith.constant 128 : index
    %62 = vector.load %arg12[%c10, %c0_31, %c128_32] : memref<12x8x256xf32, #tpu.memory_space<vmem>>, vector<1x8x128xf32>
    %63 = vector.shape_cast %62 : vector<1x8x128xf32> to vector<8x128xf32>
    %64 = vector.shape_cast %58 : vector<8x128xf32> to vector<1x8x128xf32>
    tpu.vector_store %arg12[%c10, %c0_31, %c128_32], %64 {strides = array<i32>} : memref<12x8x256xf32, #tpu.memory_space<vmem>>, vector<1x8x128xf32>,
    %c2 = arith.constant 2 : index
    %c0_33 = arith.constant 0 : index
    %c0_34 = arith.constant 0 : index
    %65 = vector.load %arg11[%c2, %c0_33, %c0_34] : memref<12x8x512xf32, #tpu.memory_space<vmem>>, vector<1x8x512xf32>
    %66 = vector.shape_cast %65 : vector<1x8x512xf32> to vector<8x512xf32>
    %cst_35 = arith.constant dense<0.000000e+00> : vector<8x512xf32>
    %67 = tpu.matmul %58, %6, %cst_35 {dimension_numbers = #tpu.dot_dimension_numbers<[1], [0], [0], [1], [0, 0, 1, 1], [], []>} : vector<8x128xf32>, vector<128x512xf32>, vector<8x512xf32> -> vector<8x512xf32>
    %68 = arith.addf %66, %67 : vector<8x512xf32>
    %69 = vector.extract_strided_slice %68 {offsets = [0, 0], sizes = [8, 384], strides = [1, 1]} : vector<8x512xf32> to vector<8x384xf32>
    %cst_36 = arith.constant 5.000000e-01 : f32
    %70 = vector.broadcast %cst_36 : f32 to vector<8x384xf32>
    %71 = arith.mulf %70, %69 : vector<8x384xf32>
    %72 = math.tanh %71 : vector<8x384xf32>
    %cst_37 = arith.constant 5.000000e-01 : f32
    %73 = vector.broadcast %cst_37 : f32 to vector<8x384xf32>
    %74 = arith.mulf %73, %72 : vector<8x384xf32>
    %cst_38 = arith.constant 5.000000e-01 : f32
    %75 = vector.broadcast %cst_38 : f32 to vector<8x384xf32>
    %76 = arith.addf %74, %75 : vector<8x384xf32>
    %77 = vector.extract_strided_slice %68 {offsets = [0, 384], sizes = [8, 128], strides = [1, 1]} : vector<8x512xf32> to vector<8x128xf32>
    %78 = math.tanh %77 : vector<8x128xf32>
    %79 = vector.extract_strided_slice %76 {offsets = [0, 0], sizes = [8, 128], strides = [1, 1]} : vector<8x384xf32> to vector<8x128xf32>
    %80 = vector.extract_strided_slice %76 {offsets = [0, 128], sizes = [8, 128], strides = [1, 1]} : vector<8x384xf32> to vector<8x128xf32>
    %81 = vector.extract_strided_slice %76 {offsets = [0, 256], sizes = [8, 128], strides = [1, 1]} : vector<8x384xf32> to vector<8x128xf32>
    %82 = arith.mulf %80, %56 : vector<8x128xf32>
    %83 = arith.mulf %79, %78 : vector<8x128xf32>
    %84 = arith.addf %82, %83 : vector<8x128xf32>
    %85 = math.tanh %84 : vector<8x128xf32>
    %86 = arith.mulf %81, %85 : vector<8x128xf32>
    %c2_39 = arith.constant 2 : index
    %c0_40 = arith.constant 0 : index
    %c0_41 = arith.constant 0 : index
    %87 = vector.load %arg12[%c2_39, %c0_40, %c0_41] : memref<12x8x256xf32, #tpu.memory_space<vmem>>, vector<1x8x128xf32>
    %88 = vector.shape_cast %87 : vector<1x8x128xf32> to vector<8x128xf32>
    %89 = vector.shape_cast %86 : vector<8x128xf32> to vector<1x8x128xf32>
    tpu.vector_store %arg12[%c2_39, %c0_40, %c0_41], %89 {strides = array<i32>} : memref<12x8x256xf32, #tpu.memory_space<vmem>>, vector<1x8x128xf32>,
    %c9 = arith.constant 9 : index
    %c0_42 = arith.constant 0 : index
    %c128_43 = arith.constant 128 : index
    %90 = vector.load %arg12[%c9, %c0_42, %c128_43] : memref<12x8x256xf32, #tpu.memory_space<vmem>>, vector<1x8x128xf32>
    %91 = vector.shape_cast %90 : vector<1x8x128xf32> to vector<8x128xf32>
    %92 = vector.shape_cast %86 : vector<8x128xf32> to vector<1x8x128xf32>
    tpu.vector_store %arg12[%c9, %c0_42, %c128_43], %92 {strides = array<i32>} : memref<12x8x256xf32, #tpu.memory_space<vmem>>, vector<1x8x128xf32>,
    %c3 = arith.constant 3 : index
    %c0_44 = arith.constant 0 : index
    %c0_45 = arith.constant 0 : index
    %93 = vector.load %arg11[%c3, %c0_44, %c0_45] : memref<12x8x512xf32, #tpu.memory_space<vmem>>, vector<1x8x512xf32>
    %94 = vector.shape_cast %93 : vector<1x8x512xf32> to vector<8x512xf32>
    %cst_46 = arith.constant dense<0.000000e+00> : vector<8x512xf32>
    %95 = tpu.matmul %86, %6, %cst_46 {dimension_numbers = #tpu.dot_dimension_numbers<[1], [0], [0], [1], [0, 0, 1, 1], [], []>} : vector<8x128xf32>, vector<128x512xf32>, vector<8x512xf32> -> vector<8x512xf32>
    %96 = arith.addf %94, %95 : vector<8x512xf32>
    %97 = vector.extract_strided_slice %96 {offsets = [0, 0], sizes = [8, 384], strides = [1, 1]} : vector<8x512xf32> to vector<8x384xf32>
    %cst_47 = arith.constant 5.000000e-01 : f32
    %98 = vector.broadcast %cst_47 : f32 to vector<8x384xf32>
    %99 = arith.mulf %98, %97 : vector<8x384xf32>
    %100 = math.tanh %99 : vector<8x384xf32>
    %cst_48 = arith.constant 5.000000e-01 : f32
    %101 = vector.broadcast %cst_48 : f32 to vector<8x384xf32>
    %102 = arith.mulf %101, %100 : vector<8x384xf32>
    %cst_49 = arith.constant 5.000000e-01 : f32
    %103 = vector.broadcast %cst_49 : f32 to vector<8x384xf32>
    %104 = arith.addf %102, %103 : vector<8x384xf32>
    %105 = vector.extract_strided_slice %96 {offsets = [0, 384], sizes = [8, 128], strides = [1, 1]} : vector<8x512xf32> to vector<8x128xf32>
    %106 = math.tanh %105 : vector<8x128xf32>
    %107 = vector.extract_strided_slice %104 {offsets = [0, 0], sizes = [8, 128], strides = [1, 1]} : vector<8x384xf32> to vector<8x128xf32>
    %108 = vector.extract_strided_slice %104 {offsets = [0, 128], sizes = [8, 128], strides = [1, 1]} : vector<8x384xf32> to vector<8x128xf32>
    %109 = vector.extract_strided_slice %104 {offsets = [0, 256], sizes = [8, 128], strides = [1, 1]} : vector<8x384xf32> to vector<8x128xf32>
    %110 = arith.mulf %108, %84 : vector<8x128xf32>
    %111 = arith.mulf %107, %106 : vector<8x128xf32>
    %112 = arith.addf %110, %111 : vector<8x128xf32>
    %113 = math.tanh %112 : vector<8x128xf32>
    %114 = arith.mulf %109, %113 : vector<8x128xf32>
    %c3_50 = arith.constant 3 : index
    %c0_51 = arith.constant 0 : index
    %c0_52 = arith.constant 0 : index
    %115 = vector.load %arg12[%c3_50, %c0_51, %c0_52] : memref<12x8x256xf32, #tpu.memory_space<vmem>>, vector<1x8x128xf32>
    %116 = vector.shape_cast %115 : vector<1x8x128xf32> to vector<8x128xf32>
    %117 = vector.shape_cast %114 : vector<8x128xf32> to vector<1x8x128xf32>
    tpu.vector_store %arg12[%c3_50, %c0_51, %c0_52], %117 {strides = array<i32>} : memref<12x8x256xf32, #tpu.memory_space<vmem>>, vector<1x8x128xf32>,
    %c8 = arith.constant 8 : index
    %c0_53 = arith.constant 0 : index
    %c128_54 = arith.constant 128 : index
    %118 = vector.load %arg12[%c8, %c0_53, %c128_54] : memref<12x8x256xf32, #tpu.memory_space<vmem>>, vector<1x8x128xf32>
    %119 = vector.shape_cast %118 : vector<1x8x128xf32> to vector<8x128xf32>
    %120 = vector.shape_cast %114 : vector<8x128xf32> to vector<1x8x128xf32>
    tpu.vector_store %arg12[%c8, %c0_53, %c128_54], %120 {strides = array<i32>} : memref<12x8x256xf32, #tpu.memory_space<vmem>>, vector<1x8x128xf32>,
    %c4 = arith.constant 4 : index
    %c0_55 = arith.constant 0 : index
    %c0_56 = arith.constant 0 : index
    %121 = vector.load %arg11[%c4, %c0_55, %c0_56] : memref<12x8x512xf32, #tpu.memory_space<vmem>>, vector<1x8x512xf32>
    %122 = vector.shape_cast %121 : vector<1x8x512xf32> to vector<8x512xf32>
    %cst_57 = arith.constant dense<0.000000e+00> : vector<8x512xf32>
    %123 = tpu.matmul %114, %6, %cst_57 {dimension_numbers = #tpu.dot_dimension_numbers<[1], [0], [0], [1], [0, 0, 1, 1], [], []>} : vector<8x128xf32>, vector<128x512xf32>, vector<8x512xf32> -> vector<8x512xf32>
    %124 = arith.addf %122, %123 : vector<8x512xf32>
    %125 = vector.extract_strided_slice %124 {offsets = [0, 0], sizes = [8, 384], strides = [1, 1]} : vector<8x512xf32> to vector<8x384xf32>
    %cst_58 = arith.constant 5.000000e-01 : f32
    %126 = vector.broadcast %cst_58 : f32 to vector<8x384xf32>
    %127 = arith.mulf %126, %125 : vector<8x384xf32>
    %128 = math.tanh %127 : vector<8x384xf32>
    %cst_59 = arith.constant 5.000000e-01 : f32
    %129 = vector.broadcast %cst_59 : f32 to vector<8x384xf32>
    %130 = arith.mulf %129, %128 : vector<8x384xf32>
    %cst_60 = arith.constant 5.000000e-01 : f32
    %131 = vector.broadcast %cst_60 : f32 to vector<8x384xf32>
    %132 = arith.addf %130, %131 : vector<8x384xf32>
    %133 = vector.extract_strided_slice %124 {offsets = [0, 384], sizes = [8, 128], strides = [1, 1]} : vector<8x512xf32> to vector<8x128xf32>
    %134 = math.tanh %133 : vector<8x128xf32>
    %135 = vector.extract_strided_slice %132 {offsets = [0, 0], sizes = [8, 128], strides = [1, 1]} : vector<8x384xf32> to vector<8x128xf32>
    %136 = vector.extract_strided_slice %132 {offsets = [0, 128], sizes = [8, 128], strides = [1, 1]} : vector<8x384xf32> to vector<8x128xf32>
    %137 = vector.extract_strided_slice %132 {offsets = [0, 256], sizes = [8, 128], strides = [1, 1]} : vector<8x384xf32> to vector<8x128xf32>
    %138 = arith.mulf %136, %112 : vector<8x128xf32>
    %139 = arith.mulf %135, %134 : vector<8x128xf32>
    %140 = arith.addf %138, %139 : vector<8x128xf32>
    %141 = math.tanh %140 : vector<8x128xf32>
    %142 = arith.mulf %137, %141 : vector<8x128xf32>
    %c4_61 = arith.constant 4 : index
    %c0_62 = arith.constant 0 : index
    %c0_63 = arith.constant 0 : index
    %143 = vector.load %arg12[%c4_61, %c0_62, %c0_63] : memref<12x8x256xf32, #tpu.memory_space<vmem>>, vector<1x8x128xf32>
    %144 = vector.shape_cast %143 : vector<1x8x128xf32> to vector<8x128xf32>
    %145 = vector.shape_cast %142 : vector<8x128xf32> to vector<1x8x128xf32>
    tpu.vector_store %arg12[%c4_61, %c0_62, %c0_63], %145 {strides = array<i32>} : memref<12x8x256xf32, #tpu.memory_space<vmem>>, vector<1x8x128xf32>,
    %c7 = arith.constant 7 : index
    %c0_64 = arith.constant 0 : index
    %c128_65 = arith.constant 128 : index
    %146 = vector.load %arg12[%c7, %c0_64, %c128_65] : memref<12x8x256xf32, #tpu.memory_space<vmem>>, vector<1x8x128xf32>
    %147 = vector.shape_cast %146 : vector<1x8x128xf32> to vector<8x128xf32>
    %148 = vector.shape_cast %142 : vector<8x128xf32> to vector<1x8x128xf32>
    tpu.vector_store %arg12[%c7, %c0_64, %c128_65], %148 {strides = array<i32>} : memref<12x8x256xf32, #tpu.memory_space<vmem>>, vector<1x8x128xf32>,
    %c5 = arith.constant 5 : index
    %c0_66 = arith.constant 0 : index
    %c0_67 = arith.constant 0 : index
    %149 = vector.load %arg11[%c5, %c0_66, %c0_67] : memref<12x8x512xf32, #tpu.memory_space<vmem>>, vector<1x8x512xf32>
    %150 = vector.shape_cast %149 : vector<1x8x512xf32> to vector<8x512xf32>
    %cst_68 = arith.constant dense<0.000000e+00> : vector<8x512xf32>
    %151 = tpu.matmul %142, %6, %cst_68 {dimension_numbers = #tpu.dot_dimension_numbers<[1], [0], [0], [1], [0, 0, 1, 1], [], []>} : vector<8x128xf32>, vector<128x512xf32>, vector<8x512xf32> -> vector<8x512xf32>
    %152 = arith.addf %150, %151 : vector<8x512xf32>
    %153 = vector.extract_strided_slice %152 {offsets = [0, 0], sizes = [8, 384], strides = [1, 1]} : vector<8x512xf32> to vector<8x384xf32>
    %cst_69 = arith.constant 5.000000e-01 : f32
    %154 = vector.broadcast %cst_69 : f32 to vector<8x384xf32>
    %155 = arith.mulf %154, %153 : vector<8x384xf32>
    %156 = math.tanh %155 : vector<8x384xf32>
    %cst_70 = arith.constant 5.000000e-01 : f32
    %157 = vector.broadcast %cst_70 : f32 to vector<8x384xf32>
    %158 = arith.mulf %157, %156 : vector<8x384xf32>
    %cst_71 = arith.constant 5.000000e-01 : f32
    %159 = vector.broadcast %cst_71 : f32 to vector<8x384xf32>
    %160 = arith.addf %158, %159 : vector<8x384xf32>
    %161 = vector.extract_strided_slice %152 {offsets = [0, 384], sizes = [8, 128], strides = [1, 1]} : vector<8x512xf32> to vector<8x128xf32>
    %162 = math.tanh %161 : vector<8x128xf32>
    %163 = vector.extract_strided_slice %160 {offsets = [0, 0], sizes = [8, 128], strides = [1, 1]} : vector<8x384xf32> to vector<8x128xf32>
    %164 = vector.extract_strided_slice %160 {offsets = [0, 128], sizes = [8, 128], strides = [1, 1]} : vector<8x384xf32> to vector<8x128xf32>
    %165 = vector.extract_strided_slice %160 {offsets = [0, 256], sizes = [8, 128], strides = [1, 1]} : vector<8x384xf32> to vector<8x128xf32>
    %166 = arith.mulf %164, %140 : vector<8x128xf32>
    %167 = arith.mulf %163, %162 : vector<8x128xf32>
    %168 = arith.addf %166, %167 : vector<8x128xf32>
    %169 = math.tanh %168 : vector<8x128xf32>
    %170 = arith.mulf %165, %169 : vector<8x128xf32>
    %c5_72 = arith.constant 5 : index
    %c0_73 = arith.constant 0 : index
    %c0_74 = arith.constant 0 : index
    %171 = vector.load %arg12[%c5_72, %c0_73, %c0_74] : memref<12x8x256xf32, #tpu.memory_space<vmem>>, vector<1x8x128xf32>
    %172 = vector.shape_cast %171 : vector<1x8x128xf32> to vector<8x128xf32>
    %173 = vector.shape_cast %170 : vector<8x128xf32> to vector<1x8x128xf32>
    tpu.vector_store %arg12[%c5_72, %c0_73, %c0_74], %173 {strides = array<i32>} : memref<12x8x256xf32, #tpu.memory_space<vmem>>, vector<1x8x128xf32>,
    %c6 = arith.constant 6 : index
    %c0_75 = arith.constant 0 : index
    %c128_76 = arith.constant 128 : index
    %174 = vector.load %arg12[%c6, %c0_75, %c128_76] : memref<12x8x256xf32, #tpu.memory_space<vmem>>, vector<1x8x128xf32>
    %175 = vector.shape_cast %174 : vector<1x8x128xf32> to vector<8x128xf32>
    %176 = vector.shape_cast %170 : vector<8x128xf32> to vector<1x8x128xf32>
    tpu.vector_store %arg12[%c6, %c0_75, %c128_76], %176 {strides = array<i32>} : memref<12x8x256xf32, #tpu.memory_space<vmem>>, vector<1x8x128xf32>,
    %c6_77 = arith.constant 6 : index
    %c0_78 = arith.constant 0 : index
    %c0_79 = arith.constant 0 : index
    %177 = vector.load %arg11[%c6_77, %c0_78, %c0_79] : memref<12x8x512xf32, #tpu.memory_space<vmem>>, vector<1x8x512xf32>
    %178 = vector.shape_cast %177 : vector<1x8x512xf32> to vector<8x512xf32>
    %cst_80 = arith.constant dense<0.000000e+00> : vector<8x512xf32>
    %179 = tpu.matmul %170, %6, %cst_80 {dimension_numbers = #tpu.dot_dimension_numbers<[1], [0], [0], [1], [0, 0, 1, 1], [], []>} : vector<8x128xf32>, vector<128x512xf32>, vector<8x512xf32> -> vector<8x512xf32>
    %180 = arith.addf %178, %179 : vector<8x512xf32>
    %181 = vector.extract_strided_slice %180 {offsets = [0, 0], sizes = [8, 384], strides = [1, 1]} : vector<8x512xf32> to vector<8x384xf32>
    %cst_81 = arith.constant 5.000000e-01 : f32
    %182 = vector.broadcast %cst_81 : f32 to vector<8x384xf32>
    %183 = arith.mulf %182, %181 : vector<8x384xf32>
    %184 = math.tanh %183 : vector<8x384xf32>
    %cst_82 = arith.constant 5.000000e-01 : f32
    %185 = vector.broadcast %cst_82 : f32 to vector<8x384xf32>
    %186 = arith.mulf %185, %184 : vector<8x384xf32>
    %cst_83 = arith.constant 5.000000e-01 : f32
    %187 = vector.broadcast %cst_83 : f32 to vector<8x384xf32>
    %188 = arith.addf %186, %187 : vector<8x384xf32>
    %189 = vector.extract_strided_slice %180 {offsets = [0, 384], sizes = [8, 128], strides = [1, 1]} : vector<8x512xf32> to vector<8x128xf32>
    %190 = math.tanh %189 : vector<8x128xf32>
    %191 = vector.extract_strided_slice %188 {offsets = [0, 0], sizes = [8, 128], strides = [1, 1]} : vector<8x384xf32> to vector<8x128xf32>
    %192 = vector.extract_strided_slice %188 {offsets = [0, 128], sizes = [8, 128], strides = [1, 1]} : vector<8x384xf32> to vector<8x128xf32>
    %193 = vector.extract_strided_slice %188 {offsets = [0, 256], sizes = [8, 128], strides = [1, 1]} : vector<8x384xf32> to vector<8x128xf32>
    %194 = arith.mulf %192, %168 : vector<8x128xf32>
    %195 = arith.mulf %191, %190 : vector<8x128xf32>
    %196 = arith.addf %194, %195 : vector<8x128xf32>
    %197 = math.tanh %196 : vector<8x128xf32>
    %198 = arith.mulf %193, %197 : vector<8x128xf32>
    %c6_84 = arith.constant 6 : index
    %c0_85 = arith.constant 0 : index
    %c0_86 = arith.constant 0 : index
    %199 = vector.load %arg12[%c6_84, %c0_85, %c0_86] : memref<12x8x256xf32, #tpu.memory_space<vmem>>, vector<1x8x128xf32>
    %200 = vector.shape_cast %199 : vector<1x8x128xf32> to vector<8x128xf32>
    %201 = vector.shape_cast %198 : vector<8x128xf32> to vector<1x8x128xf32>
    tpu.vector_store %arg12[%c6_84, %c0_85, %c0_86], %201 {strides = array<i32>} : memref<12x8x256xf32, #tpu.memory_space<vmem>>, vector<1x8x128xf32>,
    %c5_87 = arith.constant 5 : index
    %c0_88 = arith.constant 0 : index
    %c128_89 = arith.constant 128 : index
    %202 = vector.load %arg12[%c5_87, %c0_88, %c128_89] : memref<12x8x256xf32, #tpu.memory_space<vmem>>, vector<1x8x128xf32>
    %203 = vector.shape_cast %202 : vector<1x8x128xf32> to vector<8x128xf32>
    %204 = vector.shape_cast %198 : vector<8x128xf32> to vector<1x8x128xf32>
    tpu.vector_store %arg12[%c5_87, %c0_88, %c128_89], %204 {strides = array<i32>} : memref<12x8x256xf32, #tpu.memory_space<vmem>>, vector<1x8x128xf32>,
    %c7_90 = arith.constant 7 : index
    %c0_91 = arith.constant 0 : index
    %c0_92 = arith.constant 0 : index
    %205 = vector.load %arg11[%c7_90, %c0_91, %c0_92] : memref<12x8x512xf32, #tpu.memory_space<vmem>>, vector<1x8x512xf32>
    %206 = vector.shape_cast %205 : vector<1x8x512xf32> to vector<8x512xf32>
    %cst_93 = arith.constant dense<0.000000e+00> : vector<8x512xf32>
    %207 = tpu.matmul %198, %6, %cst_93 {dimension_numbers = #tpu.dot_dimension_numbers<[1], [0], [0], [1], [0, 0, 1, 1], [], []>} : vector<8x128xf32>, vector<128x512xf32>, vector<8x512xf32> -> vector<8x512xf32>
    %208 = arith.addf %206, %207 : vector<8x512xf32>
    %209 = vector.extract_strided_slice %208 {offsets = [0, 0], sizes = [8, 384], strides = [1, 1]} : vector<8x512xf32> to vector<8x384xf32>
    %cst_94 = arith.constant 5.000000e-01 : f32
    %210 = vector.broadcast %cst_94 : f32 to vector<8x384xf32>
    %211 = arith.mulf %210, %209 : vector<8x384xf32>
    %212 = math.tanh %211 : vector<8x384xf32>
    %cst_95 = arith.constant 5.000000e-01 : f32
    %213 = vector.broadcast %cst_95 : f32 to vector<8x384xf32>
    %214 = arith.mulf %213, %212 : vector<8x384xf32>
    %cst_96 = arith.constant 5.000000e-01 : f32
    %215 = vector.broadcast %cst_96 : f32 to vector<8x384xf32>
    %216 = arith.addf %214, %215 : vector<8x384xf32>
    %217 = vector.extract_strided_slice %208 {offsets = [0, 384], sizes = [8, 128], strides = [1, 1]} : vector<8x512xf32> to vector<8x128xf32>
    %218 = math.tanh %217 : vector<8x128xf32>
    %219 = vector.extract_strided_slice %216 {offsets = [0, 0], sizes = [8, 128], strides = [1, 1]} : vector<8x384xf32> to vector<8x128xf32>
    %220 = vector.extract_strided_slice %216 {offsets = [0, 128], sizes = [8, 128], strides = [1, 1]} : vector<8x384xf32> to vector<8x128xf32>
    %221 = vector.extract_strided_slice %216 {offsets = [0, 256], sizes = [8, 128], strides = [1, 1]} : vector<8x384xf32> to vector<8x128xf32>
    %222 = arith.mulf %220, %196 : vector<8x128xf32>
    %223 = arith.mulf %219, %218 : vector<8x128xf32>
    %224 = arith.addf %222, %223 : vector<8x128xf32>
    %225 = math.tanh %224 : vector<8x128xf32>
    %226 = arith.mulf %221, %225 : vector<8x128xf32>
    %c7_97 = arith.constant 7 : index
    %c0_98 = arith.constant 0 : index
    %c0_99 = arith.constant 0 : index
    %227 = vector.load %arg12[%c7_97, %c0_98, %c0_99] : memref<12x8x256xf32, #tpu.memory_space<vmem>>, vector<1x8x128xf32>
    %228 = vector.shape_cast %227 : vector<1x8x128xf32> to vector<8x128xf32>
    %229 = vector.shape_cast %226 : vector<8x128xf32> to vector<1x8x128xf32>
    tpu.vector_store %arg12[%c7_97, %c0_98, %c0_99], %229 {strides = array<i32>} : memref<12x8x256xf32, #tpu.memory_space<vmem>>, vector<1x8x128xf32>,
    %c4_100 = arith.constant 4 : index
    %c0_101 = arith.constant 0 : index
    %c128_102 = arith.constant 128 : index
    %230 = vector.load %arg12[%c4_100, %c0_101, %c128_102] : memref<12x8x256xf32, #tpu.memory_space<vmem>>, vector<1x8x128xf32>
    %231 = vector.shape_cast %230 : vector<1x8x128xf32> to vector<8x128xf32>
    %232 = vector.shape_cast %226 : vector<8x128xf32> to vector<1x8x128xf32>
    tpu.vector_store %arg12[%c4_100, %c0_101, %c128_102], %232 {strides = array<i32>} : memref<12x8x256xf32, #tpu.memory_space<vmem>>, vector<1x8x128xf32>,
    %c8_103 = arith.constant 8 : index
    %c0_104 = arith.constant 0 : index
    %c0_105 = arith.constant 0 : index
    %233 = vector.load %arg11[%c8_103, %c0_104, %c0_105] : memref<12x8x512xf32, #tpu.memory_space<vmem>>, vector<1x8x512xf32>
    %234 = vector.shape_cast %233 : vector<1x8x512xf32> to vector<8x512xf32>
    %cst_106 = arith.constant dense<0.000000e+00> : vector<8x512xf32>
    %235 = tpu.matmul %226, %6, %cst_106 {dimension_numbers = #tpu.dot_dimension_numbers<[1], [0], [0], [1], [0, 0, 1, 1], [], []>} : vector<8x128xf32>, vector<128x512xf32>, vector<8x512xf32> -> vector<8x512xf32>
    %236 = arith.addf %234, %235 : vector<8x512xf32>
    %237 = vector.extract_strided_slice %236 {offsets = [0, 0], sizes = [8, 384], strides = [1, 1]} : vector<8x512xf32> to vector<8x384xf32>
    %cst_107 = arith.constant 5.000000e-01 : f32
    %238 = vector.broadcast %cst_107 : f32 to vector<8x384xf32>
    %239 = arith.mulf %238, %237 : vector<8x384xf32>
    %240 = math.tanh %239 : vector<8x384xf32>
    %cst_108 = arith.constant 5.000000e-01 : f32
    %241 = vector.broadcast %cst_108 : f32 to vector<8x384xf32>
    %242 = arith.mulf %241, %240 : vector<8x384xf32>
    %cst_109 = arith.constant 5.000000e-01 : f32
    %243 = vector.broadcast %cst_109 : f32 to vector<8x384xf32>
    %244 = arith.addf %242, %243 : vector<8x384xf32>
    %245 = vector.extract_strided_slice %236 {offsets = [0, 384], sizes = [8, 128], strides = [1, 1]} : vector<8x512xf32> to vector<8x128xf32>
    %246 = math.tanh %245 : vector<8x128xf32>
    %247 = vector.extract_strided_slice %244 {offsets = [0, 0], sizes = [8, 128], strides = [1, 1]} : vector<8x384xf32> to vector<8x128xf32>
    %248 = vector.extract_strided_slice %244 {offsets = [0, 128], sizes = [8, 128], strides = [1, 1]} : vector<8x384xf32> to vector<8x128xf32>
    %249 = vector.extract_strided_slice %244 {offsets = [0, 256], sizes = [8, 128], strides = [1, 1]} : vector<8x384xf32> to vector<8x128xf32>
    %250 = arith.mulf %248, %224 : vector<8x128xf32>
    %251 = arith.mulf %247, %246 : vector<8x128xf32>
    %252 = arith.addf %250, %251 : vector<8x128xf32>
    %253 = math.tanh %252 : vector<8x128xf32>
    %254 = arith.mulf %249, %253 : vector<8x128xf32>
    %c8_110 = arith.constant 8 : index
    %c0_111 = arith.constant 0 : index
    %c0_112 = arith.constant 0 : index
    %255 = vector.load %arg12[%c8_110, %c0_111, %c0_112] : memref<12x8x256xf32, #tpu.memory_space<vmem>>, vector<1x8x128xf32>
    %256 = vector.shape_cast %255 : vector<1x8x128xf32> to vector<8x128xf32>
    %257 = vector.shape_cast %254 : vector<8x128xf32> to vector<1x8x128xf32>
    tpu.vector_store %arg12[%c8_110, %c0_111, %c0_112], %257 {strides = array<i32>} : memref<12x8x256xf32, #tpu.memory_space<vmem>>, vector<1x8x128xf32>,
    %c3_113 = arith.constant 3 : index
    %c0_114 = arith.constant 0 : index
    %c128_115 = arith.constant 128 : index
    %258 = vector.load %arg12[%c3_113, %c0_114, %c128_115] : memref<12x8x256xf32, #tpu.memory_space<vmem>>, vector<1x8x128xf32>
    %259 = vector.shape_cast %258 : vector<1x8x128xf32> to vector<8x128xf32>
    %260 = vector.shape_cast %254 : vector<8x128xf32> to vector<1x8x128xf32>
    tpu.vector_store %arg12[%c3_113, %c0_114, %c128_115], %260 {strides = array<i32>} : memref<12x8x256xf32, #tpu.memory_space<vmem>>, vector<1x8x128xf32>,
    %c9_116 = arith.constant 9 : index
    %c0_117 = arith.constant 0 : index
    %c0_118 = arith.constant 0 : index
    %261 = vector.load %arg11[%c9_116, %c0_117, %c0_118] : memref<12x8x512xf32, #tpu.memory_space<vmem>>, vector<1x8x512xf32>
    %262 = vector.shape_cast %261 : vector<1x8x512xf32> to vector<8x512xf32>
    %cst_119 = arith.constant dense<0.000000e+00> : vector<8x512xf32>
    %263 = tpu.matmul %254, %6, %cst_119 {dimension_numbers = #tpu.dot_dimension_numbers<[1], [0], [0], [1], [0, 0, 1, 1], [], []>} : vector<8x128xf32>, vector<128x512xf32>, vector<8x512xf32> -> vector<8x512xf32>
    %264 = arith.addf %262, %263 : vector<8x512xf32>
    %265 = vector.extract_strided_slice %264 {offsets = [0, 0], sizes = [8, 384], strides = [1, 1]} : vector<8x512xf32> to vector<8x384xf32>
    %cst_120 = arith.constant 5.000000e-01 : f32
    %266 = vector.broadcast %cst_120 : f32 to vector<8x384xf32>
    %267 = arith.mulf %266, %265 : vector<8x384xf32>
    %268 = math.tanh %267 : vector<8x384xf32>
    %cst_121 = arith.constant 5.000000e-01 : f32
    %269 = vector.broadcast %cst_121 : f32 to vector<8x384xf32>
    %270 = arith.mulf %269, %268 : vector<8x384xf32>
    %cst_122 = arith.constant 5.000000e-01 : f32
    %271 = vector.broadcast %cst_122 : f32 to vector<8x384xf32>
    %272 = arith.addf %270, %271 : vector<8x384xf32>
    %273 = vector.extract_strided_slice %264 {offsets = [0, 384], sizes = [8, 128], strides = [1, 1]} : vector<8x512xf32> to vector<8x128xf32>
    %274 = math.tanh %273 : vector<8x128xf32>
    %275 = vector.extract_strided_slice %272 {offsets = [0, 0], sizes = [8, 128], strides = [1, 1]} : vector<8x384xf32> to vector<8x128xf32>
    %276 = vector.extract_strided_slice %272 {offsets = [0, 128], sizes = [8, 128], strides = [1, 1]} : vector<8x384xf32> to vector<8x128xf32>
    %277 = vector.extract_strided_slice %272 {offsets = [0, 256], sizes = [8, 128], strides = [1, 1]} : vector<8x384xf32> to vector<8x128xf32>
    %278 = arith.mulf %276, %252 : vector<8x128xf32>
    %279 = arith.mulf %275, %274 : vector<8x128xf32>
    %280 = arith.addf %278, %279 : vector<8x128xf32>
    %281 = math.tanh %280 : vector<8x128xf32>
    %282 = arith.mulf %277, %281 : vector<8x128xf32>
    %c9_123 = arith.constant 9 : index
    %c0_124 = arith.constant 0 : index
    %c0_125 = arith.constant 0 : index
    %283 = vector.load %arg12[%c9_123, %c0_124, %c0_125] : memref<12x8x256xf32, #tpu.memory_space<vmem>>, vector<1x8x128xf32>
    %284 = vector.shape_cast %283 : vector<1x8x128xf32> to vector<8x128xf32>
    %285 = vector.shape_cast %282 : vector<8x128xf32> to vector<1x8x128xf32>
    tpu.vector_store %arg12[%c9_123, %c0_124, %c0_125], %285 {strides = array<i32>} : memref<12x8x256xf32, #tpu.memory_space<vmem>>, vector<1x8x128xf32>,
    %c2_126 = arith.constant 2 : index
    %c0_127 = arith.constant 0 : index
    %c128_128 = arith.constant 128 : index
    %286 = vector.load %arg12[%c2_126, %c0_127, %c128_128] : memref<12x8x256xf32, #tpu.memory_space<vmem>>, vector<1x8x128xf32>
    %287 = vector.shape_cast %286 : vector<1x8x128xf32> to vector<8x128xf32>
    %288 = vector.shape_cast %282 : vector<8x128xf32> to vector<1x8x128xf32>
    tpu.vector_store %arg12[%c2_126, %c0_127, %c128_128], %288 {strides = array<i32>} : memref<12x8x256xf32, #tpu.memory_space<vmem>>, vector<1x8x128xf32>,
    %c10_129 = arith.constant 10 : index
    %c0_130 = arith.constant 0 : index
    %c0_131 = arith.constant 0 : index
    %289 = vector.load %arg11[%c10_129, %c0_130, %c0_131] : memref<12x8x512xf32, #tpu.memory_space<vmem>>, vector<1x8x512xf32>
    %290 = vector.shape_cast %289 : vector<1x8x512xf32> to vector<8x512xf32>
    %cst_132 = arith.constant dense<0.000000e+00> : vector<8x512xf32>
    %291 = tpu.matmul %282, %6, %cst_132 {dimension_numbers = #tpu.dot_dimension_numbers<[1], [0], [0], [1], [0, 0, 1, 1], [], []>} : vector<8x128xf32>, vector<128x512xf32>, vector<8x512xf32> -> vector<8x512xf32>
    %292 = arith.addf %290, %291 : vector<8x512xf32>
    %293 = vector.extract_strided_slice %292 {offsets = [0, 0], sizes = [8, 384], strides = [1, 1]} : vector<8x512xf32> to vector<8x384xf32>
    %cst_133 = arith.constant 5.000000e-01 : f32
    %294 = vector.broadcast %cst_133 : f32 to vector<8x384xf32>
    %295 = arith.mulf %294, %293 : vector<8x384xf32>
    %296 = math.tanh %295 : vector<8x384xf32>
    %cst_134 = arith.constant 5.000000e-01 : f32
    %297 = vector.broadcast %cst_134 : f32 to vector<8x384xf32>
    %298 = arith.mulf %297, %296 : vector<8x384xf32>
    %cst_135 = arith.constant 5.000000e-01 : f32
    %299 = vector.broadcast %cst_135 : f32 to vector<8x384xf32>
    %300 = arith.addf %298, %299 : vector<8x384xf32>
    %301 = vector.extract_strided_slice %292 {offsets = [0, 384], sizes = [8, 128], strides = [1, 1]} : vector<8x512xf32> to vector<8x128xf32>
    %302 = math.tanh %301 : vector<8x128xf32>
    %303 = vector.extract_strided_slice %300 {offsets = [0, 0], sizes = [8, 128], strides = [1, 1]} : vector<8x384xf32> to vector<8x128xf32>
    %304 = vector.extract_strided_slice %300 {offsets = [0, 128], sizes = [8, 128], strides = [1, 1]} : vector<8x384xf32> to vector<8x128xf32>
    %305 = vector.extract_strided_slice %300 {offsets = [0, 256], sizes = [8, 128], strides = [1, 1]} : vector<8x384xf32> to vector<8x128xf32>
    %306 = arith.mulf %304, %280 : vector<8x128xf32>
    %307 = arith.mulf %303, %302 : vector<8x128xf32>
    %308 = arith.addf %306, %307 : vector<8x128xf32>
    %309 = math.tanh %308 : vector<8x128xf32>
    %310 = arith.mulf %305, %309 : vector<8x128xf32>
    %c10_136 = arith.constant 10 : index
    %c0_137 = arith.constant 0 : index
    %c0_138 = arith.constant 0 : index
    %311 = vector.load %arg12[%c10_136, %c0_137, %c0_138] : memref<12x8x256xf32, #tpu.memory_space<vmem>>, vector<1x8x128xf32>
    %312 = vector.shape_cast %311 : vector<1x8x128xf32> to vector<8x128xf32>
    %313 = vector.shape_cast %310 : vector<8x128xf32> to vector<1x8x128xf32>
    tpu.vector_store %arg12[%c10_136, %c0_137, %c0_138], %313 {strides = array<i32>} : memref<12x8x256xf32, #tpu.memory_space<vmem>>, vector<1x8x128xf32>,
    %c1_139 = arith.constant 1 : index
    %c0_140 = arith.constant 0 : index
    %c128_141 = arith.constant 128 : index
    %314 = vector.load %arg12[%c1_139, %c0_140, %c128_141] : memref<12x8x256xf32, #tpu.memory_space<vmem>>, vector<1x8x128xf32>
    %315 = vector.shape_cast %314 : vector<1x8x128xf32> to vector<8x128xf32>
    %316 = vector.shape_cast %310 : vector<8x128xf32> to vector<1x8x128xf32>
    tpu.vector_store %arg12[%c1_139, %c0_140, %c128_141], %316 {strides = array<i32>} : memref<12x8x256xf32, #tpu.memory_space<vmem>>, vector<1x8x128xf32>,
    %c11_142 = arith.constant 11 : index
    %c0_143 = arith.constant 0 : index
    %c0_144 = arith.constant 0 : index
    %317 = vector.load %arg11[%c11_142, %c0_143, %c0_144] : memref<12x8x512xf32, #tpu.memory_space<vmem>>, vector<1x8x512xf32>
    %318 = vector.shape_cast %317 : vector<1x8x512xf32> to vector<8x512xf32>
    %cst_145 = arith.constant dense<0.000000e+00> : vector<8x512xf32>
    %319 = tpu.matmul %310, %6, %cst_145 {dimension_numbers = #tpu.dot_dimension_numbers<[1], [0], [0], [1], [0, 0, 1, 1], [], []>} : vector<8x128xf32>, vector<128x512xf32>, vector<8x512xf32> -> vector<8x512xf32>
    %320 = arith.addf %318, %319 : vector<8x512xf32>
    %321 = vector.extract_strided_slice %320 {offsets = [0, 0], sizes = [8, 384], strides = [1, 1]} : vector<8x512xf32> to vector<8x384xf32>
    %cst_146 = arith.constant 5.000000e-01 : f32
    %322 = vector.broadcast %cst_146 : f32 to vector<8x384xf32>
    %323 = arith.mulf %322, %321 : vector<8x384xf32>
    %324 = math.tanh %323 : vector<8x384xf32>
    %cst_147 = arith.constant 5.000000e-01 : f32
    %325 = vector.broadcast %cst_147 : f32 to vector<8x384xf32>
    %326 = arith.mulf %325, %324 : vector<8x384xf32>
    %cst_148 = arith.constant 5.000000e-01 : f32
    %327 = vector.broadcast %cst_148 : f32 to vector<8x384xf32>
    %328 = arith.addf %326, %327 : vector<8x384xf32>
    %329 = vector.extract_strided_slice %320 {offsets = [0, 384], sizes = [8, 128], strides = [1, 1]} : vector<8x512xf32> to vector<8x128xf32>
    %330 = math.tanh %329 : vector<8x128xf32>
    %331 = vector.extract_strided_slice %328 {offsets = [0, 0], sizes = [8, 128], strides = [1, 1]} : vector<8x384xf32> to vector<8x128xf32>
    %332 = vector.extract_strided_slice %328 {offsets = [0, 128], sizes = [8, 128], strides = [1, 1]} : vector<8x384xf32> to vector<8x128xf32>
    %333 = vector.extract_strided_slice %328 {offsets = [0, 256], sizes = [8, 128], strides = [1, 1]} : vector<8x384xf32> to vector<8x128xf32>
    %334 = arith.mulf %332, %308 : vector<8x128xf32>
    %335 = arith.mulf %331, %330 : vector<8x128xf32>
    %336 = arith.addf %334, %335 : vector<8x128xf32>
    %337 = math.tanh %336 : vector<8x128xf32>
    %338 = arith.mulf %333, %337 : vector<8x128xf32>
    %c11_149 = arith.constant 11 : index
    %c0_150 = arith.constant 0 : index
    %c0_151 = arith.constant 0 : index
    %339 = vector.load %arg12[%c11_149, %c0_150, %c0_151] : memref<12x8x256xf32, #tpu.memory_space<vmem>>, vector<1x8x128xf32>
    %340 = vector.shape_cast %339 : vector<1x8x128xf32> to vector<8x128xf32>
    %341 = vector.shape_cast %338 : vector<8x128xf32> to vector<1x8x128xf32>
    tpu.vector_store %arg12[%c11_149, %c0_150, %c0_151], %341 {strides = array<i32>} : memref<12x8x256xf32, #tpu.memory_space<vmem>>, vector<1x8x128xf32>,
    %c0_152 = arith.constant 0 : index
    %c0_153 = arith.constant 0 : index
    %c128_154 = arith.constant 128 : index
    %342 = vector.load %arg12[%c0_152, %c0_153, %c128_154] : memref<12x8x256xf32, #tpu.memory_space<vmem>>, vector<1x8x128xf32>
    %343 = vector.shape_cast %342 : vector<1x8x128xf32> to vector<8x128xf32>
    %344 = vector.shape_cast %338 : vector<8x128xf32> to vector<1x8x128xf32>
    tpu.vector_store %arg12[%c0_152, %c0_153, %c128_154], %344 {strides = array<i32>} : memref<12x8x256xf32, #tpu.memory_space<vmem>>, vector<1x8x128xf32>,
    %c0_155 = arith.constant 0 : index
    %c0_156 = arith.constant 0 : index
    %c0_157 = arith.constant 0 : index
    %345 = vector.load %arg12[%c0_155, %c0_156, %c0_157] : memref<12x8x256xf32, #tpu.memory_space<vmem>>, vector<12x8x256xf32>
    %346 = vector.shape_cast %345 : vector<12x8x256xf32> to vector<96x256xf32>
    %c0_158 = arith.constant 0 : index
    %c0_159 = arith.constant 0 : index
    %347 = vector.load %arg4[%c0_158, %c0_159] : memref<256x512xf32, #tpu.memory_space<vmem>>, vector<256x512xf32>
    %cst_160 = arith.constant dense<0.000000e+00> : vector<96x512xf32>
    %348 = tpu.matmul %346, %347, %cst_160 {dimension_numbers = #tpu.dot_dimension_numbers<[1], [0], [0], [1], [0, 0, 1, 1], [], []>} : vector<96x256xf32>, vector<256x512xf32>, vector<96x512xf32> -> vector<96x512xf32>
    %349 = vector.shape_cast %348 : vector<96x512xf32> to vector<12x8x512xf32>
    %c0_161 = arith.constant 0 : index
    %c0_162 = arith.constant 0 : index
    %c0_163 = arith.constant 0 : index
    %350 = vector.load %arg11[%c0_161, %c0_162, %c0_163] : memref<12x8x512xf32, #tpu.memory_space<vmem>>, vector<12x8x512xf32>
    tpu.vector_store %arg11[%c0_161, %c0_162, %c0_163], %349 {strides = array<i32>} : memref<12x8x512xf32, #tpu.memory_space<vmem>>, vector<12x8x512xf32>,
    %c0_164 = arith.constant 0 : index
    %c0_165 = arith.constant 0 : index
    %351 = vector.load %arg5[%c0_164, %c0_165] : memref<128x512xf32, #tpu.memory_space<vmem>>, vector<128x512xf32>
    %cst_166 = arith.constant 0.000000e+00 : f32
    %352 = vector.broadcast %cst_166 : f32 to vector<8x128xf32>
    %cst_167 = arith.constant 0.000000e+00 : f32
    %353 = vector.broadcast %cst_167 : f32 to vector<8x128xf32>
    %cst_168 = arith.constant 0.000000e+00 : f32
    %354 = vector.broadcast %cst_168 : f32 to vector<8x256xf32>
    %c0_169 = arith.constant 0 : index
    %c0_170 = arith.constant 0 : index
    %355 = vector.load %arg13[%c0_169, %c0_170] : memref<8x256xf32, #tpu.memory_space<vmem>>, vector<8x256xf32>
    tpu.vector_store %arg13[%c0_169, %c0_170], %354 {strides = array<i32>} : memref<8x256xf32, #tpu.memory_space<vmem>>, vector<8x256xf32>,
    %c0_171 = arith.constant 0 : index
    %c0_172 = arith.constant 0 : index
    %c0_173 = arith.constant 0 : index
    %356 = vector.load %arg11[%c0_171, %c0_172, %c0_173] : memref<12x8x512xf32, #tpu.memory_space<vmem>>, vector<1x8x512xf32>
    %357 = vector.shape_cast %356 : vector<1x8x512xf32> to vector<8x512xf32>
    %cst_174 = arith.constant dense<0.000000e+00> : vector<8x512xf32>
    %358 = tpu.matmul %352, %351, %cst_174 {dimension_numbers = #tpu.dot_dimension_numbers<[1], [0], [0], [1], [0, 0, 1, 1], [], []>} : vector<8x128xf32>, vector<128x512xf32>, vector<8x512xf32> -> vector<8x512xf32>
    %359 = arith.addf %357, %358 : vector<8x512xf32>
    %360 = vector.extract_strided_slice %359 {offsets = [0, 0], sizes = [8, 384], strides = [1, 1]} : vector<8x512xf32> to vector<8x384xf32>
    %cst_175 = arith.constant 5.000000e-01 : f32
    %361 = vector.broadcast %cst_175 : f32 to vector<8x384xf32>
    %362 = arith.mulf %361, %360 : vector<8x384xf32>
    %363 = math.tanh %362 : vector<8x384xf32>
    %cst_176 = arith.constant 5.000000e-01 : f32
    %364 = vector.broadcast %cst_176 : f32 to vector<8x384xf32>
    %365 = arith.mulf %364, %363 : vector<8x384xf32>
    %cst_177 = arith.constant 5.000000e-01 : f32
    %366 = vector.broadcast %cst_177 : f32 to vector<8x384xf32>
    %367 = arith.addf %365, %366 : vector<8x384xf32>
    %368 = vector.extract_strided_slice %359 {offsets = [0, 384], sizes = [8, 128], strides = [1, 1]} : vector<8x512xf32> to vector<8x128xf32>
    %369 = math.tanh %368 : vector<8x128xf32>
    %370 = vector.extract_strided_slice %367 {offsets = [0, 0], sizes = [8, 128], strides = [1, 1]} : vector<8x384xf32> to vector<8x128xf32>
    %371 = vector.extract_strided_slice %367 {offsets = [0, 128], sizes = [8, 128], strides = [1, 1]} : vector<8x384xf32> to vector<8x128xf32>
    %372 = vector.extract_strided_slice %367 {offsets = [0, 256], sizes = [8, 128], strides = [1, 1]} : vector<8x384xf32> to vector<8x128xf32>
    %373 = arith.mulf %371, %353 : vector<8x128xf32>
    %374 = arith.mulf %370, %369 : vector<8x128xf32>
    %375 = arith.addf %373, %374 : vector<8x128xf32>
    %376 = math.tanh %375 : vector<8x128xf32>
    %377 = arith.mulf %372, %376 : vector<8x128xf32>
    %c0_178 = arith.constant 0 : index
    %c0_179 = arith.constant 0 : index
    %378 = vector.load %arg13[%c0_178, %c0_179] : memref<8x256xf32, #tpu.memory_space<vmem>>, vector<8x256xf32>
    %379 = math.tanh %377 : vector<8x128xf32>
    %c0_180 = arith.constant 0 : index
    %c0_181 = arith.constant 0 : index
    %c0_182 = arith.constant 0 : index
    %380 = vector.load %arg6[%c0_180, %c0_181, %c0_182] : memref<12x128x256xf32, #tpu.memory_space<vmem>>, vector<1x128x256xf32>
    %381 = vector.shape_cast %380 : vector<1x128x256xf32> to vector<128x256xf32>
    %cst_183 = arith.constant dense<0.000000e+00> : vector<8x256xf32>
    %382 = tpu.matmul %379, %381, %cst_183 {dimension_numbers = #tpu.dot_dimension_numbers<[1], [0], [0], [1], [0, 0, 1, 1], [], []>} : vector<8x128xf32>, vector<128x256xf32>, vector<8x256xf32> -> vector<8x256xf32>
    %383 = arith.addf %378, %382 : vector<8x256xf32>
    %c0_184 = arith.constant 0 : index
    %c0_185 = arith.constant 0 : index
    %384 = vector.load %arg13[%c0_184, %c0_185] : memref<8x256xf32, #tpu.memory_space<vmem>>, vector<8x256xf32>
    tpu.vector_store %arg13[%c0_184, %c0_185], %383 {strides = array<i32>} : memref<8x256xf32, #tpu.memory_space<vmem>>, vector<8x256xf32>,
    %c1_186 = arith.constant 1 : index
    %c0_187 = arith.constant 0 : index
    %c0_188 = arith.constant 0 : index
    %385 = vector.load %arg11[%c1_186, %c0_187, %c0_188] : memref<12x8x512xf32, #tpu.memory_space<vmem>>, vector<1x8x512xf32>
    %386 = vector.shape_cast %385 : vector<1x8x512xf32> to vector<8x512xf32>
    %cst_189 = arith.constant dense<0.000000e+00> : vector<8x512xf32>
    %387 = tpu.matmul %377, %351, %cst_189 {dimension_numbers = #tpu.dot_dimension_numbers<[1], [0], [0], [1], [0, 0, 1, 1], [], []>} : vector<8x128xf32>, vector<128x512xf32>, vector<8x512xf32> -> vector<8x512xf32>
    %388 = arith.addf %386, %387 : vector<8x512xf32>
    %389 = vector.extract_strided_slice %388 {offsets = [0, 0], sizes = [8, 384], strides = [1, 1]} : vector<8x512xf32> to vector<8x384xf32>
    %cst_190 = arith.constant 5.000000e-01 : f32
    %390 = vector.broadcast %cst_190 : f32 to vector<8x384xf32>
    %391 = arith.mulf %390, %389 : vector<8x384xf32>
    %392 = math.tanh %391 : vector<8x384xf32>
    %cst_191 = arith.constant 5.000000e-01 : f32
    %393 = vector.broadcast %cst_191 : f32 to vector<8x384xf32>
    %394 = arith.mulf %393, %392 : vector<8x384xf32>
    %cst_192 = arith.constant 5.000000e-01 : f32
    %395 = vector.broadcast %cst_192 : f32 to vector<8x384xf32>
    %396 = arith.addf %394, %395 : vector<8x384xf32>
    %397 = vector.extract_strided_slice %388 {offsets = [0, 384], sizes = [8, 128], strides = [1, 1]} : vector<8x512xf32> to vector<8x128xf32>
    %398 = math.tanh %397 : vector<8x128xf32>
    %399 = vector.extract_strided_slice %396 {offsets = [0, 0], sizes = [8, 128], strides = [1, 1]} : vector<8x384xf32> to vector<8x128xf32>
    %400 = vector.extract_strided_slice %396 {offsets = [0, 128], sizes = [8, 128], strides = [1, 1]} : vector<8x384xf32> to vector<8x128xf32>
    %401 = vector.extract_strided_slice %396 {offsets = [0, 256], sizes = [8, 128], strides = [1, 1]} : vector<8x384xf32> to vector<8x128xf32>
    %402 = arith.mulf %400, %375 : vector<8x128xf32>
    %403 = arith.mulf %399, %398 : vector<8x128xf32>
    %404 = arith.addf %402, %403 : vector<8x128xf32>
    %405 = math.tanh %404 : vector<8x128xf32>
    %406 = arith.mulf %401, %405 : vector<8x128xf32>
    %c0_193 = arith.constant 0 : index
    %c0_194 = arith.constant 0 : index
    %407 = vector.load %arg13[%c0_193, %c0_194] : memref<8x256xf32, #tpu.memory_space<vmem>>, vector<8x256xf32>
    %408 = math.tanh %406 : vector<8x128xf32>
    %c1_195 = arith.constant 1 : index
    %c0_196 = arith.constant 0 : index
    %c0_197 = arith.constant 0 : index
    %409 = vector.load %arg6[%c1_195, %c0_196, %c0_197] : memref<12x128x256xf32, #tpu.memory_space<vmem>>, vector<1x128x256xf32>
    %410 = vector.shape_cast %409 : vector<1x128x256xf32> to vector<128x256xf32>
    %cst_198 = arith.constant dense<0.000000e+00> : vector<8x256xf32>
    %411 = tpu.matmul %408, %410, %cst_198 {dimension_numbers = #tpu.dot_dimension_numbers<[1], [0], [0], [1], [0, 0, 1, 1], [], []>} : vector<8x128xf32>, vector<128x256xf32>, vector<8x256xf32> -> vector<8x256xf32>
    %412 = arith.addf %407, %411 : vector<8x256xf32>
    %c0_199 = arith.constant 0 : index
    %c0_200 = arith.constant 0 : index
    %413 = vector.load %arg13[%c0_199, %c0_200] : memref<8x256xf32, #tpu.memory_space<vmem>>, vector<8x256xf32>
    tpu.vector_store %arg13[%c0_199, %c0_200], %412 {strides = array<i32>} : memref<8x256xf32, #tpu.memory_space<vmem>>, vector<8x256xf32>,
    %c2_201 = arith.constant 2 : index
    %c0_202 = arith.constant 0 : index
    %c0_203 = arith.constant 0 : index
    %414 = vector.load %arg11[%c2_201, %c0_202, %c0_203] : memref<12x8x512xf32, #tpu.memory_space<vmem>>, vector<1x8x512xf32>
    %415 = vector.shape_cast %414 : vector<1x8x512xf32> to vector<8x512xf32>
    %cst_204 = arith.constant dense<0.000000e+00> : vector<8x512xf32>
    %416 = tpu.matmul %406, %351, %cst_204 {dimension_numbers = #tpu.dot_dimension_numbers<[1], [0], [0], [1], [0, 0, 1, 1], [], []>} : vector<8x128xf32>, vector<128x512xf32>, vector<8x512xf32> -> vector<8x512xf32>
    %417 = arith.addf %415, %416 : vector<8x512xf32>
    %418 = vector.extract_strided_slice %417 {offsets = [0, 0], sizes = [8, 384], strides = [1, 1]} : vector<8x512xf32> to vector<8x384xf32>
    %cst_205 = arith.constant 5.000000e-01 : f32
    %419 = vector.broadcast %cst_205 : f32 to vector<8x384xf32>
    %420 = arith.mulf %419, %418 : vector<8x384xf32>
    %421 = math.tanh %420 : vector<8x384xf32>
    %cst_206 = arith.constant 5.000000e-01 : f32
    %422 = vector.broadcast %cst_206 : f32 to vector<8x384xf32>
    %423 = arith.mulf %422, %421 : vector<8x384xf32>
    %cst_207 = arith.constant 5.000000e-01 : f32
    %424 = vector.broadcast %cst_207 : f32 to vector<8x384xf32>
    %425 = arith.addf %423, %424 : vector<8x384xf32>
    %426 = vector.extract_strided_slice %417 {offsets = [0, 384], sizes = [8, 128], strides = [1, 1]} : vector<8x512xf32> to vector<8x128xf32>
    %427 = math.tanh %426 : vector<8x128xf32>
    %428 = vector.extract_strided_slice %425 {offsets = [0, 0], sizes = [8, 128], strides = [1, 1]} : vector<8x384xf32> to vector<8x128xf32>
    %429 = vector.extract_strided_slice %425 {offsets = [0, 128], sizes = [8, 128], strides = [1, 1]} : vector<8x384xf32> to vector<8x128xf32>
    %430 = vector.extract_strided_slice %425 {offsets = [0, 256], sizes = [8, 128], strides = [1, 1]} : vector<8x384xf32> to vector<8x128xf32>
    %431 = arith.mulf %429, %404 : vector<8x128xf32>
    %432 = arith.mulf %428, %427 : vector<8x128xf32>
    %433 = arith.addf %431, %432 : vector<8x128xf32>
    %434 = math.tanh %433 : vector<8x128xf32>
    %435 = arith.mulf %430, %434 : vector<8x128xf32>
    %c0_208 = arith.constant 0 : index
    %c0_209 = arith.constant 0 : index
    %436 = vector.load %arg13[%c0_208, %c0_209] : memref<8x256xf32, #tpu.memory_space<vmem>>, vector<8x256xf32>
    %437 = math.tanh %435 : vector<8x128xf32>
    %c2_210 = arith.constant 2 : index
    %c0_211 = arith.constant 0 : index
    %c0_212 = arith.constant 0 : index
    %438 = vector.load %arg6[%c2_210, %c0_211, %c0_212] : memref<12x128x256xf32, #tpu.memory_space<vmem>>, vector<1x128x256xf32>
    %439 = vector.shape_cast %438 : vector<1x128x256xf32> to vector<128x256xf32>
    %cst_213 = arith.constant dense<0.000000e+00> : vector<8x256xf32>
    %440 = tpu.matmul %437, %439, %cst_213 {dimension_numbers = #tpu.dot_dimension_numbers<[1], [0], [0], [1], [0, 0, 1, 1], [], []>} : vector<8x128xf32>, vector<128x256xf32>, vector<8x256xf32> -> vector<8x256xf32>
    %441 = arith.addf %436, %440 : vector<8x256xf32>
    %c0_214 = arith.constant 0 : index
    %c0_215 = arith.constant 0 : index
    %442 = vector.load %arg13[%c0_214, %c0_215] : memref<8x256xf32, #tpu.memory_space<vmem>>, vector<8x256xf32>
    tpu.vector_store %arg13[%c0_214, %c0_215], %441 {strides = array<i32>} : memref<8x256xf32, #tpu.memory_space<vmem>>, vector<8x256xf32>,
    %c3_216 = arith.constant 3 : index
    %c0_217 = arith.constant 0 : index
    %c0_218 = arith.constant 0 : index
    %443 = vector.load %arg11[%c3_216, %c0_217, %c0_218] : memref<12x8x512xf32, #tpu.memory_space<vmem>>, vector<1x8x512xf32>
    %444 = vector.shape_cast %443 : vector<1x8x512xf32> to vector<8x512xf32>
    %cst_219 = arith.constant dense<0.000000e+00> : vector<8x512xf32>
    %445 = tpu.matmul %435, %351, %cst_219 {dimension_numbers = #tpu.dot_dimension_numbers<[1], [0], [0], [1], [0, 0, 1, 1], [], []>} : vector<8x128xf32>, vector<128x512xf32>, vector<8x512xf32> -> vector<8x512xf32>
    %446 = arith.addf %444, %445 : vector<8x512xf32>
    %447 = vector.extract_strided_slice %446 {offsets = [0, 0], sizes = [8, 384], strides = [1, 1]} : vector<8x512xf32> to vector<8x384xf32>
    %cst_220 = arith.constant 5.000000e-01 : f32
    %448 = vector.broadcast %cst_220 : f32 to vector<8x384xf32>
    %449 = arith.mulf %448, %447 : vector<8x384xf32>
    %450 = math.tanh %449 : vector<8x384xf32>
    %cst_221 = arith.constant 5.000000e-01 : f32
    %451 = vector.broadcast %cst_221 : f32 to vector<8x384xf32>
    %452 = arith.mulf %451, %450 : vector<8x384xf32>
    %cst_222 = arith.constant 5.000000e-01 : f32
    %453 = vector.broadcast %cst_222 : f32 to vector<8x384xf32>
    %454 = arith.addf %452, %453 : vector<8x384xf32>
    %455 = vector.extract_strided_slice %446 {offsets = [0, 384], sizes = [8, 128], strides = [1, 1]} : vector<8x512xf32> to vector<8x128xf32>
    %456 = math.tanh %455 : vector<8x128xf32>
    %457 = vector.extract_strided_slice %454 {offsets = [0, 0], sizes = [8, 128], strides = [1, 1]} : vector<8x384xf32> to vector<8x128xf32>
    %458 = vector.extract_strided_slice %454 {offsets = [0, 128], sizes = [8, 128], strides = [1, 1]} : vector<8x384xf32> to vector<8x128xf32>
    %459 = vector.extract_strided_slice %454 {offsets = [0, 256], sizes = [8, 128], strides = [1, 1]} : vector<8x384xf32> to vector<8x128xf32>
    %460 = arith.mulf %458, %433 : vector<8x128xf32>
    %461 = arith.mulf %457, %456 : vector<8x128xf32>
    %462 = arith.addf %460, %461 : vector<8x128xf32>
    %463 = math.tanh %462 : vector<8x128xf32>
    %464 = arith.mulf %459, %463 : vector<8x128xf32>
    %c0_223 = arith.constant 0 : index
    %c0_224 = arith.constant 0 : index
    %465 = vector.load %arg13[%c0_223, %c0_224] : memref<8x256xf32, #tpu.memory_space<vmem>>, vector<8x256xf32>
    %466 = math.tanh %464 : vector<8x128xf32>
    %c3_225 = arith.constant 3 : index
    %c0_226 = arith.constant 0 : index
    %c0_227 = arith.constant 0 : index
    %467 = vector.load %arg6[%c3_225, %c0_226, %c0_227] : memref<12x128x256xf32, #tpu.memory_space<vmem>>, vector<1x128x256xf32>
    %468 = vector.shape_cast %467 : vector<1x128x256xf32> to vector<128x256xf32>
    %cst_228 = arith.constant dense<0.000000e+00> : vector<8x256xf32>
    %469 = tpu.matmul %466, %468, %cst_228 {dimension_numbers = #tpu.dot_dimension_numbers<[1], [0], [0], [1], [0, 0, 1, 1], [], []>} : vector<8x128xf32>, vector<128x256xf32>, vector<8x256xf32> -> vector<8x256xf32>
    %470 = arith.addf %465, %469 : vector<8x256xf32>
    %c0_229 = arith.constant 0 : index
    %c0_230 = arith.constant 0 : index
    %471 = vector.load %arg13[%c0_229, %c0_230] : memref<8x256xf32, #tpu.memory_space<vmem>>, vector<8x256xf32>
    tpu.vector_store %arg13[%c0_229, %c0_230], %470 {strides = array<i32>} : memref<8x256xf32, #tpu.memory_space<vmem>>, vector<8x256xf32>,
    %c4_231 = arith.constant 4 : index
    %c0_232 = arith.constant 0 : index
    %c0_233 = arith.constant 0 : index
    %472 = vector.load %arg11[%c4_231, %c0_232, %c0_233] : memref<12x8x512xf32, #tpu.memory_space<vmem>>, vector<1x8x512xf32>
    %473 = vector.shape_cast %472 : vector<1x8x512xf32> to vector<8x512xf32>
    %cst_234 = arith.constant dense<0.000000e+00> : vector<8x512xf32>
    %474 = tpu.matmul %464, %351, %cst_234 {dimension_numbers = #tpu.dot_dimension_numbers<[1], [0], [0], [1], [0, 0, 1, 1], [], []>} : vector<8x128xf32>, vector<128x512xf32>, vector<8x512xf32> -> vector<8x512xf32>
    %475 = arith.addf %473, %474 : vector<8x512xf32>
    %476 = vector.extract_strided_slice %475 {offsets = [0, 0], sizes = [8, 384], strides = [1, 1]} : vector<8x512xf32> to vector<8x384xf32>
    %cst_235 = arith.constant 5.000000e-01 : f32
    %477 = vector.broadcast %cst_235 : f32 to vector<8x384xf32>
    %478 = arith.mulf %477, %476 : vector<8x384xf32>
    %479 = math.tanh %478 : vector<8x384xf32>
    %cst_236 = arith.constant 5.000000e-01 : f32
    %480 = vector.broadcast %cst_236 : f32 to vector<8x384xf32>
    %481 = arith.mulf %480, %479 : vector<8x384xf32>
    %cst_237 = arith.constant 5.000000e-01 : f32
    %482 = vector.broadcast %cst_237 : f32 to vector<8x384xf32>
    %483 = arith.addf %481, %482 : vector<8x384xf32>
    %484 = vector.extract_strided_slice %475 {offsets = [0, 384], sizes = [8, 128], strides = [1, 1]} : vector<8x512xf32> to vector<8x128xf32>
    %485 = math.tanh %484 : vector<8x128xf32>
    %486 = vector.extract_strided_slice %483 {offsets = [0, 0], sizes = [8, 128], strides = [1, 1]} : vector<8x384xf32> to vector<8x128xf32>
    %487 = vector.extract_strided_slice %483 {offsets = [0, 128], sizes = [8, 128], strides = [1, 1]} : vector<8x384xf32> to vector<8x128xf32>
    %488 = vector.extract_strided_slice %483 {offsets = [0, 256], sizes = [8, 128], strides = [1, 1]} : vector<8x384xf32> to vector<8x128xf32>
    %489 = arith.mulf %487, %462 : vector<8x128xf32>
    %490 = arith.mulf %486, %485 : vector<8x128xf32>
    %491 = arith.addf %489, %490 : vector<8x128xf32>
    %492 = math.tanh %491 : vector<8x128xf32>
    %493 = arith.mulf %488, %492 : vector<8x128xf32>
    %c0_238 = arith.constant 0 : index
    %c0_239 = arith.constant 0 : index
    %494 = vector.load %arg13[%c0_238, %c0_239] : memref<8x256xf32, #tpu.memory_space<vmem>>, vector<8x256xf32>
    %495 = math.tanh %493 : vector<8x128xf32>
    %c4_240 = arith.constant 4 : index
    %c0_241 = arith.constant 0 : index
    %c0_242 = arith.constant 0 : index
    %496 = vector.load %arg6[%c4_240, %c0_241, %c0_242] : memref<12x128x256xf32, #tpu.memory_space<vmem>>, vector<1x128x256xf32>
    %497 = vector.shape_cast %496 : vector<1x128x256xf32> to vector<128x256xf32>
    %cst_243 = arith.constant dense<0.000000e+00> : vector<8x256xf32>
    %498 = tpu.matmul %495, %497, %cst_243 {dimension_numbers = #tpu.dot_dimension_numbers<[1], [0], [0], [1], [0, 0, 1, 1], [], []>} : vector<8x128xf32>, vector<128x256xf32>, vector<8x256xf32> -> vector<8x256xf32>
    %499 = arith.addf %494, %498 : vector<8x256xf32>
    %c0_244 = arith.constant 0 : index
    %c0_245 = arith.constant 0 : index
    %500 = vector.load %arg13[%c0_244, %c0_245] : memref<8x256xf32, #tpu.memory_space<vmem>>, vector<8x256xf32>
    tpu.vector_store %arg13[%c0_244, %c0_245], %499 {strides = array<i32>} : memref<8x256xf32, #tpu.memory_space<vmem>>, vector<8x256xf32>,
    %c5_246 = arith.constant 5 : index
    %c0_247 = arith.constant 0 : index
    %c0_248 = arith.constant 0 : index
    %501 = vector.load %arg11[%c5_246, %c0_247, %c0_248] : memref<12x8x512xf32, #tpu.memory_space<vmem>>, vector<1x8x512xf32>
    %502 = vector.shape_cast %501 : vector<1x8x512xf32> to vector<8x512xf32>
    %cst_249 = arith.constant dense<0.000000e+00> : vector<8x512xf32>
    %503 = tpu.matmul %493, %351, %cst_249 {dimension_numbers = #tpu.dot_dimension_numbers<[1], [0], [0], [1], [0, 0, 1, 1], [], []>} : vector<8x128xf32>, vector<128x512xf32>, vector<8x512xf32> -> vector<8x512xf32>
    %504 = arith.addf %502, %503 : vector<8x512xf32>
    %505 = vector.extract_strided_slice %504 {offsets = [0, 0], sizes = [8, 384], strides = [1, 1]} : vector<8x512xf32> to vector<8x384xf32>
    %cst_250 = arith.constant 5.000000e-01 : f32
    %506 = vector.broadcast %cst_250 : f32 to vector<8x384xf32>
    %507 = arith.mulf %506, %505 : vector<8x384xf32>
    %508 = math.tanh %507 : vector<8x384xf32>
    %cst_251 = arith.constant 5.000000e-01 : f32
    %509 = vector.broadcast %cst_251 : f32 to vector<8x384xf32>
    %510 = arith.mulf %509, %508 : vector<8x384xf32>
    %cst_252 = arith.constant 5.000000e-01 : f32
    %511 = vector.broadcast %cst_252 : f32 to vector<8x384xf32>
    %512 = arith.addf %510, %511 : vector<8x384xf32>
    %513 = vector.extract_strided_slice %504 {offsets = [0, 384], sizes = [8, 128], strides = [1, 1]} : vector<8x512xf32> to vector<8x128xf32>
    %514 = math.tanh %513 : vector<8x128xf32>
    %515 = vector.extract_strided_slice %512 {offsets = [0, 0], sizes = [8, 128], strides = [1, 1]} : vector<8x384xf32> to vector<8x128xf32>
    %516 = vector.extract_strided_slice %512 {offsets = [0, 128], sizes = [8, 128], strides = [1, 1]} : vector<8x384xf32> to vector<8x128xf32>
    %517 = vector.extract_strided_slice %512 {offsets = [0, 256], sizes = [8, 128], strides = [1, 1]} : vector<8x384xf32> to vector<8x128xf32>
    %518 = arith.mulf %516, %491 : vector<8x128xf32>
    %519 = arith.mulf %515, %514 : vector<8x128xf32>
    %520 = arith.addf %518, %519 : vector<8x128xf32>
    %521 = math.tanh %520 : vector<8x128xf32>
    %522 = arith.mulf %517, %521 : vector<8x128xf32>
    %c0_253 = arith.constant 0 : index
    %c0_254 = arith.constant 0 : index
    %523 = vector.load %arg13[%c0_253, %c0_254] : memref<8x256xf32, #tpu.memory_space<vmem>>, vector<8x256xf32>
    %524 = math.tanh %522 : vector<8x128xf32>
    %c5_255 = arith.constant 5 : index
    %c0_256 = arith.constant 0 : index
    %c0_257 = arith.constant 0 : index
    %525 = vector.load %arg6[%c5_255, %c0_256, %c0_257] : memref<12x128x256xf32, #tpu.memory_space<vmem>>, vector<1x128x256xf32>
    %526 = vector.shape_cast %525 : vector<1x128x256xf32> to vector<128x256xf32>
    %cst_258 = arith.constant dense<0.000000e+00> : vector<8x256xf32>
    %527 = tpu.matmul %524, %526, %cst_258 {dimension_numbers = #tpu.dot_dimension_numbers<[1], [0], [0], [1], [0, 0, 1, 1], [], []>} : vector<8x128xf32>, vector<128x256xf32>, vector<8x256xf32> -> vector<8x256xf32>
    %528 = arith.addf %523, %527 : vector<8x256xf32>
    %c0_259 = arith.constant 0 : index
    %c0_260 = arith.constant 0 : index
    %529 = vector.load %arg13[%c0_259, %c0_260] : memref<8x256xf32, #tpu.memory_space<vmem>>, vector<8x256xf32>
    tpu.vector_store %arg13[%c0_259, %c0_260], %528 {strides = array<i32>} : memref<8x256xf32, #tpu.memory_space<vmem>>, vector<8x256xf32>,
    %c6_261 = arith.constant 6 : index
    %c0_262 = arith.constant 0 : index
    %c0_263 = arith.constant 0 : index
    %530 = vector.load %arg11[%c6_261, %c0_262, %c0_263] : memref<12x8x512xf32, #tpu.memory_space<vmem>>, vector<1x8x512xf32>
    %531 = vector.shape_cast %530 : vector<1x8x512xf32> to vector<8x512xf32>
    %cst_264 = arith.constant dense<0.000000e+00> : vector<8x512xf32>
    %532 = tpu.matmul %522, %351, %cst_264 {dimension_numbers = #tpu.dot_dimension_numbers<[1], [0], [0], [1], [0, 0, 1, 1], [], []>} : vector<8x128xf32>, vector<128x512xf32>, vector<8x512xf32> -> vector<8x512xf32>
    %533 = arith.addf %531, %532 : vector<8x512xf32>
    %534 = vector.extract_strided_slice %533 {offsets = [0, 0], sizes = [8, 384], strides = [1, 1]} : vector<8x512xf32> to vector<8x384xf32>
    %cst_265 = arith.constant 5.000000e-01 : f32
    %535 = vector.broadcast %cst_265 : f32 to vector<8x384xf32>
    %536 = arith.mulf %535, %534 : vector<8x384xf32>
    %537 = math.tanh %536 : vector<8x384xf32>
    %cst_266 = arith.constant 5.000000e-01 : f32
    %538 = vector.broadcast %cst_266 : f32 to vector<8x384xf32>
    %539 = arith.mulf %538, %537 : vector<8x384xf32>
    %cst_267 = arith.constant 5.000000e-01 : f32
    %540 = vector.broadcast %cst_267 : f32 to vector<8x384xf32>
    %541 = arith.addf %539, %540 : vector<8x384xf32>
    %542 = vector.extract_strided_slice %533 {offsets = [0, 384], sizes = [8, 128], strides = [1, 1]} : vector<8x512xf32> to vector<8x128xf32>
    %543 = math.tanh %542 : vector<8x128xf32>
    %544 = vector.extract_strided_slice %541 {offsets = [0, 0], sizes = [8, 128], strides = [1, 1]} : vector<8x384xf32> to vector<8x128xf32>
    %545 = vector.extract_strided_slice %541 {offsets = [0, 128], sizes = [8, 128], strides = [1, 1]} : vector<8x384xf32> to vector<8x128xf32>
    %546 = vector.extract_strided_slice %541 {offsets = [0, 256], sizes = [8, 128], strides = [1, 1]} : vector<8x384xf32> to vector<8x128xf32>
    %547 = arith.mulf %545, %520 : vector<8x128xf32>
    %548 = arith.mulf %544, %543 : vector<8x128xf32>
    %549 = arith.addf %547, %548 : vector<8x128xf32>
    %550 = math.tanh %549 : vector<8x128xf32>
    %551 = arith.mulf %546, %550 : vector<8x128xf32>
    %c0_268 = arith.constant 0 : index
    %c0_269 = arith.constant 0 : index
    %552 = vector.load %arg13[%c0_268, %c0_269] : memref<8x256xf32, #tpu.memory_space<vmem>>, vector<8x256xf32>
    %553 = math.tanh %551 : vector<8x128xf32>
    %c6_270 = arith.constant 6 : index
    %c0_271 = arith.constant 0 : index
    %c0_272 = arith.constant 0 : index
    %554 = vector.load %arg6[%c6_270, %c0_271, %c0_272] : memref<12x128x256xf32, #tpu.memory_space<vmem>>, vector<1x128x256xf32>
    %555 = vector.shape_cast %554 : vector<1x128x256xf32> to vector<128x256xf32>
    %cst_273 = arith.constant dense<0.000000e+00> : vector<8x256xf32>
    %556 = tpu.matmul %553, %555, %cst_273 {dimension_numbers = #tpu.dot_dimension_numbers<[1], [0], [0], [1], [0, 0, 1, 1], [], []>} : vector<8x128xf32>, vector<128x256xf32>, vector<8x256xf32> -> vector<8x256xf32>
    %557 = arith.addf %552, %556 : vector<8x256xf32>
    %c0_274 = arith.constant 0 : index
    %c0_275 = arith.constant 0 : index
    %558 = vector.load %arg13[%c0_274, %c0_275] : memref<8x256xf32, #tpu.memory_space<vmem>>, vector<8x256xf32>
    tpu.vector_store %arg13[%c0_274, %c0_275], %557 {strides = array<i32>} : memref<8x256xf32, #tpu.memory_space<vmem>>, vector<8x256xf32>,
    %c7_276 = arith.constant 7 : index
    %c0_277 = arith.constant 0 : index
    %c0_278 = arith.constant 0 : index
    %559 = vector.load %arg11[%c7_276, %c0_277, %c0_278] : memref<12x8x512xf32, #tpu.memory_space<vmem>>, vector<1x8x512xf32>
    %560 = vector.shape_cast %559 : vector<1x8x512xf32> to vector<8x512xf32>
    %cst_279 = arith.constant dense<0.000000e+00> : vector<8x512xf32>
    %561 = tpu.matmul %551, %351, %cst_279 {dimension_numbers = #tpu.dot_dimension_numbers<[1], [0], [0], [1], [0, 0, 1, 1], [], []>} : vector<8x128xf32>, vector<128x512xf32>, vector<8x512xf32> -> vector<8x512xf32>
    %562 = arith.addf %560, %561 : vector<8x512xf32>
    %563 = vector.extract_strided_slice %562 {offsets = [0, 0], sizes = [8, 384], strides = [1, 1]} : vector<8x512xf32> to vector<8x384xf32>
    %cst_280 = arith.constant 5.000000e-01 : f32
    %564 = vector.broadcast %cst_280 : f32 to vector<8x384xf32>
    %565 = arith.mulf %564, %563 : vector<8x384xf32>
    %566 = math.tanh %565 : vector<8x384xf32>
    %cst_281 = arith.constant 5.000000e-01 : f32
    %567 = vector.broadcast %cst_281 : f32 to vector<8x384xf32>
    %568 = arith.mulf %567, %566 : vector<8x384xf32>
    %cst_282 = arith.constant 5.000000e-01 : f32
    %569 = vector.broadcast %cst_282 : f32 to vector<8x384xf32>
    %570 = arith.addf %568, %569 : vector<8x384xf32>
    %571 = vector.extract_strided_slice %562 {offsets = [0, 384], sizes = [8, 128], strides = [1, 1]} : vector<8x512xf32> to vector<8x128xf32>
    %572 = math.tanh %571 : vector<8x128xf32>
    %573 = vector.extract_strided_slice %570 {offsets = [0, 0], sizes = [8, 128], strides = [1, 1]} : vector<8x384xf32> to vector<8x128xf32>
    %574 = vector.extract_strided_slice %570 {offsets = [0, 128], sizes = [8, 128], strides = [1, 1]} : vector<8x384xf32> to vector<8x128xf32>
    %575 = vector.extract_strided_slice %570 {offsets = [0, 256], sizes = [8, 128], strides = [1, 1]} : vector<8x384xf32> to vector<8x128xf32>
    %576 = arith.mulf %574, %549 : vector<8x128xf32>
    %577 = arith.mulf %573, %572 : vector<8x128xf32>
    %578 = arith.addf %576, %577 : vector<8x128xf32>
    %579 = math.tanh %578 : vector<8x128xf32>
    %580 = arith.mulf %575, %579 : vector<8x128xf32>
    %c0_283 = arith.constant 0 : index
    %c0_284 = arith.constant 0 : index
    %581 = vector.load %arg13[%c0_283, %c0_284] : memref<8x256xf32, #tpu.memory_space<vmem>>, vector<8x256xf32>
    %582 = math.tanh %580 : vector<8x128xf32>
    %c7_285 = arith.constant 7 : index
    %c0_286 = arith.constant 0 : index
    %c0_287 = arith.constant 0 : index
    %583 = vector.load %arg6[%c7_285, %c0_286, %c0_287] : memref<12x128x256xf32, #tpu.memory_space<vmem>>, vector<1x128x256xf32>
    %584 = vector.shape_cast %583 : vector<1x128x256xf32> to vector<128x256xf32>
    %cst_288 = arith.constant dense<0.000000e+00> : vector<8x256xf32>
    %585 = tpu.matmul %582, %584, %cst_288 {dimension_numbers = #tpu.dot_dimension_numbers<[1], [0], [0], [1], [0, 0, 1, 1], [], []>} : vector<8x128xf32>, vector<128x256xf32>, vector<8x256xf32> -> vector<8x256xf32>
    %586 = arith.addf %581, %585 : vector<8x256xf32>
    %c0_289 = arith.constant 0 : index
    %c0_290 = arith.constant 0 : index
    %587 = vector.load %arg13[%c0_289, %c0_290] : memref<8x256xf32, #tpu.memory_space<vmem>>, vector<8x256xf32>
    tpu.vector_store %arg13[%c0_289, %c0_290], %586 {strides = array<i32>} : memref<8x256xf32, #tpu.memory_space<vmem>>, vector<8x256xf32>,
    %c8_291 = arith.constant 8 : index
    %c0_292 = arith.constant 0 : index
    %c0_293 = arith.constant 0 : index
    %588 = vector.load %arg11[%c8_291, %c0_292, %c0_293] : memref<12x8x512xf32, #tpu.memory_space<vmem>>, vector<1x8x512xf32>
    %589 = vector.shape_cast %588 : vector<1x8x512xf32> to vector<8x512xf32>
    %cst_294 = arith.constant dense<0.000000e+00> : vector<8x512xf32>
    %590 = tpu.matmul %580, %351, %cst_294 {dimension_numbers = #tpu.dot_dimension_numbers<[1], [0], [0], [1], [0, 0, 1, 1], [], []>} : vector<8x128xf32>, vector<128x512xf32>, vector<8x512xf32> -> vector<8x512xf32>
    %591 = arith.addf %589, %590 : vector<8x512xf32>
    %592 = vector.extract_strided_slice %591 {offsets = [0, 0], sizes = [8, 384], strides = [1, 1]} : vector<8x512xf32> to vector<8x384xf32>
    %cst_295 = arith.constant 5.000000e-01 : f32
    %593 = vector.broadcast %cst_295 : f32 to vector<8x384xf32>
    %594 = arith.mulf %593, %592 : vector<8x384xf32>
    %595 = math.tanh %594 : vector<8x384xf32>
    %cst_296 = arith.constant 5.000000e-01 : f32
    %596 = vector.broadcast %cst_296 : f32 to vector<8x384xf32>
    %597 = arith.mulf %596, %595 : vector<8x384xf32>
    %cst_297 = arith.constant 5.000000e-01 : f32
    %598 = vector.broadcast %cst_297 : f32 to vector<8x384xf32>
    %599 = arith.addf %597, %598 : vector<8x384xf32>
    %600 = vector.extract_strided_slice %591 {offsets = [0, 384], sizes = [8, 128], strides = [1, 1]} : vector<8x512xf32> to vector<8x128xf32>
    %601 = math.tanh %600 : vector<8x128xf32>
    %602 = vector.extract_strided_slice %599 {offsets = [0, 0], sizes = [8, 128], strides = [1, 1]} : vector<8x384xf32> to vector<8x128xf32>
    %603 = vector.extract_strided_slice %599 {offsets = [0, 128], sizes = [8, 128], strides = [1, 1]} : vector<8x384xf32> to vector<8x128xf32>
    %604 = vector.extract_strided_slice %599 {offsets = [0, 256], sizes = [8, 128], strides = [1, 1]} : vector<8x384xf32> to vector<8x128xf32>
    %605 = arith.mulf %603, %578 : vector<8x128xf32>
    %606 = arith.mulf %602, %601 : vector<8x128xf32>
    %607 = arith.addf %605, %606 : vector<8x128xf32>
    %608 = math.tanh %607 : vector<8x128xf32>
    %609 = arith.mulf %604, %608 : vector<8x128xf32>
    %c0_298 = arith.constant 0 : index
    %c0_299 = arith.constant 0 : index
    %610 = vector.load %arg13[%c0_298, %c0_299] : memref<8x256xf32, #tpu.memory_space<vmem>>, vector<8x256xf32>
    %611 = math.tanh %609 : vector<8x128xf32>
    %c8_300 = arith.constant 8 : index
    %c0_301 = arith.constant 0 : index
    %c0_302 = arith.constant 0 : index
    %612 = vector.load %arg6[%c8_300, %c0_301, %c0_302] : memref<12x128x256xf32, #tpu.memory_space<vmem>>, vector<1x128x256xf32>
    %613 = vector.shape_cast %612 : vector<1x128x256xf32> to vector<128x256xf32>
    %cst_303 = arith.constant dense<0.000000e+00> : vector<8x256xf32>
    %614 = tpu.matmul %611, %613, %cst_303 {dimension_numbers = #tpu.dot_dimension_numbers<[1], [0], [0], [1], [0, 0, 1, 1], [], []>} : vector<8x128xf32>, vector<128x256xf32>, vector<8x256xf32> -> vector<8x256xf32>
    %615 = arith.addf %610, %614 : vector<8x256xf32>
    %c0_304 = arith.constant 0 : index
    %c0_305 = arith.constant 0 : index
    %616 = vector.load %arg13[%c0_304, %c0_305] : memref<8x256xf32, #tpu.memory_space<vmem>>, vector<8x256xf32>
    tpu.vector_store %arg13[%c0_304, %c0_305], %615 {strides = array<i32>} : memref<8x256xf32, #tpu.memory_space<vmem>>, vector<8x256xf32>,
    %c9_306 = arith.constant 9 : index
    %c0_307 = arith.constant 0 : index
    %c0_308 = arith.constant 0 : index
    %617 = vector.load %arg11[%c9_306, %c0_307, %c0_308] : memref<12x8x512xf32, #tpu.memory_space<vmem>>, vector<1x8x512xf32>
    %618 = vector.shape_cast %617 : vector<1x8x512xf32> to vector<8x512xf32>
    %cst_309 = arith.constant dense<0.000000e+00> : vector<8x512xf32>
    %619 = tpu.matmul %609, %351, %cst_309 {dimension_numbers = #tpu.dot_dimension_numbers<[1], [0], [0], [1], [0, 0, 1, 1], [], []>} : vector<8x128xf32>, vector<128x512xf32>, vector<8x512xf32> -> vector<8x512xf32>
    %620 = arith.addf %618, %619 : vector<8x512xf32>
    %621 = vector.extract_strided_slice %620 {offsets = [0, 0], sizes = [8, 384], strides = [1, 1]} : vector<8x512xf32> to vector<8x384xf32>
    %cst_310 = arith.constant 5.000000e-01 : f32
    %622 = vector.broadcast %cst_310 : f32 to vector<8x384xf32>
    %623 = arith.mulf %622, %621 : vector<8x384xf32>
    %624 = math.tanh %623 : vector<8x384xf32>
    %cst_311 = arith.constant 5.000000e-01 : f32
    %625 = vector.broadcast %cst_311 : f32 to vector<8x384xf32>
    %626 = arith.mulf %625, %624 : vector<8x384xf32>
    %cst_312 = arith.constant 5.000000e-01 : f32
    %627 = vector.broadcast %cst_312 : f32 to vector<8x384xf32>
    %628 = arith.addf %626, %627 : vector<8x384xf32>
    %629 = vector.extract_strided_slice %620 {offsets = [0, 384], sizes = [8, 128], strides = [1, 1]} : vector<8x512xf32> to vector<8x128xf32>
    %630 = math.tanh %629 : vector<8x128xf32>
    %631 = vector.extract_strided_slice %628 {offsets = [0, 0], sizes = [8, 128], strides = [1, 1]} : vector<8x384xf32> to vector<8x128xf32>
    %632 = vector.extract_strided_slice %628 {offsets = [0, 128], sizes = [8, 128], strides = [1, 1]} : vector<8x384xf32> to vector<8x128xf32>
    %633 = vector.extract_strided_slice %628 {offsets = [0, 256], sizes = [8, 128], strides = [1, 1]} : vector<8x384xf32> to vector<8x128xf32>
    %634 = arith.mulf %632, %607 : vector<8x128xf32>
    %635 = arith.mulf %631, %630 : vector<8x128xf32>
    %636 = arith.addf %634, %635 : vector<8x128xf32>
    %637 = math.tanh %636 : vector<8x128xf32>
    %638 = arith.mulf %633, %637 : vector<8x128xf32>
    %c0_313 = arith.constant 0 : index
    %c0_314 = arith.constant 0 : index
    %639 = vector.load %arg13[%c0_313, %c0_314] : memref<8x256xf32, #tpu.memory_space<vmem>>, vector<8x256xf32>
    %640 = math.tanh %638 : vector<8x128xf32>
    %c9_315 = arith.constant 9 : index
    %c0_316 = arith.constant 0 : index
    %c0_317 = arith.constant 0 : index
    %641 = vector.load %arg6[%c9_315, %c0_316, %c0_317] : memref<12x128x256xf32, #tpu.memory_space<vmem>>, vector<1x128x256xf32>
    %642 = vector.shape_cast %641 : vector<1x128x256xf32> to vector<128x256xf32>
    %cst_318 = arith.constant dense<0.000000e+00> : vector<8x256xf32>
    %643 = tpu.matmul %640, %642, %cst_318 {dimension_numbers = #tpu.dot_dimension_numbers<[1], [0], [0], [1], [0, 0, 1, 1], [], []>} : vector<8x128xf32>, vector<128x256xf32>, vector<8x256xf32> -> vector<8x256xf32>
    %644 = arith.addf %639, %643 : vector<8x256xf32>
    %c0_319 = arith.constant 0 : index
    %c0_320 = arith.constant 0 : index
    %645 = vector.load %arg13[%c0_319, %c0_320] : memref<8x256xf32, #tpu.memory_space<vmem>>, vector<8x256xf32>
    tpu.vector_store %arg13[%c0_319, %c0_320], %644 {strides = array<i32>} : memref<8x256xf32, #tpu.memory_space<vmem>>, vector<8x256xf32>,
    %c10_321 = arith.constant 10 : index
    %c0_322 = arith.constant 0 : index
    %c0_323 = arith.constant 0 : index
    %646 = vector.load %arg11[%c10_321, %c0_322, %c0_323] : memref<12x8x512xf32, #tpu.memory_space<vmem>>, vector<1x8x512xf32>
    %647 = vector.shape_cast %646 : vector<1x8x512xf32> to vector<8x512xf32>
    %cst_324 = arith.constant dense<0.000000e+00> : vector<8x512xf32>
    %648 = tpu.matmul %638, %351, %cst_324 {dimension_numbers = #tpu.dot_dimension_numbers<[1], [0], [0], [1], [0, 0, 1, 1], [], []>} : vector<8x128xf32>, vector<128x512xf32>, vector<8x512xf32> -> vector<8x512xf32>
    %649 = arith.addf %647, %648 : vector<8x512xf32>
    %650 = vector.extract_strided_slice %649 {offsets = [0, 0], sizes = [8, 384], strides = [1, 1]} : vector<8x512xf32> to vector<8x384xf32>
    %cst_325 = arith.constant 5.000000e-01 : f32
    %651 = vector.broadcast %cst_325 : f32 to vector<8x384xf32>
    %652 = arith.mulf %651, %650 : vector<8x384xf32>
    %653 = math.tanh %652 : vector<8x384xf32>
    %cst_326 = arith.constant 5.000000e-01 : f32
    %654 = vector.broadcast %cst_326 : f32 to vector<8x384xf32>
    %655 = arith.mulf %654, %653 : vector<8x384xf32>
    %cst_327 = arith.constant 5.000000e-01 : f32
    %656 = vector.broadcast %cst_327 : f32 to vector<8x384xf32>
    %657 = arith.addf %655, %656 : vector<8x384xf32>
    %658 = vector.extract_strided_slice %649 {offsets = [0, 384], sizes = [8, 128], strides = [1, 1]} : vector<8x512xf32> to vector<8x128xf32>
    %659 = math.tanh %658 : vector<8x128xf32>
    %660 = vector.extract_strided_slice %657 {offsets = [0, 0], sizes = [8, 128], strides = [1, 1]} : vector<8x384xf32> to vector<8x128xf32>
    %661 = vector.extract_strided_slice %657 {offsets = [0, 128], sizes = [8, 128], strides = [1, 1]} : vector<8x384xf32> to vector<8x128xf32>
    %662 = vector.extract_strided_slice %657 {offsets = [0, 256], sizes = [8, 128], strides = [1, 1]} : vector<8x384xf32> to vector<8x128xf32>
    %663 = arith.mulf %661, %636 : vector<8x128xf32>
    %664 = arith.mulf %660, %659 : vector<8x128xf32>
    %665 = arith.addf %663, %664 : vector<8x128xf32>
    %666 = math.tanh %665 : vector<8x128xf32>
    %667 = arith.mulf %662, %666 : vector<8x128xf32>
    %c0_328 = arith.constant 0 : index
    %c0_329 = arith.constant 0 : index
    %668 = vector.load %arg13[%c0_328, %c0_329] : memref<8x256xf32, #tpu.memory_space<vmem>>, vector<8x256xf32>
    %669 = math.tanh %667 : vector<8x128xf32>
    %c10_330 = arith.constant 10 : index
    %c0_331 = arith.constant 0 : index
    %c0_332 = arith.constant 0 : index
    %670 = vector.load %arg6[%c10_330, %c0_331, %c0_332] : memref<12x128x256xf32, #tpu.memory_space<vmem>>, vector<1x128x256xf32>
    %671 = vector.shape_cast %670 : vector<1x128x256xf32> to vector<128x256xf32>
    %cst_333 = arith.constant dense<0.000000e+00> : vector<8x256xf32>
    %672 = tpu.matmul %669, %671, %cst_333 {dimension_numbers = #tpu.dot_dimension_numbers<[1], [0], [0], [1], [0, 0, 1, 1], [], []>} : vector<8x128xf32>, vector<128x256xf32>, vector<8x256xf32> -> vector<8x256xf32>
    %673 = arith.addf %668, %672 : vector<8x256xf32>
    %c0_334 = arith.constant 0 : index
    %c0_335 = arith.constant 0 : index
    %674 = vector.load %arg13[%c0_334, %c0_335] : memref<8x256xf32, #tpu.memory_space<vmem>>, vector<8x256xf32>
    tpu.vector_store %arg13[%c0_334, %c0_335], %673 {strides = array<i32>} : memref<8x256xf32, #tpu.memory_space<vmem>>, vector<8x256xf32>,
    %c11_336 = arith.constant 11 : index
    %c0_337 = arith.constant 0 : index
    %c0_338 = arith.constant 0 : index
    %675 = vector.load %arg11[%c11_336, %c0_337, %c0_338] : memref<12x8x512xf32, #tpu.memory_space<vmem>>, vector<1x8x512xf32>
    %676 = vector.shape_cast %675 : vector<1x8x512xf32> to vector<8x512xf32>
    %cst_339 = arith.constant dense<0.000000e+00> : vector<8x512xf32>
    %677 = tpu.matmul %667, %351, %cst_339 {dimension_numbers = #tpu.dot_dimension_numbers<[1], [0], [0], [1], [0, 0, 1, 1], [], []>} : vector<8x128xf32>, vector<128x512xf32>, vector<8x512xf32> -> vector<8x512xf32>
    %678 = arith.addf %676, %677 : vector<8x512xf32>
    %679 = vector.extract_strided_slice %678 {offsets = [0, 0], sizes = [8, 384], strides = [1, 1]} : vector<8x512xf32> to vector<8x384xf32>
    %cst_340 = arith.constant 5.000000e-01 : f32
    %680 = vector.broadcast %cst_340 : f32 to vector<8x384xf32>
    %681 = arith.mulf %680, %679 : vector<8x384xf32>
    %682 = math.tanh %681 : vector<8x384xf32>
    %cst_341 = arith.constant 5.000000e-01 : f32
    %683 = vector.broadcast %cst_341 : f32 to vector<8x384xf32>
    %684 = arith.mulf %683, %682 : vector<8x384xf32>
    %cst_342 = arith.constant 5.000000e-01 : f32
    %685 = vector.broadcast %cst_342 : f32 to vector<8x384xf32>
    %686 = arith.addf %684, %685 : vector<8x384xf32>
    %687 = vector.extract_strided_slice %678 {offsets = [0, 384], sizes = [8, 128], strides = [1, 1]} : vector<8x512xf32> to vector<8x128xf32>
    %688 = math.tanh %687 : vector<8x128xf32>
    %689 = vector.extract_strided_slice %686 {offsets = [0, 0], sizes = [8, 128], strides = [1, 1]} : vector<8x384xf32> to vector<8x128xf32>
    %690 = vector.extract_strided_slice %686 {offsets = [0, 128], sizes = [8, 128], strides = [1, 1]} : vector<8x384xf32> to vector<8x128xf32>
    %691 = vector.extract_strided_slice %686 {offsets = [0, 256], sizes = [8, 128], strides = [1, 1]} : vector<8x384xf32> to vector<8x128xf32>
    %692 = arith.mulf %690, %665 : vector<8x128xf32>
    %693 = arith.mulf %689, %688 : vector<8x128xf32>
    %694 = arith.addf %692, %693 : vector<8x128xf32>
    %695 = math.tanh %694 : vector<8x128xf32>
    %696 = arith.mulf %691, %695 : vector<8x128xf32>
    %c0_343 = arith.constant 0 : index
    %c0_344 = arith.constant 0 : index
    %697 = vector.load %arg13[%c0_343, %c0_344] : memref<8x256xf32, #tpu.memory_space<vmem>>, vector<8x256xf32>
    %698 = math.tanh %696 : vector<8x128xf32>
    %c11_345 = arith.constant 11 : index
    %c0_346 = arith.constant 0 : index
    %c0_347 = arith.constant 0 : index
    %699 = vector.load %arg6[%c11_345, %c0_346, %c0_347] : memref<12x128x256xf32, #tpu.memory_space<vmem>>, vector<1x128x256xf32>
    %700 = vector.shape_cast %699 : vector<1x128x256xf32> to vector<128x256xf32>
    %cst_348 = arith.constant dense<0.000000e+00> : vector<8x256xf32>
    %701 = tpu.matmul %698, %700, %cst_348 {dimension_numbers = #tpu.dot_dimension_numbers<[1], [0], [0], [1], [0, 0, 1, 1], [], []>} : vector<8x128xf32>, vector<128x256xf32>, vector<8x256xf32> -> vector<8x256xf32>
    %702 = arith.addf %697, %701 : vector<8x256xf32>
    %c0_349 = arith.constant 0 : index
    %c0_350 = arith.constant 0 : index
    %703 = vector.load %arg13[%c0_349, %c0_350] : memref<8x256xf32, #tpu.memory_space<vmem>>, vector<8x256xf32>
    tpu.vector_store %arg13[%c0_349, %c0_350], %702 {strides = array<i32>} : memref<8x256xf32, #tpu.memory_space<vmem>>, vector<8x256xf32>,
    %c0_351 = arith.constant 0 : index
    %c0_352 = arith.constant 0 : index
    %704 = vector.load %arg13[%c0_351, %c0_352] : memref<8x256xf32, #tpu.memory_space<vmem>>, vector<8x256xf32>
    %c0_353 = arith.constant 0 : index
    %c0_354 = arith.constant 0 : index
    %705 = vector.load %arg7[%c0_353, %c0_354] : memref<1x256xf32, #tpu.memory_space<vmem>>, vector<1x256xf32>
    %706 = vector.broadcast %705 : vector<1x256xf32> to vector<8x256xf32>
    %707 = arith.addf %704, %706 : vector<8x256xf32>
    %cst_355 = arith.constant 0.000000e+00 : f32
    %708 = vector.broadcast %cst_355 : f32 to vector<8x256xf32>
    %709 = arith.maximumf %707, %708 : vector<8x256xf32>
    %c0_356 = arith.constant 0 : index
    %c0_357 = arith.constant 0 : index
    %710 = vector.load %arg8[%c0_356, %c0_357] : memref<1x256xf32, #tpu.memory_space<vmem>>, vector<1x256xf32>
    %711 = vector.broadcast %710 : vector<1x256xf32> to vector<8x256xf32>
    %712 = arith.mulf %709, %711 : vector<8x256xf32>
    %cst_358 = arith.constant dense<0.000000e+00> : vector<8xf32>
    %713 = vector.multi_reduction <add>, %712, %cst_358 [1] : vector<8x256xf32> to vector<8xf32>
    %714 = vector.shape_cast %713 : vector<8xf32> to vector<8x1xf32>
    %c0_359 = arith.constant 0 : index
    %c0_360 = arith.constant 0 : index
    %715 = vector.load %arg9[%c0_359, %c0_360] : memref<1x1xf32, #tpu.memory_space<vmem>>, vector<1x1xf32>
    %716 = vector.broadcast %715 : vector<1x1xf32> to vector<8x1xf32>
    %717 = arith.addf %714, %716 : vector<8x1xf32>
    %718 = vector.shape_cast %717 : vector<8x1xf32> to vector<8x1xf32>
    %719 = vector.broadcast %718 : vector<8x1xf32> to vector<8x128xf32>
    %c0_361 = arith.constant 0 : index
    %c0_362 = arith.constant 0 : index
    %720 = vector.load %arg10[%c0_361, %c0_362] : memref<8x128xf32, #tpu.memory_space<vmem>>, vector<8x128xf32>
    tpu.vector_store %arg10[%c0_361, %c0_362], %719 {strides = array<i32>} : memref<8x128xf32, #tpu.memory_space<vmem>>, vector<8x128xf32>,
    return
  }
  func.func @transform_0(%arg0: i32) -> (i32, i32, i32) {
    %c0_i32 = arith.constant 0 : i32
    %c0_i32_0 = arith.constant 0 : i32
    %c0_i32_1 = arith.constant 0 : i32
    return %c0_i32, %arg0, %c0_i32_0 : i32, i32, i32
  }
  func.func @transform_1(%arg0: i32) -> (i32, i32) {
    %c0_i32 = arith.constant 0 : i32
    %c0_i32_0 = arith.constant 0 : i32
    %c0_i32_1 = arith.constant 0 : i32
    return %c0_i32, %c0_i32_0 : i32, i32
  }
  func.func @transform_2(%arg0: i32) -> (i32, i32) {
    %c0_i32 = arith.constant 0 : i32
    %c0_i32_0 = arith.constant 0 : i32
    %c0_i32_1 = arith.constant 0 : i32
    return %c0_i32, %c0_i32_0 : i32, i32
  }
  func.func @transform_3(%arg0: i32) -> (i32, i32) {
    %c0_i32 = arith.constant 0 : i32
    %c0_i32_0 = arith.constant 0 : i32
    %c0_i32_1 = arith.constant 0 : i32
    return %c0_i32, %c0_i32_0 : i32, i32
  }
  func.func @transform_4(%arg0: i32) -> (i32, i32) {
    %c0_i32 = arith.constant 0 : i32
    %c0_i32_0 = arith.constant 0 : i32
    %c0_i32_1 = arith.constant 0 : i32
    return %c0_i32, %c0_i32_0 : i32, i32
  }
  func.func @transform_5(%arg0: i32) -> (i32, i32, i32) {
    %c0_i32 = arith.constant 0 : i32
    %c0_i32_0 = arith.constant 0 : i32
    %c0_i32_1 = arith.constant 0 : i32
    %c0_i32_2 = arith.constant 0 : i32
    return %c0_i32, %c0_i32_0, %c0_i32_1 : i32, i32, i32
  }
  func.func @transform_6(%arg0: i32) -> (i32, i32) {
    %c0_i32 = arith.constant 0 : i32
    %c0_i32_0 = arith.constant 0 : i32
    %c0_i32_1 = arith.constant 0 : i32
    return %c0_i32, %c0_i32_0 : i32, i32
  }
  func.func @transform_7(%arg0: i32) -> (i32, i32) {
    %c0_i32 = arith.constant 0 : i32
    %c0_i32_0 = arith.constant 0 : i32
    %c0_i32_1 = arith.constant 0 : i32
    return %c0_i32, %c0_i32_0 : i32, i32
  }
  func.func @transform_8(%arg0: i32) -> (i32, i32) {
    %c0_i32 = arith.constant 0 : i32
    %c0_i32_0 = arith.constant 0 : i32
    %c0_i32_1 = arith.constant 0 : i32
    return %c0_i32, %c0_i32_0 : i32, i32
  }
  func.func @transform_9(%arg0: i32) -> (i32, i32) {
    %c0_i32 = arith.constant 0 : i32
    %c0_i32_0 = arith.constant 0 : i32
    return %arg0, %c0_i32 : i32, i32
  }
}

</mosaic_0001>

<llo_original>
// kernel: tpu_custom_call.1
$region0: #{tpu_custom_call.1}
  #allocation0 [shape = 'u32[]', space=smem, size = 0x4, offset = 0x4, fixed_abs, tag = 'smem constant byte address 0x4 - core index']
  #allocation1 [shape = 'u32[72,128]{1,0:T(1,128)}', space=vmem, size = 0x9000, scoped, tag = 'internal scratch']
  #allocation2 [shape = 'f32[12,8,512]{2,1,0:T(8,128)}', space=vmem, size = 0x30000, scoped, tag = 'scratch operand']
  #allocation3 [shape = 'f32[12,8,256]{2,1,0:T(8,128)}', space=vmem, size = 0x18000, scoped, tag = 'scratch operand']
  #allocation4 [shape = 'f32[8,256]{1,0:T(8,128)}', space=vmem, size = 0x2000, scoped, tag = 'scratch operand']
  #allocation5 [shape = 'f32[1,1]{1,0:T(1,128)S(1)}', space=vmem, size = 0x200, scoped, tag = 'scoped memory for tpu_custom_call.1']
  %s0 = inlined_call_operand.vmem [shape: f32[12,8,4], index: 0, kind: input, shape index: {}]
  %s1 = inlined_call_operand.hbm [shape: f32[4,512], index: 1, kind: input, shape index: {}]
  %s2 = inlined_call_operand.hbm [shape: f32[128,512], index: 2, kind: input, shape index: {}]
  %s3 = inlined_call_operand.hbm [shape: f32[256,512], index: 3, kind: input, shape index: {}]
  %s4 = inlined_call_operand.hbm [shape: f32[128,512], index: 4, kind: input, shape index: {}]
  %s5 = inlined_call_operand.hbm [shape: f32[12,128,256], index: 5, kind: input, shape index: {}]
  %s6 = inlined_call_operand.hbm [shape: f32[1,256], index: 6, kind: input, shape index: {}]
  %s7 = inlined_call_operand.hbm [shape: f32[1,256], index: 7, kind: input, shape index: {}]
  %s8 = inlined_call_operand.<no memory space> [shape: f32[1,1], index: 8, kind: input, shape index: {}]
  %s9 = inlined_call_operand.hbm [shape: f32[8,128], index: 9, kind: output, shape index: {}]
  %s10 = sld [smem:[#allocation0]]
  $region74: #{tpu_custom_call.1} parent=0
    _
  %s12 = ssub.s32 1, %s10
  %s13 = scalar_select 0, %s12, %s10
  %v14 = vstv %s8
  %15 = vst [vmem:[#allocation5] sm:$0x1] %v14
  $region1: #{tpu_custom_call.1} parent=0
    #allocation6 [shape = 'u8[8192]{0}', space=vmem, size = 0x2000, scoped, tag = 'input window, operand 1, single buffered']
    #allocation7 [shape = 's32[1]{0}', space=sflag, size = 0x4, scoped, tag = 'scoped memory for tpu_custom_call.1']
    #allocation8 [shape = 's32[1]{0}', space=sflag, size = 0x4, scoped, tag = 'scoped memory for tpu_custom_call.1']
    #allocation9 [shape = 'u8[262144]{0}', space=vmem, size = 0x40000, scoped, tag = 'input window, operand 2, single buffered']
    #allocation10 [shape = 's32[1]{0}', space=sflag, size = 0x4, scoped, tag = 'scoped memory for tpu_custom_call.1']
    #allocation11 [shape = 'u8[524288]{0}', space=vmem, size = 0x80000, scoped, tag = 'input window, operand 3, single buffered']
    #allocation12 [shape = 'u8[262144]{0}', space=vmem, size = 0x40000, scoped, tag = 'input window, operand 4, single buffered']
    #allocation13 [shape = 's32[1]{0}', space=sflag, size = 0x4, scoped, tag = 'scoped memory for tpu_custom_call.1']
    #allocation14 [shape = 'u8[1572864]{0}', space=vmem, size = 0x180000, scoped, tag = 'input window, operand 5, single buffered']
    #allocation15 [shape = 'u8[1024]{0}', space=vmem, size = 0x400, scoped, tag = 'input window, operand 6, single buffered']
    #allocation16 [shape = 's32[1]{0}', space=sflag, size = 0x4, scoped, tag = 'scoped memory for tpu_custom_call.1']
    #allocation17 [shape = 'u8[1024]{0}', space=vmem, size = 0x400, scoped, tag = 'input window, operand 7, single buffered']
    #allocation18 [shape = 'u8[4096]{0}', space=vmem, size = 0x1000, scoped, tag = 'output window, operand 0, single buffered']
    %16 = vsyncpa [#allocation7], 0
    %17 = vsyncpa [#allocation10], 0
    %18 = vsyncpa [#allocation13], 0
    %19 = vsyncpa [#allocation16], 0
    %20 = vsyncpa [#allocation8], 0
    // Predicated region
    $region2: #{tpu_custom_call.1} parent=1 // pred_check
      _
    $region3: #{tpu_custom_call.1} parent=1 // pred_check_branch
      %22 = sbr.rel (0) target = $region5
    $region4: #{tpu_custom_call.1} parent=1 // pred_region
      _
    $region5: #{tpu_custom_call.1} parent=1 // pred_fallthru
      _
    // Predicated region
    $region6: #{tpu_custom_call.1} parent=1 // pred_check
      _
    $region7: #{tpu_custom_call.1} parent=1 // pred_check_branch
      %24 = sbr.rel (0) target = $region9
    $region8: #{tpu_custom_call.1} parent=1 // pred_region
      %26 = vsyncadd [#allocation7], 0
      %s28 = sshll.u32 %s1, 4
      %s29 = int_to_ptr.hbm [resolvable:$true] %s28
      %s30 = sshll.u32 [#allocation6], 4
      %s31 = int_to_ptr.vmem [resolvable:$true] %s30
      %33 = dma.hbm_to_vmem [thread:$0]  %s29, 256, %s31, [#allocation7]
    $region9: #{tpu_custom_call.1} parent=1 // pred_fallthru
      _
    // Predicated region
    $region10: #{tpu_custom_call.1} parent=1 // pred_check
      _
    $region11: #{tpu_custom_call.1} parent=1 // pred_check_branch
      %35 = sbr.rel (0) target = $region13
    $region12: #{tpu_custom_call.1} parent=1 // pred_region
      %37 = vsyncadd [#allocation10], 0
      %s38 = sshll.u32 %s2, 4
      %s39 = int_to_ptr.hbm [resolvable:$true] %s38
      %s40 = sshll.u32 [#allocation9], 4
      %s41 = int_to_ptr.vmem [resolvable:$true] %s40
      %46 = dma.hbm_to_vmem [thread:$0]  %s39, 8192, %s41, [#allocation10], 512, 512, 32
    $region13: #{tpu_custom_call.1} parent=1 // pred_fallthru
      _
    // Predicated region
    $region14: #{tpu_custom_call.1} parent=1 // pred_check
      _
    $region15: #{tpu_custom_call.1} parent=1 // pred_check_branch
      %48 = sbr.rel (0) target = $region17
    $region16: #{tpu_custom_call.1} parent=1 // pred_region
      %50 = vsyncadd [#allocation10], 0
      %s51 = sshll.u32 %s3, 4
      %s52 = int_to_ptr.hbm [resolvable:$true] %s51
      %s53 = sshll.u32 [#allocation11], 4
      %s54 = int_to_ptr.vmem [resolvable:$true] %s53
      %59 = dma.hbm_to_vmem [thread:$0]  %s52, 16384, %s54, [#allocation10], 512, 512, 32
    $region17: #{tpu_custom_call.1} parent=1 // pred_fallthru
      _
    // Predicated region
    $region18: #{tpu_custom_call.1} parent=1 // pred_check
      _
    $region19: #{tpu_custom_call.1} parent=1 // pred_check_branch
      %61 = sbr.rel (0) target = $region21
    $region20: #{tpu_custom_call.1} parent=1 // pred_region
      %63 = vsyncadd [#allocation13], 0
      %s64 = sshll.u32 %s4, 4
      %s65 = int_to_ptr.hbm [resolvable:$true] %s64
      %s66 = sshll.u32 [#allocation12], 4
      %s67 = int_to_ptr.vmem [resolvable:$true] %s66
      %72 = dma.hbm_to_vmem [thread:$0]  %s65, 8192, %s67, [#allocation13], 512, 512, 32
    $region21: #{tpu_custom_call.1} parent=1 // pred_fallthru
      _
    // Predicated region
    $region22: #{tpu_custom_call.1} parent=1 // pred_check
      _
    $region23: #{tpu_custom_call.1} parent=1 // pred_check_branch
      %74 = sbr.rel (0) target = $region25
    $region24: #{tpu_custom_call.1} parent=1 // pred_region
      %76 = vsyncadd [#allocation13], 0
      %s77 = sshll.u32 %s5, 4
      %s78 = int_to_ptr.hbm [resolvable:$true] %s77
      %s79 = sshll.u32 [#allocation14], 4
      %s80 = int_to_ptr.vmem [resolvable:$true] %s79
      %85 = dma.hbm_to_vmem [thread:$0]  %s78, 49152, %s80, [#allocation13], 256, 256, 16
    $region25: #{tpu_custom_call.1} parent=1 // pred_fallthru
      _
    // Predicated region
    $region26: #{tpu_custom_call.1} parent=1 // pred_check
      _
    $region27: #{tpu_custom_call.1} parent=1 // pred_check_branch
      %87 = sbr.rel (0) target = $region29
    $region28: #{tpu_custom_call.1} parent=1 // pred_region
      %89 = vsyncadd [#allocation16], 0
      %s91 = sshll.u32 %s6, 4
      %s92 = int_to_ptr.hbm [resolvable:$true] %s91
      %s93 = sshll.u32 [#allocation15], 4
      %s94 = int_to_ptr.vmem [resolvable:$true] %s93
      %96 = dma.hbm_to_vmem [thread:$0]  %s92, 32, %s94, [#allocation16]
    $region29: #{tpu_custom_call.1} parent=1 // pred_fallthru
      _
    // Predicated region
    $region30: #{tpu_custom_call.1} parent=1 // pred_check
      _
    $region31: #{tpu_custom_call.1} parent=1 // pred_check_branch
      %98 = sbr.rel (0) target = $region33
    $region32: #{tpu_custom_call.1} parent=1 // pred_region
      %100 = vsyncadd [#allocation16], 0
      %s102 = sshll.u32 %s7, 4
      %s103 = int_to_ptr.hbm [resolvable:$true] %s102
      %s104 = sshll.u32 [#allocation17], 4
      %s105 = int_to_ptr.vmem [resolvable:$true] %s104
      %107 = dma.hbm_to_vmem [thread:$0]  %s103, 32, %s105, [#allocation16]
    $region33: #{tpu_custom_call.1} parent=1 // pred_fallthru
      _
    // Predicated region
    $region34: #{tpu_custom_call.1} parent=1 // pred_check
      _
    $region35: #{tpu_custom_call.1} parent=1 // pred_check_branch
      %109 = sbr.rel (0) target = $region37
    $region36: #{tpu_custom_call.1} parent=1 // pred_region
      _
    $region37: #{tpu_custom_call.1} parent=1 // pred_fallthru
      _
    // Predicated region
    $region38: #{tpu_custom_call.1} parent=1 // pred_check
      _
    $region39: #{tpu_custom_call.1} parent=1 // pred_check_branch
      %111 = sbr.rel (0) target = $region41
    $region40: #{tpu_custom_call.1} parent=1 // pred_region
      %113 = dma.done [#allocation7], 256
    $region41: #{tpu_custom_call.1} parent=1 // pred_fallthru
      _
    // Predicated region
    $region42: #{tpu_custom_call.1} parent=1 // pred_check
      _
    $region43: #{tpu_custom_call.1} parent=1 // pred_check_branch
      %115 = sbr.rel (0) target = $region45
    $region44: #{tpu_custom_call.1} parent=1 // pred_region
      %117 = dma.done [#allocation10], 8192
    $region45: #{tpu_custom_call.1} parent=1 // pred_fallthru
      _
    // Predicated region
    $region46: #{tpu_custom_call.1} parent=1 // pred_check
      _
    $region47: #{tpu_custom_call.1} parent=1 // pred_check_branch
      %119 = sbr.rel (0) target = $region49
    $region48: #{tpu_custom_call.1} parent=1 // pred_region
      %121 = dma.done [#allocation10], 16384
    $region49: #{tpu_custom_call.1} parent=1 // pred_fallthru
      _
    // Predicated region
    $region50: #{tpu_custom_call.1} parent=1 // pred_check
      _
    $region51: #{tpu_custom_call.1} parent=1 // pred_check_branch
      %123 = sbr.rel (0) target = $region53
    $region52: #{tpu_custom_call.1} parent=1 // pred_region
      %125 = dma.done [#allocation13], 8192
    $region53: #{tpu_custom_call.1} parent=1 // pred_fallthru
      _
    // Predicated region
    $region54: #{tpu_custom_call.1} parent=1 // pred_check
      _
    $region55: #{tpu_custom_call.1} parent=1 // pred_check_branch
      %127 = sbr.rel (0) target = $region57
    $region56: #{tpu_custom_call.1} parent=1 // pred_region
      %129 = dma.done [#allocation13], 49152
    $region57: #{tpu_custom_call.1} parent=1 // pred_fallthru
      _
    // Predicated region
    $region58: #{tpu_custom_call.1} parent=1 // pred_check
      _
    $region59: #{tpu_custom_call.1} parent=1 // pred_check_branch
      %131 = sbr.rel (0) target = $region61
    $region60: #{tpu_custom_call.1} parent=1 // pred_region
      %133 = dma.done [#allocation16], 32
    $region61: #{tpu_custom_call.1} parent=1 // pred_fallthru
      _
    // Predicated region
    $region62: #{tpu_custom_call.1} parent=1 // pred_check
      _
    $region63: #{tpu_custom_call.1} parent=1 // pred_check_branch
      %135 = sbr.rel (0) target = $region65
    $region64: #{tpu_custom_call.1} parent=1 // pred_region
      %137 = dma.done [#allocation16], 32
    $region65: #{tpu_custom_call.1} parent=1 // pred_fallthru
      _
    %v138 = vld [vmem:[%s0] sm:$0xff]
    %v139 = vld [vmem:[%s0 + $0x8] sm:$0xff]
    %v140 = vld [vmem:[%s0 + $0x10] sm:$0xff]
    %v141 = vld [vmem:[%s0 + $0x18] sm:$0xff]
    %v142 = vld [vmem:[%s0 + $0x20] sm:$0xff]
    %v143 = vld [vmem:[%s0 + $0x28] sm:$0xff]
    %v144 = vld [vmem:[%s0 + $0x30] sm:$0xff]
    %v145 = vld [vmem:[%s0 + $0x38] sm:$0xff]
    %v146 = vld [vmem:[%s0 + $0x40] sm:$0xff]
    %v147 = vld [vmem:[%s0 + $0x48] sm:$0xff]
    %v148 = vld [vmem:[%s0 + $0x50] sm:$0xff]
    %v149 = vld [vmem:[%s0 + $0x58] sm:$0xff]
    %v150 = vld [vmem:[#allocation6] sm:$0xff]
    %v151 = vld [vmem:[#allocation6 + $0x8] sm:$0xff]
    %154 = vst [vmem:[#allocation1] ss:$2 sm:$0xff] %v150
    %s155 = scalar_lea.vmem [#allocation1], 16
    %156 = vst [vmem:[%s155] ss:$2 sm:$0xff] %v151
    %v157 = vld.sshfl [vmem:[#allocation1] sm:$0xff pattern:$0x75316420]
    %v158 = vld.sshfl [vmem:[#allocation1 + $0x8] sm:$0xff pattern:$0x75316420]
    %v159 = vld.sshfl [vmem:[#allocation1 + $0x10] sm:$0xff pattern:$0x75316420]
    %v160 = vld.sshfl [vmem:[#allocation1 + $0x18] sm:$0xff pattern:$0x75316420]
    %vm161 = vcmask 31744
    %v163 = vsel %vm161, %v138, 0
    %v166 = vsel %vm161, %v139, 0
    %v169 = vsel %vm161, %v140, 0
    %v172 = vsel %vm161, %v141, 0
    %v175 = vsel %vm161, %v142, 0
    %v178 = vsel %vm161, %v143, 0
    %v181 = vsel %vm161, %v144, 0
    %v184 = vsel %vm161, %v145, 0
    %v187 = vsel %vm161, %v146, 0
    %v190 = vsel %vm161, %v147, 0
    %v193 = vsel %vm161, %v148, 0
    %v196 = vsel %vm161, %v149, 0
    %vm198 = vcmask 1043456
    %v199 = vsel %vm198, %v157, 0
    %v201 = vsel %vm198, %v158, 0
    %v203 = vsel %vm198, %v159, 0
    %v205 = vsel %vm198, %v160, 0
    %207 = vmatpush.msra.mxu0 0.0
    %208 = vmatpush.msra.mxu0 0.0
    %209 = vmatpush.msra.mxu0 0.0
    %210 = vmatpush.msra.mxu0 0.0
    %211 = vmatpush.msra.mxu0 0.0
    %212 = vmatpush.msra.mxu0 0.0
    %213 = vmatpush.msra.mxu0 0.0
    %214 = vmatpush.msra.mxu0 0.0
    %215 = vmatpush.msra.mxu0 0.0
    %216 = vmatpush.msra.mxu0 0.0
    %217 = vmatpush.msra.mxu0 0.0
    %218 = vmatpush.msra.mxu0 0.0
    %219 = vmatpush.msra.mxu0 0.0
    %220 = vmatpush.msra.mxu0 0.0
    %221 = vmatpush.msra.mxu0 0.0
    %222 = vmatpush.msra.mxu0 %v199
    %223 = vmatmul.f32.gmra.mxu0 %v163
    %v224 = vpop.f32.mrf.mxu0
    %v225 = vadd.f32 0.0, %v224
    %226 = vmatmul.f32.gmra.mxu0 %v166
    %v227 = vpop.f32.mrf.mxu0
    %v228 = vadd.f32 0.0, %v227
    %229 = vmatmul.f32.gmra.mxu0 %v169
    %v230 = vpop.f32.mrf.mxu0
    %v231 = vadd.f32 0.0, %v230
    %232 = vmatmul.f32.gmra.mxu0 %v172
    %v233 = vpop.f32.mrf.mxu0
    %v234 = vadd.f32 0.0, %v233
    %235 = vmatmul.f32.gmra.mxu0 %v175
    %v236 = vpop.f32.mrf.mxu0
    %v237 = vadd.f32 0.0, %v236
    %238 = vmatmul.f32.gmra.mxu0 %v178
    %v239 = vpop.f32.mrf.mxu0
    %v240 = vadd.f32 0.0, %v239
    %241 = vmatmul.f32.gmra.mxu0 %v181
    %v242 = vpop.f32.mrf.mxu0
    %v243 = vadd.f32 0.0, %v242
    %244 = vmatmul.f32.gmra.mxu0 %v184
    %v245 = vpop.f32.mrf.mxu0
    %v246 = vadd.f32 0.0, %v245
    %247 = vmatmul.f32.gmra.mxu0 %v187
    %v248 = vpop.f32.mrf.mxu0
    %v249 = vadd.f32 0.0, %v248
    %250 = vmatmul.f32.gmra.mxu0 %v190
    %v251 = vpop.f32.mrf.mxu0
    %v252 = vadd.f32 0.0, %v251
    %253 = vmatmul.f32.gmra.mxu0 %v193
    %v254 = vpop.f32.mrf.mxu0
    %v255 = vadd.f32 0.0, %v254
    %256 = vmatmul.f32.gmra.mxu0 %v196
    %v257 = vpop.f32.mrf.mxu0
    %v258 = vadd.f32 0.0, %v257
    %259 = vdwg.mxu0
    %260 = vmatpush.msra.mxu0 0.0
    %261 = vmatpush.msra.mxu0 0.0
    %262 = vmatpush.msra.mxu0 0.0
    %263 = vmatpush.msra.mxu0 0.0
    %264 = vmatpush.msra.mxu0 0.0
    %265 = vmatpush.msra.mxu0 0.0
    %266 = vmatpush.msra.mxu0 0.0
    %267 = vmatpush.msra.mxu0 0.0
    %268 = vmatpush.msra.mxu0 0.0
    %269 = vmatpush.msra.mxu0 0.0
    %270 = vmatpush.msra.mxu0 0.0
    %271 = vmatpush.msra.mxu0 0.0
    %272 = vmatpush.msra.mxu0 0.0
    %273 = vmatpush.msra.mxu0 0.0
    %274 = vmatpush.msra.mxu0 0.0
    %275 = vmatpush.msra.mxu0 %v201
    %276 = vmatmul.f32.gmra.mxu0 %v163
    %v277 = vpop.f32.mrf.mxu0
    %v278 = vadd.f32 0.0, %v277
    %279 = vmatmul.f32.gmra.mxu0 %v166
    %v280 = vpop.f32.mrf.mxu0
    %v281 = vadd.f32 0.0, %v280
    %282 = vmatmul.f32.gmra.mxu0 %v169
    %v283 = vpop.f32.mrf.mxu0
    %v284 = vadd.f32 0.0, %v283
    %285 = vmatmul.f32.gmra.mxu0 %v172
    %v286 = vpop.f32.mrf.mxu0
    %v287 = vadd.f32 0.0, %v286
    %288 = vmatmul.f32.gmra.mxu0 %v175
    %v289 = vpop.f32.mrf.mxu0
    %v290 = vadd.f32 0.0, %v289
    %291 = vmatmul.f32.gmra.mxu0 %v178
    %v292 = vpop.f32.mrf.mxu0
    %v293 = vadd.f32 0.0, %v292
    %294 = vmatmul.f32.gmra.mxu0 %v181
    %v295 = vpop.f32.mrf.mxu0
    %v296 = vadd.f32 0.0, %v295
    %297 = vmatmul.f32.gmra.mxu0 %v184
    %v298 = vpop.f32.mrf.mxu0
    %v299 = vadd.f32 0.0, %v298
    %300 = vmatmul.f32.gmra.mxu0 %v187
    %v301 = vpop.f32.mrf.mxu0
    %v302 = vadd.f32 0.0, %v301
    %303 = vmatmul.f32.gmra.mxu0 %v190
    %v304 = vpop.f32.mrf.mxu0
    %v305 = vadd.f32 0.0, %v304
    %306 = vmatmul.f32.gmra.mxu0 %v193
    %v307 = vpop.f32.mrf.mxu0
    %v308 = vadd.f32 0.0, %v307
    %309 = vmatmul.f32.gmra.mxu0 %v196
    %v310 = vpop.f32.mrf.mxu0
    %v311 = vadd.f32 0.0, %v310
    %312 = vdwg.mxu0
    %313 = vmatpush.msra.mxu0 0.0
    %314 = vmatpush.msra.mxu0 0.0
    %315 = vmatpush.msra.mxu0 0.0
    %316 = vmatpush.msra.mxu0 0.0
    %317 = vmatpush.msra.mxu0 0.0
    %318 = vmatpush.msra.mxu0 0.0
    %319 = vmatpush.msra.mxu0 0.0
    %320 = vmatpush.msra.mxu0 0.0
    %321 = vmatpush.msra.mxu0 0.0
    %322 = vmatpush.msra.mxu0 0.0
    %323 = vmatpush.msra.mxu0 0.0
    %324 = vmatpush.msra.mxu0 0.0
    %325 = vmatpush.msra.mxu0 0.0
    %326 = vmatpush.msra.mxu0 0.0
    %327 = vmatpush.msra.mxu0 0.0
    %328 = vmatpush.msra.mxu0 %v203
    %329 = vmatmul.f32.gmra.mxu0 %v163
    %v330 = vpop.f32.mrf.mxu0
    %v331 = vadd.f32 0.0, %v330
    %332 = vmatmul.f32.gmra.mxu0 %v166
    %v333 = vpop.f32.mrf.mxu0
    %v334 = vadd.f32 0.0, %v333
    %335 = vmatmul.f32.gmra.mxu0 %v169
    %v336 = vpop.f32.mrf.mxu0
    %v337 = vadd.f32 0.0, %v336
    %338 = vmatmul.f32.gmra.mxu0 %v172
    %v339 = vpop.f32.mrf.mxu0
    %v340 = vadd.f32 0.0, %v339
    %341 = vmatmul.f32.gmra.mxu0 %v175
    %v342 = vpop.f32.mrf.mxu0
    %v343 = vadd.f32 0.0, %v342
    %344 = vmatmul.f32.gmra.mxu0 %v178
    %v345 = vpop.f32.mrf.mxu0
    %v346 = vadd.f32 0.0, %v345
    %347 = vmatmul.f32.gmra.mxu0 %v181
    %v348 = vpop.f32.mrf.mxu0
    %v349 = vadd.f32 0.0, %v348
    %350 = vmatmul.f32.gmra.mxu0 %v184
    %v351 = vpop.f32.mrf.mxu0
    %v352 = vadd.f32 0.0, %v351
    %353 = vmatmul.f32.gmra.mxu0 %v187
    %v354 = vpop.f32.mrf.mxu0
    %v355 = vadd.f32 0.0, %v354
    %356 = vmatmul.f32.gmra.mxu0 %v190
    %v357 = vpop.f32.mrf.mxu0
    %v358 = vadd.f32 0.0, %v357
    %359 = vmatmul.f32.gmra.mxu0 %v193
    %v360 = vpop.f32.mrf.mxu0
    %v361 = vadd.f32 0.0, %v360
    %362 = vmatmul.f32.gmra.mxu0 %v196
    %v363 = vpop.f32.mrf.mxu0
    %v364 = vadd.f32 0.0, %v363
    %365 = vdwg.mxu0
    %366 = vmatpush.msra.mxu0 0.0
    %367 = vmatpush.msra.mxu0 0.0
    %368 = vmatpush.msra.mxu0 0.0
    %369 = vmatpush.msra.mxu0 0.0
    %370 = vmatpush.msra.mxu0 0.0
    %371 = vmatpush.msra.mxu0 0.0
    %372 = vmatpush.msra.mxu0 0.0
    %373 = vmatpush.msra.mxu0 0.0
    %374 = vmatpush.msra.mxu0 0.0
    %375 = vmatpush.msra.mxu0 0.0
    %376 = vmatpush.msra.mxu0 0.0
    %377 = vmatpush.msra.mxu0 0.0
    %378 = vmatpush.msra.mxu0 0.0
    %379 = vmatpush.msra.mxu0 0.0
    %380 = vmatpush.msra.mxu0 0.0
    %381 = vmatpush.msra.mxu0 %v205
    %382 = vmatmul.f32.gmra.mxu0 %v163
    %v383 = vpop.f32.mrf.mxu0
    %v384 = vadd.f32 0.0, %v383
    %385 = vmatmul.f32.gmra.mxu0 %v166
    %v386 = vpop.f32.mrf.mxu0
    %v387 = vadd.f32 0.0, %v386
    %388 = vmatmul.f32.gmra.mxu0 %v169
    %v389 = vpop.f32.mrf.mxu0
    %v390 = vadd.f32 0.0, %v389
    %391 = vmatmul.f32.gmra.mxu0 %v172
    %v392 = vpop.f32.mrf.mxu0
    %v393 = vadd.f32 0.0, %v392
    %394 = vmatmul.f32.gmra.mxu0 %v175
    %v395 = vpop.f32.mrf.mxu0
    %v396 = vadd.f32 0.0, %v395
    %397 = vmatmul.f32.gmra.mxu0 %v178
    %v398 = vpop.f32.mrf.mxu0
    %v399 = vadd.f32 0.0, %v398
    %400 = vmatmul.f32.gmra.mxu0 %v181
    %v401 = vpop.f32.mrf.mxu0
    %v402 = vadd.f32 0.0, %v401
    %403 = vmatmul.f32.gmra.mxu0 %v184
    %v404 = vpop.f32.mrf.mxu0
    %v405 = vadd.f32 0.0, %v404
    %406 = vmatmul.f32.gmra.mxu0 %v187
    %v407 = vpop.f32.mrf.mxu0
    %v408 = vadd.f32 0.0, %v407
    %409 = vmatmul.f32.gmra.mxu0 %v190
    %v410 = vpop.f32.mrf.mxu0
    %v411 = vadd.f32 0.0, %v410
    %412 = vmatmul.f32.gmra.mxu0 %v193
    %v413 = vpop.f32.mrf.mxu0
    %v414 = vadd.f32 0.0, %v413
    %415 = vmatmul.f32.gmra.mxu0 %v196
    %v416 = vpop.f32.mrf.mxu0
    %v417 = vadd.f32 0.0, %v416
    %418 = vdwg.mxu0
    %419 = vst [vmem:[#allocation2] sm:$0xff] %v225
    %420 = vst [vmem:[#allocation2 + $0x8] sm:$0xff] %v278
    %421 = vst [vmem:[#allocation2 + $0x10] sm:$0xff] %v331
    %422 = vst [vmem:[#allocation2 + $0x18] sm:$0xff] %v384
    %423 = vst [vmem:[#allocation2 + $0x20] sm:$0xff] %v228
    %424 = vst [vmem:[#allocation2 + $0x28] sm:$0xff] %v281
    %425 = vst [vmem:[#allocation2 + $0x30] sm:$0xff] %v334
    %426 = vst [vmem:[#allocation2 + $0x38] sm:$0xff] %v387
    %427 = vst [vmem:[#allocation2 + $0x40] sm:$0xff] %v231
    %428 = vst [vmem:[#allocation2 + $0x48] sm:$0xff] %v284
    %429 = vst [vmem:[#allocation2 + $0x50] sm:$0xff] %v337
    %430 = vst [vmem:[#allocation2 + $0x58] sm:$0xff] %v390
    %431 = vst [vmem:[#allocation2 + $0x60] sm:$0xff] %v234
    %432 = vst [vmem:[#allocation2 + $0x68] sm:$0xff] %v287
    %433 = vst [vmem:[#allocation2 + $0x70] sm:$0xff] %v340
    %434 = vst [vmem:[#allocation2 + $0x78] sm:$0xff] %v393
    %435 = vst [vmem:[#allocation2 + $0x80] sm:$0xff] %v237
    %436 = vst [vmem:[#allocation2 + $0x88] sm:$0xff] %v290
    %437 = vst [vmem:[#allocation2 + $0x90] sm:$0xff] %v343
    %438 = vst [vmem:[#allocation2 + $0x98] sm:$0xff] %v396
    %439 = vst [vmem:[#allocation2 + $0xa0] sm:$0xff] %v240
    %440 = vst [vmem:[#allocation2 + $0xa8] sm:$0xff] %v293
    %441 = vst [vmem:[#allocation2 + $0xb0] sm:$0xff] %v346
    %442 = vst [vmem:[#allocation2 + $0xb8] sm:$0xff] %v399
    %443 = vst [vmem:[#allocation2 + $0xc0] sm:$0xff] %v243
    %444 = vst [vmem:[#allocation2 + $0xc8] sm:$0xff] %v296
    %445 = vst [vmem:[#allocation2 + $0xd0] sm:$0xff] %v349
    %446 = vst [vmem:[#allocation2 + $0xd8] sm:$0xff] %v402
    %447 = vst [vmem:[#allocation2 + $0xe0] sm:$0xff] %v246
    %448 = vst [vmem:[#allocation2 + $0xe8] sm:$0xff] %v299
    %449 = vst [vmem:[#allocation2 + $0xf0] sm:$0xff] %v352
    %450 = vst [vmem:[#allocation2 + $0xf8] sm:$0xff] %v405
    %451 = vst [vmem:[#allocation2 + $0x100] sm:$0xff] %v249
    %452 = vst [vmem:[#allocation2 + $0x108] sm:$0xff] %v302
    %453 = vst [vmem:[#allocation2 + $0x110] sm:$0xff] %v355
    %454 = vst [vmem:[#allocation2 + $0x118] sm:$0xff] %v408
    %455 = vst [vmem:[#allocation2 + $0x120] sm:$0xff] %v252
    %456 = vst [vmem:[#allocation2 + $0x128] sm:$0xff] %v305
    %457 = vst [vmem:[#allocation2 + $0x130] sm:$0xff] %v358
    %458 = vst [vmem:[#allocation2 + $0x138] sm:$0xff] %v411
    %459 = vst [vmem:[#allocation2 + $0x140] sm:$0xff] %v255
    %460 = vst [vmem:[#allocation2 + $0x148] sm:$0xff] %v308
    %461 = vst [vmem:[#allocation2 + $0x150] sm:$0xff] %v361
    %462 = vst [vmem:[#allocation2 + $0x158] sm:$0xff] %v414
    %463 = vst [vmem:[#allocation2 + $0x160] sm:$0xff] %v258
    %464 = vst [vmem:[#allocation2 + $0x168] sm:$0xff] %v311
    %465 = vst [vmem:[#allocation2 + $0x170] sm:$0xff] %v364
    %466 = vst [vmem:[#allocation2 + $0x178] sm:$0xff] %v417
    %v467 = vld [vmem:[#allocation9] sm:$0xff]
    %v468 = vld [vmem:[#allocation9 + $0x8] sm:$0xff]
    %v469 = vld [vmem:[#allocation9 + $0x10] sm:$0xff]
    %v470 = vld [vmem:[#allocation9 + $0x18] sm:$0xff]
    %v471 = vld [vmem:[#allocation9 + $0x20] sm:$0xff]
    %v472 = vld [vmem:[#allocation9 + $0x28] sm:$0xff]
    %v473 = vld [vmem:[#allocation9 + $0x30] sm:$0xff]
    %v474 = vld [vmem:[#allocation9 + $0x38] sm:$0xff]
    %v475 = vld [vmem:[#allocation9 + $0x40] sm:$0xff]
    %v476 = vld [vmem:[#allocation9 + $0x48] sm:$0xff]
    %v477 = vld [vmem:[#allocation9 + $0x50] sm:$0xff]
    %v478 = vld [vmem:[#allocation9 + $0x58] sm:$0xff]
    %v479 = vld [vmem:[#allocation9 + $0x60] sm:$0xff]
    %v480 = vld [vmem:[#allocation9 + $0x68] sm:$0xff]
    %v481 = vld [vmem:[#allocation9 + $0x70] sm:$0xff]
    %v482 = vld [vmem:[#allocation9 + $0x78] sm:$0xff]
    %v483 = vld [vmem:[#allocation9 + $0x80] sm:$0xff]
    %v484 = vld [vmem:[#allocation9 + $0x88] sm:$0xff]
    %v485 = vld [vmem:[#allocation9 + $0x90] sm:$0xff]
    %v486 = vld [vmem:[#allocation9 + $0x98] sm:$0xff]
    %v487 = vld [vmem:[#allocation9 + $0xa0] sm:$0xff]
    %v488 = vld [vmem:[#allocation9 + $0xa8] sm:$0xff]
    %v489 = vld [vmem:[#allocation9 + $0xb0] sm:$0xff]
    %v490 = vld [vmem:[#allocation9 + $0xb8] sm:$0xff]
    %v491 = vld [vmem:[#allocation9 + $0xc0] sm:$0xff]
    %v492 = vld [vmem:[#allocation9 + $0xc8] sm:$0xff]
    %v493 = vld [vmem:[#allocation9 + $0xd0] sm:$0xff]
    %v494 = vld [vmem:[#allocation9 + $0xd8] sm:$0xff]
    %v495 = vld [vmem:[#allocation9 + $0xe0] sm:$0xff]
    %v496 = vld [vmem:[#allocation9 + $0xe8] sm:$0xff]
    %v497 = vld [vmem:[#allocation9 + $0xf0] sm:$0xff]
    %v498 = vld [vmem:[#allocation9 + $0xf8] sm:$0xff]
    %v499 = vld [vmem:[#allocation9 + $0x100] sm:$0xff]
    %v500 = vld [vmem:[#allocation9 + $0x108] sm:$0xff]
    %v501 = vld [vmem:[#allocation9 + $0x110] sm:$0xff]
    %v502 = vld [vmem:[#allocation9 + $0x118] sm:$0xff]
    %v503 = vld [vmem:[#allocation9 + $0x120] sm:$0xff]
    %v504 = vld [vmem:[#allocation9 + $0x128] sm:$0xff]
    %v505 = vld [vmem:[#allocation9 + $0x130] sm:$0xff]
    %v506 = vld [vmem:[#allocation9 + $0x138] sm:$0xff]
    %v507 = vld [vmem:[#allocation9 + $0x140] sm:$0xff]
    %v508 = vld [vmem:[#allocation9 + $0x148] sm:$0xff]
    %v509 = vld [vmem:[#allocation9 + $0x150] sm:$0xff]
    %v510 = vld [vmem:[#allocation9 + $0x158] sm:$0xff]
    %v511 = vld [vmem:[#allocation9 + $0x160] sm:$0xff]
    %v512 = vld [vmem:[#allocation9 + $0x168] sm:$0xff]
    %v513 = vld [vmem:[#allocation9 + $0x170] sm:$0xff]
    %v514 = vld [vmem:[#allocation9 + $0x178] sm:$0xff]
    %v515 = vld [vmem:[#allocation9 + $0x180] sm:$0xff]
    %v516 = vld [vmem:[#allocation9 + $0x188] sm:$0xff]
    %v517 = vld [vmem:[#allocation9 + $0x190] sm:$0xff]
    %v518 = vld [vmem:[#allocation9 + $0x198] sm:$0xff]
    %v519 = vld [vmem:[#allocation9 + $0x1a0] sm:$0xff]
    %v520 = vld [vmem:[#allocation9 + $0x1a8] sm:$0xff]
    %v521 = vld [vmem:[#allocation9 + $0x1b0] sm:$0xff]
    %v522 = vld [vmem:[#allocation9 + $0x1b8] sm:$0xff]
    %v523 = vld [vmem:[#allocation9 + $0x1c0] sm:$0xff]
    %v524 = vld [vmem:[#allocation9 + $0x1c8] sm:$0xff]
    %v525 = vld [vmem:[#allocation9 + $0x1d0] sm:$0xff]
    %v526 = vld [vmem:[#allocation9 + $0x1d8] sm:$0xff]
    %v527 = vld [vmem:[#allocation9 + $0x1e0] sm:$0xff]
    %v528 = vld [vmem:[#allocation9 + $0x1e8] sm:$0xff]
    %v529 = vld [vmem:[#allocation9 + $0x1f0] sm:$0xff]
    %v530 = vld [vmem:[#allocation9 + $0x1f8] sm:$0xff]
    %v531 = vld [vmem:[#allocation2] sm:$0xff]
    %v532 = vld [vmem:[#allocation2 + $0x8] sm:$0xff]
    %v533 = vld [vmem:[#allocation2 + $0x10] sm:$0xff]
    %v534 = vld [vmem:[#allocation2 + $0x18] sm:$0xff]
    %535 = vmatpush.msra.mxu0 %v527
    %536 = vmatpush.msra.mxu0 %v523
    %537 = vmatpush.msra.mxu0 %v519
    %538 = vmatpush.msra.mxu0 %v515
    %539 = vmatpush.msra.mxu0 %v511
    %540 = vmatpush.msra.mxu0 %v507
    %541 = vmatpush.msra.mxu0 %v503
    %542 = vmatpush.msra.mxu0 %v499
    %543 = vmatpush.msra.mxu0 %v495
    %544 = vmatpush.msra.mxu0 %v491
    %545 = vmatpush.msra.mxu0 %v487
    %546 = vmatpush.msra.mxu0 %v483
    %547 = vmatpush.msra.mxu0 %v479
    %548 = vmatpush.msra.mxu0 %v475
    %549 = vmatpush.msra.mxu0 %v471
    %550 = vmatpush.msra.mxu0 %v467
    %551 = vmatmul.f32.gmra.mxu0 0.0
    %v552 = vpop.f32.mrf.mxu0
    %v553 = vadd.f32 0.0, %v552
    %554 = vdwg.mxu0
    %555 = vmatpush.msra.mxu0 %v528
    %556 = vmatpush.msra.mxu0 %v524
    %557 = vmatpush.msra.mxu0 %v520
    %558 = vmatpush.msra.mxu0 %v516
    %559 = vmatpush.msra.mxu0 %v512
    %560 = vmatpush.msra.mxu0 %v508
    %561 = vmatpush.msra.mxu0 %v504
    %562 = vmatpush.msra.mxu0 %v500
    %563 = vmatpush.msra.mxu0 %v496
    %564 = vmatpush.msra.mxu0 %v492
    %565 = vmatpush.msra.mxu0 %v488
    %566 = vmatpush.msra.mxu0 %v484
    %567 = vmatpush.msra.mxu0 %v480
    %568 = vmatpush.msra.mxu0 %v476
    %569 = vmatpush.msra.mxu0 %v472
    %570 = vmatpush.msra.mxu0 %v468
    %571 = vmatmul.f32.gmra.mxu0 0.0
    %v572 = vpop.f32.mrf.mxu0
    %v573 = vadd.f32 0.0, %v572
    %574 = vdwg.mxu0
    %575 = vmatpush.msra.mxu0 %v529
    %576 = vmatpush.msra.mxu0 %v525
    %577 = vmatpush.msra.mxu0 %v521
    %578 = vmatpush.msra.mxu0 %v517
    %579 = vmatpush.msra.mxu0 %v513
    %580 = vmatpush.msra.mxu0 %v509
    %581 = vmatpush.msra.mxu0 %v505
    %582 = vmatpush.msra.mxu0 %v501
    %583 = vmatpush.msra.mxu0 %v497
    %584 = vmatpush.msra.mxu0 %v493
    %585 = vmatpush.msra.mxu0 %v489
    %586 = vmatpush.msra.mxu0 %v485
    %587 = vmatpush.msra.mxu0 %v481
    %588 = vmatpush.msra.mxu0 %v477
    %589 = vmatpush.msra.mxu0 %v473
    %590 = vmatpush.msra.mxu0 %v469
    %591 = vmatmul.f32.gmra.mxu0 0.0
    %v592 = vpop.f32.mrf.mxu0
    %v593 = vadd.f32 0.0, %v592
    %594 = vdwg.mxu0
    %595 = vmatpush.msra.mxu0 %v530
    %596 = vmatpush.msra.mxu0 %v526
    %597 = vmatpush.msra.mxu0 %v522
    %598 = vmatpush.msra.mxu0 %v518
    %599 = vmatpush.msra.mxu0 %v514
    %600 = vmatpush.msra.mxu0 %v510
    %601 = vmatpush.msra.mxu0 %v506
    %602 = vmatpush.msra.mxu0 %v502
    %603 = vmatpush.msra.mxu0 %v498
    %604 = vmatpush.msra.mxu0 %v494
    %605 = vmatpush.msra.mxu0 %v490
    %606 = vmatpush.msra.mxu0 %v486
    %607 = vmatpush.msra.mxu0 %v482
    %608 = vmatpush.msra.mxu0 %v478
    %609 = vmatpush.msra.mxu0 %v474
    %610 = vmatpush.msra.mxu0 %v470
    %611 = vmatmul.f32.gmra.mxu0 0.0
    %v612 = vpop.f32.mrf.mxu0
    %v613 = vadd.f32 0.0, %v612
    %614 = vdwg.mxu0
    %v615 = vadd.f32 %v531, %v553
    %v616 = vadd.f32 %v532, %v573
    %v617 = vadd.f32 %v533, %v593
    %v618 = vadd.f32 %v534, %v613
    %v619 = vmul.f32 %v615, 0.5
    %v620 = vmul.f32 %v616, 0.5
    %v621 = vmul.f32 %v617, 0.5
    %v622 = vtanh.pop %v619
    %v623 = vtanh.pop %v620
    %v624 = vtanh.pop %v621
    %v625 = vmul.f32 %v622, 0.5
    %v626 = vmul.f32 %v623, 0.5
    %v627 = vmul.f32 %v624, 0.5
    %v628 = vadd.f32 %v625, 0.5
    %v629 = vadd.f32 %v626, 0.5
    %v630 = vadd.f32 %v627, 0.5
    %v631 = vtanh.pop %v618
    %v632 = vmul.f32 %v629, 0.0
    %v633 = vmul.f32 %v628, %v631
    %v634 = vadd.f32 %v632, %v633
    %v635 = vtanh.pop %v634
    %v636 = vmul.f32 %v630, %v635
    %637 = vst [vmem:[#allocation3] sm:$0xff] %v636
    %s638 = scalar_lea.vmem [#allocation3], 176
    %639 = vst [vmem:[%s638 + $0x8] sm:$0xff] %v636
    %s640 = scalar_lea.vmem [#allocation2], 32
    %v641 = vld [vmem:[%s640] sm:$0xff]
    %v642 = vld [vmem:[%s640 + $0x8] sm:$0xff]
    %v643 = vld [vmem:[%s640 + $0x10] sm:$0xff]
    %v644 = vld [vmem:[%s640 + $0x18] sm:$0xff]
    %645 = vmatpush.msra.mxu0 %v527
    %646 = vmatpush.msra.mxu0 %v523
    %647 = vmatpush.msra.mxu0 %v519
    %648 = vmatpush.msra.mxu0 %v515
    %649 = vmatpush.msra.mxu0 %v511
    %650 = vmatpush.msra.mxu0 %v507
    %651 = vmatpush.msra.mxu0 %v503
    %652 = vmatpush.msra.mxu0 %v499
    %653 = vmatpush.msra.mxu0 %v495
    %654 = vmatpush.msra.mxu0 %v491
    %655 = vmatpush.msra.mxu0 %v487
    %656 = vmatpush.msra.mxu0 %v483
    %657 = vmatpush.msra.mxu0 %v479
    %658 = vmatpush.msra.mxu0 %v475
    %659 = vmatpush.msra.mxu0 %v471
    %660 = vmatpush.msra.mxu0 %v467
    %661 = vmatmul.f32.gmra.mxu0 %v636
    %v662 = vpop.f32.mrf.mxu0
    %v663 = vadd.f32 0.0, %v662
    %664 = vdwg.mxu0
    %665 = vmatpush.msra.mxu0 %v528
    %666 = vmatpush.msra.mxu0 %v524
    %667 = vmatpush.msra.mxu0 %v520
    %668 = vmatpush.msra.mxu0 %v516
    %669 = vmatpush.msra.mxu0 %v512
    %670 = vmatpush.msra.mxu0 %v508
    %671 = vmatpush.msra.mxu0 %v504
    %672 = vmatpush.msra.mxu0 %v500
    %673 = vmatpush.msra.mxu0 %v496
    %674 = vmatpush.msra.mxu0 %v492
    %675 = vmatpush.msra.mxu0 %v488
    %676 = vmatpush.msra.mxu0 %v484
    %677 = vmatpush.msra.mxu0 %v480
    %678 = vmatpush.msra.mxu0 %v476
    %679 = vmatpush.msra.mxu0 %v472
    %680 = vmatpush.msra.mxu0 %v468
    %681 = vmatmul.f32.gmra.mxu0 %v636
    %v682 = vpop.f32.mrf.mxu0
    %v683 = vadd.f32 0.0, %v682
    %684 = vdwg.mxu0
    %685 = vmatpush.msra.mxu0 %v529
    %686 = vmatpush.msra.mxu0 %v525
    %687 = vmatpush.msra.mxu0 %v521
    %688 = vmatpush.msra.mxu0 %v517
    %689 = vmatpush.msra.mxu0 %v513
    %690 = vmatpush.msra.mxu0 %v509
    %691 = vmatpush.msra.mxu0 %v505
    %692 = vmatpush.msra.mxu0 %v501
    %693 = vmatpush.msra.mxu0 %v497
    %694 = vmatpush.msra.mxu0 %v493
    %695 = vmatpush.msra.mxu0 %v489
    %696 = vmatpush.msra.mxu0 %v485
    %697 = vmatpush.msra.mxu0 %v481
    %698 = vmatpush.msra.mxu0 %v477
    %699 = vmatpush.msra.mxu0 %v473
    %700 = vmatpush.msra.mxu0 %v469
    %701 = vmatmul.f32.gmra.mxu0 %v636
    %v702 = vpop.f32.mrf.mxu0
    %v703 = vadd.f32 0.0, %v702
    %704 = vdwg.mxu0
    %705 = vmatpush.msra.mxu0 %v530
    %706 = vmatpush.msra.mxu0 %v526
    %707 = vmatpush.msra.mxu0 %v522
    %708 = vmatpush.msra.mxu0 %v518
    %709 = vmatpush.msra.mxu0 %v514
    %710 = vmatpush.msra.mxu0 %v510
    %711 = vmatpush.msra.mxu0 %v506
    %712 = vmatpush.msra.mxu0 %v502
    %713 = vmatpush.msra.mxu0 %v498
    %714 = vmatpush.msra.mxu0 %v494
    %715 = vmatpush.msra.mxu0 %v490
    %716 = vmatpush.msra.mxu0 %v486
    %717 = vmatpush.msra.mxu0 %v482
    %718 = vmatpush.msra.mxu0 %v478
    %719 = vmatpush.msra.mxu0 %v474
    %720 = vmatpush.msra.mxu0 %v470
    %721 = vmatmul.f32.gmra.mxu0 %v636
    %v722 = vpop.f32.mrf.mxu0
    %v723 = vadd.f32 0.0, %v722
    %724 = vdwg.mxu0
    %v725 = vadd.f32 %v641, %v663
    %v726 = vadd.f32 %v642, %v683
    %v727 = vadd.f32 %v643, %v703
    %v728 = vadd.f32 %v644, %v723
    %v729 = vmul.f32 %v725, 0.5
    %v730 = vmul.f32 %v726, 0.5
    %v731 = vmul.f32 %v727, 0.5
    %v732 = vtanh.pop %v729
    %v733 = vtanh.pop %v730
    %v734 = vtanh.pop %v731
    %v735 = vmul.f32 %v732, 0.5
    %v736 = vmul.f32 %v733, 0.5
    %v737 = vmul.f32 %v734, 0.5
    %v738 = vadd.f32 %v735, 0.5
    %v739 = vadd.f32 %v736, 0.5
    %v740 = vadd.f32 %v737, 0.5
    %v741 = vtanh.pop %v728
    %v742 = vmul.f32 %v739, %v634
    %v743 = vmul.f32 %v738, %v741
    %v744 = vadd.f32 %v742, %v743
    %v745 = vtanh.pop %v744
    %v746 = vmul.f32 %v740, %v745
    %s747 = scalar_lea.vmem [#allocation3], 16
    %748 = vst [vmem:[%s747] sm:$0xff] %v746
    %s749 = scalar_lea.vmem [#allocation3], 160
    %750 = vst [vmem:[%s749 + $0x8] sm:$0xff] %v746
    %s751 = scalar_lea.vmem [#allocation2], 64
    %v752 = vld [vmem:[%s751] sm:$0xff]
    %v753 = vld [vmem:[%s751 + $0x8] sm:$0xff]
    %v754 = vld [vmem:[%s751 + $0x10] sm:$0xff]
    %v755 = vld [vmem:[%s751 + $0x18] sm:$0xff]
    %756 = vmatpush.msra.mxu0 %v527
    %757 = vmatpush.msra.mxu0 %v523
    %758 = vmatpush.msra.mxu0 %v519
    %759 = vmatpush.msra.mxu0 %v515
    %760 = vmatpush.msra.mxu0 %v511
    %761 = vmatpush.msra.mxu0 %v507
    %762 = vmatpush.msra.mxu0 %v503
    %763 = vmatpush.msra.mxu0 %v499
    %764 = vmatpush.msra.mxu0 %v495
    %765 = vmatpush.msra.mxu0 %v491
    %766 = vmatpush.msra.mxu0 %v487
    %767 = vmatpush.msra.mxu0 %v483
    %768 = vmatpush.msra.mxu0 %v479
    %769 = vmatpush.msra.mxu0 %v475
    %770 = vmatpush.msra.mxu0 %v471
    %771 = vmatpush.msra.mxu0 %v467
    %772 = vmatmul.f32.gmra.mxu0 %v746
    %v773 = vpop.f32.mrf.mxu0
    %v774 = vadd.f32 0.0, %v773
    %775 = vdwg.mxu0
    %776 = vmatpush.msra.mxu0 %v528
    %777 = vmatpush.msra.mxu0 %v524
    %778 = vmatpush.msra.mxu0 %v520
    %779 = vmatpush.msra.mxu0 %v516
    %780 = vmatpush.msra.mxu0 %v512
    %781 = vmatpush.msra.mxu0 %v508
    %782 = vmatpush.msra.mxu0 %v504
    %783 = vmatpush.msra.mxu0 %v500
    %784 = vmatpush.msra.mxu0 %v496
    %785 = vmatpush.msra.mxu0 %v492
    %786 = vmatpush.msra.mxu0 %v488
    %787 = vmatpush.msra.mxu0 %v484
    %788 = vmatpush.msra.mxu0 %v480
    %789 = vmatpush.msra.mxu0 %v476
    %790 = vmatpush.msra.mxu0 %v472
    %791 = vmatpush.msra.mxu0 %v468
    %792 = vmatmul.f32.gmra.mxu0 %v746
    %v793 = vpop.f32.mrf.mxu0
    %v794 = vadd.f32 0.0, %v793
    %795 = vdwg.mxu0
    %796 = vmatpush.msra.mxu0 %v529
    %797 = vmatpush.msra.mxu0 %v525
    %798 = vmatpush.msra.mxu0 %v521
    %799 = vmatpush.msra.mxu0 %v517
    %800 = vmatpush.msra.mxu0 %v513
    %801 = vmatpush.msra.mxu0 %v509
    %802 = vmatpush.msra.mxu0 %v505
    %803 = vmatpush.msra.mxu0 %v501
    %804 = vmatpush.msra.mxu0 %v497
    %805 = vmatpush.msra.mxu0 %v493
    %806 = vmatpush.msra.mxu0 %v489
    %807 = vmatpush.msra.mxu0 %v485
    %808 = vmatpush.msra.mxu0 %v481
    %809 = vmatpush.msra.mxu0 %v477
    %810 = vmatpush.msra.mxu0 %v473
    %811 = vmatpush.msra.mxu0 %v469
    %812 = vmatmul.f32.gmra.mxu0 %v746
    %v813 = vpop.f32.mrf.mxu0
    %v814 = vadd.f32 0.0, %v813
    %815 = vdwg.mxu0
    %816 = vmatpush.msra.mxu0 %v530
    %817 = vmatpush.msra.mxu0 %v526
    %818 = vmatpush.msra.mxu0 %v522
    %819 = vmatpush.msra.mxu0 %v518
    %820 = vmatpush.msra.mxu0 %v514
    %821 = vmatpush.msra.mxu0 %v510
    %822 = vmatpush.msra.mxu0 %v506
    %823 = vmatpush.msra.mxu0 %v502
    %824 = vmatpush.msra.mxu0 %v498
    %825 = vmatpush.msra.mxu0 %v494
    %826 = vmatpush.msra.mxu0 %v490
    %827 = vmatpush.msra.mxu0 %v486
    %828 = vmatpush.msra.mxu0 %v482
    %829 = vmatpush.msra.mxu0 %v478
    %830 = vmatpush.msra.mxu0 %v474
    %831 = vmatpush.msra.mxu0 %v470
    %832 = vmatmul.f32.gmra.mxu0 %v746
    %v833 = vpop.f32.mrf.mxu0
    %v834 = vadd.f32 0.0, %v833
    %835 = vdwg.mxu0
    %v836 = vadd.f32 %v752, %v774
    %v837 = vadd.f32 %v753, %v794
    %v838 = vadd.f32 %v754, %v814
    %v839 = vadd.f32 %v755, %v834
    %v840 = vmul.f32 %v836, 0.5
    %v841 = vmul.f32 %v837, 0.5
    %v842 = vmul.f32 %v838, 0.5
    %v843 = vtanh.pop %v840
    %v844 = vtanh.pop %v841
    %v845 = vtanh.pop %v842
    %v846 = vmul.f32 %v843, 0.5
    %v847 = vmul.f32 %v844, 0.5
    %v848 = vmul.f32 %v845, 0.5
    %v849 = vadd.f32 %v846, 0.5
    %v850 = vadd.f32 %v847, 0.5
    %v851 = vadd.f32 %v848, 0.5
    %v852 = vtanh.pop %v839
    %v853 = vmul.f32 %v850, %v744
    %v854 = vmul.f32 %v849, %v852
    %v855 = vadd.f32 %v853, %v854
    %v856 = vtanh.pop %v855
    %v857 = vmul.f32 %v851, %v856
    %s858 = scalar_lea.vmem [#allocation3], 32
    %859 = vst [vmem:[%s858] sm:$0xff] %v857
    %s860 = scalar_lea.vmem [#allocation3], 144
    %861 = vst [vmem:[%s860 + $0x8] sm:$0xff] %v857
    %s862 = scalar_lea.vmem [#allocation2], 96
    %v863 = vld [vmem:[%s862] sm:$0xff]
    %v864 = vld [vmem:[%s862 + $0x8] sm:$0xff]
    %v865 = vld [vmem:[%s862 + $0x10] sm:$0xff]
    %v866 = vld [vmem:[%s862 + $0x18] sm:$0xff]
    %867 = vmatpush.msra.mxu0 %v527
    %868 = vmatpush.msra.mxu0 %v523
    %869 = vmatpush.msra.mxu0 %v519
    %870 = vmatpush.msra.mxu0 %v515
    %871 = vmatpush.msra.mxu0 %v511
    %872 = vmatpush.msra.mxu0 %v507
    %873 = vmatpush.msra.mxu0 %v503
    %874 = vmatpush.msra.mxu0 %v499
    %875 = vmatpush.msra.mxu0 %v495
    %876 = vmatpush.msra.mxu0 %v491
    %877 = vmatpush.msra.mxu0 %v487
    %878 = vmatpush.msra.mxu0 %v483
    %879 = vmatpush.msra.mxu0 %v479
    %880 = vmatpush.msra.mxu0 %v475
    %881 = vmatpush.msra.mxu0 %v471
    %882 = vmatpush.msra.mxu0 %v467
    %883 = vmatmul.f32.gmra.mxu0 %v857
    %v884 = vpop.f32.mrf.mxu0
    %v885 = vadd.f32 0.0, %v884
    %886 = vdwg.mxu0
    %887 = vmatpush.msra.mxu0 %v528
    %888 = vmatpush.msra.mxu0 %v524
    %889 = vmatpush.msra.mxu0 %v520
    %890 = vmatpush.msra.mxu0 %v516
    %891 = vmatpush.msra.mxu0 %v512
    %892 = vmatpush.msra.mxu0 %v508
    %893 = vmatpush.msra.mxu0 %v504
    %894 = vmatpush.msra.mxu0 %v500
    %895 = vmatpush.msra.mxu0 %v496
    %896 = vmatpush.msra.mxu0 %v492
    %897 = vmatpush.msra.mxu0 %v488
    %898 = vmatpush.msra.mxu0 %v484
    %899 = vmatpush.msra.mxu0 %v480
    %900 = vmatpush.msra.mxu0 %v476
    %901 = vmatpush.msra.mxu0 %v472
    %902 = vmatpush.msra.mxu0 %v468
    %903 = vmatmul.f32.gmra.mxu0 %v857
    %v904 = vpop.f32.mrf.mxu0
    %v905 = vadd.f32 0.0, %v904
    %906 = vdwg.mxu0
    %907 = vmatpush.msra.mxu0 %v529
    %908 = vmatpush.msra.mxu0 %v525
    %909 = vmatpush.msra.mxu0 %v521
    %910 = vmatpush.msra.mxu0 %v517
    %911 = vmatpush.msra.mxu0 %v513
    %912 = vmatpush.msra.mxu0 %v509
    %913 = vmatpush.msra.mxu0 %v505
    %914 = vmatpush.msra.mxu0 %v501
    %915 = vmatpush.msra.mxu0 %v497
    %916 = vmatpush.msra.mxu0 %v493
    %917 = vmatpush.msra.mxu0 %v489
    %918 = vmatpush.msra.mxu0 %v485
    %919 = vmatpush.msra.mxu0 %v481
    %920 = vmatpush.msra.mxu0 %v477
    %921 = vmatpush.msra.mxu0 %v473
    %922 = vmatpush.msra.mxu0 %v469
    %923 = vmatmul.f32.gmra.mxu0 %v857
    %v924 = vpop.f32.mrf.mxu0
    %v925 = vadd.f32 0.0, %v924
    %926 = vdwg.mxu0
    %927 = vmatpush.msra.mxu0 %v530
    %928 = vmatpush.msra.mxu0 %v526
    %929 = vmatpush.msra.mxu0 %v522
    %930 = vmatpush.msra.mxu0 %v518
    %931 = vmatpush.msra.mxu0 %v514
    %932 = vmatpush.msra.mxu0 %v510
    %933 = vmatpush.msra.mxu0 %v506
    %934 = vmatpush.msra.mxu0 %v502
    %935 = vmatpush.msra.mxu0 %v498
    %936 = vmatpush.msra.mxu0 %v494
    %937 = vmatpush.msra.mxu0 %v490
    %938 = vmatpush.msra.mxu0 %v486
    %939 = vmatpush.msra.mxu0 %v482
    %940 = vmatpush.msra.mxu0 %v478
    %941 = vmatpush.msra.mxu0 %v474
    %942 = vmatpush.msra.mxu0 %v470
    %943 = vmatmul.f32.gmra.mxu0 %v857
    %v944 = vpop.f32.mrf.mxu0
    %v945 = vadd.f32 0.0, %v944
    %946 = vdwg.mxu0
    %v947 = vadd.f32 %v863, %v885
    %v948 = vadd.f32 %v864, %v905
    %v949 = vadd.f32 %v865, %v925
    %v950 = vadd.f32 %v866, %v945
    %v951 = vmul.f32 %v947, 0.5
    %v952 = vmul.f32 %v948, 0.5
    %v953 = vmul.f32 %v949, 0.5
    %v954 = vtanh.pop %v951
    %v955 = vtanh.pop %v952
    %v956 = vtanh.pop %v953
    %v957 = vmul.f32 %v954, 0.5
    %v958 = vmul.f32 %v955, 0.5
    %v959 = vmul.f32 %v956, 0.5
    %v960 = vadd.f32 %v957, 0.5
    %v961 = vadd.f32 %v958, 0.5
    %v962 = vadd.f32 %v959, 0.5
    %v963 = vtanh.pop %v950
    %v964 = vmul.f32 %v961, %v855
    %v965 = vmul.f32 %v960, %v963
    %v966 = vadd.f32 %v964, %v965
    %v967 = vtanh.pop %v966
    %v968 = vmul.f32 %v962, %v967
    %s969 = scalar_lea.vmem [#allocation3], 48
    %970 = vst [vmem:[%s969] sm:$0xff] %v968
    %s971 = scalar_lea.vmem [#allocation3], 128
    %972 = vst [vmem:[%s971 + $0x8] sm:$0xff] %v968
    %s973 = scalar_lea.vmem [#allocation2], 128
    %v974 = vld [vmem:[%s973] sm:$0xff]
    %v975 = vld [vmem:[%s973 + $0x8] sm:$0xff]
    %v976 = vld [vmem:[%s973 + $0x10] sm:$0xff]
    %v977 = vld [vmem:[%s973 + $0x18] sm:$0xff]
    %978 = vmatpush.msra.mxu0 %v527
    %979 = vmatpush.msra.mxu0 %v523
    %980 = vmatpush.msra.mxu0 %v519
    %981 = vmatpush.msra.mxu0 %v515
    %982 = vmatpush.msra.mxu0 %v511
    %983 = vmatpush.msra.mxu0 %v507
    %984 = vmatpush.msra.mxu0 %v503
    %985 = vmatpush.msra.mxu0 %v499
    %986 = vmatpush.msra.mxu0 %v495
    %987 = vmatpush.msra.mxu0 %v491
    %988 = vmatpush.msra.mxu0 %v487
    %989 = vmatpush.msra.mxu0 %v483
    %990 = vmatpush.msra.mxu0 %v479
    %991 = vmatpush.msra.mxu0 %v475
    %992 = vmatpush.msra.mxu0 %v471
    %993 = vmatpush.msra.mxu0 %v467
    %994 = vmatmul.f32.gmra.mxu0 %v968
    %v995 = vpop.f32.mrf.mxu0
    %v996 = vadd.f32 0.0, %v995
    %997 = vdwg.mxu0
    %998 = vmatpush.msra.mxu0 %v528
    %999 = vmatpush.msra.mxu0 %v524
    %1000 = vmatpush.msra.mxu0 %v520
    %1001 = vmatpush.msra.mxu0 %v516
    %1002 = vmatpush.msra.mxu0 %v512
    %1003 = vmatpush.msra.mxu0 %v508
    %1004 = vmatpush.msra.mxu0 %v504
    %1005 = vmatpush.msra.mxu0 %v500
    %1006 = vmatpush.msra.mxu0 %v496
    %1007 = vmatpush.msra.mxu0 %v492
    %1008 = vmatpush.msra.mxu0 %v488
    %1009 = vmatpush.msra.mxu0 %v484
    %1010 = vmatpush.msra.mxu0 %v480
    %1011 = vmatpush.msra.mxu0 %v476
    %1012 = vmatpush.msra.mxu0 %v472
    %1013 = vmatpush.msra.mxu0 %v468
    %1014 = vmatmul.f32.gmra.mxu0 %v968
    %v1015 = vpop.f32.mrf.mxu0
    %v1016 = vadd.f32 0.0, %v1015
    %1017 = vdwg.mxu0
    %1018 = vmatpush.msra.mxu0 %v529
    %1019 = vmatpush.msra.mxu0 %v525
    %1020 = vmatpush.msra.mxu0 %v521
    %1021 = vmatpush.msra.mxu0 %v517
    %1022 = vmatpush.msra.mxu0 %v513
    %1023 = vmatpush.msra.mxu0 %v509
    %1024 = vmatpush.msra.mxu0 %v505
    %1025 = vmatpush.msra.mxu0 %v501
    %1026 = vmatpush.msra.mxu0 %v497
    %1027 = vmatpush.msra.mxu0 %v493
    %1028 = vmatpush.msra.mxu0 %v489
    %1029 = vmatpush.msra.mxu0 %v485
    %1030 = vmatpush.msra.mxu0 %v481
    %1031 = vmatpush.msra.mxu0 %v477
    %1032 = vmatpush.msra.mxu0 %v473
    %1033 = vmatpush.msra.mxu0 %v469
    %1034 = vmatmul.f32.gmra.mxu0 %v968
    %v1035 = vpop.f32.mrf.mxu0
    %v1036 = vadd.f32 0.0, %v1035
    %1037 = vdwg.mxu0
    %1038 = vmatpush.msra.mxu0 %v530
    %1039 = vmatpush.msra.mxu0 %v526
    %1040 = vmatpush.msra.mxu0 %v522
    %1041 = vmatpush.msra.mxu0 %v518
    %1042 = vmatpush.msra.mxu0 %v514
    %1043 = vmatpush.msra.mxu0 %v510
    %1044 = vmatpush.msra.mxu0 %v506
    %1045 = vmatpush.msra.mxu0 %v502
    %1046 = vmatpush.msra.mxu0 %v498
    %1047 = vmatpush.msra.mxu0 %v494
    %1048 = vmatpush.msra.mxu0 %v490
    %1049 = vmatpush.msra.mxu0 %v486
    %1050 = vmatpush.msra.mxu0 %v482
    %1051 = vmatpush.msra.mxu0 %v478
    %1052 = vmatpush.msra.mxu0 %v474
    %1053 = vmatpush.msra.mxu0 %v470
    %1054 = vmatmul.f32.gmra.mxu0 %v968
    %v1055 = vpop.f32.mrf.mxu0
    %v1056 = vadd.f32 0.0, %v1055
    %1057 = vdwg.mxu0
    %v1058 = vadd.f32 %v974, %v996
    %v1059 = vadd.f32 %v975, %v1016
    %v1060 = vadd.f32 %v976, %v1036
    %v1061 = vadd.f32 %v977, %v1056
    %v1062 = vmul.f32 %v1058, 0.5
    %v1063 = vmul.f32 %v1059, 0.5
    %v1064 = vmul.f32 %v1060, 0.5
    %v1065 = vtanh.pop %v1062
    %v1066 = vtanh.pop %v1063
    %v1067 = vtanh.pop %v1064
    %v1068 = vmul.f32 %v1065, 0.5
    %v1069 = vmul.f32 %v1066, 0.5
    %v1070 = vmul.f32 %v1067, 0.5
    %v1071 = vadd.f32 %v1068, 0.5
    %v1072 = vadd.f32 %v1069, 0.5
    %v1073 = vadd.f32 %v1070, 0.5
    %v1074 = vtanh.pop %v1061
    %v1075 = vmul.f32 %v1072, %v966
    %v1076 = vmul.f32 %v1071, %v1074
    %v1077 = vadd.f32 %v1075, %v1076
    %v1078 = vtanh.pop %v1077
    %v1079 = vmul.f32 %v1073, %v1078
    %s1080 = scalar_lea.vmem [#allocation3], 64
    %1081 = vst [vmem:[%s1080] sm:$0xff] %v1079
    %s1082 = scalar_lea.vmem [#allocation3], 112
    %1083 = vst [vmem:[%s1082 + $0x8] sm:$0xff] %v1079
    %s1084 = scalar_lea.vmem [#allocation2], 160
    %v1085 = vld [vmem:[%s1084] sm:$0xff]
    %v1086 = vld [vmem:[%s1084 + $0x8] sm:$0xff]
    %v1087 = vld [vmem:[%s1084 + $0x10] sm:$0xff]
    %v1088 = vld [vmem:[%s1084 + $0x18] sm:$0xff]
    %1089 = vmatpush.msra.mxu0 %v527
    %1090 = vmatpush.msra.mxu0 %v523
    %1091 = vmatpush.msra.mxu0 %v519
    %1092 = vmatpush.msra.mxu0 %v515
    %1093 = vmatpush.msra.mxu0 %v511
    %1094 = vmatpush.msra.mxu0 %v507
    %1095 = vmatpush.msra.mxu0 %v503
    %1096 = vmatpush.msra.mxu0 %v499
    %1097 = vmatpush.msra.mxu0 %v495
    %1098 = vmatpush.msra.mxu0 %v491
    %1099 = vmatpush.msra.mxu0 %v487
    %1100 = vmatpush.msra.mxu0 %v483
    %1101 = vmatpush.msra.mxu0 %v479
    %1102 = vmatpush.msra.mxu0 %v475
    %1103 = vmatpush.msra.mxu0 %v471
    %1104 = vmatpush.msra.mxu0 %v467
    %1105 = vmatmul.f32.gmra.mxu0 %v1079
    %v1106 = vpop.f32.mrf.mxu0
    %v1107 = vadd.f32 0.0, %v1106
    %1108 = vdwg.mxu0
    %1109 = vmatpush.msra.mxu0 %v528
    %1110 = vmatpush.msra.mxu0 %v524
    %1111 = vmatpush.msra.mxu0 %v520
    %1112 = vmatpush.msra.mxu0 %v516
    %1113 = vmatpush.msra.mxu0 %v512
    %1114 = vmatpush.msra.mxu0 %v508
    %1115 = vmatpush.msra.mxu0 %v504
    %1116 = vmatpush.msra.mxu0 %v500
    %1117 = vmatpush.msra.mxu0 %v496
    %1118 = vmatpush.msra.mxu0 %v492
    %1119 = vmatpush.msra.mxu0 %v488
    %1120 = vmatpush.msra.mxu0 %v484
    %1121 = vmatpush.msra.mxu0 %v480
    %1122 = vmatpush.msra.mxu0 %v476
    %1123 = vmatpush.msra.mxu0 %v472
    %1124 = vmatpush.msra.mxu0 %v468
    %1125 = vmatmul.f32.gmra.mxu0 %v1079
    %v1126 = vpop.f32.mrf.mxu0
    %v1127 = vadd.f32 0.0, %v1126
    %1128 = vdwg.mxu0
    %1129 = vmatpush.msra.mxu0 %v529
    %1130 = vmatpush.msra.mxu0 %v525
    %1131 = vmatpush.msra.mxu0 %v521
    %1132 = vmatpush.msra.mxu0 %v517
    %1133 = vmatpush.msra.mxu0 %v513
    %1134 = vmatpush.msra.mxu0 %v509
    %1135 = vmatpush.msra.mxu0 %v505
    %1136 = vmatpush.msra.mxu0 %v501
    %1137 = vmatpush.msra.mxu0 %v497
    %1138 = vmatpush.msra.mxu0 %v493
    %1139 = vmatpush.msra.mxu0 %v489
    %1140 = vmatpush.msra.mxu0 %v485
    %1141 = vmatpush.msra.mxu0 %v481
    %1142 = vmatpush.msra.mxu0 %v477
    %1143 = vmatpush.msra.mxu0 %v473
    %1144 = vmatpush.msra.mxu0 %v469
    %1145 = vmatmul.f32.gmra.mxu0 %v1079
    %v1146 = vpop.f32.mrf.mxu0
    %v1147 = vadd.f32 0.0, %v1146
    %1148 = vdwg.mxu0
    %1149 = vmatpush.msra.mxu0 %v530
    %1150 = vmatpush.msra.mxu0 %v526
    %1151 = vmatpush.msra.mxu0 %v522
    %1152 = vmatpush.msra.mxu0 %v518
    %1153 = vmatpush.msra.mxu0 %v514
    %1154 = vmatpush.msra.mxu0 %v510
    %1155 = vmatpush.msra.mxu0 %v506
    %1156 = vmatpush.msra.mxu0 %v502
    %1157 = vmatpush.msra.mxu0 %v498
    %1158 = vmatpush.msra.mxu0 %v494
    %1159 = vmatpush.msra.mxu0 %v490
    %1160 = vmatpush.msra.mxu0 %v486
    %1161 = vmatpush.msra.mxu0 %v482
    %1162 = vmatpush.msra.mxu0 %v478
    %1163 = vmatpush.msra.mxu0 %v474
    %1164 = vmatpush.msra.mxu0 %v470
    %1165 = vmatmul.f32.gmra.mxu0 %v1079
    %v1166 = vpop.f32.mrf.mxu0
    %v1167 = vadd.f32 0.0, %v1166
    %1168 = vdwg.mxu0
    %v1169 = vadd.f32 %v1085, %v1107
    %v1170 = vadd.f32 %v1086, %v1127
    %v1171 = vadd.f32 %v1087, %v1147
    %v1172 = vadd.f32 %v1088, %v1167
    %v1173 = vmul.f32 %v1169, 0.5
    %v1174 = vmul.f32 %v1170, 0.5
    %v1175 = vmul.f32 %v1171, 0.5
    %v1176 = vtanh.pop %v1173
    %v1177 = vtanh.pop %v1174
    %v1178 = vtanh.pop %v1175
    %v1179 = vmul.f32 %v1176, 0.5
    %v1180 = vmul.f32 %v1177, 0.5
    %v1181 = vmul.f32 %v1178, 0.5
    %v1182 = vadd.f32 %v1179, 0.5
    %v1183 = vadd.f32 %v1180, 0.5
    %v1184 = vadd.f32 %v1181, 0.5
    %v1185 = vtanh.pop %v1172
    %v1186 = vmul.f32 %v1183, %v1077
    %v1187 = vmul.f32 %v1182, %v1185
    %v1188 = vadd.f32 %v1186, %v1187
    %v1189 = vtanh.pop %v1188
    %v1190 = vmul.f32 %v1184, %v1189
    %s1191 = scalar_lea.vmem [#allocation3], 80
    %1192 = vst [vmem:[%s1191] sm:$0xff] %v1190
    %s1193 = scalar_lea.vmem [#allocation3], 96
    %1194 = vst [vmem:[%s1193 + $0x8] sm:$0xff] %v1190
    %s1195 = scalar_lea.vmem [#allocation2], 192
    %v1196 = vld [vmem:[%s1195] sm:$0xff]
    %v1197 = vld [vmem:[%s1195 + $0x8] sm:$0xff]
    %v1198 = vld [vmem:[%s1195 + $0x10] sm:$0xff]
    %v1199 = vld [vmem:[%s1195 + $0x18] sm:$0xff]
    %1200 = vmatpush.msra.mxu0 %v527
    %1201 = vmatpush.msra.mxu0 %v523
    %1202 = vmatpush.msra.mxu0 %v519
    %1203 = vmatpush.msra.mxu0 %v515
    %1204 = vmatpush.msra.mxu0 %v511
    %1205 = vmatpush.msra.mxu0 %v507
    %1206 = vmatpush.msra.mxu0 %v503
    %1207 = vmatpush.msra.mxu0 %v499
    %1208 = vmatpush.msra.mxu0 %v495
    %1209 = vmatpush.msra.mxu0 %v491
    %1210 = vmatpush.msra.mxu0 %v487
    %1211 = vmatpush.msra.mxu0 %v483
    %1212 = vmatpush.msra.mxu0 %v479
    %1213 = vmatpush.msra.mxu0 %v475
    %1214 = vmatpush.msra.mxu0 %v471
    %1215 = vmatpush.msra.mxu0 %v467
    %1216 = vmatmul.f32.gmra.mxu0 %v1190
    %v1217 = vpop.f32.mrf.mxu0
    %v1218 = vadd.f32 0.0, %v1217
    %1219 = vdwg.mxu0
    %1220 = vmatpush.msra.mxu0 %v528
    %1221 = vmatpush.msra.mxu0 %v524
    %1222 = vmatpush.msra.mxu0 %v520
    %1223 = vmatpush.msra.mxu0 %v516
    %1224 = vmatpush.msra.mxu0 %v512
    %1225 = vmatpush.msra.mxu0 %v508
    %1226 = vmatpush.msra.mxu0 %v504
    %1227 = vmatpush.msra.mxu0 %v500
    %1228 = vmatpush.msra.mxu0 %v496
    %1229 = vmatpush.msra.mxu0 %v492
    %1230 = vmatpush.msra.mxu0 %v488
    %1231 = vmatpush.msra.mxu0 %v484
    %1232 = vmatpush.msra.mxu0 %v480
    %1233 = vmatpush.msra.mxu0 %v476
    %1234 = vmatpush.msra.mxu0 %v472
    %1235 = vmatpush.msra.mxu0 %v468
    %1236 = vmatmul.f32.gmra.mxu0 %v1190
    %v1237 = vpop.f32.mrf.mxu0
    %v1238 = vadd.f32 0.0, %v1237
    %1239 = vdwg.mxu0
    %1240 = vmatpush.msra.mxu0 %v529
    %1241 = vmatpush.msra.mxu0 %v525
    %1242 = vmatpush.msra.mxu0 %v521
    %1243 = vmatpush.msra.mxu0 %v517
    %1244 = vmatpush.msra.mxu0 %v513
    %1245 = vmatpush.msra.mxu0 %v509
    %1246 = vmatpush.msra.mxu0 %v505
    %1247 = vmatpush.msra.mxu0 %v501
    %1248 = vmatpush.msra.mxu0 %v497
    %1249 = vmatpush.msra.mxu0 %v493
    %1250 = vmatpush.msra.mxu0 %v489
    %1251 = vmatpush.msra.mxu0 %v485
    %1252 = vmatpush.msra.mxu0 %v481
    %1253 = vmatpush.msra.mxu0 %v477
    %1254 = vmatpush.msra.mxu0 %v473
    %1255 = vmatpush.msra.mxu0 %v469
    %1256 = vmatmul.f32.gmra.mxu0 %v1190
    %v1257 = vpop.f32.mrf.mxu0
    %v1258 = vadd.f32 0.0, %v1257
    %1259 = vdwg.mxu0
    %1260 = vmatpush.msra.mxu0 %v530
    %1261 = vmatpush.msra.mxu0 %v526
    %1262 = vmatpush.msra.mxu0 %v522
    %1263 = vmatpush.msra.mxu0 %v518
    %1264 = vmatpush.msra.mxu0 %v514
    %1265 = vmatpush.msra.mxu0 %v510
    %1266 = vmatpush.msra.mxu0 %v506
    %1267 = vmatpush.msra.mxu0 %v502
    %1268 = vmatpush.msra.mxu0 %v498
    %1269 = vmatpush.msra.mxu0 %v494
    %1270 = vmatpush.msra.mxu0 %v490
    %1271 = vmatpush.msra.mxu0 %v486
    %1272 = vmatpush.msra.mxu0 %v482
    %1273 = vmatpush.msra.mxu0 %v478
    %1274 = vmatpush.msra.mxu0 %v474
    %1275 = vmatpush.msra.mxu0 %v470
    %1276 = vmatmul.f32.gmra.mxu0 %v1190
    %v1277 = vpop.f32.mrf.mxu0
    %v1278 = vadd.f32 0.0, %v1277
    %1279 = vdwg.mxu0
    %v1280 = vadd.f32 %v1196, %v1218
    %v1281 = vadd.f32 %v1197, %v1238
    %v1282 = vadd.f32 %v1198, %v1258
    %v1283 = vadd.f32 %v1199, %v1278
    %v1284 = vmul.f32 %v1280, 0.5
    %v1285 = vmul.f32 %v1281, 0.5
    %v1286 = vmul.f32 %v1282, 0.5
    %v1287 = vtanh.pop %v1284
    %v1288 = vtanh.pop %v1285
    %v1289 = vtanh.pop %v1286
    %v1290 = vmul.f32 %v1287, 0.5
    %v1291 = vmul.f32 %v1288, 0.5
    %v1292 = vmul.f32 %v1289, 0.5
    %v1293 = vadd.f32 %v1290, 0.5
    %v1294 = vadd.f32 %v1291, 0.5
    %v1295 = vadd.f32 %v1292, 0.5
    %v1296 = vtanh.pop %v1283
    %v1297 = vmul.f32 %v1294, %v1188
    %v1298 = vmul.f32 %v1293, %v1296
    %v1299 = vadd.f32 %v1297, %v1298
    %v1300 = vtanh.pop %v1299
    %v1301 = vmul.f32 %v1295, %v1300
    %1302 = vst [vmem:[%s1193] sm:$0xff] %v1301
    %1303 = vst [vmem:[%s1191 + $0x8] sm:$0xff] %v1301
    %s1304 = scalar_lea.vmem [#allocation2], 224
    %v1305 = vld [vmem:[%s1304] sm:$0xff]
    %v1306 = vld [vmem:[%s1304 + $0x8] sm:$0xff]
    %v1307 = vld [vmem:[%s1304 + $0x10] sm:$0xff]
    %v1308 = vld [vmem:[%s1304 + $0x18] sm:$0xff]
    %1309 = vmatpush.msra.mxu0 %v527
    %1310 = vmatpush.msra.mxu0 %v523
    %1311 = vmatpush.msra.mxu0 %v519
    %1312 = vmatpush.msra.mxu0 %v515
    %1313 = vmatpush.msra.mxu0 %v511
    %1314 = vmatpush.msra.mxu0 %v507
    %1315 = vmatpush.msra.mxu0 %v503
    %1316 = vmatpush.msra.mxu0 %v499
    %1317 = vmatpush.msra.mxu0 %v495
    %1318 = vmatpush.msra.mxu0 %v491
    %1319 = vmatpush.msra.mxu0 %v487
    %1320 = vmatpush.msra.mxu0 %v483
    %1321 = vmatpush.msra.mxu0 %v479
    %1322 = vmatpush.msra.mxu0 %v475
    %1323 = vmatpush.msra.mxu0 %v471
    %1324 = vmatpush.msra.mxu0 %v467
    %1325 = vmatmul.f32.gmra.mxu0 %v1301
    %v1326 = vpop.f32.mrf.mxu0
    %v1327 = vadd.f32 0.0, %v1326
    %1328 = vdwg.mxu0
    %1329 = vmatpush.msra.mxu0 %v528
    %1330 = vmatpush.msra.mxu0 %v524
    %1331 = vmatpush.msra.mxu0 %v520
    %1332 = vmatpush.msra.mxu0 %v516
    %1333 = vmatpush.msra.mxu0 %v512
    %1334 = vmatpush.msra.mxu0 %v508
    %1335 = vmatpush.msra.mxu0 %v504
    %1336 = vmatpush.msra.mxu0 %v500
    %1337 = vmatpush.msra.mxu0 %v496
    %1338 = vmatpush.msra.mxu0 %v492
    %1339 = vmatpush.msra.mxu0 %v488
    %1340 = vmatpush.msra.mxu0 %v484
    %1341 = vmatpush.msra.mxu0 %v480
    %1342 = vmatpush.msra.mxu0 %v476
    %1343 = vmatpush.msra.mxu0 %v472
    %1344 = vmatpush.msra.mxu0 %v468
    %1345 = vmatmul.f32.gmra.mxu0 %v1301
    %v1346 = vpop.f32.mrf.mxu0
    %v1347 = vadd.f32 0.0, %v1346
    %1348 = vdwg.mxu0
    %1349 = vmatpush.msra.mxu0 %v529
    %1350 = vmatpush.msra.mxu0 %v525
    %1351 = vmatpush.msra.mxu0 %v521
    %1352 = vmatpush.msra.mxu0 %v517
    %1353 = vmatpush.msra.mxu0 %v513
    %1354 = vmatpush.msra.mxu0 %v509
    %1355 = vmatpush.msra.mxu0 %v505
    %1356 = vmatpush.msra.mxu0 %v501
    %1357 = vmatpush.msra.mxu0 %v497
    %1358 = vmatpush.msra.mxu0 %v493
    %1359 = vmatpush.msra.mxu0 %v489
    %1360 = vmatpush.msra.mxu0 %v485
    %1361 = vmatpush.msra.mxu0 %v481
    %1362 = vmatpush.msra.mxu0 %v477
    %1363 = vmatpush.msra.mxu0 %v473
    %1364 = vmatpush.msra.mxu0 %v469
    %1365 = vmatmul.f32.gmra.mxu0 %v1301
    %v1366 = vpop.f32.mrf.mxu0
    %v1367 = vadd.f32 0.0, %v1366
    %1368 = vdwg.mxu0
    %1369 = vmatpush.msra.mxu0 %v530
    %1370 = vmatpush.msra.mxu0 %v526
    %1371 = vmatpush.msra.mxu0 %v522
    %1372 = vmatpush.msra.mxu0 %v518
    %1373 = vmatpush.msra.mxu0 %v514
    %1374 = vmatpush.msra.mxu0 %v510
    %1375 = vmatpush.msra.mxu0 %v506
    %1376 = vmatpush.msra.mxu0 %v502
    %1377 = vmatpush.msra.mxu0 %v498
    %1378 = vmatpush.msra.mxu0 %v494
    %1379 = vmatpush.msra.mxu0 %v490
    %1380 = vmatpush.msra.mxu0 %v486
    %1381 = vmatpush.msra.mxu0 %v482
    %1382 = vmatpush.msra.mxu0 %v478
    %1383 = vmatpush.msra.mxu0 %v474
    %1384 = vmatpush.msra.mxu0 %v470
    %1385 = vmatmul.f32.gmra.mxu0 %v1301
    %v1386 = vpop.f32.mrf.mxu0
    %v1387 = vadd.f32 0.0, %v1386
    %1388 = vdwg.mxu0
    %v1389 = vadd.f32 %v1305, %v1327
    %v1390 = vadd.f32 %v1306, %v1347
    %v1391 = vadd.f32 %v1307, %v1367
    %v1392 = vadd.f32 %v1308, %v1387
    %v1393 = vmul.f32 %v1389, 0.5
    %v1394 = vmul.f32 %v1390, 0.5
    %v1395 = vmul.f32 %v1391, 0.5
    %v1396 = vtanh.pop %v1393
    %v1397 = vtanh.pop %v1394
    %v1398 = vtanh.pop %v1395
    %v1399 = vmul.f32 %v1396, 0.5
    %v1400 = vmul.f32 %v1397, 0.5
    %v1401 = vmul.f32 %v1398, 0.5
    %v1402 = vadd.f32 %v1399, 0.5
    %v1403 = vadd.f32 %v1400, 0.5
    %v1404 = vadd.f32 %v1401, 0.5
    %v1405 = vtanh.pop %v1392
    %v1406 = vmul.f32 %v1403, %v1299
    %v1407 = vmul.f32 %v1402, %v1405
    %v1408 = vadd.f32 %v1406, %v1407
    %v1409 = vtanh.pop %v1408
    %v1410 = vmul.f32 %v1404, %v1409
    %1411 = vst [vmem:[%s1082] sm:$0xff] %v1410
    %1412 = vst [vmem:[%s1080 + $0x8] sm:$0xff] %v1410
    %s1413 = scalar_lea.vmem [#allocation2], 256
    %v1414 = vld [vmem:[%s1413] sm:$0xff]
    %v1415 = vld [vmem:[%s1413 + $0x8] sm:$0xff]
    %v1416 = vld [vmem:[%s1413 + $0x10] sm:$0xff]
    %v1417 = vld [vmem:[%s1413 + $0x18] sm:$0xff]
    %1418 = vmatpush.msra.mxu0 %v527
    %1419 = vmatpush.msra.mxu0 %v523
    %1420 = vmatpush.msra.mxu0 %v519
    %1421 = vmatpush.msra.mxu0 %v515
    %1422 = vmatpush.msra.mxu0 %v511
    %1423 = vmatpush.msra.mxu0 %v507
    %1424 = vmatpush.msra.mxu0 %v503
    %1425 = vmatpush.msra.mxu0 %v499
    %1426 = vmatpush.msra.mxu0 %v495
    %1427 = vmatpush.msra.mxu0 %v491
    %1428 = vmatpush.msra.mxu0 %v487
    %1429 = vmatpush.msra.mxu0 %v483
    %1430 = vmatpush.msra.mxu0 %v479
    %1431 = vmatpush.msra.mxu0 %v475
    %1432 = vmatpush.msra.mxu0 %v471
    %1433 = vmatpush.msra.mxu0 %v467
    %1434 = vmatmul.f32.gmra.mxu0 %v1410
    %v1435 = vpop.f32.mrf.mxu0
    %v1436 = vadd.f32 0.0, %v1435
    %1437 = vdwg.mxu0
    %1438 = vmatpush.msra.mxu0 %v528
    %1439 = vmatpush.msra.mxu0 %v524
    %1440 = vmatpush.msra.mxu0 %v520
    %1441 = vmatpush.msra.mxu0 %v516
    %1442 = vmatpush.msra.mxu0 %v512
    %1443 = vmatpush.msra.mxu0 %v508
    %1444 = vmatpush.msra.mxu0 %v504
    %1445 = vmatpush.msra.mxu0 %v500
    %1446 = vmatpush.msra.mxu0 %v496
    %1447 = vmatpush.msra.mxu0 %v492
    %1448 = vmatpush.msra.mxu0 %v488
    %1449 = vmatpush.msra.mxu0 %v484
    %1450 = vmatpush.msra.mxu0 %v480
    %1451 = vmatpush.msra.mxu0 %v476
    %1452 = vmatpush.msra.mxu0 %v472
    %1453 = vmatpush.msra.mxu0 %v468
    %1454 = vmatmul.f32.gmra.mxu0 %v1410
    %v1455 = vpop.f32.mrf.mxu0
    %v1456 = vadd.f32 0.0, %v1455
    %1457 = vdwg.mxu0
    %1458 = vmatpush.msra.mxu0 %v529
    %1459 = vmatpush.msra.mxu0 %v525
    %1460 = vmatpush.msra.mxu0 %v521
    %1461 = vmatpush.msra.mxu0 %v517
    %1462 = vmatpush.msra.mxu0 %v513
    %1463 = vmatpush.msra.mxu0 %v509
    %1464 = vmatpush.msra.mxu0 %v505
    %1465 = vmatpush.msra.mxu0 %v501
    %1466 = vmatpush.msra.mxu0 %v497
    %1467 = vmatpush.msra.mxu0 %v493
    %1468 = vmatpush.msra.mxu0 %v489
    %1469 = vmatpush.msra.mxu0 %v485
    %1470 = vmatpush.msra.mxu0 %v481
    %1471 = vmatpush.msra.mxu0 %v477
    %1472 = vmatpush.msra.mxu0 %v473
    %1473 = vmatpush.msra.mxu0 %v469
    %1474 = vmatmul.f32.gmra.mxu0 %v1410
    %v1475 = vpop.f32.mrf.mxu0
    %v1476 = vadd.f32 0.0, %v1475
    %1477 = vdwg.mxu0
    %1478 = vmatpush.msra.mxu0 %v530
    %1479 = vmatpush.msra.mxu0 %v526
    %1480 = vmatpush.msra.mxu0 %v522
    %1481 = vmatpush.msra.mxu0 %v518
    %1482 = vmatpush.msra.mxu0 %v514
    %1483 = vmatpush.msra.mxu0 %v510
    %1484 = vmatpush.msra.mxu0 %v506
    %1485 = vmatpush.msra.mxu0 %v502
    %1486 = vmatpush.msra.mxu0 %v498
    %1487 = vmatpush.msra.mxu0 %v494
    %1488 = vmatpush.msra.mxu0 %v490
    %1489 = vmatpush.msra.mxu0 %v486
    %1490 = vmatpush.msra.mxu0 %v482
    %1491 = vmatpush.msra.mxu0 %v478
    %1492 = vmatpush.msra.mxu0 %v474
    %1493 = vmatpush.msra.mxu0 %v470
    %1494 = vmatmul.f32.gmra.mxu0 %v1410
    %v1495 = vpop.f32.mrf.mxu0
    %v1496 = vadd.f32 0.0, %v1495
    %1497 = vdwg.mxu0
    %v1498 = vadd.f32 %v1414, %v1436
    %v1499 = vadd.f32 %v1415, %v1456
    %v1500 = vadd.f32 %v1416, %v1476
    %v1501 = vadd.f32 %v1417, %v1496
    %v1502 = vmul.f32 %v1498, 0.5
    %v1503 = vmul.f32 %v1499, 0.5
    %v1504 = vmul.f32 %v1500, 0.5
    %v1505 = vtanh.pop %v1502
    %v1506 = vtanh.pop %v1503
    %v1507 = vtanh.pop %v1504
    %v1508 = vmul.f32 %v1505, 0.5
    %v1509 = vmul.f32 %v1506, 0.5
    %v1510 = vmul.f32 %v1507, 0.5
    %v1511 = vadd.f32 %v1508, 0.5
    %v1512 = vadd.f32 %v1509, 0.5
    %v1513 = vadd.f32 %v1510, 0.5
    %v1514 = vtanh.pop %v1501
    %v1515 = vmul.f32 %v1512, %v1408
    %v1516 = vmul.f32 %v1511, %v1514
    %v1517 = vadd.f32 %v1515, %v1516
    %v1518 = vtanh.pop %v1517
    %v1519 = vmul.f32 %v1513, %v1518
    %1520 = vst [vmem:[%s971] sm:$0xff] %v1519
    %1521 = vst [vmem:[%s969 + $0x8] sm:$0xff] %v1519
    %s1522 = scalar_lea.vmem [#allocation2], 288
    %v1523 = vld [vmem:[%s1522] sm:$0xff]
    %v1524 = vld [vmem:[%s1522 + $0x8] sm:$0xff]
    %v1525 = vld [vmem:[%s1522 + $0x10] sm:$0xff]
    %v1526 = vld [vmem:[%s1522 + $0x18] sm:$0xff]
    %1527 = vmatpush.msra.mxu0 %v527
    %1528 = vmatpush.msra.mxu0 %v523
    %1529 = vmatpush.msra.mxu0 %v519
    %1530 = vmatpush.msra.mxu0 %v515
    %1531 = vmatpush.msra.mxu0 %v511
    %1532 = vmatpush.msra.mxu0 %v507
    %1533 = vmatpush.msra.mxu0 %v503
    %1534 = vmatpush.msra.mxu0 %v499
    %1535 = vmatpush.msra.mxu0 %v495
    %1536 = vmatpush.msra.mxu0 %v491
    %1537 = vmatpush.msra.mxu0 %v487
    %1538 = vmatpush.msra.mxu0 %v483
    %1539 = vmatpush.msra.mxu0 %v479
    %1540 = vmatpush.msra.mxu0 %v475
    %1541 = vmatpush.msra.mxu0 %v471
    %1542 = vmatpush.msra.mxu0 %v467
    %1543 = vmatmul.f32.gmra.mxu0 %v1519
    %v1544 = vpop.f32.mrf.mxu0
    %v1545 = vadd.f32 0.0, %v1544
    %1546 = vdwg.mxu0
    %1547 = vmatpush.msra.mxu0 %v528
    %1548 = vmatpush.msra.mxu0 %v524
    %1549 = vmatpush.msra.mxu0 %v520
    %1550 = vmatpush.msra.mxu0 %v516
    %1551 = vmatpush.msra.mxu0 %v512
    %1552 = vmatpush.msra.mxu0 %v508
    %1553 = vmatpush.msra.mxu0 %v504
    %1554 = vmatpush.msra.mxu0 %v500
    %1555 = vmatpush.msra.mxu0 %v496
    %1556 = vmatpush.msra.mxu0 %v492
    %1557 = vmatpush.msra.mxu0 %v488
    %1558 = vmatpush.msra.mxu0 %v484
    %1559 = vmatpush.msra.mxu0 %v480
    %1560 = vmatpush.msra.mxu0 %v476
    %1561 = vmatpush.msra.mxu0 %v472
    %1562 = vmatpush.msra.mxu0 %v468
    %1563 = vmatmul.f32.gmra.mxu0 %v1519
    %v1564 = vpop.f32.mrf.mxu0
    %v1565 = vadd.f32 0.0, %v1564
    %1566 = vdwg.mxu0
    %1567 = vmatpush.msra.mxu0 %v529
    %1568 = vmatpush.msra.mxu0 %v525
    %1569 = vmatpush.msra.mxu0 %v521
    %1570 = vmatpush.msra.mxu0 %v517
    %1571 = vmatpush.msra.mxu0 %v513
    %1572 = vmatpush.msra.mxu0 %v509
    %1573 = vmatpush.msra.mxu0 %v505
    %1574 = vmatpush.msra.mxu0 %v501
    %1575 = vmatpush.msra.mxu0 %v497
    %1576 = vmatpush.msra.mxu0 %v493
    %1577 = vmatpush.msra.mxu0 %v489
    %1578 = vmatpush.msra.mxu0 %v485
    %1579 = vmatpush.msra.mxu0 %v481
    %1580 = vmatpush.msra.mxu0 %v477
    %1581 = vmatpush.msra.mxu0 %v473
    %1582 = vmatpush.msra.mxu0 %v469
    %1583 = vmatmul.f32.gmra.mxu0 %v1519
    %v1584 = vpop.f32.mrf.mxu0
    %v1585 = vadd.f32 0.0, %v1584
    %1586 = vdwg.mxu0
    %1587 = vmatpush.msra.mxu0 %v530
    %1588 = vmatpush.msra.mxu0 %v526
    %1589 = vmatpush.msra.mxu0 %v522
    %1590 = vmatpush.msra.mxu0 %v518
    %1591 = vmatpush.msra.mxu0 %v514
    %1592 = vmatpush.msra.mxu0 %v510
    %1593 = vmatpush.msra.mxu0 %v506
    %1594 = vmatpush.msra.mxu0 %v502
    %1595 = vmatpush.msra.mxu0 %v498
    %1596 = vmatpush.msra.mxu0 %v494
    %1597 = vmatpush.msra.mxu0 %v490
    %1598 = vmatpush.msra.mxu0 %v486
    %1599 = vmatpush.msra.mxu0 %v482
    %1600 = vmatpush.msra.mxu0 %v478
    %1601 = vmatpush.msra.mxu0 %v474
    %1602 = vmatpush.msra.mxu0 %v470
    %1603 = vmatmul.f32.gmra.mxu0 %v1519
    %v1604 = vpop.f32.mrf.mxu0
    %v1605 = vadd.f32 0.0, %v1604
    %1606 = vdwg.mxu0
    %v1607 = vadd.f32 %v1523, %v1545
    %v1608 = vadd.f32 %v1524, %v1565
    %v1609 = vadd.f32 %v1525, %v1585
    %v1610 = vadd.f32 %v1526, %v1605
    %v1611 = vmul.f32 %v1607, 0.5
    %v1612 = vmul.f32 %v1608, 0.5
    %v1613 = vmul.f32 %v1609, 0.5
    %v1614 = vtanh.pop %v1611
    %v1615 = vtanh.pop %v1612
    %v1616 = vtanh.pop %v1613
    %v1617 = vmul.f32 %v1614, 0.5
    %v1618 = vmul.f32 %v1615, 0.5
    %v1619 = vmul.f32 %v1616, 0.5
    %v1620 = vadd.f32 %v1617, 0.5
    %v1621 = vadd.f32 %v1618, 0.5
    %v1622 = vadd.f32 %v1619, 0.5
    %v1623 = vtanh.pop %v1610
    %v1624 = vmul.f32 %v1621, %v1517
    %v1625 = vmul.f32 %v1620, %v1623
    %v1626 = vadd.f32 %v1624, %v1625
    %v1627 = vtanh.pop %v1626
    %v1628 = vmul.f32 %v1622, %v1627
    %1629 = vst [vmem:[%s860] sm:$0xff] %v1628
    %1630 = vst [vmem:[%s858 + $0x8] sm:$0xff] %v1628
    %s1631 = scalar_lea.vmem [#allocation2], 320
    %v1632 = vld [vmem:[%s1631] sm:$0xff]
    %v1633 = vld [vmem:[%s1631 + $0x8] sm:$0xff]
    %v1634 = vld [vmem:[%s1631 + $0x10] sm:$0xff]
    %v1635 = vld [vmem:[%s1631 + $0x18] sm:$0xff]
    %1636 = vmatpush.msra.mxu0 %v527
    %1637 = vmatpush.msra.mxu0 %v523
    %1638 = vmatpush.msra.mxu0 %v519
    %1639 = vmatpush.msra.mxu0 %v515
    %1640 = vmatpush.msra.mxu0 %v511
    %1641 = vmatpush.msra.mxu0 %v507
    %1642 = vmatpush.msra.mxu0 %v503
    %1643 = vmatpush.msra.mxu0 %v499
    %1644 = vmatpush.msra.mxu0 %v495
    %1645 = vmatpush.msra.mxu0 %v491
    %1646 = vmatpush.msra.mxu0 %v487
    %1647 = vmatpush.msra.mxu0 %v483
    %1648 = vmatpush.msra.mxu0 %v479
    %1649 = vmatpush.msra.mxu0 %v475
    %1650 = vmatpush.msra.mxu0 %v471
    %1651 = vmatpush.msra.mxu0 %v467
    %1652 = vmatmul.f32.gmra.mxu0 %v1628
    %v1653 = vpop.f32.mrf.mxu0
    %v1654 = vadd.f32 0.0, %v1653
    %1655 = vdwg.mxu0
    %1656 = vmatpush.msra.mxu0 %v528
    %1657 = vmatpush.msra.mxu0 %v524
    %1658 = vmatpush.msra.mxu0 %v520
    %1659 = vmatpush.msra.mxu0 %v516
    %1660 = vmatpush.msra.mxu0 %v512
    %1661 = vmatpush.msra.mxu0 %v508
    %1662 = vmatpush.msra.mxu0 %v504
    %1663 = vmatpush.msra.mxu0 %v500
    %1664 = vmatpush.msra.mxu0 %v496
    %1665 = vmatpush.msra.mxu0 %v492
    %1666 = vmatpush.msra.mxu0 %v488
    %1667 = vmatpush.msra.mxu0 %v484
    %1668 = vmatpush.msra.mxu0 %v480
    %1669 = vmatpush.msra.mxu0 %v476
    %1670 = vmatpush.msra.mxu0 %v472
    %1671 = vmatpush.msra.mxu0 %v468
    %1672 = vmatmul.f32.gmra.mxu0 %v1628
    %v1673 = vpop.f32.mrf.mxu0
    %v1674 = vadd.f32 0.0, %v1673
    %1675 = vdwg.mxu0
    %1676 = vmatpush.msra.mxu0 %v529
    %1677 = vmatpush.msra.mxu0 %v525
    %1678 = vmatpush.msra.mxu0 %v521
    %1679 = vmatpush.msra.mxu0 %v517
    %1680 = vmatpush.msra.mxu0 %v513
    %1681 = vmatpush.msra.mxu0 %v509
    %1682 = vmatpush.msra.mxu0 %v505
    %1683 = vmatpush.msra.mxu0 %v501
    %1684 = vmatpush.msra.mxu0 %v497
    %1685 = vmatpush.msra.mxu0 %v493
    %1686 = vmatpush.msra.mxu0 %v489
    %1687 = vmatpush.msra.mxu0 %v485
    %1688 = vmatpush.msra.mxu0 %v481
    %1689 = vmatpush.msra.mxu0 %v477
    %1690 = vmatpush.msra.mxu0 %v473
    %1691 = vmatpush.msra.mxu0 %v469
    %1692 = vmatmul.f32.gmra.mxu0 %v1628
    %v1693 = vpop.f32.mrf.mxu0
    %v1694 = vadd.f32 0.0, %v1693
    %1695 = vdwg.mxu0
    %1696 = vmatpush.msra.mxu0 %v530
    %1697 = vmatpush.msra.mxu0 %v526
    %1698 = vmatpush.msra.mxu0 %v522
    %1699 = vmatpush.msra.mxu0 %v518
    %1700 = vmatpush.msra.mxu0 %v514
    %1701 = vmatpush.msra.mxu0 %v510
    %1702 = vmatpush.msra.mxu0 %v506
    %1703 = vmatpush.msra.mxu0 %v502
    %1704 = vmatpush.msra.mxu0 %v498
    %1705 = vmatpush.msra.mxu0 %v494
    %1706 = vmatpush.msra.mxu0 %v490
    %1707 = vmatpush.msra.mxu0 %v486
    %1708 = vmatpush.msra.mxu0 %v482
    %1709 = vmatpush.msra.mxu0 %v478
    %1710 = vmatpush.msra.mxu0 %v474
    %1711 = vmatpush.msra.mxu0 %v470
    %1712 = vmatmul.f32.gmra.mxu0 %v1628
    %v1713 = vpop.f32.mrf.mxu0
    %v1714 = vadd.f32 0.0, %v1713
    %1715 = vdwg.mxu0
    %v1716 = vadd.f32 %v1632, %v1654
    %v1717 = vadd.f32 %v1633, %v1674
    %v1718 = vadd.f32 %v1634, %v1694
    %v1719 = vadd.f32 %v1635, %v1714
    %v1720 = vmul.f32 %v1716, 0.5
    %v1721 = vmul.f32 %v1717, 0.5
    %v1722 = vmul.f32 %v1718, 0.5
    %v1723 = vtanh.pop %v1720
    %v1724 = vtanh.pop %v1721
    %v1725 = vtanh.pop %v1722
    %v1726 = vmul.f32 %v1723, 0.5
    %v1727 = vmul.f32 %v1724, 0.5
    %v1728 = vmul.f32 %v1725, 0.5
    %v1729 = vadd.f32 %v1726, 0.5
    %v1730 = vadd.f32 %v1727, 0.5
    %v1731 = vadd.f32 %v1728, 0.5
    %v1732 = vtanh.pop %v1719
    %v1733 = vmul.f32 %v1730, %v1626
    %v1734 = vmul.f32 %v1729, %v1732
    %v1735 = vadd.f32 %v1733, %v1734
    %v1736 = vtanh.pop %v1735
    %v1737 = vmul.f32 %v1731, %v1736
    %1738 = vst [vmem:[%s749] sm:$0xff] %v1737
    %1739 = vst [vmem:[%s747 + $0x8] sm:$0xff] %v1737
    %s1740 = scalar_lea.vmem [#allocation2], 352
    %v1741 = vld [vmem:[%s1740] sm:$0xff]
    %v1742 = vld [vmem:[%s1740 + $0x8] sm:$0xff]
    %v1743 = vld [vmem:[%s1740 + $0x10] sm:$0xff]
    %v1744 = vld [vmem:[%s1740 + $0x18] sm:$0xff]
    %1745 = vmatpush.msra.mxu0 %v527
    %1746 = vmatpush.msra.mxu0 %v523
    %1747 = vmatpush.msra.mxu0 %v519
    %1748 = vmatpush.msra.mxu0 %v515
    %1749 = vmatpush.msra.mxu0 %v511
    %1750 = vmatpush.msra.mxu0 %v507
    %1751 = vmatpush.msra.mxu0 %v503
    %1752 = vmatpush.msra.mxu0 %v499
    %1753 = vmatpush.msra.mxu0 %v495
    %1754 = vmatpush.msra.mxu0 %v491
    %1755 = vmatpush.msra.mxu0 %v487
    %1756 = vmatpush.msra.mxu0 %v483
    %1757 = vmatpush.msra.mxu0 %v479
    %1758 = vmatpush.msra.mxu0 %v475
    %1759 = vmatpush.msra.mxu0 %v471
    %1760 = vmatpush.msra.mxu0 %v467
    %1761 = vmatmul.f32.gmra.mxu0 %v1737
    %v1762 = vpop.f32.mrf.mxu0
    %v1763 = vadd.f32 0.0, %v1762
    %1764 = vdwg.mxu0
    %1765 = vmatpush.msra.mxu0 %v528
    %1766 = vmatpush.msra.mxu0 %v524
    %1767 = vmatpush.msra.mxu0 %v520
    %1768 = vmatpush.msra.mxu0 %v516
    %1769 = vmatpush.msra.mxu0 %v512
    %1770 = vmatpush.msra.mxu0 %v508
    %1771 = vmatpush.msra.mxu0 %v504
    %1772 = vmatpush.msra.mxu0 %v500
    %1773 = vmatpush.msra.mxu0 %v496
    %1774 = vmatpush.msra.mxu0 %v492
    %1775 = vmatpush.msra.mxu0 %v488
    %1776 = vmatpush.msra.mxu0 %v484
    %1777 = vmatpush.msra.mxu0 %v480
    %1778 = vmatpush.msra.mxu0 %v476
    %1779 = vmatpush.msra.mxu0 %v472
    %1780 = vmatpush.msra.mxu0 %v468
    %1781 = vmatmul.f32.gmra.mxu0 %v1737
    %v1782 = vpop.f32.mrf.mxu0
    %v1783 = vadd.f32 0.0, %v1782
    %1784 = vdwg.mxu0
    %1785 = vmatpush.msra.mxu0 %v529
    %1786 = vmatpush.msra.mxu0 %v525
    %1787 = vmatpush.msra.mxu0 %v521
    %1788 = vmatpush.msra.mxu0 %v517
    %1789 = vmatpush.msra.mxu0 %v513
    %1790 = vmatpush.msra.mxu0 %v509
    %1791 = vmatpush.msra.mxu0 %v505
    %1792 = vmatpush.msra.mxu0 %v501
    %1793 = vmatpush.msra.mxu0 %v497
    %1794 = vmatpush.msra.mxu0 %v493
    %1795 = vmatpush.msra.mxu0 %v489
    %1796 = vmatpush.msra.mxu0 %v485
    %1797 = vmatpush.msra.mxu0 %v481
    %1798 = vmatpush.msra.mxu0 %v477
    %1799 = vmatpush.msra.mxu0 %v473
    %1800 = vmatpush.msra.mxu0 %v469
    %1801 = vmatmul.f32.gmra.mxu0 %v1737
    %v1802 = vpop.f32.mrf.mxu0
    %v1803 = vadd.f32 0.0, %v1802
    %1804 = vdwg.mxu0
    %1805 = vmatpush.msra.mxu0 %v530
    %1806 = vmatpush.msra.mxu0 %v526
    %1807 = vmatpush.msra.mxu0 %v522
    %1808 = vmatpush.msra.mxu0 %v518
    %1809 = vmatpush.msra.mxu0 %v514
    %1810 = vmatpush.msra.mxu0 %v510
    %1811 = vmatpush.msra.mxu0 %v506
    %1812 = vmatpush.msra.mxu0 %v502
    %1813 = vmatpush.msra.mxu0 %v498
    %1814 = vmatpush.msra.mxu0 %v494
    %1815 = vmatpush.msra.mxu0 %v490
    %1816 = vmatpush.msra.mxu0 %v486
    %1817 = vmatpush.msra.mxu0 %v482
    %1818 = vmatpush.msra.mxu0 %v478
    %1819 = vmatpush.msra.mxu0 %v474
    %1820 = vmatpush.msra.mxu0 %v470
    %1821 = vmatmul.f32.gmra.mxu0 %v1737
    %v1822 = vpop.f32.mrf.mxu0
    %v1823 = vadd.f32 0.0, %v1822
    %1824 = vdwg.mxu0
    %v1825 = vadd.f32 %v1741, %v1763
    %v1826 = vadd.f32 %v1742, %v1783
    %v1827 = vadd.f32 %v1743, %v1803
    %v1828 = vadd.f32 %v1744, %v1823
    %v1829 = vmul.f32 %v1825, 0.5
    %v1830 = vmul.f32 %v1826, 0.5
    %v1831 = vmul.f32 %v1827, 0.5
    %v1832 = vtanh.pop %v1829
    %v1833 = vtanh.pop %v1830
    %v1834 = vtanh.pop %v1831
    %v1835 = vmul.f32 %v1832, 0.5
    %v1836 = vmul.f32 %v1833, 0.5
    %v1837 = vmul.f32 %v1834, 0.5
    %v1838 = vadd.f32 %v1835, 0.5
    %v1839 = vadd.f32 %v1836, 0.5
    %v1840 = vadd.f32 %v1837, 0.5
    %v1841 = vtanh.pop %v1828
    %v1842 = vmul.f32 %v1839, %v1735
    %v1843 = vmul.f32 %v1838, %v1841
    %v1844 = vadd.f32 %v1842, %v1843
    %v1845 = vtanh.pop %v1844
    %v1846 = vmul.f32 %v1840, %v1845
    %1847 = vst [vmem:[%s638] sm:$0xff] %v1846
    %1848 = vst [vmem:[#allocation3 + $0x8] sm:$0xff] %v1846
    %v1849 = vld [vmem:[#allocation3] sm:$0xff]
    %v1850 = vld [vmem:[#allocation3 + $0x8] sm:$0xff]
    %v1851 = vld [vmem:[#allocation3 + $0x10] sm:$0xff]
    %v1852 = vld [vmem:[#allocation3 + $0x18] sm:$0xff]
    %v1853 = vld [vmem:[#allocation3 + $0x20] sm:$0xff]
    %v1854 = vld [vmem:[#allocation3 + $0x28] sm:$0xff]
    %v1855 = vld [vmem:[#allocation3 + $0x30] sm:$0xff]
    %v1856 = vld [vmem:[#allocation3 + $0x38] sm:$0xff]
    %v1857 = vld [vmem:[#allocation3 + $0x40] sm:$0xff]
    %v1858 = vld [vmem:[#allocation3 + $0x48] sm:$0xff]
    %v1859 = vld [vmem:[#allocation3 + $0x50] sm:$0xff]
    %v1860 = vld [vmem:[#allocation3 + $0x58] sm:$0xff]
    %v1861 = vld [vmem:[#allocation3 + $0x60] sm:$0xff]
    %v1862 = vld [vmem:[#allocation3 + $0x68] sm:$0xff]
    %v1863 = vld [vmem:[#allocation3 + $0x70] sm:$0xff]
    %v1864 = vld [vmem:[#allocation3 + $0x78] sm:$0xff]
    %v1865 = vld [vmem:[#allocation3 + $0x80] sm:$0xff]
    %v1866 = vld [vmem:[#allocation3 + $0x88] sm:$0xff]
    %v1867 = vld [vmem:[#allocation3 + $0x90] sm:$0xff]
    %v1868 = vld [vmem:[#allocation3 + $0x98] sm:$0xff]
    %v1869 = vld [vmem:[#allocation3 + $0xa0] sm:$0xff]
    %v1870 = vld [vmem:[#allocation3 + $0xa8] sm:$0xff]
    %v1871 = vld [vmem:[#allocation3 + $0xb0] sm:$0xff]
    %v1872 = vld [vmem:[#allocation3 + $0xb8] sm:$0xff]
    %v1873 = vld [vmem:[#allocation11] sm:$0xff]
    %v1874 = vld [vmem:[#allocation11 + $0x8] sm:$0xff]
    %v1875 = vld [vmem:[#allocation11 + $0x10] sm:$0xff]
    %v1876 = vld [vmem:[#allocation11 + $0x18] sm:$0xff]
    %v1877 = vld [vmem:[#allocation11 + $0x20] sm:$0xff]
    %v1878 = vld [vmem:[#allocation11 + $0x28] sm:$0xff]
    %v1879 = vld [vmem:[#allocation11 + $0x30] sm:$0xff]
    %v1880 = vld [vmem:[#allocation11 + $0x38] sm:$0xff]
    %v1881 = vld [vmem:[#allocation11 + $0x40] sm:$0xff]
    %v1882 = vld [vmem:[#allocation11 + $0x48] sm:$0xff]
    %v1883 = vld [vmem:[#allocation11 + $0x50] sm:$0xff]
    %v1884 = vld [vmem:[#allocation11 + $0x58] sm:$0xff]
    %v1885 = vld [vmem:[#allocation11 + $0x60] sm:$0xff]
    %v1886 = vld [vmem:[#allocation11 + $0x68] sm:$0xff]
    %v1887 = vld [vmem:[#allocation11 + $0x70] sm:$0xff]
    %v1888 = vld [vmem:[#allocation11 + $0x78] sm:$0xff]
    %v1889 = vld [vmem:[#allocation11 + $0x80] sm:$0xff]
    %v1890 = vld [vmem:[#allocation11 + $0x88] sm:$0xff]
    %v1891 = vld [vmem:[#allocation11 + $0x90] sm:$0xff]
    %v1892 = vld [vmem:[#allocation11 + $0x98] sm:$0xff]
    %v1893 = vld [vmem:[#allocation11 + $0xa0] sm:$0xff]
    %v1894 = vld [vmem:[#allocation11 + $0xa8] sm:$0xff]
    %v1895 = vld [vmem:[#allocation11 + $0xb0] sm:$0xff]
    %v1896 = vld [vmem:[#allocation11 + $0xb8] sm:$0xff]
    %v1897 = vld [vmem:[#allocation11 + $0xc0] sm:$0xff]
    %v1898 = vld [vmem:[#allocation11 + $0xc8] sm:$0xff]
    %v1899 = vld [vmem:[#allocation11 + $0xd0] sm:$0xff]
    %v1900 = vld [vmem:[#allocation11 + $0xd8] sm:$0xff]
    %v1901 = vld [vmem:[#allocation11 + $0xe0] sm:$0xff]
    %v1902 = vld [vmem:[#allocation11 + $0xe8] sm:$0xff]
    %v1903 = vld [vmem:[#allocation11 + $0xf0] sm:$0xff]
    %v1904 = vld [vmem:[#allocation11 + $0xf8] sm:$0xff]
    %v1905 = vld [vmem:[#allocation11 + $0x100] sm:$0xff]
    %v1906 = vld [vmem:[#allocation11 + $0x108] sm:$0xff]
    %v1907 = vld [vmem:[#allocation11 + $0x110] sm:$0xff]
    %v1908 = vld [vmem:[#allocation11 + $0x118] sm:$0xff]
    %v1909 = vld [vmem:[#allocation11 + $0x120] sm:$0xff]
    %v1910 = vld [vmem:[#allocation11 + $0x128] sm:$0xff]
    %v1911 = vld [vmem:[#allocation11 + $0x130] sm:$0xff]
    %v1912 = vld [vmem:[#allocation11 + $0x138] sm:$0xff]
    %v1913 = vld [vmem:[#allocation11 + $0x140] sm:$0xff]
    %v1914 = vld [vmem:[#allocation11 + $0x148] sm:$0xff]
    %v1915 = vld [vmem:[#allocation11 + $0x150] sm:$0xff]
    %v1916 = vld [vmem:[#allocation11 + $0x158] sm:$0xff]
    %v1917 = vld [vmem:[#allocation11 + $0x160] sm:$0xff]
    %v1918 = vld [vmem:[#allocation11 + $0x168] sm:$0xff]
    %v1919 = vld [vmem:[#allocation11 + $0x170] sm:$0xff]
    %v1920 = vld [vmem:[#allocation11 + $0x178] sm:$0xff]
    %v1921 = vld [vmem:[#allocation11 + $0x180] sm:$0xff]
    %v1922 = vld [vmem:[#allocation11 + $0x188] sm:$0xff]
    %v1923 = vld [vmem:[#allocation11 + $0x190] sm:$0xff]
    %v1924 = vld [vmem:[#allocation11 + $0x198] sm:$0xff]
    %v1925 = vld [vmem:[#allocation11 + $0x1a0] sm:$0xff]
    %v1926 = vld [vmem:[#allocation11 + $0x1a8] sm:$0xff]
    %v1927 = vld [vmem:[#allocation11 + $0x1b0] sm:$0xff]
    %v1928 = vld [vmem:[#allocation11 + $0x1b8] sm:$0xff]
    %v1929 = vld [vmem:[#allocation11 + $0x1c0] sm:$0xff]
    %v1930 = vld [vmem:[#allocation11 + $0x1c8] sm:$0xff]
    %v1931 = vld [vmem:[#allocation11 + $0x1d0] sm:$0xff]
    %v1932 = vld [vmem:[#allocation11 + $0x1d8] sm:$0xff]
    %v1933 = vld [vmem:[#allocation11 + $0x1e0] sm:$0xff]
    %v1934 = vld [vmem:[#allocation11 + $0x1e8] sm:$0xff]
    %v1935 = vld [vmem:[#allocation11 + $0x1f0] sm:$0xff]
    %v1936 = vld [vmem:[#allocation11 + $0x1f8] sm:$0xff]
    %v1937 = vld [vmem:[#allocation11 + $0x200] sm:$0xff]
    %v1938 = vld [vmem:[#allocation11 + $0x208] sm:$0xff]
    %v1939 = vld [vmem:[#allocation11 + $0x210] sm:$0xff]
    %v1940 = vld [vmem:[#allocation11 + $0x218] sm:$0xff]
    %v1941 = vld [vmem:[#allocation11 + $0x220] sm:$0xff]
    %v1942 = vld [vmem:[#allocation11 + $0x228] sm:$0xff]
    %v1943 = vld [vmem:[#allocation11 + $0x230] sm:$0xff]
    %v1944 = vld [vmem:[#allocation11 + $0x238] sm:$0xff]
    %v1945 = vld [vmem:[#allocation11 + $0x240] sm:$0xff]
    %v1946 = vld [vmem:[#allocation11 + $0x248] sm:$0xff]
    %v1947 = vld [vmem:[#allocation11 + $0x250] sm:$0xff]
    %v1948 = vld [vmem:[#allocation11 + $0x258] sm:$0xff]
    %v1949 = vld [vmem:[#allocation11 + $0x260] sm:$0xff]
    %v1950 = vld [vmem:[#allocation11 + $0x268] sm:$0xff]
    %v1951 = vld [vmem:[#allocation11 + $0x270] sm:$0xff]
    %v1952 = vld [vmem:[#allocation11 + $0x278] sm:$0xff]
    %v1953 = vld [vmem:[#allocation11 + $0x280] sm:$0xff]
    %v1954 = vld [vmem:[#allocation11 + $0x288] sm:$0xff]
    %v1955 = vld [vmem:[#allocation11 + $0x290] sm:$0xff]
    %v1956 = vld [vmem:[#allocation11 + $0x298] sm:$0xff]
    %v1957 = vld [vmem:[#allocation11 + $0x2a0] sm:$0xff]
    %v1958 = vld [vmem:[#allocation11 + $0x2a8] sm:$0xff]
    %v1959 = vld [vmem:[#allocation11 + $0x2b0] sm:$0xff]
    %v1960 = vld [vmem:[#allocation11 + $0x2b8] sm:$0xff]
    %v1961 = vld [vmem:[#allocation11 + $0x2c0] sm:$0xff]
    %v1962 = vld [vmem:[#allocation11 + $0x2c8] sm:$0xff]
    %v1963 = vld [vmem:[#allocation11 + $0x2d0] sm:$0xff]
    %v1964 = vld [vmem:[#allocation11 + $0x2d8] sm:$0xff]
    %v1965 = vld [vmem:[#allocation11 + $0x2e0] sm:$0xff]
    %v1966 = vld [vmem:[#allocation11 + $0x2e8] sm:$0xff]
    %v1967 = vld [vmem:[#allocation11 + $0x2f0] sm:$0xff]
    %v1968 = vld [vmem:[#allocation11 + $0x2f8] sm:$0xff]
    %v1969 = vld [vmem:[#allocation11 + $0x300] sm:$0xff]
    %v1970 = vld [vmem:[#allocation11 + $0x308] sm:$0xff]
    %v1971 = vld [vmem:[#allocation11 + $0x310] sm:$0xff]
    %v1972 = vld [vmem:[#allocation11 + $0x318] sm:$0xff]
    %v1973 = vld [vmem:[#allocation11 + $0x320] sm:$0xff]
    %v1974 = vld [vmem:[#allocation11 + $0x328] sm:$0xff]
    %v1975 = vld [vmem:[#allocation11 + $0x330] sm:$0xff]
    %v1976 = vld [vmem:[#allocation11 + $0x338] sm:$0xff]
    %v1977 = vld [vmem:[#allocation11 + $0x340] sm:$0xff]
    %v1978 = vld [vmem:[#allocation11 + $0x348] sm:$0xff]
    %v1979 = vld [vmem:[#allocation11 + $0x350] sm:$0xff]
    %v1980 = vld [vmem:[#allocation11 + $0x358] sm:$0xff]
    %v1981 = vld [vmem:[#allocation11 + $0x360] sm:$0xff]
    %v1982 = vld [vmem:[#allocation11 + $0x368] sm:$0xff]
    %v1983 = vld [vmem:[#allocation11 + $0x370] sm:$0xff]
    %v1984 = vld [vmem:[#allocation11 + $0x378] sm:$0xff]
    %v1985 = vld [vmem:[#allocation11 + $0x380] sm:$0xff]
    %v1986 = vld [vmem:[#allocation11 + $0x388] sm:$0xff]
    %v1987 = vld [vmem:[#allocation11 + $0x390] sm:$0xff]
    %v1988 = vld [vmem:[#allocation11 + $0x398] sm:$0xff]
    %v1989 = vld [vmem:[#allocation11 + $0x3a0] sm:$0xff]
    %v1990 = vld [vmem:[#allocation11 + $0x3a8] sm:$0xff]
    %v1991 = vld [vmem:[#allocation11 + $0x3b0] sm:$0xff]
    %v1992 = vld [vmem:[#allocation11 + $0x3b8] sm:$0xff]
    %v1993 = vld [vmem:[#allocation11 + $0x3c0] sm:$0xff]
    %v1994 = vld [vmem:[#allocation11 + $0x3c8] sm:$0xff]
    %v1995 = vld [vmem:[#allocation11 + $0x3d0] sm:$0xff]
    %v1996 = vld [vmem:[#allocation11 + $0x3d8] sm:$0xff]
    %v1997 = vld [vmem:[#allocation11 + $0x3e0] sm:$0xff]
    %v1998 = vld [vmem:[#allocation11 + $0x3e8] sm:$0xff]
    %v1999 = vld [vmem:[#allocation11 + $0x3f0] sm:$0xff]
    %v2000 = vld [vmem:[#allocation11 + $0x3f8] sm:$0xff]
    %2001 = vmatpush.msra.mxu0 %v1933
    %2002 = vmatpush.msra.mxu0 %v1929
    %2003 = vmatpush.msra.mxu0 %v1925
    %2004 = vmatpush.msra.mxu0 %v1921
    %2005 = vmatpush.msra.mxu0 %v1917
    %2006 = vmatpush.msra.mxu0 %v1913
    %2007 = vmatpush.msra.mxu0 %v1909
    %2008 = vmatpush.msra.mxu0 %v1905
    %2009 = vmatpush.msra.mxu0 %v1901
    %2010 = vmatpush.msra.mxu0 %v1897
    %2011 = vmatpush.msra.mxu0 %v1893
    %2012 = vmatpush.msra.mxu0 %v1889
    %2013 = vmatpush.msra.mxu0 %v1885
    %2014 = vmatpush.msra.mxu0 %v1881
    %2015 = vmatpush.msra.mxu0 %v1877
    %2016 = vmatpush.msra.mxu0 %v1873
    %2017 = vmatmul.f32.gmra.mxu0 %v1849
    %v2018 = vpop.f32.mrf.mxu0
    %v2019 = vadd.f32 0.0, %v2018
    %2020 = vmatmul.f32.gmra.mxu0 %v1851
    %v2021 = vpop.f32.mrf.mxu0
    %v2022 = vadd.f32 0.0, %v2021
    %2023 = vmatmul.f32.gmra.mxu0 %v1853
    %v2024 = vpop.f32.mrf.mxu0
    %v2025 = vadd.f32 0.0, %v2024
    %2026 = vmatmul.f32.gmra.mxu0 %v1855
    %v2027 = vpop.f32.mrf.mxu0
    %v2028 = vadd.f32 0.0, %v2027
    %2029 = vmatmul.f32.gmra.mxu0 %v1857
    %v2030 = vpop.f32.mrf.mxu0
    %v2031 = vadd.f32 0.0, %v2030
    %2032 = vmatmul.f32.gmra.mxu0 %v1859
    %v2033 = vpop.f32.mrf.mxu0
    %v2034 = vadd.f32 0.0, %v2033
    %2035 = vmatmul.f32.gmra.mxu0 %v1861
    %v2036 = vpop.f32.mrf.mxu0
    %v2037 = vadd.f32 0.0, %v2036
    %2038 = vmatmul.f32.gmra.mxu0 %v1863
    %v2039 = vpop.f32.mrf.mxu0
    %v2040 = vadd.f32 0.0, %v2039
    %2041 = vmatmul.f32.gmra.mxu0 %v1865
    %v2042 = vpop.f32.mrf.mxu0
    %v2043 = vadd.f32 0.0, %v2042
    %2044 = vmatmul.f32.gmra.mxu0 %v1867
    %v2045 = vpop.f32.mrf.mxu0
    %v2046 = vadd.f32 0.0, %v2045
    %2047 = vmatmul.f32.gmra.mxu0 %v1869
    %v2048 = vpop.f32.mrf.mxu0
    %v2049 = vadd.f32 0.0, %v2048
    %2050 = vmatmul.f32.gmra.mxu0 %v1871
    %v2051 = vpop.f32.mrf.mxu0
    %v2052 = vadd.f32 0.0, %v2051
    %2053 = vdwg.mxu0
    %2054 = vmatpush.msra.mxu0 %v1997
    %2055 = vmatpush.msra.mxu0 %v1993
    %2056 = vmatpush.msra.mxu0 %v1989
    %2057 = vmatpush.msra.mxu0 %v1985
    %2058 = vmatpush.msra.mxu0 %v1981
    %2059 = vmatpush.msra.mxu0 %v1977
    %2060 = vmatpush.msra.mxu0 %v1973
    %2061 = vmatpush.msra.mxu0 %v1969
    %2062 = vmatpush.msra.mxu0 %v1965
    %2063 = vmatpush.msra.mxu0 %v1961
    %2064 = vmatpush.msra.mxu0 %v1957
    %2065 = vmatpush.msra.mxu0 %v1953
    %2066 = vmatpush.msra.mxu0 %v1949
    %2067 = vmatpush.msra.mxu0 %v1945
    %2068 = vmatpush.msra.mxu0 %v1941
    %2069 = vmatpush.msra.mxu0 %v1937
    %2070 = vmatmul.f32.gmra.mxu0 %v1850
    %v2071 = vpop.f32.mrf.mxu0
    %v2072 = vadd.f32 %v2019, %v2071
    %2073 = vmatmul.f32.gmra.mxu0 %v1852
    %v2074 = vpop.f32.mrf.mxu0
    %v2075 = vadd.f32 %v2022, %v2074
    %2076 = vmatmul.f32.gmra.mxu0 %v1854
    %v2077 = vpop.f32.mrf.mxu0
    %v2078 = vadd.f32 %v2025, %v2077
    %2079 = vmatmul.f32.gmra.mxu0 %v1856
    %v2080 = vpop.f32.mrf.mxu0
    %v2081 = vadd.f32 %v2028, %v2080
    %2082 = vmatmul.f32.gmra.mxu0 %v1858
    %v2083 = vpop.f32.mrf.mxu0
    %v2084 = vadd.f32 %v2031, %v2083
    %2085 = vmatmul.f32.gmra.mxu0 %v1860
    %v2086 = vpop.f32.mrf.mxu0
    %v2087 = vadd.f32 %v2034, %v2086
    %2088 = vmatmul.f32.gmra.mxu0 %v1862
    %v2089 = vpop.f32.mrf.mxu0
    %v2090 = vadd.f32 %v2037, %v2089
    %2091 = vmatmul.f32.gmra.mxu0 %v1864
    %v2092 = vpop.f32.mrf.mxu0
    %v2093 = vadd.f32 %v2040, %v2092
    %2094 = vmatmul.f32.gmra.mxu0 %v1866
    %v2095 = vpop.f32.mrf.mxu0
    %v2096 = vadd.f32 %v2043, %v2095
    %2097 = vmatmul.f32.gmra.mxu0 %v1868
    %v2098 = vpop.f32.mrf.mxu0
    %v2099 = vadd.f32 %v2046, %v2098
    %2100 = vmatmul.f32.gmra.mxu0 %v1870
    %v2101 = vpop.f32.mrf.mxu0
    %v2102 = vadd.f32 %v2049, %v2101
    %2103 = vmatmul.f32.gmra.mxu0 %v1872
    %v2104 = vpop.f32.mrf.mxu0
    %v2105 = vadd.f32 %v2052, %v2104
    %2106 = vdwg.mxu0
    %2107 = vmatpush.msra.mxu0 %v1934
    %2108 = vmatpush.msra.mxu0 %v1930
    %2109 = vmatpush.msra.mxu0 %v1926
    %2110 = vmatpush.msra.mxu0 %v1922
    %2111 = vmatpush.msra.mxu0 %v1918
    %2112 = vmatpush.msra.mxu0 %v1914
    %2113 = vmatpush.msra.mxu0 %v1910
    %2114 = vmatpush.msra.mxu0 %v1906
    %2115 = vmatpush.msra.mxu0 %v1902
    %2116 = vmatpush.msra.mxu0 %v1898
    %2117 = vmatpush.msra.mxu0 %v1894
    %2118 = vmatpush.msra.mxu0 %v1890
    %2119 = vmatpush.msra.mxu0 %v1886
    %2120 = vmatpush.msra.mxu0 %v1882
    %2121 = vmatpush.msra.mxu0 %v1878
    %2122 = vmatpush.msra.mxu0 %v1874
    %2123 = vmatmul.f32.gmra.mxu0 %v1849
    %v2124 = vpop.f32.mrf.mxu0
    %v2125 = vadd.f32 0.0, %v2124
    %2126 = vmatmul.f32.gmra.mxu0 %v1851
    %v2127 = vpop.f32.mrf.mxu0
    %v2128 = vadd.f32 0.0, %v2127
    %2129 = vmatmul.f32.gmra.mxu0 %v1853
    %v2130 = vpop.f32.mrf.mxu0
    %v2131 = vadd.f32 0.0, %v2130
    %2132 = vmatmul.f32.gmra.mxu0 %v1855
    %v2133 = vpop.f32.mrf.mxu0
    %v2134 = vadd.f32 0.0, %v2133
    %2135 = vmatmul.f32.gmra.mxu0 %v1857
    %v2136 = vpop.f32.mrf.mxu0
    %v2137 = vadd.f32 0.0, %v2136
    %2138 = vmatmul.f32.gmra.mxu0 %v1859
    %v2139 = vpop.f32.mrf.mxu0
    %v2140 = vadd.f32 0.0, %v2139
    %2141 = vmatmul.f32.gmra.mxu0 %v1861
    %v2142 = vpop.f32.mrf.mxu0
    %v2143 = vadd.f32 0.0, %v2142
    %2144 = vmatmul.f32.gmra.mxu0 %v1863
    %v2145 = vpop.f32.mrf.mxu0
    %v2146 = vadd.f32 0.0, %v2145
    %2147 = vmatmul.f32.gmra.mxu0 %v1865
    %v2148 = vpop.f32.mrf.mxu0
    %v2149 = vadd.f32 0.0, %v2148
    %2150 = vmatmul.f32.gmra.mxu0 %v1867
    %v2151 = vpop.f32.mrf.mxu0
    %v2152 = vadd.f32 0.0, %v2151
    %2153 = vmatmul.f32.gmra.mxu0 %v1869
    %v2154 = vpop.f32.mrf.mxu0
    %v2155 = vadd.f32 0.0, %v2154
    %2156 = vmatmul.f32.gmra.mxu0 %v1871
    %v2157 = vpop.f32.mrf.mxu0
    %v2158 = vadd.f32 0.0, %v2157
    %2159 = vdwg.mxu0
    %2160 = vmatpush.msra.mxu0 %v1998
    %2161 = vmatpush.msra.mxu0 %v1994
    %2162 = vmatpush.msra.mxu0 %v1990
    %2163 = vmatpush.msra.mxu0 %v1986
    %2164 = vmatpush.msra.mxu0 %v1982
    %2165 = vmatpush.msra.mxu0 %v1978
    %2166 = vmatpush.msra.mxu0 %v1974
    %2167 = vmatpush.msra.mxu0 %v1970
    %2168 = vmatpush.msra.mxu0 %v1966
    %2169 = vmatpush.msra.mxu0 %v1962
    %2170 = vmatpush.msra.mxu0 %v1958
    %2171 = vmatpush.msra.mxu0 %v1954
    %2172 = vmatpush.msra.mxu0 %v1950
    %2173 = vmatpush.msra.mxu0 %v1946
    %2174 = vmatpush.msra.mxu0 %v1942
    %2175 = vmatpush.msra.mxu0 %v1938
    %2176 = vmatmul.f32.gmra.mxu0 %v1850
    %v2177 = vpop.f32.mrf.mxu0
    %v2178 = vadd.f32 %v2125, %v2177
    %2179 = vmatmul.f32.gmra.mxu0 %v1852
    %v2180 = vpop.f32.mrf.mxu0
    %v2181 = vadd.f32 %v2128, %v2180
    %2182 = vmatmul.f32.gmra.mxu0 %v1854
    %v2183 = vpop.f32.mrf.mxu0
    %v2184 = vadd.f32 %v2131, %v2183
    %2185 = vmatmul.f32.gmra.mxu0 %v1856
    %v2186 = vpop.f32.mrf.mxu0
    %v2187 = vadd.f32 %v2134, %v2186
    %2188 = vmatmul.f32.gmra.mxu0 %v1858
    %v2189 = vpop.f32.mrf.mxu0
    %v2190 = vadd.f32 %v2137, %v2189
    %2191 = vmatmul.f32.gmra.mxu0 %v1860
    %v2192 = vpop.f32.mrf.mxu0
    %v2193 = vadd.f32 %v2140, %v2192
    %2194 = vmatmul.f32.gmra.mxu0 %v1862
    %v2195 = vpop.f32.mrf.mxu0
    %v2196 = vadd.f32 %v2143, %v2195
    %2197 = vmatmul.f32.gmra.mxu0 %v1864
    %v2198 = vpop.f32.mrf.mxu0
    %v2199 = vadd.f32 %v2146, %v2198
    %2200 = vmatmul.f32.gmra.mxu0 %v1866
    %v2201 = vpop.f32.mrf.mxu0
    %v2202 = vadd.f32 %v2149, %v2201
    %2203 = vmatmul.f32.gmra.mxu0 %v1868
    %v2204 = vpop.f32.mrf.mxu0
    %v2205 = vadd.f32 %v2152, %v2204
    %2206 = vmatmul.f32.gmra.mxu0 %v1870
    %v2207 = vpop.f32.mrf.mxu0
    %v2208 = vadd.f32 %v2155, %v2207
    %2209 = vmatmul.f32.gmra.mxu0 %v1872
    %v2210 = vpop.f32.mrf.mxu0
    %v2211 = vadd.f32 %v2158, %v2210
    %2212 = vdwg.mxu0
    %2213 = vmatpush.msra.mxu0 %v1935
    %2214 = vmatpush.msra.mxu0 %v1931
    %2215 = vmatpush.msra.mxu0 %v1927
    %2216 = vmatpush.msra.mxu0 %v1923
    %2217 = vmatpush.msra.mxu0 %v1919
    %2218 = vmatpush.msra.mxu0 %v1915
    %2219 = vmatpush.msra.mxu0 %v1911
    %2220 = vmatpush.msra.mxu0 %v1907
    %2221 = vmatpush.msra.mxu0 %v1903
    %2222 = vmatpush.msra.mxu0 %v1899
    %2223 = vmatpush.msra.mxu0 %v1895
    %2224 = vmatpush.msra.mxu0 %v1891
    %2225 = vmatpush.msra.mxu0 %v1887
    %2226 = vmatpush.msra.mxu0 %v1883
    %2227 = vmatpush.msra.mxu0 %v1879
    %2228 = vmatpush.msra.mxu0 %v1875
    %2229 = vmatmul.f32.gmra.mxu0 %v1849
    %v2230 = vpop.f32.mrf.mxu0
    %v2231 = vadd.f32 0.0, %v2230
    %2232 = vmatmul.f32.gmra.mxu0 %v1851
    %v2233 = vpop.f32.mrf.mxu0
    %v2234 = vadd.f32 0.0, %v2233
    %2235 = vmatmul.f32.gmra.mxu0 %v1853
    %v2236 = vpop.f32.mrf.mxu0
    %v2237 = vadd.f32 0.0, %v2236
    %2238 = vmatmul.f32.gmra.mxu0 %v1855
    %v2239 = vpop.f32.mrf.mxu0
    %v2240 = vadd.f32 0.0, %v2239
    %2241 = vmatmul.f32.gmra.mxu0 %v1857
    %v2242 = vpop.f32.mrf.mxu0
    %v2243 = vadd.f32 0.0, %v2242
    %2244 = vmatmul.f32.gmra.mxu0 %v1859
    %v2245 = vpop.f32.mrf.mxu0
    %v2246 = vadd.f32 0.0, %v2245
    %2247 = vmatmul.f32.gmra.mxu0 %v1861
    %v2248 = vpop.f32.mrf.mxu0
    %v2249 = vadd.f32 0.0, %v2248
    %2250 = vmatmul.f32.gmra.mxu0 %v1863
    %v2251 = vpop.f32.mrf.mxu0
    %v2252 = vadd.f32 0.0, %v2251
    %2253 = vmatmul.f32.gmra.mxu0 %v1865
    %v2254 = vpop.f32.mrf.mxu0
    %v2255 = vadd.f32 0.0, %v2254
    %2256 = vmatmul.f32.gmra.mxu0 %v1867
    %v2257 = vpop.f32.mrf.mxu0
    %v2258 = vadd.f32 0.0, %v2257
    %2259 = vmatmul.f32.gmra.mxu0 %v1869
    %v2260 = vpop.f32.mrf.mxu0
    %v2261 = vadd.f32 0.0, %v2260
    %2262 = vmatmul.f32.gmra.mxu0 %v1871
    %v2263 = vpop.f32.mrf.mxu0
    %v2264 = vadd.f32 0.0, %v2263
    %2265 = vdwg.mxu0
    %2266 = vmatpush.msra.mxu0 %v1999
    %2267 = vmatpush.msra.mxu0 %v1995
    %2268 = vmatpush.msra.mxu0 %v1991
    %2269 = vmatpush.msra.mxu0 %v1987
    %2270 = vmatpush.msra.mxu0 %v1983
    %2271 = vmatpush.msra.mxu0 %v1979
    %2272 = vmatpush.msra.mxu0 %v1975
    %2273 = vmatpush.msra.mxu0 %v1971
    %2274 = vmatpush.msra.mxu0 %v1967
    %2275 = vmatpush.msra.mxu0 %v1963
    %2276 = vmatpush.msra.mxu0 %v1959
    %2277 = vmatpush.msra.mxu0 %v1955
    %2278 = vmatpush.msra.mxu0 %v1951
    %2279 = vmatpush.msra.mxu0 %v1947
    %2280 = vmatpush.msra.mxu0 %v1943
    %2281 = vmatpush.msra.mxu0 %v1939
    %2282 = vmatmul.f32.gmra.mxu0 %v1850
    %v2283 = vpop.f32.mrf.mxu0
    %v2284 = vadd.f32 %v2231, %v2283
    %2285 = vmatmul.f32.gmra.mxu0 %v1852
    %v2286 = vpop.f32.mrf.mxu0
    %v2287 = vadd.f32 %v2234, %v2286
    %2288 = vmatmul.f32.gmra.mxu0 %v1854
    %v2289 = vpop.f32.mrf.mxu0
    %v2290 = vadd.f32 %v2237, %v2289
    %2291 = vmatmul.f32.gmra.mxu0 %v1856
    %v2292 = vpop.f32.mrf.mxu0
    %v2293 = vadd.f32 %v2240, %v2292
    %2294 = vmatmul.f32.gmra.mxu0 %v1858
    %v2295 = vpop.f32.mrf.mxu0
    %v2296 = vadd.f32 %v2243, %v2295
    %2297 = vmatmul.f32.gmra.mxu0 %v1860
    %v2298 = vpop.f32.mrf.mxu0
    %v2299 = vadd.f32 %v2246, %v2298
    %2300 = vmatmul.f32.gmra.mxu0 %v1862
    %v2301 = vpop.f32.mrf.mxu0
    %v2302 = vadd.f32 %v2249, %v2301
    %2303 = vmatmul.f32.gmra.mxu0 %v1864
    %v2304 = vpop.f32.mrf.mxu0
    %v2305 = vadd.f32 %v2252, %v2304
    %2306 = vmatmul.f32.gmra.mxu0 %v1866
    %v2307 = vpop.f32.mrf.mxu0
    %v2308 = vadd.f32 %v2255, %v2307
    %2309 = vmatmul.f32.gmra.mxu0 %v1868
    %v2310 = vpop.f32.mrf.mxu0
    %v2311 = vadd.f32 %v2258, %v2310
    %2312 = vmatmul.f32.gmra.mxu0 %v1870
    %v2313 = vpop.f32.mrf.mxu0
    %v2314 = vadd.f32 %v2261, %v2313
    %2315 = vmatmul.f32.gmra.mxu0 %v1872
    %v2316 = vpop.f32.mrf.mxu0
    %v2317 = vadd.f32 %v2264, %v2316
    %2318 = vdwg.mxu0
    %2319 = vmatpush.msra.mxu0 %v1936
    %2320 = vmatpush.msra.mxu0 %v1932
    %2321 = vmatpush.msra.mxu0 %v1928
    %2322 = vmatpush.msra.mxu0 %v1924
    %2323 = vmatpush.msra.mxu0 %v1920
    %2324 = vmatpush.msra.mxu0 %v1916
    %2325 = vmatpush.msra.mxu0 %v1912
    %2326 = vmatpush.msra.mxu0 %v1908
    %2327 = vmatpush.msra.mxu0 %v1904
    %2328 = vmatpush.msra.mxu0 %v1900
    %2329 = vmatpush.msra.mxu0 %v1896
    %2330 = vmatpush.msra.mxu0 %v1892
    %2331 = vmatpush.msra.mxu0 %v1888
    %2332 = vmatpush.msra.mxu0 %v1884
    %2333 = vmatpush.msra.mxu0 %v1880
    %2334 = vmatpush.msra.mxu0 %v1876
    %2335 = vmatmul.f32.gmra.mxu0 %v1849
    %v2336 = vpop.f32.mrf.mxu0
    %v2337 = vadd.f32 0.0, %v2336
    %2338 = vmatmul.f32.gmra.mxu0 %v1851
    %v2339 = vpop.f32.mrf.mxu0
    %v2340 = vadd.f32 0.0, %v2339
    %2341 = vmatmul.f32.gmra.mxu0 %v1853
    %v2342 = vpop.f32.mrf.mxu0
    %v2343 = vadd.f32 0.0, %v2342
    %2344 = vmatmul.f32.gmra.mxu0 %v1855
    %v2345 = vpop.f32.mrf.mxu0
    %v2346 = vadd.f32 0.0, %v2345
    %2347 = vmatmul.f32.gmra.mxu0 %v1857
    %v2348 = vpop.f32.mrf.mxu0
    %v2349 = vadd.f32 0.0, %v2348
    %2350 = vmatmul.f32.gmra.mxu0 %v1859
    %v2351 = vpop.f32.mrf.mxu0
    %v2352 = vadd.f32 0.0, %v2351
    %2353 = vmatmul.f32.gmra.mxu0 %v1861
    %v2354 = vpop.f32.mrf.mxu0
    %v2355 = vadd.f32 0.0, %v2354
    %2356 = vmatmul.f32.gmra.mxu0 %v1863
    %v2357 = vpop.f32.mrf.mxu0
    %v2358 = vadd.f32 0.0, %v2357
    %2359 = vmatmul.f32.gmra.mxu0 %v1865
    %v2360 = vpop.f32.mrf.mxu0
    %v2361 = vadd.f32 0.0, %v2360
    %2362 = vmatmul.f32.gmra.mxu0 %v1867
    %v2363 = vpop.f32.mrf.mxu0
    %v2364 = vadd.f32 0.0, %v2363
    %2365 = vmatmul.f32.gmra.mxu0 %v1869
    %v2366 = vpop.f32.mrf.mxu0
    %v2367 = vadd.f32 0.0, %v2366
    %2368 = vmatmul.f32.gmra.mxu0 %v1871
    %v2369 = vpop.f32.mrf.mxu0
    %v2370 = vadd.f32 0.0, %v2369
    %2371 = vdwg.mxu0
    %2372 = vmatpush.msra.mxu0 %v2000
    %2373 = vmatpush.msra.mxu0 %v1996
    %2374 = vmatpush.msra.mxu0 %v1992
    %2375 = vmatpush.msra.mxu0 %v1988
    %2376 = vmatpush.msra.mxu0 %v1984
    %2377 = vmatpush.msra.mxu0 %v1980
    %2378 = vmatpush.msra.mxu0 %v1976
    %2379 = vmatpush.msra.mxu0 %v1972
    %2380 = vmatpush.msra.mxu0 %v1968
    %2381 = vmatpush.msra.mxu0 %v1964
    %2382 = vmatpush.msra.mxu0 %v1960
    %2383 = vmatpush.msra.mxu0 %v1956
    %2384 = vmatpush.msra.mxu0 %v1952
    %2385 = vmatpush.msra.mxu0 %v1948
    %2386 = vmatpush.msra.mxu0 %v1944
    %2387 = vmatpush.msra.mxu0 %v1940
    %2388 = vmatmul.f32.gmra.mxu0 %v1850
    %v2389 = vpop.f32.mrf.mxu0
    %v2390 = vadd.f32 %v2337, %v2389
    %2391 = vmatmul.f32.gmra.mxu0 %v1852
    %v2392 = vpop.f32.mrf.mxu0
    %v2393 = vadd.f32 %v2340, %v2392
    %2394 = vmatmul.f32.gmra.mxu0 %v1854
    %v2395 = vpop.f32.mrf.mxu0
    %v2396 = vadd.f32 %v2343, %v2395
    %2397 = vmatmul.f32.gmra.mxu0 %v1856
    %v2398 = vpop.f32.mrf.mxu0
    %v2399 = vadd.f32 %v2346, %v2398
    %2400 = vmatmul.f32.gmra.mxu0 %v1858
    %v2401 = vpop.f32.mrf.mxu0
    %v2402 = vadd.f32 %v2349, %v2401
    %2403 = vmatmul.f32.gmra.mxu0 %v1860
    %v2404 = vpop.f32.mrf.mxu0
    %v2405 = vadd.f32 %v2352, %v2404
    %2406 = vmatmul.f32.gmra.mxu0 %v1862
    %v2407 = vpop.f32.mrf.mxu0
    %v2408 = vadd.f32 %v2355, %v2407
    %2409 = vmatmul.f32.gmra.mxu0 %v1864
    %v2410 = vpop.f32.mrf.mxu0
    %v2411 = vadd.f32 %v2358, %v2410
    %2412 = vmatmul.f32.gmra.mxu0 %v1866
    %v2413 = vpop.f32.mrf.mxu0
    %v2414 = vadd.f32 %v2361, %v2413
    %2415 = vmatmul.f32.gmra.mxu0 %v1868
    %v2416 = vpop.f32.mrf.mxu0
    %v2417 = vadd.f32 %v2364, %v2416
    %2418 = vmatmul.f32.gmra.mxu0 %v1870
    %v2419 = vpop.f32.mrf.mxu0
    %v2420 = vadd.f32 %v2367, %v2419
    %2421 = vmatmul.f32.gmra.mxu0 %v1872
    %v2422 = vpop.f32.mrf.mxu0
    %v2423 = vadd.f32 %v2370, %v2422
    %2424 = vdwg.mxu0
    %2425 = vst [vmem:[#allocation2] sm:$0xff] %v2072
    %2426 = vst [vmem:[#allocation2 + $0x8] sm:$0xff] %v2178
    %2427 = vst [vmem:[#allocation2 + $0x10] sm:$0xff] %v2284
    %2428 = vst [vmem:[#allocation2 + $0x18] sm:$0xff] %v2390
    %2429 = vst [vmem:[#allocation2 + $0x20] sm:$0xff] %v2075
    %2430 = vst [vmem:[#allocation2 + $0x28] sm:$0xff] %v2181
    %2431 = vst [vmem:[#allocation2 + $0x30] sm:$0xff] %v2287
    %2432 = vst [vmem:[#allocation2 + $0x38] sm:$0xff] %v2393
    %2433 = vst [vmem:[#allocation2 + $0x40] sm:$0xff] %v2078
    %2434 = vst [vmem:[#allocation2 + $0x48] sm:$0xff] %v2184
    %2435 = vst [vmem:[#allocation2 + $0x50] sm:$0xff] %v2290
    %2436 = vst [vmem:[#allocation2 + $0x58] sm:$0xff] %v2396
    %2437 = vst [vmem:[#allocation2 + $0x60] sm:$0xff] %v2081
    %2438 = vst [vmem:[#allocation2 + $0x68] sm:$0xff] %v2187
    %2439 = vst [vmem:[#allocation2 + $0x70] sm:$0xff] %v2293
    %2440 = vst [vmem:[#allocation2 + $0x78] sm:$0xff] %v2399
    %2441 = vst [vmem:[#allocation2 + $0x80] sm:$0xff] %v2084
    %2442 = vst [vmem:[#allocation2 + $0x88] sm:$0xff] %v2190
    %2443 = vst [vmem:[#allocation2 + $0x90] sm:$0xff] %v2296
    %2444 = vst [vmem:[#allocation2 + $0x98] sm:$0xff] %v2402
    %2445 = vst [vmem:[#allocation2 + $0xa0] sm:$0xff] %v2087
    %2446 = vst [vmem:[#allocation2 + $0xa8] sm:$0xff] %v2193
    %2447 = vst [vmem:[#allocation2 + $0xb0] sm:$0xff] %v2299
    %2448 = vst [vmem:[#allocation2 + $0xb8] sm:$0xff] %v2405
    %2449 = vst [vmem:[#allocation2 + $0xc0] sm:$0xff] %v2090
    %2450 = vst [vmem:[#allocation2 + $0xc8] sm:$0xff] %v2196
    %2451 = vst [vmem:[#allocation2 + $0xd0] sm:$0xff] %v2302
    %2452 = vst [vmem:[#allocation2 + $0xd8] sm:$0xff] %v2408
    %2453 = vst [vmem:[#allocation2 + $0xe0] sm:$0xff] %v2093
    %2454 = vst [vmem:[#allocation2 + $0xe8] sm:$0xff] %v2199
    %2455 = vst [vmem:[#allocation2 + $0xf0] sm:$0xff] %v2305
    %2456 = vst [vmem:[#allocation2 + $0xf8] sm:$0xff] %v2411
    %2457 = vst [vmem:[#allocation2 + $0x100] sm:$0xff] %v2096
    %2458 = vst [vmem:[#allocation2 + $0x108] sm:$0xff] %v2202
    %2459 = vst [vmem:[#allocation2 + $0x110] sm:$0xff] %v2308
    %2460 = vst [vmem:[#allocation2 + $0x118] sm:$0xff] %v2414
    %2461 = vst [vmem:[#allocation2 + $0x120] sm:$0xff] %v2099
    %2462 = vst [vmem:[#allocation2 + $0x128] sm:$0xff] %v2205
    %2463 = vst [vmem:[#allocation2 + $0x130] sm:$0xff] %v2311
    %2464 = vst [vmem:[#allocation2 + $0x138] sm:$0xff] %v2417
    %2465 = vst [vmem:[#allocation2 + $0x140] sm:$0xff] %v2102
    %2466 = vst [vmem:[#allocation2 + $0x148] sm:$0xff] %v2208
    %2467 = vst [vmem:[#allocation2 + $0x150] sm:$0xff] %v2314
    %2468 = vst [vmem:[#allocation2 + $0x158] sm:$0xff] %v2420
    %2469 = vst [vmem:[#allocation2 + $0x160] sm:$0xff] %v2105
    %2470 = vst [vmem:[#allocation2 + $0x168] sm:$0xff] %v2211
    %2471 = vst [vmem:[#allocation2 + $0x170] sm:$0xff] %v2317
    %2472 = vst [vmem:[#allocation2 + $0x178] sm:$0xff] %v2423
    %v2473 = vld [vmem:[#allocation12] sm:$0xff]
    %v2474 = vld [vmem:[#allocation12 + $0x8] sm:$0xff]
    %v2475 = vld [vmem:[#allocation12 + $0x10] sm:$0xff]
    %v2476 = vld [vmem:[#allocation12 + $0x18] sm:$0xff]
    %v2477 = vld [vmem:[#allocation12 + $0x20] sm:$0xff]
    %v2478 = vld [vmem:[#allocation12 + $0x28] sm:$0xff]
    %v2479 = vld [vmem:[#allocation12 + $0x30] sm:$0xff]
    %v2480 = vld [vmem:[#allocation12 + $0x38] sm:$0xff]
    %v2481 = vld [vmem:[#allocation12 + $0x40] sm:$0xff]
    %v2482 = vld [vmem:[#allocation12 + $0x48] sm:$0xff]
    %v2483 = vld [vmem:[#allocation12 + $0x50] sm:$0xff]
    %v2484 = vld [vmem:[#allocation12 + $0x58] sm:$0xff]
    %v2485 = vld [vmem:[#allocation12 + $0x60] sm:$0xff]
    %v2486 = vld [vmem:[#allocation12 + $0x68] sm:$0xff]
    %v2487 = vld [vmem:[#allocation12 + $0x70] sm:$0xff]
    %v2488 = vld [vmem:[#allocation12 + $0x78] sm:$0xff]
    %v2489 = vld [vmem:[#allocation12 + $0x80] sm:$0xff]
    %v2490 = vld [vmem:[#allocation12 + $0x88] sm:$0xff]
    %v2491 = vld [vmem:[#allocation12 + $0x90] sm:$0xff]
    %v2492 = vld [vmem:[#allocation12 + $0x98] sm:$0xff]
    %v2493 = vld [vmem:[#allocation12 + $0xa0] sm:$0xff]
    %v2494 = vld [vmem:[#allocation12 + $0xa8] sm:$0xff]
    %v2495 = vld [vmem:[#allocation12 + $0xb0] sm:$0xff]
    %v2496 = vld [vmem:[#allocation12 + $0xb8] sm:$0xff]
    %v2497 = vld [vmem:[#allocation12 + $0xc0] sm:$0xff]
    %v2498 = vld [vmem:[#allocation12 + $0xc8] sm:$0xff]
    %v2499 = vld [vmem:[#allocation12 + $0xd0] sm:$0xff]
    %v2500 = vld [vmem:[#allocation12 + $0xd8] sm:$0xff]
    %v2501 = vld [vmem:[#allocation12 + $0xe0] sm:$0xff]
    %v2502 = vld [vmem:[#allocation12 + $0xe8] sm:$0xff]
    %v2503 = vld [vmem:[#allocation12 + $0xf0] sm:$0xff]
    %v2504 = vld [vmem:[#allocation12 + $0xf8] sm:$0xff]
    %v2505 = vld [vmem:[#allocation12 + $0x100] sm:$0xff]
    %v2506 = vld [vmem:[#allocation12 + $0x108] sm:$0xff]
    %v2507 = vld [vmem:[#allocation12 + $0x110] sm:$0xff]
    %v2508 = vld [vmem:[#allocation12 + $0x118] sm:$0xff]
    %v2509 = vld [vmem:[#allocation12 + $0x120] sm:$0xff]
    %v2510 = vld [vmem:[#allocation12 + $0x128] sm:$0xff]
    %v2511 = vld [vmem:[#allocation12 + $0x130] sm:$0xff]
    %v2512 = vld [vmem:[#allocation12 + $0x138] sm:$0xff]
    %v2513 = vld [vmem:[#allocation12 + $0x140] sm:$0xff]
    %v2514 = vld [vmem:[#allocation12 + $0x148] sm:$0xff]
    %v2515 = vld [vmem:[#allocation12 + $0x150] sm:$0xff]
    %v2516 = vld [vmem:[#allocation12 + $0x158] sm:$0xff]
    %v2517 = vld [vmem:[#allocation12 + $0x160] sm:$0xff]
    %v2518 = vld [vmem:[#allocation12 + $0x168] sm:$0xff]
    %v2519 = vld [vmem:[#allocation12 + $0x170] sm:$0xff]
    %v2520 = vld [vmem:[#allocation12 + $0x178] sm:$0xff]
    %v2521 = vld [vmem:[#allocation12 + $0x180] sm:$0xff]
    %v2522 = vld [vmem:[#allocation12 + $0x188] sm:$0xff]
    %v2523 = vld [vmem:[#allocation12 + $0x190] sm:$0xff]
    %v2524 = vld [vmem:[#allocation12 + $0x198] sm:$0xff]
    %v2525 = vld [vmem:[#allocation12 + $0x1a0] sm:$0xff]
    %v2526 = vld [vmem:[#allocation12 + $0x1a8] sm:$0xff]
    %v2527 = vld [vmem:[#allocation12 + $0x1b0] sm:$0xff]
    %v2528 = vld [vmem:[#allocation12 + $0x1b8] sm:$0xff]
    %v2529 = vld [vmem:[#allocation12 + $0x1c0] sm:$0xff]
    %v2530 = vld [vmem:[#allocation12 + $0x1c8] sm:$0xff]
    %v2531 = vld [vmem:[#allocation12 + $0x1d0] sm:$0xff]
    %v2532 = vld [vmem:[#allocation12 + $0x1d8] sm:$0xff]
    %v2533 = vld [vmem:[#allocation12 + $0x1e0] sm:$0xff]
    %v2534 = vld [vmem:[#allocation12 + $0x1e8] sm:$0xff]
    %v2535 = vld [vmem:[#allocation12 + $0x1f0] sm:$0xff]
    %v2536 = vld [vmem:[#allocation12 + $0x1f8] sm:$0xff]
    %2537 = vst [vmem:[#allocation4] sm:$0xff] 0.0
    %2538 = vst [vmem:[#allocation4 + $0x8] sm:$0xff] 0.0
    %v2539 = vld [vmem:[#allocation2] sm:$0xff]
    %v2540 = vld [vmem:[#allocation2 + $0x8] sm:$0xff]
    %v2541 = vld [vmem:[#allocation2 + $0x10] sm:$0xff]
    %v2542 = vld [vmem:[#allocation2 + $0x18] sm:$0xff]
    %2543 = vmatpush.msra.mxu0 %v2533
    %2544 = vmatpush.msra.mxu0 %v2529
    %2545 = vmatpush.msra.mxu0 %v2525
    %2546 = vmatpush.msra.mxu0 %v2521
    %2547 = vmatpush.msra.mxu0 %v2517
    %2548 = vmatpush.msra.mxu0 %v2513
    %2549 = vmatpush.msra.mxu0 %v2509
    %2550 = vmatpush.msra.mxu0 %v2505
    %2551 = vmatpush.msra.mxu0 %v2501
    %2552 = vmatpush.msra.mxu0 %v2497
    %2553 = vmatpush.msra.mxu0 %v2493
    %2554 = vmatpush.msra.mxu0 %v2489
    %2555 = vmatpush.msra.mxu0 %v2485
    %2556 = vmatpush.msra.mxu0 %v2481
    %2557 = vmatpush.msra.mxu0 %v2477
    %2558 = vmatpush.msra.mxu0 %v2473
    %2559 = vmatmul.f32.gmra.mxu0 0.0
    %v2560 = vpop.f32.mrf.mxu0
    %v2561 = vadd.f32 0.0, %v2560
    %2562 = vdwg.mxu0
    %2563 = vmatpush.msra.mxu0 %v2534
    %2564 = vmatpush.msra.mxu0 %v2530
    %2565 = vmatpush.msra.mxu0 %v2526
    %2566 = vmatpush.msra.mxu0 %v2522
    %2567 = vmatpush.msra.mxu0 %v2518
    %2568 = vmatpush.msra.mxu0 %v2514
    %2569 = vmatpush.msra.mxu0 %v2510
    %2570 = vmatpush.msra.mxu0 %v2506
    %2571 = vmatpush.msra.mxu0 %v2502
    %2572 = vmatpush.msra.mxu0 %v2498
    %2573 = vmatpush.msra.mxu0 %v2494
    %2574 = vmatpush.msra.mxu0 %v2490
    %2575 = vmatpush.msra.mxu0 %v2486
    %2576 = vmatpush.msra.mxu0 %v2482
    %2577 = vmatpush.msra.mxu0 %v2478
    %2578 = vmatpush.msra.mxu0 %v2474
    %2579 = vmatmul.f32.gmra.mxu0 0.0
    %v2580 = vpop.f32.mrf.mxu0
    %v2581 = vadd.f32 0.0, %v2580
    %2582 = vdwg.mxu0
    %2583 = vmatpush.msra.mxu0 %v2535
    %2584 = vmatpush.msra.mxu0 %v2531
    %2585 = vmatpush.msra.mxu0 %v2527
    %2586 = vmatpush.msra.mxu0 %v2523
    %2587 = vmatpush.msra.mxu0 %v2519
    %2588 = vmatpush.msra.mxu0 %v2515
    %2589 = vmatpush.msra.mxu0 %v2511
    %2590 = vmatpush.msra.mxu0 %v2507
    %2591 = vmatpush.msra.mxu0 %v2503
    %2592 = vmatpush.msra.mxu0 %v2499
    %2593 = vmatpush.msra.mxu0 %v2495
    %2594 = vmatpush.msra.mxu0 %v2491
    %2595 = vmatpush.msra.mxu0 %v2487
    %2596 = vmatpush.msra.mxu0 %v2483
    %2597 = vmatpush.msra.mxu0 %v2479
    %2598 = vmatpush.msra.mxu0 %v2475
    %2599 = vmatmul.f32.gmra.mxu0 0.0
    %v2600 = vpop.f32.mrf.mxu0
    %v2601 = vadd.f32 0.0, %v2600
    %2602 = vdwg.mxu0
    %2603 = vmatpush.msra.mxu0 %v2536
    %2604 = vmatpush.msra.mxu0 %v2532
    %2605 = vmatpush.msra.mxu0 %v2528
    %2606 = vmatpush.msra.mxu0 %v2524
    %2607 = vmatpush.msra.mxu0 %v2520
    %2608 = vmatpush.msra.mxu0 %v2516
    %2609 = vmatpush.msra.mxu0 %v2512
    %2610 = vmatpush.msra.mxu0 %v2508
    %2611 = vmatpush.msra.mxu0 %v2504
    %2612 = vmatpush.msra.mxu0 %v2500
    %2613 = vmatpush.msra.mxu0 %v2496
    %2614 = vmatpush.msra.mxu0 %v2492
    %2615 = vmatpush.msra.mxu0 %v2488
    %2616 = vmatpush.msra.mxu0 %v2484
    %2617 = vmatpush.msra.mxu0 %v2480
    %2618 = vmatpush.msra.mxu0 %v2476
    %2619 = vmatmul.f32.gmra.mxu0 0.0
    %v2620 = vpop.f32.mrf.mxu0
    %v2621 = vadd.f32 0.0, %v2620
    %2622 = vdwg.mxu0
    %v2623 = vadd.f32 %v2539, %v2561
    %v2624 = vadd.f32 %v2540, %v2581
    %v2625 = vadd.f32 %v2541, %v2601
    %v2626 = vadd.f32 %v2542, %v2621
    %v2627 = vmul.f32 %v2623, 0.5
    %v2628 = vmul.f32 %v2624, 0.5
    %v2629 = vmul.f32 %v2625, 0.5
    %v2630 = vtanh.pop %v2627
    %v2631 = vtanh.pop %v2628
    %v2632 = vtanh.pop %v2629
    %v2633 = vmul.f32 %v2630, 0.5
    %v2634 = vmul.f32 %v2631, 0.5
    %v2635 = vmul.f32 %v2632, 0.5
    %v2636 = vadd.f32 %v2633, 0.5
    %v2637 = vadd.f32 %v2634, 0.5
    %v2638 = vadd.f32 %v2635, 0.5
    %v2639 = vtanh.pop %v2626
    %v2640 = vmul.f32 %v2637, 0.0
    %v2641 = vmul.f32 %v2636, %v2639
    %v2642 = vadd.f32 %v2640, %v2641
    %v2643 = vtanh.pop %v2642
    %v2644 = vmul.f32 %v2638, %v2643
    %v2645 = vld [vmem:[#allocation4] sm:$0xff]
    %v2646 = vld [vmem:[#allocation4 + $0x8] sm:$0xff]
    %v2647 = vtanh.pop %v2644
    %v2648 = vld [vmem:[#allocation14] sm:$0xff]
    %v2649 = vld [vmem:[#allocation14 + $0x8] sm:$0xff]
    %v2650 = vld [vmem:[#allocation14 + $0x10] sm:$0xff]
    %v2651 = vld [vmem:[#allocation14 + $0x18] sm:$0xff]
    %v2652 = vld [vmem:[#allocation14 + $0x20] sm:$0xff]
    %v2653 = vld [vmem:[#allocation14 + $0x28] sm:$0xff]
    %v2654 = vld [vmem:[#allocation14 + $0x30] sm:$0xff]
    %v2655 = vld [vmem:[#allocation14 + $0x38] sm:$0xff]
    %v2656 = vld [vmem:[#allocation14 + $0x40] sm:$0xff]
    %v2657 = vld [vmem:[#allocation14 + $0x48] sm:$0xff]
    %v2658 = vld [vmem:[#allocation14 + $0x50] sm:$0xff]
    %v2659 = vld [vmem:[#allocation14 + $0x58] sm:$0xff]
    %v2660 = vld [vmem:[#allocation14 + $0x60] sm:$0xff]
    %v2661 = vld [vmem:[#allocation14 + $0x68] sm:$0xff]
    %v2662 = vld [vmem:[#allocation14 + $0x70] sm:$0xff]
    %v2663 = vld [vmem:[#allocation14 + $0x78] sm:$0xff]
    %v2664 = vld [vmem:[#allocation14 + $0x80] sm:$0xff]
    %v2665 = vld [vmem:[#allocation14 + $0x88] sm:$0xff]
    %v2666 = vld [vmem:[#allocation14 + $0x90] sm:$0xff]
    %v2667 = vld [vmem:[#allocation14 + $0x98] sm:$0xff]
    %v2668 = vld [vmem:[#allocation14 + $0xa0] sm:$0xff]
    %v2669 = vld [vmem:[#allocation14 + $0xa8] sm:$0xff]
    %v2670 = vld [vmem:[#allocation14 + $0xb0] sm:$0xff]
    %v2671 = vld [vmem:[#allocation14 + $0xb8] sm:$0xff]
    %v2672 = vld [vmem:[#allocation14 + $0xc0] sm:$0xff]
    %v2673 = vld [vmem:[#allocation14 + $0xc8] sm:$0xff]
    %v2674 = vld [vmem:[#allocation14 + $0xd0] sm:$0xff]
    %v2675 = vld [vmem:[#allocation14 + $0xd8] sm:$0xff]
    %v2676 = vld [vmem:[#allocation14 + $0xe0] sm:$0xff]
    %v2677 = vld [vmem:[#allocation14 + $0xe8] sm:$0xff]
    %v2678 = vld [vmem:[#allocation14 + $0xf0] sm:$0xff]
    %v2679 = vld [vmem:[#allocation14 + $0xf8] sm:$0xff]
    %2680 = vmatpush.msra.mxu0 %v2678
    %2681 = vmatpush.msra.mxu0 %v2676
    %2682 = vmatpush.msra.mxu0 %v2674
    %2683 = vmatpush.msra.mxu0 %v2672
    %2684 = vmatpush.msra.mxu0 %v2670
    %2685 = vmatpush.msra.mxu0 %v2668
    %2686 = vmatpush.msra.mxu0 %v2666
    %2687 = vmatpush.msra.mxu0 %v2664
    %2688 = vmatpush.msra.mxu0 %v2662
    %2689 = vmatpush.msra.mxu0 %v2660
    %2690 = vmatpush.msra.mxu0 %v2658
    %2691 = vmatpush.msra.mxu0 %v2656
    %2692 = vmatpush.msra.mxu0 %v2654
    %2693 = vmatpush.msra.mxu0 %v2652
    %2694 = vmatpush.msra.mxu0 %v2650
    %2695 = vmatpush.msra.mxu0 %v2648
    %2696 = vmatmul.f32.gmra.mxu0 %v2647
    %v2697 = vpop.f32.mrf.mxu0
    %v2698 = vadd.f32 0.0, %v2697
    %2699 = vdwg.mxu0
    %2700 = vmatpush.msra.mxu0 %v2679
    %2701 = vmatpush.msra.mxu0 %v2677
    %2702 = vmatpush.msra.mxu0 %v2675
    %2703 = vmatpush.msra.mxu0 %v2673
    %2704 = vmatpush.msra.mxu0 %v2671
    %2705 = vmatpush.msra.mxu0 %v2669
    %2706 = vmatpush.msra.mxu0 %v2667
    %2707 = vmatpush.msra.mxu0 %v2665
    %2708 = vmatpush.msra.mxu0 %v2663
    %2709 = vmatpush.msra.mxu0 %v2661
    %2710 = vmatpush.msra.mxu0 %v2659
    %2711 = vmatpush.msra.mxu0 %v2657
    %2712 = vmatpush.msra.mxu0 %v2655
    %2713 = vmatpush.msra.mxu0 %v2653
    %2714 = vmatpush.msra.mxu0 %v2651
    %2715 = vmatpush.msra.mxu0 %v2649
    %2716 = vmatmul.f32.gmra.mxu0 %v2647
    %v2717 = vpop.f32.mrf.mxu0
    %v2718 = vadd.f32 0.0, %v2717
    %2719 = vdwg.mxu0
    %v2720 = vadd.f32 %v2645, %v2698
    %v2721 = vadd.f32 %v2646, %v2718
    %2722 = vst [vmem:[#allocation4] sm:$0xff] %v2720
    %2723 = vst [vmem:[#allocation4 + $0x8] sm:$0xff] %v2721
    %v2724 = vld [vmem:[%s640] sm:$0xff]
    %v2725 = vld [vmem:[%s640 + $0x8] sm:$0xff]
    %v2726 = vld [vmem:[%s640 + $0x10] sm:$0xff]
    %v2727 = vld [vmem:[%s640 + $0x18] sm:$0xff]
    %2728 = vmatpush.msra.mxu0 %v2533
    %2729 = vmatpush.msra.mxu0 %v2529
    %2730 = vmatpush.msra.mxu0 %v2525
    %2731 = vmatpush.msra.mxu0 %v2521
    %2732 = vmatpush.msra.mxu0 %v2517
    %2733 = vmatpush.msra.mxu0 %v2513
    %2734 = vmatpush.msra.mxu0 %v2509
    %2735 = vmatpush.msra.mxu0 %v2505
    %2736 = vmatpush.msra.mxu0 %v2501
    %2737 = vmatpush.msra.mxu0 %v2497
    %2738 = vmatpush.msra.mxu0 %v2493
    %2739 = vmatpush.msra.mxu0 %v2489
    %2740 = vmatpush.msra.mxu0 %v2485
    %2741 = vmatpush.msra.mxu0 %v2481
    %2742 = vmatpush.msra.mxu0 %v2477
    %2743 = vmatpush.msra.mxu0 %v2473
    %2744 = vmatmul.f32.gmra.mxu0 %v2644
    %v2745 = vpop.f32.mrf.mxu0
    %v2746 = vadd.f32 0.0, %v2745
    %2747 = vdwg.mxu0
    %2748 = vmatpush.msra.mxu0 %v2534
    %2749 = vmatpush.msra.mxu0 %v2530
    %2750 = vmatpush.msra.mxu0 %v2526
    %2751 = vmatpush.msra.mxu0 %v2522
    %2752 = vmatpush.msra.mxu0 %v2518
    %2753 = vmatpush.msra.mxu0 %v2514
    %2754 = vmatpush.msra.mxu0 %v2510
    %2755 = vmatpush.msra.mxu0 %v2506
    %2756 = vmatpush.msra.mxu0 %v2502
    %2757 = vmatpush.msra.mxu0 %v2498
    %2758 = vmatpush.msra.mxu0 %v2494
    %2759 = vmatpush.msra.mxu0 %v2490
    %2760 = vmatpush.msra.mxu0 %v2486
    %2761 = vmatpush.msra.mxu0 %v2482
    %2762 = vmatpush.msra.mxu0 %v2478
    %2763 = vmatpush.msra.mxu0 %v2474
    %2764 = vmatmul.f32.gmra.mxu0 %v2644
    %v2765 = vpop.f32.mrf.mxu0
    %v2766 = vadd.f32 0.0, %v2765
    %2767 = vdwg.mxu0
    %2768 = vmatpush.msra.mxu0 %v2535
    %2769 = vmatpush.msra.mxu0 %v2531
    %2770 = vmatpush.msra.mxu0 %v2527
    %2771 = vmatpush.msra.mxu0 %v2523
    %2772 = vmatpush.msra.mxu0 %v2519
    %2773 = vmatpush.msra.mxu0 %v2515
    %2774 = vmatpush.msra.mxu0 %v2511
    %2775 = vmatpush.msra.mxu0 %v2507
    %2776 = vmatpush.msra.mxu0 %v2503
    %2777 = vmatpush.msra.mxu0 %v2499
    %2778 = vmatpush.msra.mxu0 %v2495
    %2779 = vmatpush.msra.mxu0 %v2491
    %2780 = vmatpush.msra.mxu0 %v2487
    %2781 = vmatpush.msra.mxu0 %v2483
    %2782 = vmatpush.msra.mxu0 %v2479
    %2783 = vmatpush.msra.mxu0 %v2475
    %2784 = vmatmul.f32.gmra.mxu0 %v2644
    %v2785 = vpop.f32.mrf.mxu0
    %v2786 = vadd.f32 0.0, %v2785
    %2787 = vdwg.mxu0
    %2788 = vmatpush.msra.mxu0 %v2536
    %2789 = vmatpush.msra.mxu0 %v2532
    %2790 = vmatpush.msra.mxu0 %v2528
    %2791 = vmatpush.msra.mxu0 %v2524
    %2792 = vmatpush.msra.mxu0 %v2520
    %2793 = vmatpush.msra.mxu0 %v2516
    %2794 = vmatpush.msra.mxu0 %v2512
    %2795 = vmatpush.msra.mxu0 %v2508
    %2796 = vmatpush.msra.mxu0 %v2504
    %2797 = vmatpush.msra.mxu0 %v2500
    %2798 = vmatpush.msra.mxu0 %v2496
    %2799 = vmatpush.msra.mxu0 %v2492
    %2800 = vmatpush.msra.mxu0 %v2488
    %2801 = vmatpush.msra.mxu0 %v2484
    %2802 = vmatpush.msra.mxu0 %v2480
    %2803 = vmatpush.msra.mxu0 %v2476
    %2804 = vmatmul.f32.gmra.mxu0 %v2644
    %v2805 = vpop.f32.mrf.mxu0
    %v2806 = vadd.f32 0.0, %v2805
    %2807 = vdwg.mxu0
    %v2808 = vadd.f32 %v2724, %v2746
    %v2809 = vadd.f32 %v2725, %v2766
    %v2810 = vadd.f32 %v2726, %v2786
    %v2811 = vadd.f32 %v2727, %v2806
    %v2812 = vmul.f32 %v2808, 0.5
    %v2813 = vmul.f32 %v2809, 0.5
    %v2814 = vmul.f32 %v2810, 0.5
    %v2815 = vtanh.pop %v2812
    %v2816 = vtanh.pop %v2813
    %v2817 = vtanh.pop %v2814
    %v2818 = vmul.f32 %v2815, 0.5
    %v2819 = vmul.f32 %v2816, 0.5
    %v2820 = vmul.f32 %v2817, 0.5
    %v2821 = vadd.f32 %v2818, 0.5
    %v2822 = vadd.f32 %v2819, 0.5
    %v2823 = vadd.f32 %v2820, 0.5
    %v2824 = vtanh.pop %v2811
    %v2825 = vmul.f32 %v2822, %v2642
    %v2826 = vmul.f32 %v2821, %v2824
    %v2827 = vadd.f32 %v2825, %v2826
    %v2828 = vtanh.pop %v2827
    %v2829 = vmul.f32 %v2823, %v2828
    %v2830 = vld [vmem:[#allocation4] sm:$0xff]
    %v2831 = vld [vmem:[#allocation4 + $0x8] sm:$0xff]
    %v2832 = vtanh.pop %v2829
    %s2833 = scalar_lea.vmem [#allocation14], 256
    %v2834 = vld [vmem:[%s2833] sm:$0xff]
    %v2835 = vld [vmem:[%s2833 + $0x8] sm:$0xff]
    %v2836 = vld [vmem:[%s2833 + $0x10] sm:$0xff]
    %v2837 = vld [vmem:[%s2833 + $0x18] sm:$0xff]
    %v2838 = vld [vmem:[%s2833 + $0x20] sm:$0xff]
    %v2839 = vld [vmem:[%s2833 + $0x28] sm:$0xff]
    %v2840 = vld [vmem:[%s2833 + $0x30] sm:$0xff]
    %v2841 = vld [vmem:[%s2833 + $0x38] sm:$0xff]
    %v2842 = vld [vmem:[%s2833 + $0x40] sm:$0xff]
    %v2843 = vld [vmem:[%s2833 + $0x48] sm:$0xff]
    %v2844 = vld [vmem:[%s2833 + $0x50] sm:$0xff]
    %v2845 = vld [vmem:[%s2833 + $0x58] sm:$0xff]
    %v2846 = vld [vmem:[%s2833 + $0x60] sm:$0xff]
    %v2847 = vld [vmem:[%s2833 + $0x68] sm:$0xff]
    %v2848 = vld [vmem:[%s2833 + $0x70] sm:$0xff]
    %v2849 = vld [vmem:[%s2833 + $0x78] sm:$0xff]
    %v2850 = vld [vmem:[%s2833 + $0x80] sm:$0xff]
    %v2851 = vld [vmem:[%s2833 + $0x88] sm:$0xff]
    %v2852 = vld [vmem:[%s2833 + $0x90] sm:$0xff]
    %v2853 = vld [vmem:[%s2833 + $0x98] sm:$0xff]
    %v2854 = vld [vmem:[%s2833 + $0xa0] sm:$0xff]
    %v2855 = vld [vmem:[%s2833 + $0xa8] sm:$0xff]
    %v2856 = vld [vmem:[%s2833 + $0xb0] sm:$0xff]
    %v2857 = vld [vmem:[%s2833 + $0xb8] sm:$0xff]
    %v2858 = vld [vmem:[%s2833 + $0xc0] sm:$0xff]
    %v2859 = vld [vmem:[%s2833 + $0xc8] sm:$0xff]
    %v2860 = vld [vmem:[%s2833 + $0xd0] sm:$0xff]
    %v2861 = vld [vmem:[%s2833 + $0xd8] sm:$0xff]
    %v2862 = vld [vmem:[%s2833 + $0xe0] sm:$0xff]
    %v2863 = vld [vmem:[%s2833 + $0xe8] sm:$0xff]
    %v2864 = vld [vmem:[%s2833 + $0xf0] sm:$0xff]
    %v2865 = vld [vmem:[%s2833 + $0xf8] sm:$0xff]
    %2866 = vmatpush.msra.mxu0 %v2864
    %2867 = vmatpush.msra.mxu0 %v2862
    %2868 = vmatpush.msra.mxu0 %v2860
    %2869 = vmatpush.msra.mxu0 %v2858
    %2870 = vmatpush.msra.mxu0 %v2856
    %2871 = vmatpush.msra.mxu0 %v2854
    %2872 = vmatpush.msra.mxu0 %v2852
    %2873 = vmatpush.msra.mxu0 %v2850
    %2874 = vmatpush.msra.mxu0 %v2848
    %2875 = vmatpush.msra.mxu0 %v2846
    %2876 = vmatpush.msra.mxu0 %v2844
    %2877 = vmatpush.msra.mxu0 %v2842
    %2878 = vmatpush.msra.mxu0 %v2840
    %2879 = vmatpush.msra.mxu0 %v2838
    %2880 = vmatpush.msra.mxu0 %v2836
    %2881 = vmatpush.msra.mxu0 %v2834
    %2882 = vmatmul.f32.gmra.mxu0 %v2832
    %v2883 = vpop.f32.mrf.mxu0
    %v2884 = vadd.f32 0.0, %v2883
    %2885 = vdwg.mxu0
    %2886 = vmatpush.msra.mxu0 %v2865
    %2887 = vmatpush.msra.mxu0 %v2863
    %2888 = vmatpush.msra.mxu0 %v2861
    %2889 = vmatpush.msra.mxu0 %v2859
    %2890 = vmatpush.msra.mxu0 %v2857
    %2891 = vmatpush.msra.mxu0 %v2855
    %2892 = vmatpush.msra.mxu0 %v2853
    %2893 = vmatpush.msra.mxu0 %v2851
    %2894 = vmatpush.msra.mxu0 %v2849
    %2895 = vmatpush.msra.mxu0 %v2847
    %2896 = vmatpush.msra.mxu0 %v2845
    %2897 = vmatpush.msra.mxu0 %v2843
    %2898 = vmatpush.msra.mxu0 %v2841
    %2899 = vmatpush.msra.mxu0 %v2839
    %2900 = vmatpush.msra.mxu0 %v2837
    %2901 = vmatpush.msra.mxu0 %v2835
    %2902 = vmatmul.f32.gmra.mxu0 %v2832
    %v2903 = vpop.f32.mrf.mxu0
    %v2904 = vadd.f32 0.0, %v2903
    %2905 = vdwg.mxu0
    %v2906 = vadd.f32 %v2830, %v2884
    %v2907 = vadd.f32 %v2831, %v2904
    %2908 = vst [vmem:[#allocation4] sm:$0xff] %v2906
    %2909 = vst [vmem:[#allocation4 + $0x8] sm:$0xff] %v2907
    %v2910 = vld [vmem:[%s751] sm:$0xff]
    %v2911 = vld [vmem:[%s751 + $0x8] sm:$0xff]
    %v2912 = vld [vmem:[%s751 + $0x10] sm:$0xff]
    %v2913 = vld [vmem:[%s751 + $0x18] sm:$0xff]
    %2914 = vmatpush.msra.mxu0 %v2533
    %2915 = vmatpush.msra.mxu0 %v2529
    %2916 = vmatpush.msra.mxu0 %v2525
    %2917 = vmatpush.msra.mxu0 %v2521
    %2918 = vmatpush.msra.mxu0 %v2517
    %2919 = vmatpush.msra.mxu0 %v2513
    %2920 = vmatpush.msra.mxu0 %v2509
    %2921 = vmatpush.msra.mxu0 %v2505
    %2922 = vmatpush.msra.mxu0 %v2501
    %2923 = vmatpush.msra.mxu0 %v2497
    %2924 = vmatpush.msra.mxu0 %v2493
    %2925 = vmatpush.msra.mxu0 %v2489
    %2926 = vmatpush.msra.mxu0 %v2485
    %2927 = vmatpush.msra.mxu0 %v2481
    %2928 = vmatpush.msra.mxu0 %v2477
    %2929 = vmatpush.msra.mxu0 %v2473
    %2930 = vmatmul.f32.gmra.mxu0 %v2829
    %v2931 = vpop.f32.mrf.mxu0
    %v2932 = vadd.f32 0.0, %v2931
    %2933 = vdwg.mxu0
    %2934 = vmatpush.msra.mxu0 %v2534
    %2935 = vmatpush.msra.mxu0 %v2530
    %2936 = vmatpush.msra.mxu0 %v2526
    %2937 = vmatpush.msra.mxu0 %v2522
    %2938 = vmatpush.msra.mxu0 %v2518
    %2939 = vmatpush.msra.mxu0 %v2514
    %2940 = vmatpush.msra.mxu0 %v2510
    %2941 = vmatpush.msra.mxu0 %v2506
    %2942 = vmatpush.msra.mxu0 %v2502
    %2943 = vmatpush.msra.mxu0 %v2498
    %2944 = vmatpush.msra.mxu0 %v2494
    %2945 = vmatpush.msra.mxu0 %v2490
    %2946 = vmatpush.msra.mxu0 %v2486
    %2947 = vmatpush.msra.mxu0 %v2482
    %2948 = vmatpush.msra.mxu0 %v2478
    %2949 = vmatpush.msra.mxu0 %v2474
    %2950 = vmatmul.f32.gmra.mxu0 %v2829
    %v2951 = vpop.f32.mrf.mxu0
    %v2952 = vadd.f32 0.0, %v2951
    %2953 = vdwg.mxu0
    %2954 = vmatpush.msra.mxu0 %v2535
    %2955 = vmatpush.msra.mxu0 %v2531
    %2956 = vmatpush.msra.mxu0 %v2527
    %2957 = vmatpush.msra.mxu0 %v2523
    %2958 = vmatpush.msra.mxu0 %v2519
    %2959 = vmatpush.msra.mxu0 %v2515
    %2960 = vmatpush.msra.mxu0 %v2511
    %2961 = vmatpush.msra.mxu0 %v2507
    %2962 = vmatpush.msra.mxu0 %v2503
    %2963 = vmatpush.msra.mxu0 %v2499
    %2964 = vmatpush.msra.mxu0 %v2495
    %2965 = vmatpush.msra.mxu0 %v2491
    %2966 = vmatpush.msra.mxu0 %v2487
    %2967 = vmatpush.msra.mxu0 %v2483
    %2968 = vmatpush.msra.mxu0 %v2479
    %2969 = vmatpush.msra.mxu0 %v2475
    %2970 = vmatmul.f32.gmra.mxu0 %v2829
    %v2971 = vpop.f32.mrf.mxu0
    %v2972 = vadd.f32 0.0, %v2971
    %2973 = vdwg.mxu0
    %2974 = vmatpush.msra.mxu0 %v2536
    %2975 = vmatpush.msra.mxu0 %v2532
    %2976 = vmatpush.msra.mxu0 %v2528
    %2977 = vmatpush.msra.mxu0 %v2524
    %2978 = vmatpush.msra.mxu0 %v2520
    %2979 = vmatpush.msra.mxu0 %v2516
    %2980 = vmatpush.msra.mxu0 %v2512
    %2981 = vmatpush.msra.mxu0 %v2508
    %2982 = vmatpush.msra.mxu0 %v2504
    %2983 = vmatpush.msra.mxu0 %v2500
    %2984 = vmatpush.msra.mxu0 %v2496
    %2985 = vmatpush.msra.mxu0 %v2492
    %2986 = vmatpush.msra.mxu0 %v2488
    %2987 = vmatpush.msra.mxu0 %v2484
    %2988 = vmatpush.msra.mxu0 %v2480
    %2989 = vmatpush.msra.mxu0 %v2476
    %2990 = vmatmul.f32.gmra.mxu0 %v2829
    %v2991 = vpop.f32.mrf.mxu0
    %v2992 = vadd.f32 0.0, %v2991
    %2993 = vdwg.mxu0
    %v2994 = vadd.f32 %v2910, %v2932
    %v2995 = vadd.f32 %v2911, %v2952
    %v2996 = vadd.f32 %v2912, %v2972
    %v2997 = vadd.f32 %v2913, %v2992
    %v2998 = vmul.f32 %v2994, 0.5
    %v2999 = vmul.f32 %v2995, 0.5
    %v3000 = vmul.f32 %v2996, 0.5
    %v3001 = vtanh.pop %v2998
    %v3002 = vtanh.pop %v2999
    %v3003 = vtanh.pop %v3000
    %v3004 = vmul.f32 %v3001, 0.5
    %v3005 = vmul.f32 %v3002, 0.5
    %v3006 = vmul.f32 %v3003, 0.5
    %v3007 = vadd.f32 %v3004, 0.5
    %v3008 = vadd.f32 %v3005, 0.5
    %v3009 = vadd.f32 %v3006, 0.5
    %v3010 = vtanh.pop %v2997
    %v3011 = vmul.f32 %v3008, %v2827
    %v3012 = vmul.f32 %v3007, %v3010
    %v3013 = vadd.f32 %v3011, %v3012
    %v3014 = vtanh.pop %v3013
    %v3015 = vmul.f32 %v3009, %v3014
    %v3016 = vld [vmem:[#allocation4] sm:$0xff]
    %v3017 = vld [vmem:[#allocation4 + $0x8] sm:$0xff]
    %v3018 = vtanh.pop %v3015
    %s3019 = scalar_lea.vmem [#allocation14], 512
    %v3020 = vld [vmem:[%s3019] sm:$0xff]
    %v3021 = vld [vmem:[%s3019 + $0x8] sm:$0xff]
    %v3022 = vld [vmem:[%s3019 + $0x10] sm:$0xff]
    %v3023 = vld [vmem:[%s3019 + $0x18] sm:$0xff]
    %v3024 = vld [vmem:[%s3019 + $0x20] sm:$0xff]
    %v3025 = vld [vmem:[%s3019 + $0x28] sm:$0xff]
    %v3026 = vld [vmem:[%s3019 + $0x30] sm:$0xff]
    %v3027 = vld [vmem:[%s3019 + $0x38] sm:$0xff]
    %v3028 = vld [vmem:[%s3019 + $0x40] sm:$0xff]
    %v3029 = vld [vmem:[%s3019 + $0x48] sm:$0xff]
    %v3030 = vld [vmem:[%s3019 + $0x50] sm:$0xff]
    %v3031 = vld [vmem:[%s3019 + $0x58] sm:$0xff]
    %v3032 = vld [vmem:[%s3019 + $0x60] sm:$0xff]
    %v3033 = vld [vmem:[%s3019 + $0x68] sm:$0xff]
    %v3034 = vld [vmem:[%s3019 + $0x70] sm:$0xff]
    %v3035 = vld [vmem:[%s3019 + $0x78] sm:$0xff]
    %v3036 = vld [vmem:[%s3019 + $0x80] sm:$0xff]
    %v3037 = vld [vmem:[%s3019 + $0x88] sm:$0xff]
    %v3038 = vld [vmem:[%s3019 + $0x90] sm:$0xff]
    %v3039 = vld [vmem:[%s3019 + $0x98] sm:$0xff]
    %v3040 = vld [vmem:[%s3019 + $0xa0] sm:$0xff]
    %v3041 = vld [vmem:[%s3019 + $0xa8] sm:$0xff]
    %v3042 = vld [vmem:[%s3019 + $0xb0] sm:$0xff]
    %v3043 = vld [vmem:[%s3019 + $0xb8] sm:$0xff]
    %v3044 = vld [vmem:[%s3019 + $0xc0] sm:$0xff]
    %v3045 = vld [vmem:[%s3019 + $0xc8] sm:$0xff]
    %v3046 = vld [vmem:[%s3019 + $0xd0] sm:$0xff]
    %v3047 = vld [vmem:[%s3019 + $0xd8] sm:$0xff]
    %v3048 = vld [vmem:[%s3019 + $0xe0] sm:$0xff]
    %v3049 = vld [vmem:[%s3019 + $0xe8] sm:$0xff]
    %v3050 = vld [vmem:[%s3019 + $0xf0] sm:$0xff]
    %v3051 = vld [vmem:[%s3019 + $0xf8] sm:$0xff]
    %3052 = vmatpush.msra.mxu0 %v3050
    %3053 = vmatpush.msra.mxu0 %v3048
    %3054 = vmatpush.msra.mxu0 %v3046
    %3055 = vmatpush.msra.mxu0 %v3044
    %3056 = vmatpush.msra.mxu0 %v3042
    %3057 = vmatpush.msra.mxu0 %v3040
    %3058 = vmatpush.msra.mxu0 %v3038
    %3059 = vmatpush.msra.mxu0 %v3036
    %3060 = vmatpush.msra.mxu0 %v3034
    %3061 = vmatpush.msra.mxu0 %v3032
    %3062 = vmatpush.msra.mxu0 %v3030
    %3063 = vmatpush.msra.mxu0 %v3028
    %3064 = vmatpush.msra.mxu0 %v3026
    %3065 = vmatpush.msra.mxu0 %v3024
    %3066 = vmatpush.msra.mxu0 %v3022
    %3067 = vmatpush.msra.mxu0 %v3020
    %3068 = vmatmul.f32.gmra.mxu0 %v3018
    %v3069 = vpop.f32.mrf.mxu0
    %v3070 = vadd.f32 0.0, %v3069
    %3071 = vdwg.mxu0
    %3072 = vmatpush.msra.mxu0 %v3051
    %3073 = vmatpush.msra.mxu0 %v3049
    %3074 = vmatpush.msra.mxu0 %v3047
    %3075 = vmatpush.msra.mxu0 %v3045
    %3076 = vmatpush.msra.mxu0 %v3043
    %3077 = vmatpush.msra.mxu0 %v3041
    %3078 = vmatpush.msra.mxu0 %v3039
    %3079 = vmatpush.msra.mxu0 %v3037
    %3080 = vmatpush.msra.mxu0 %v3035
    %3081 = vmatpush.msra.mxu0 %v3033
    %3082 = vmatpush.msra.mxu0 %v3031
    %3083 = vmatpush.msra.mxu0 %v3029
    %3084 = vmatpush.msra.mxu0 %v3027
    %3085 = vmatpush.msra.mxu0 %v3025
    %3086 = vmatpush.msra.mxu0 %v3023
    %3087 = vmatpush.msra.mxu0 %v3021
    %3088 = vmatmul.f32.gmra.mxu0 %v3018
    %v3089 = vpop.f32.mrf.mxu0
    %v3090 = vadd.f32 0.0, %v3089
    %3091 = vdwg.mxu0
    %v3092 = vadd.f32 %v3016, %v3070
    %v3093 = vadd.f32 %v3017, %v3090
    %3094 = vst [vmem:[#allocation4] sm:$0xff] %v3092
    %3095 = vst [vmem:[#allocation4 + $0x8] sm:$0xff] %v3093
    %v3096 = vld [vmem:[%s862] sm:$0xff]
    %v3097 = vld [vmem:[%s862 + $0x8] sm:$0xff]
    %v3098 = vld [vmem:[%s862 + $0x10] sm:$0xff]
    %v3099 = vld [vmem:[%s862 + $0x18] sm:$0xff]
    %3100 = vmatpush.msra.mxu0 %v2533
    %3101 = vmatpush.msra.mxu0 %v2529
    %3102 = vmatpush.msra.mxu0 %v2525
    %3103 = vmatpush.msra.mxu0 %v2521
    %3104 = vmatpush.msra.mxu0 %v2517
    %3105 = vmatpush.msra.mxu0 %v2513
    %3106 = vmatpush.msra.mxu0 %v2509
    %3107 = vmatpush.msra.mxu0 %v2505
    %3108 = vmatpush.msra.mxu0 %v2501
    %3109 = vmatpush.msra.mxu0 %v2497
    %3110 = vmatpush.msra.mxu0 %v2493
    %3111 = vmatpush.msra.mxu0 %v2489
    %3112 = vmatpush.msra.mxu0 %v2485
    %3113 = vmatpush.msra.mxu0 %v2481
    %3114 = vmatpush.msra.mxu0 %v2477
    %3115 = vmatpush.msra.mxu0 %v2473
    %3116 = vmatmul.f32.gmra.mxu0 %v3015
    %v3117 = vpop.f32.mrf.mxu0
    %v3118 = vadd.f32 0.0, %v3117
    %3119 = vdwg.mxu0
    %3120 = vmatpush.msra.mxu0 %v2534
    %3121 = vmatpush.msra.mxu0 %v2530
    %3122 = vmatpush.msra.mxu0 %v2526
    %3123 = vmatpush.msra.mxu0 %v2522
    %3124 = vmatpush.msra.mxu0 %v2518
    %3125 = vmatpush.msra.mxu0 %v2514
    %3126 = vmatpush.msra.mxu0 %v2510
    %3127 = vmatpush.msra.mxu0 %v2506
    %3128 = vmatpush.msra.mxu0 %v2502
    %3129 = vmatpush.msra.mxu0 %v2498
    %3130 = vmatpush.msra.mxu0 %v2494
    %3131 = vmatpush.msra.mxu0 %v2490
    %3132 = vmatpush.msra.mxu0 %v2486
    %3133 = vmatpush.msra.mxu0 %v2482
    %3134 = vmatpush.msra.mxu0 %v2478
    %3135 = vmatpush.msra.mxu0 %v2474
    %3136 = vmatmul.f32.gmra.mxu0 %v3015
    %v3137 = vpop.f32.mrf.mxu0
    %v3138 = vadd.f32 0.0, %v3137
    %3139 = vdwg.mxu0
    %3140 = vmatpush.msra.mxu0 %v2535
    %3141 = vmatpush.msra.mxu0 %v2531
    %3142 = vmatpush.msra.mxu0 %v2527
    %3143 = vmatpush.msra.mxu0 %v2523
    %3144 = vmatpush.msra.mxu0 %v2519
    %3145 = vmatpush.msra.mxu0 %v2515
    %3146 = vmatpush.msra.mxu0 %v2511
    %3147 = vmatpush.msra.mxu0 %v2507
    %3148 = vmatpush.msra.mxu0 %v2503
    %3149 = vmatpush.msra.mxu0 %v2499
    %3150 = vmatpush.msra.mxu0 %v2495
    %3151 = vmatpush.msra.mxu0 %v2491
    %3152 = vmatpush.msra.mxu0 %v2487
    %3153 = vmatpush.msra.mxu0 %v2483
    %3154 = vmatpush.msra.mxu0 %v2479
    %3155 = vmatpush.msra.mxu0 %v2475
    %3156 = vmatmul.f32.gmra.mxu0 %v3015
    %v3157 = vpop.f32.mrf.mxu0
    %v3158 = vadd.f32 0.0, %v3157
    %3159 = vdwg.mxu0
    %3160 = vmatpush.msra.mxu0 %v2536
    %3161 = vmatpush.msra.mxu0 %v2532
    %3162 = vmatpush.msra.mxu0 %v2528
    %3163 = vmatpush.msra.mxu0 %v2524
    %3164 = vmatpush.msra.mxu0 %v2520
    %3165 = vmatpush.msra.mxu0 %v2516
    %3166 = vmatpush.msra.mxu0 %v2512
    %3167 = vmatpush.msra.mxu0 %v2508
    %3168 = vmatpush.msra.mxu0 %v2504
    %3169 = vmatpush.msra.mxu0 %v2500
    %3170 = vmatpush.msra.mxu0 %v2496
    %3171 = vmatpush.msra.mxu0 %v2492
    %3172 = vmatpush.msra.mxu0 %v2488
    %3173 = vmatpush.msra.mxu0 %v2484
    %3174 = vmatpush.msra.mxu0 %v2480
    %3175 = vmatpush.msra.mxu0 %v2476
    %3176 = vmatmul.f32.gmra.mxu0 %v3015
    %v3177 = vpop.f32.mrf.mxu0
    %v3178 = vadd.f32 0.0, %v3177
    %3179 = vdwg.mxu0
    %v3180 = vadd.f32 %v3096, %v3118
    %v3181 = vadd.f32 %v3097, %v3138
    %v3182 = vadd.f32 %v3098, %v3158
    %v3183 = vadd.f32 %v3099, %v3178
    %v3184 = vmul.f32 %v3180, 0.5
    %v3185 = vmul.f32 %v3181, 0.5
    %v3186 = vmul.f32 %v3182, 0.5
    %v3187 = vtanh.pop %v3184
    %v3188 = vtanh.pop %v3185
    %v3189 = vtanh.pop %v3186
    %v3190 = vmul.f32 %v3187, 0.5
    %v3191 = vmul.f32 %v3188, 0.5
    %v3192 = vmul.f32 %v3189, 0.5
    %v3193 = vadd.f32 %v3190, 0.5
    %v3194 = vadd.f32 %v3191, 0.5
    %v3195 = vadd.f32 %v3192, 0.5
    %v3196 = vtanh.pop %v3183
    %v3197 = vmul.f32 %v3194, %v3013
    %v3198 = vmul.f32 %v3193, %v3196
    %v3199 = vadd.f32 %v3197, %v3198
    %v3200 = vtanh.pop %v3199
    %v3201 = vmul.f32 %v3195, %v3200
    %v3202 = vld [vmem:[#allocation4] sm:$0xff]
    %v3203 = vld [vmem:[#allocation4 + $0x8] sm:$0xff]
    %v3204 = vtanh.pop %v3201
    %s3205 = scalar_lea.vmem [#allocation14], 768
    %v3206 = vld [vmem:[%s3205] sm:$0xff]
    %v3207 = vld [vmem:[%s3205 + $0x8] sm:$0xff]
    %v3208 = vld [vmem:[%s3205 + $0x10] sm:$0xff]
    %v3209 = vld [vmem:[%s3205 + $0x18] sm:$0xff]
    %v3210 = vld [vmem:[%s3205 + $0x20] sm:$0xff]
    %v3211 = vld [vmem:[%s3205 + $0x28] sm:$0xff]
    %v3212 = vld [vmem:[%s3205 + $0x30] sm:$0xff]
    %v3213 = vld [vmem:[%s3205 + $0x38] sm:$0xff]
    %v3214 = vld [vmem:[%s3205 + $0x40] sm:$0xff]
    %v3215 = vld [vmem:[%s3205 + $0x48] sm:$0xff]
    %v3216 = vld [vmem:[%s3205 + $0x50] sm:$0xff]
    %v3217 = vld [vmem:[%s3205 + $0x58] sm:$0xff]
    %v3218 = vld [vmem:[%s3205 + $0x60] sm:$0xff]
    %v3219 = vld [vmem:[%s3205 + $0x68] sm:$0xff]
    %v3220 = vld [vmem:[%s3205 + $0x70] sm:$0xff]
    %v3221 = vld [vmem:[%s3205 + $0x78] sm:$0xff]
    %v3222 = vld [vmem:[%s3205 + $0x80] sm:$0xff]
    %v3223 = vld [vmem:[%s3205 + $0x88] sm:$0xff]
    %v3224 = vld [vmem:[%s3205 + $0x90] sm:$0xff]
    %v3225 = vld [vmem:[%s3205 + $0x98] sm:$0xff]
    %v3226 = vld [vmem:[%s3205 + $0xa0] sm:$0xff]
    %v3227 = vld [vmem:[%s3205 + $0xa8] sm:$0xff]
    %v3228 = vld [vmem:[%s3205 + $0xb0] sm:$0xff]
    %v3229 = vld [vmem:[%s3205 + $0xb8] sm:$0xff]
    %v3230 = vld [vmem:[%s3205 + $0xc0] sm:$0xff]
    %v3231 = vld [vmem:[%s3205 + $0xc8] sm:$0xff]
    %v3232 = vld [vmem:[%s3205 + $0xd0] sm:$0xff]
    %v3233 = vld [vmem:[%s3205 + $0xd8] sm:$0xff]
    %v3234 = vld [vmem:[%s3205 + $0xe0] sm:$0xff]
    %v3235 = vld [vmem:[%s3205 + $0xe8] sm:$0xff]
    %v3236 = vld [vmem:[%s3205 + $0xf0] sm:$0xff]
    %v3237 = vld [vmem:[%s3205 + $0xf8] sm:$0xff]
    %3238 = vmatpush.msra.mxu0 %v3236
    %3239 = vmatpush.msra.mxu0 %v3234
    %3240 = vmatpush.msra.mxu0 %v3232
    %3241 = vmatpush.msra.mxu0 %v3230
    %3242 = vmatpush.msra.mxu0 %v3228
    %3243 = vmatpush.msra.mxu0 %v3226
    %3244 = vmatpush.msra.mxu0 %v3224
    %3245 = vmatpush.msra.mxu0 %v3222
    %3246 = vmatpush.msra.mxu0 %v3220
    %3247 = vmatpush.msra.mxu0 %v3218
    %3248 = vmatpush.msra.mxu0 %v3216
    %3249 = vmatpush.msra.mxu0 %v3214
    %3250 = vmatpush.msra.mxu0 %v3212
    %3251 = vmatpush.msra.mxu0 %v3210
    %3252 = vmatpush.msra.mxu0 %v3208
    %3253 = vmatpush.msra.mxu0 %v3206
    %3254 = vmatmul.f32.gmra.mxu0 %v3204
    %v3255 = vpop.f32.mrf.mxu0
    %v3256 = vadd.f32 0.0, %v3255
    %3257 = vdwg.mxu0
    %3258 = vmatpush.msra.mxu0 %v3237
    %3259 = vmatpush.msra.mxu0 %v3235
    %3260 = vmatpush.msra.mxu0 %v3233
    %3261 = vmatpush.msra.mxu0 %v3231
    %3262 = vmatpush.msra.mxu0 %v3229
    %3263 = vmatpush.msra.mxu0 %v3227
    %3264 = vmatpush.msra.mxu0 %v3225
    %3265 = vmatpush.msra.mxu0 %v3223
    %3266 = vmatpush.msra.mxu0 %v3221
    %3267 = vmatpush.msra.mxu0 %v3219
    %3268 = vmatpush.msra.mxu0 %v3217
    %3269 = vmatpush.msra.mxu0 %v3215
    %3270 = vmatpush.msra.mxu0 %v3213
    %3271 = vmatpush.msra.mxu0 %v3211
    %3272 = vmatpush.msra.mxu0 %v3209
    %3273 = vmatpush.msra.mxu0 %v3207
    %3274 = vmatmul.f32.gmra.mxu0 %v3204
    %v3275 = vpop.f32.mrf.mxu0
    %v3276 = vadd.f32 0.0, %v3275
    %3277 = vdwg.mxu0
    %v3278 = vadd.f32 %v3202, %v3256
    %v3279 = vadd.f32 %v3203, %v3276
    %3280 = vst [vmem:[#allocation4] sm:$0xff] %v3278
    %3281 = vst [vmem:[#allocation4 + $0x8] sm:$0xff] %v3279
    %v3282 = vld [vmem:[%s973] sm:$0xff]
    %v3283 = vld [vmem:[%s973 + $0x8] sm:$0xff]
    %v3284 = vld [vmem:[%s973 + $0x10] sm:$0xff]
    %v3285 = vld [vmem:[%s973 + $0x18] sm:$0xff]
    %3286 = vmatpush.msra.mxu0 %v2533
    %3287 = vmatpush.msra.mxu0 %v2529
    %3288 = vmatpush.msra.mxu0 %v2525
    %3289 = vmatpush.msra.mxu0 %v2521
    %3290 = vmatpush.msra.mxu0 %v2517
    %3291 = vmatpush.msra.mxu0 %v2513
    %3292 = vmatpush.msra.mxu0 %v2509
    %3293 = vmatpush.msra.mxu0 %v2505
    %3294 = vmatpush.msra.mxu0 %v2501
    %3295 = vmatpush.msra.mxu0 %v2497
    %3296 = vmatpush.msra.mxu0 %v2493
    %3297 = vmatpush.msra.mxu0 %v2489
    %3298 = vmatpush.msra.mxu0 %v2485
    %3299 = vmatpush.msra.mxu0 %v2481
    %3300 = vmatpush.msra.mxu0 %v2477
    %3301 = vmatpush.msra.mxu0 %v2473
    %3302 = vmatmul.f32.gmra.mxu0 %v3201
    %v3303 = vpop.f32.mrf.mxu0
    %v3304 = vadd.f32 0.0, %v3303
    %3305 = vdwg.mxu0
    %3306 = vmatpush.msra.mxu0 %v2534
    %3307 = vmatpush.msra.mxu0 %v2530
    %3308 = vmatpush.msra.mxu0 %v2526
    %3309 = vmatpush.msra.mxu0 %v2522
    %3310 = vmatpush.msra.mxu0 %v2518
    %3311 = vmatpush.msra.mxu0 %v2514
    %3312 = vmatpush.msra.mxu0 %v2510
    %3313 = vmatpush.msra.mxu0 %v2506
    %3314 = vmatpush.msra.mxu0 %v2502
    %3315 = vmatpush.msra.mxu0 %v2498
    %3316 = vmatpush.msra.mxu0 %v2494
    %3317 = vmatpush.msra.mxu0 %v2490
    %3318 = vmatpush.msra.mxu0 %v2486
    %3319 = vmatpush.msra.mxu0 %v2482
    %3320 = vmatpush.msra.mxu0 %v2478
    %3321 = vmatpush.msra.mxu0 %v2474
    %3322 = vmatmul.f32.gmra.mxu0 %v3201
    %v3323 = vpop.f32.mrf.mxu0
    %v3324 = vadd.f32 0.0, %v3323
    %3325 = vdwg.mxu0
    %3326 = vmatpush.msra.mxu0 %v2535
    %3327 = vmatpush.msra.mxu0 %v2531
    %3328 = vmatpush.msra.mxu0 %v2527
    %3329 = vmatpush.msra.mxu0 %v2523
    %3330 = vmatpush.msra.mxu0 %v2519
    %3331 = vmatpush.msra.mxu0 %v2515
    %3332 = vmatpush.msra.mxu0 %v2511
    %3333 = vmatpush.msra.mxu0 %v2507
    %3334 = vmatpush.msra.mxu0 %v2503
    %3335 = vmatpush.msra.mxu0 %v2499
    %3336 = vmatpush.msra.mxu0 %v2495
    %3337 = vmatpush.msra.mxu0 %v2491
    %3338 = vmatpush.msra.mxu0 %v2487
    %3339 = vmatpush.msra.mxu0 %v2483
    %3340 = vmatpush.msra.mxu0 %v2479
    %3341 = vmatpush.msra.mxu0 %v2475
    %3342 = vmatmul.f32.gmra.mxu0 %v3201
    %v3343 = vpop.f32.mrf.mxu0
    %v3344 = vadd.f32 0.0, %v3343
    %3345 = vdwg.mxu0
    %3346 = vmatpush.msra.mxu0 %v2536
    %3347 = vmatpush.msra.mxu0 %v2532
    %3348 = vmatpush.msra.mxu0 %v2528
    %3349 = vmatpush.msra.mxu0 %v2524
    %3350 = vmatpush.msra.mxu0 %v2520
    %3351 = vmatpush.msra.mxu0 %v2516
    %3352 = vmatpush.msra.mxu0 %v2512
    %3353 = vmatpush.msra.mxu0 %v2508
    %3354 = vmatpush.msra.mxu0 %v2504
    %3355 = vmatpush.msra.mxu0 %v2500
    %3356 = vmatpush.msra.mxu0 %v2496
    %3357 = vmatpush.msra.mxu0 %v2492
    %3358 = vmatpush.msra.mxu0 %v2488
    %3359 = vmatpush.msra.mxu0 %v2484
    %3360 = vmatpush.msra.mxu0 %v2480
    %3361 = vmatpush.msra.mxu0 %v2476
    %3362 = vmatmul.f32.gmra.mxu0 %v3201
    %v3363 = vpop.f32.mrf.mxu0
    %v3364 = vadd.f32 0.0, %v3363
    %3365 = vdwg.mxu0
    %v3366 = vadd.f32 %v3282, %v3304
    %v3367 = vadd.f32 %v3283, %v3324
    %v3368 = vadd.f32 %v3284, %v3344
    %v3369 = vadd.f32 %v3285, %v3364
    %v3370 = vmul.f32 %v3366, 0.5
    %v3371 = vmul.f32 %v3367, 0.5
    %v3372 = vmul.f32 %v3368, 0.5
    %v3373 = vtanh.pop %v3370
    %v3374 = vtanh.pop %v3371
    %v3375 = vtanh.pop %v3372
    %v3376 = vmul.f32 %v3373, 0.5
    %v3377 = vmul.f32 %v3374, 0.5
    %v3378 = vmul.f32 %v3375, 0.5
    %v3379 = vadd.f32 %v3376, 0.5
    %v3380 = vadd.f32 %v3377, 0.5
    %v3381 = vadd.f32 %v3378, 0.5
    %v3382 = vtanh.pop %v3369
    %v3383 = vmul.f32 %v3380, %v3199
    %v3384 = vmul.f32 %v3379, %v3382
    %v3385 = vadd.f32 %v3383, %v3384
    %v3386 = vtanh.pop %v3385
    %v3387 = vmul.f32 %v3381, %v3386
    %v3388 = vld [vmem:[#allocation4] sm:$0xff]
    %v3389 = vld [vmem:[#allocation4 + $0x8] sm:$0xff]
    %v3390 = vtanh.pop %v3387
    %s3391 = scalar_lea.vmem [#allocation14], 1024
    %v3392 = vld [vmem:[%s3391] sm:$0xff]
    %v3393 = vld [vmem:[%s3391 + $0x8] sm:$0xff]
    %v3394 = vld [vmem:[%s3391 + $0x10] sm:$0xff]
    %v3395 = vld [vmem:[%s3391 + $0x18] sm:$0xff]
    %v3396 = vld [vmem:[%s3391 + $0x20] sm:$0xff]
    %v3397 = vld [vmem:[%s3391 + $0x28] sm:$0xff]
    %v3398 = vld [vmem:[%s3391 + $0x30] sm:$0xff]
    %v3399 = vld [vmem:[%s3391 + $0x38] sm:$0xff]
    %v3400 = vld [vmem:[%s3391 + $0x40] sm:$0xff]
    %v3401 = vld [vmem:[%s3391 + $0x48] sm:$0xff]
    %v3402 = vld [vmem:[%s3391 + $0x50] sm:$0xff]
    %v3403 = vld [vmem:[%s3391 + $0x58] sm:$0xff]
    %v3404 = vld [vmem:[%s3391 + $0x60] sm:$0xff]
    %v3405 = vld [vmem:[%s3391 + $0x68] sm:$0xff]
    %v3406 = vld [vmem:[%s3391 + $0x70] sm:$0xff]
    %v3407 = vld [vmem:[%s3391 + $0x78] sm:$0xff]
    %v3408 = vld [vmem:[%s3391 + $0x80] sm:$0xff]
    %v3409 = vld [vmem:[%s3391 + $0x88] sm:$0xff]
    %v3410 = vld [vmem:[%s3391 + $0x90] sm:$0xff]
    %v3411 = vld [vmem:[%s3391 + $0x98] sm:$0xff]
    %v3412 = vld [vmem:[%s3391 + $0xa0] sm:$0xff]
    %v3413 = vld [vmem:[%s3391 + $0xa8] sm:$0xff]
    %v3414 = vld [vmem:[%s3391 + $0xb0] sm:$0xff]
    %v3415 = vld [vmem:[%s3391 + $0xb8] sm:$0xff]
    %v3416 = vld [vmem:[%s3391 + $0xc0] sm:$0xff]
    %v3417 = vld [vmem:[%s3391 + $0xc8] sm:$0xff]
    %v3418 = vld [vmem:[%s3391 + $0xd0] sm:$0xff]
    %v3419 = vld [vmem:[%s3391 + $0xd8] sm:$0xff]
    %v3420 = vld [vmem:[%s3391 + $0xe0] sm:$0xff]
    %v3421 = vld [vmem:[%s3391 + $0xe8] sm:$0xff]
    %v3422 = vld [vmem:[%s3391 + $0xf0] sm:$0xff]
    %v3423 = vld [vmem:[%s3391 + $0xf8] sm:$0xff]
    %3424 = vmatpush.msra.mxu0 %v3422
    %3425 = vmatpush.msra.mxu0 %v3420
    %3426 = vmatpush.msra.mxu0 %v3418
    %3427 = vmatpush.msra.mxu0 %v3416
    %3428 = vmatpush.msra.mxu0 %v3414
    %3429 = vmatpush.msra.mxu0 %v3412
    %3430 = vmatpush.msra.mxu0 %v3410
    %3431 = vmatpush.msra.mxu0 %v3408
    %3432 = vmatpush.msra.mxu0 %v3406
    %3433 = vmatpush.msra.mxu0 %v3404
    %3434 = vmatpush.msra.mxu0 %v3402
    %3435 = vmatpush.msra.mxu0 %v3400
    %3436 = vmatpush.msra.mxu0 %v3398
    %3437 = vmatpush.msra.mxu0 %v3396
    %3438 = vmatpush.msra.mxu0 %v3394
    %3439 = vmatpush.msra.mxu0 %v3392
    %3440 = vmatmul.f32.gmra.mxu0 %v3390
    %v3441 = vpop.f32.mrf.mxu0
    %v3442 = vadd.f32 0.0, %v3441
    %3443 = vdwg.mxu0
    %3444 = vmatpush.msra.mxu0 %v3423
    %3445 = vmatpush.msra.mxu0 %v3421
    %3446 = vmatpush.msra.mxu0 %v3419
    %3447 = vmatpush.msra.mxu0 %v3417
    %3448 = vmatpush.msra.mxu0 %v3415
    %3449 = vmatpush.msra.mxu0 %v3413
    %3450 = vmatpush.msra.mxu0 %v3411
    %3451 = vmatpush.msra.mxu0 %v3409
    %3452 = vmatpush.msra.mxu0 %v3407
    %3453 = vmatpush.msra.mxu0 %v3405
    %3454 = vmatpush.msra.mxu0 %v3403
    %3455 = vmatpush.msra.mxu0 %v3401
    %3456 = vmatpush.msra.mxu0 %v3399
    %3457 = vmatpush.msra.mxu0 %v3397
    %3458 = vmatpush.msra.mxu0 %v3395
    %3459 = vmatpush.msra.mxu0 %v3393
    %3460 = vmatmul.f32.gmra.mxu0 %v3390
    %v3461 = vpop.f32.mrf.mxu0
    %v3462 = vadd.f32 0.0, %v3461
    %3463 = vdwg.mxu0
    %v3464 = vadd.f32 %v3388, %v3442
    %v3465 = vadd.f32 %v3389, %v3462
    %3466 = vst [vmem:[#allocation4] sm:$0xff] %v3464
    %3467 = vst [vmem:[#allocation4 + $0x8] sm:$0xff] %v3465
    %v3468 = vld [vmem:[%s1084] sm:$0xff]
    %v3469 = vld [vmem:[%s1084 + $0x8] sm:$0xff]
    %v3470 = vld [vmem:[%s1084 + $0x10] sm:$0xff]
    %v3471 = vld [vmem:[%s1084 + $0x18] sm:$0xff]
    %3472 = vmatpush.msra.mxu0 %v2533
    %3473 = vmatpush.msra.mxu0 %v2529
    %3474 = vmatpush.msra.mxu0 %v2525
    %3475 = vmatpush.msra.mxu0 %v2521
    %3476 = vmatpush.msra.mxu0 %v2517
    %3477 = vmatpush.msra.mxu0 %v2513
    %3478 = vmatpush.msra.mxu0 %v2509
    %3479 = vmatpush.msra.mxu0 %v2505
    %3480 = vmatpush.msra.mxu0 %v2501
    %3481 = vmatpush.msra.mxu0 %v2497
    %3482 = vmatpush.msra.mxu0 %v2493
    %3483 = vmatpush.msra.mxu0 %v2489
    %3484 = vmatpush.msra.mxu0 %v2485
    %3485 = vmatpush.msra.mxu0 %v2481
    %3486 = vmatpush.msra.mxu0 %v2477
    %3487 = vmatpush.msra.mxu0 %v2473
    %3488 = vmatmul.f32.gmra.mxu0 %v3387
    %v3489 = vpop.f32.mrf.mxu0
    %v3490 = vadd.f32 0.0, %v3489
    %3491 = vdwg.mxu0
    %3492 = vmatpush.msra.mxu0 %v2534
    %3493 = vmatpush.msra.mxu0 %v2530
    %3494 = vmatpush.msra.mxu0 %v2526
    %3495 = vmatpush.msra.mxu0 %v2522
    %3496 = vmatpush.msra.mxu0 %v2518
    %3497 = vmatpush.msra.mxu0 %v2514
    %3498 = vmatpush.msra.mxu0 %v2510
    %3499 = vmatpush.msra.mxu0 %v2506
    %3500 = vmatpush.msra.mxu0 %v2502
    %3501 = vmatpush.msra.mxu0 %v2498
    %3502 = vmatpush.msra.mxu0 %v2494
    %3503 = vmatpush.msra.mxu0 %v2490
    %3504 = vmatpush.msra.mxu0 %v2486
    %3505 = vmatpush.msra.mxu0 %v2482
    %3506 = vmatpush.msra.mxu0 %v2478
    %3507 = vmatpush.msra.mxu0 %v2474
    %3508 = vmatmul.f32.gmra.mxu0 %v3387
    %v3509 = vpop.f32.mrf.mxu0
    %v3510 = vadd.f32 0.0, %v3509
    %3511 = vdwg.mxu0
    %3512 = vmatpush.msra.mxu0 %v2535
    %3513 = vmatpush.msra.mxu0 %v2531
    %3514 = vmatpush.msra.mxu0 %v2527
    %3515 = vmatpush.msra.mxu0 %v2523
    %3516 = vmatpush.msra.mxu0 %v2519
    %3517 = vmatpush.msra.mxu0 %v2515
    %3518 = vmatpush.msra.mxu0 %v2511
    %3519 = vmatpush.msra.mxu0 %v2507
    %3520 = vmatpush.msra.mxu0 %v2503
    %3521 = vmatpush.msra.mxu0 %v2499
    %3522 = vmatpush.msra.mxu0 %v2495
    %3523 = vmatpush.msra.mxu0 %v2491
    %3524 = vmatpush.msra.mxu0 %v2487
    %3525 = vmatpush.msra.mxu0 %v2483
    %3526 = vmatpush.msra.mxu0 %v2479
    %3527 = vmatpush.msra.mxu0 %v2475
    %3528 = vmatmul.f32.gmra.mxu0 %v3387
    %v3529 = vpop.f32.mrf.mxu0
    %v3530 = vadd.f32 0.0, %v3529
    %3531 = vdwg.mxu0
    %3532 = vmatpush.msra.mxu0 %v2536
    %3533 = vmatpush.msra.mxu0 %v2532
    %3534 = vmatpush.msra.mxu0 %v2528
    %3535 = vmatpush.msra.mxu0 %v2524
    %3536 = vmatpush.msra.mxu0 %v2520
    %3537 = vmatpush.msra.mxu0 %v2516
    %3538 = vmatpush.msra.mxu0 %v2512
    %3539 = vmatpush.msra.mxu0 %v2508
    %3540 = vmatpush.msra.mxu0 %v2504
    %3541 = vmatpush.msra.mxu0 %v2500
    %3542 = vmatpush.msra.mxu0 %v2496
    %3543 = vmatpush.msra.mxu0 %v2492
    %3544 = vmatpush.msra.mxu0 %v2488
    %3545 = vmatpush.msra.mxu0 %v2484
    %3546 = vmatpush.msra.mxu0 %v2480
    %3547 = vmatpush.msra.mxu0 %v2476
    %3548 = vmatmul.f32.gmra.mxu0 %v3387
    %v3549 = vpop.f32.mrf.mxu0
    %v3550 = vadd.f32 0.0, %v3549
    %3551 = vdwg.mxu0
    %v3552 = vadd.f32 %v3468, %v3490
    %v3553 = vadd.f32 %v3469, %v3510
    %v3554 = vadd.f32 %v3470, %v3530
    %v3555 = vadd.f32 %v3471, %v3550
    %v3556 = vmul.f32 %v3552, 0.5
    %v3557 = vmul.f32 %v3553, 0.5
    %v3558 = vmul.f32 %v3554, 0.5
    %v3559 = vtanh.pop %v3556
    %v3560 = vtanh.pop %v3557
    %v3561 = vtanh.pop %v3558
    %v3562 = vmul.f32 %v3559, 0.5
    %v3563 = vmul.f32 %v3560, 0.5
    %v3564 = vmul.f32 %v3561, 0.5
    %v3565 = vadd.f32 %v3562, 0.5
    %v3566 = vadd.f32 %v3563, 0.5
    %v3567 = vadd.f32 %v3564, 0.5
    %v3568 = vtanh.pop %v3555
    %v3569 = vmul.f32 %v3566, %v3385
    %v3570 = vmul.f32 %v3565, %v3568
    %v3571 = vadd.f32 %v3569, %v3570
    %v3572 = vtanh.pop %v3571
    %v3573 = vmul.f32 %v3567, %v3572
    %v3574 = vld [vmem:[#allocation4] sm:$0xff]
    %v3575 = vld [vmem:[#allocation4 + $0x8] sm:$0xff]
    %v3576 = vtanh.pop %v3573
    %s3577 = scalar_lea.vmem [#allocation14], 1280
    %v3578 = vld [vmem:[%s3577] sm:$0xff]
    %v3579 = vld [vmem:[%s3577 + $0x8] sm:$0xff]
    %v3580 = vld [vmem:[%s3577 + $0x10] sm:$0xff]
    %v3581 = vld [vmem:[%s3577 + $0x18] sm:$0xff]
    %v3582 = vld [vmem:[%s3577 + $0x20] sm:$0xff]
    %v3583 = vld [vmem:[%s3577 + $0x28] sm:$0xff]
    %v3584 = vld [vmem:[%s3577 + $0x30] sm:$0xff]
    %v3585 = vld [vmem:[%s3577 + $0x38] sm:$0xff]
    %v3586 = vld [vmem:[%s3577 + $0x40] sm:$0xff]
    %v3587 = vld [vmem:[%s3577 + $0x48] sm:$0xff]
    %v3588 = vld [vmem:[%s3577 + $0x50] sm:$0xff]
    %v3589 = vld [vmem:[%s3577 + $0x58] sm:$0xff]
    %v3590 = vld [vmem:[%s3577 + $0x60] sm:$0xff]
    %v3591 = vld [vmem:[%s3577 + $0x68] sm:$0xff]
    %v3592 = vld [vmem:[%s3577 + $0x70] sm:$0xff]
    %v3593 = vld [vmem:[%s3577 + $0x78] sm:$0xff]
    %v3594 = vld [vmem:[%s3577 + $0x80] sm:$0xff]
    %v3595 = vld [vmem:[%s3577 + $0x88] sm:$0xff]
    %v3596 = vld [vmem:[%s3577 + $0x90] sm:$0xff]
    %v3597 = vld [vmem:[%s3577 + $0x98] sm:$0xff]
    %v3598 = vld [vmem:[%s3577 + $0xa0] sm:$0xff]
    %v3599 = vld [vmem:[%s3577 + $0xa8] sm:$0xff]
    %v3600 = vld [vmem:[%s3577 + $0xb0] sm:$0xff]
    %v3601 = vld [vmem:[%s3577 + $0xb8] sm:$0xff]
    %v3602 = vld [vmem:[%s3577 + $0xc0] sm:$0xff]
    %v3603 = vld [vmem:[%s3577 + $0xc8] sm:$0xff]
    %v3604 = vld [vmem:[%s3577 + $0xd0] sm:$0xff]
    %v3605 = vld [vmem:[%s3577 + $0xd8] sm:$0xff]
    %v3606 = vld [vmem:[%s3577 + $0xe0] sm:$0xff]
    %v3607 = vld [vmem:[%s3577 + $0xe8] sm:$0xff]
    %v3608 = vld [vmem:[%s3577 + $0xf0] sm:$0xff]
    %v3609 = vld [vmem:[%s3577 + $0xf8] sm:$0xff]
    %3610 = vmatpush.msra.mxu0 %v3608
    %3611 = vmatpush.msra.mxu0 %v3606
    %3612 = vmatpush.msra.mxu0 %v3604
    %3613 = vmatpush.msra.mxu0 %v3602
    %3614 = vmatpush.msra.mxu0 %v3600
    %3615 = vmatpush.msra.mxu0 %v3598
    %3616 = vmatpush.msra.mxu0 %v3596
    %3617 = vmatpush.msra.mxu0 %v3594
    %3618 = vmatpush.msra.mxu0 %v3592
    %3619 = vmatpush.msra.mxu0 %v3590
    %3620 = vmatpush.msra.mxu0 %v3588
    %3621 = vmatpush.msra.mxu0 %v3586
    %3622 = vmatpush.msra.mxu0 %v3584
    %3623 = vmatpush.msra.mxu0 %v3582
    %3624 = vmatpush.msra.mxu0 %v3580
    %3625 = vmatpush.msra.mxu0 %v3578
    %3626 = vmatmul.f32.gmra.mxu0 %v3576
    %v3627 = vpop.f32.mrf.mxu0
    %v3628 = vadd.f32 0.0, %v3627
    %3629 = vdwg.mxu0
    %3630 = vmatpush.msra.mxu0 %v3609
    %3631 = vmatpush.msra.mxu0 %v3607
    %3632 = vmatpush.msra.mxu0 %v3605
    %3633 = vmatpush.msra.mxu0 %v3603
    %3634 = vmatpush.msra.mxu0 %v3601
    %3635 = vmatpush.msra.mxu0 %v3599
    %3636 = vmatpush.msra.mxu0 %v3597
    %3637 = vmatpush.msra.mxu0 %v3595
    %3638 = vmatpush.msra.mxu0 %v3593
    %3639 = vmatpush.msra.mxu0 %v3591
    %3640 = vmatpush.msra.mxu0 %v3589
    %3641 = vmatpush.msra.mxu0 %v3587
    %3642 = vmatpush.msra.mxu0 %v3585
    %3643 = vmatpush.msra.mxu0 %v3583
    %3644 = vmatpush.msra.mxu0 %v3581
    %3645 = vmatpush.msra.mxu0 %v3579
    %3646 = vmatmul.f32.gmra.mxu0 %v3576
    %v3647 = vpop.f32.mrf.mxu0
    %v3648 = vadd.f32 0.0, %v3647
    %3649 = vdwg.mxu0
    %v3650 = vadd.f32 %v3574, %v3628
    %v3651 = vadd.f32 %v3575, %v3648
    %3652 = vst [vmem:[#allocation4] sm:$0xff] %v3650
    %3653 = vst [vmem:[#allocation4 + $0x8] sm:$0xff] %v3651
    %v3654 = vld [vmem:[%s1195] sm:$0xff]
    %v3655 = vld [vmem:[%s1195 + $0x8] sm:$0xff]
    %v3656 = vld [vmem:[%s1195 + $0x10] sm:$0xff]
    %v3657 = vld [vmem:[%s1195 + $0x18] sm:$0xff]
    %3658 = vmatpush.msra.mxu0 %v2533
    %3659 = vmatpush.msra.mxu0 %v2529
    %3660 = vmatpush.msra.mxu0 %v2525
    %3661 = vmatpush.msra.mxu0 %v2521
    %3662 = vmatpush.msra.mxu0 %v2517
    %3663 = vmatpush.msra.mxu0 %v2513
    %3664 = vmatpush.msra.mxu0 %v2509
    %3665 = vmatpush.msra.mxu0 %v2505
    %3666 = vmatpush.msra.mxu0 %v2501
    %3667 = vmatpush.msra.mxu0 %v2497
    %3668 = vmatpush.msra.mxu0 %v2493
    %3669 = vmatpush.msra.mxu0 %v2489
    %3670 = vmatpush.msra.mxu0 %v2485
    %3671 = vmatpush.msra.mxu0 %v2481
    %3672 = vmatpush.msra.mxu0 %v2477
    %3673 = vmatpush.msra.mxu0 %v2473
    %3674 = vmatmul.f32.gmra.mxu0 %v3573
    %v3675 = vpop.f32.mrf.mxu0
    %v3676 = vadd.f32 0.0, %v3675
    %3677 = vdwg.mxu0
    %3678 = vmatpush.msra.mxu0 %v2534
    %3679 = vmatpush.msra.mxu0 %v2530
    %3680 = vmatpush.msra.mxu0 %v2526
    %3681 = vmatpush.msra.mxu0 %v2522
    %3682 = vmatpush.msra.mxu0 %v2518
    %3683 = vmatpush.msra.mxu0 %v2514
    %3684 = vmatpush.msra.mxu0 %v2510
    %3685 = vmatpush.msra.mxu0 %v2506
    %3686 = vmatpush.msra.mxu0 %v2502
    %3687 = vmatpush.msra.mxu0 %v2498
    %3688 = vmatpush.msra.mxu0 %v2494
    %3689 = vmatpush.msra.mxu0 %v2490
    %3690 = vmatpush.msra.mxu0 %v2486
    %3691 = vmatpush.msra.mxu0 %v2482
    %3692 = vmatpush.msra.mxu0 %v2478
    %3693 = vmatpush.msra.mxu0 %v2474
    %3694 = vmatmul.f32.gmra.mxu0 %v3573
    %v3695 = vpop.f32.mrf.mxu0
    %v3696 = vadd.f32 0.0, %v3695
    %3697 = vdwg.mxu0
    %3698 = vmatpush.msra.mxu0 %v2535
    %3699 = vmatpush.msra.mxu0 %v2531
    %3700 = vmatpush.msra.mxu0 %v2527
    %3701 = vmatpush.msra.mxu0 %v2523
    %3702 = vmatpush.msra.mxu0 %v2519
    %3703 = vmatpush.msra.mxu0 %v2515
    %3704 = vmatpush.msra.mxu0 %v2511
    %3705 = vmatpush.msra.mxu0 %v2507
    %3706 = vmatpush.msra.mxu0 %v2503
    %3707 = vmatpush.msra.mxu0 %v2499
    %3708 = vmatpush.msra.mxu0 %v2495
    %3709 = vmatpush.msra.mxu0 %v2491
    %3710 = vmatpush.msra.mxu0 %v2487
    %3711 = vmatpush.msra.mxu0 %v2483
    %3712 = vmatpush.msra.mxu0 %v2479
    %3713 = vmatpush.msra.mxu0 %v2475
    %3714 = vmatmul.f32.gmra.mxu0 %v3573
    %v3715 = vpop.f32.mrf.mxu0
    %v3716 = vadd.f32 0.0, %v3715
    %3717 = vdwg.mxu0
    %3718 = vmatpush.msra.mxu0 %v2536
    %3719 = vmatpush.msra.mxu0 %v2532
    %3720 = vmatpush.msra.mxu0 %v2528
    %3721 = vmatpush.msra.mxu0 %v2524
    %3722 = vmatpush.msra.mxu0 %v2520
    %3723 = vmatpush.msra.mxu0 %v2516
    %3724 = vmatpush.msra.mxu0 %v2512
    %3725 = vmatpush.msra.mxu0 %v2508
    %3726 = vmatpush.msra.mxu0 %v2504
    %3727 = vmatpush.msra.mxu0 %v2500
    %3728 = vmatpush.msra.mxu0 %v2496
    %3729 = vmatpush.msra.mxu0 %v2492
    %3730 = vmatpush.msra.mxu0 %v2488
    %3731 = vmatpush.msra.mxu0 %v2484
    %3732 = vmatpush.msra.mxu0 %v2480
    %3733 = vmatpush.msra.mxu0 %v2476
    %3734 = vmatmul.f32.gmra.mxu0 %v3573
    %v3735 = vpop.f32.mrf.mxu0
    %v3736 = vadd.f32 0.0, %v3735
    %3737 = vdwg.mxu0
    %v3738 = vadd.f32 %v3654, %v3676
    %v3739 = vadd.f32 %v3655, %v3696
    %v3740 = vadd.f32 %v3656, %v3716
    %v3741 = vadd.f32 %v3657, %v3736
    %v3742 = vmul.f32 %v3738, 0.5
    %v3743 = vmul.f32 %v3739, 0.5
    %v3744 = vmul.f32 %v3740, 0.5
    %v3745 = vtanh.pop %v3742
    %v3746 = vtanh.pop %v3743
    %v3747 = vtanh.pop %v3744
    %v3748 = vmul.f32 %v3745, 0.5
    %v3749 = vmul.f32 %v3746, 0.5
    %v3750 = vmul.f32 %v3747, 0.5
    %v3751 = vadd.f32 %v3748, 0.5
    %v3752 = vadd.f32 %v3749, 0.5
    %v3753 = vadd.f32 %v3750, 0.5
    %v3754 = vtanh.pop %v3741
    %v3755 = vmul.f32 %v3752, %v3571
    %v3756 = vmul.f32 %v3751, %v3754
    %v3757 = vadd.f32 %v3755, %v3756
    %v3758 = vtanh.pop %v3757
    %v3759 = vmul.f32 %v3753, %v3758
    %v3760 = vld [vmem:[#allocation4] sm:$0xff]
    %v3761 = vld [vmem:[#allocation4 + $0x8] sm:$0xff]
    %v3762 = vtanh.pop %v3759
    %s3763 = scalar_lea.vmem [#allocation14], 1536
    %v3764 = vld [vmem:[%s3763] sm:$0xff]
    %v3765 = vld [vmem:[%s3763 + $0x8] sm:$0xff]
    %v3766 = vld [vmem:[%s3763 + $0x10] sm:$0xff]
    %v3767 = vld [vmem:[%s3763 + $0x18] sm:$0xff]
    %v3768 = vld [vmem:[%s3763 + $0x20] sm:$0xff]
    %v3769 = vld [vmem:[%s3763 + $0x28] sm:$0xff]
    %v3770 = vld [vmem:[%s3763 + $0x30] sm:$0xff]
    %v3771 = vld [vmem:[%s3763 + $0x38] sm:$0xff]
    %v3772 = vld [vmem:[%s3763 + $0x40] sm:$0xff]
    %v3773 = vld [vmem:[%s3763 + $0x48] sm:$0xff]
    %v3774 = vld [vmem:[%s3763 + $0x50] sm:$0xff]
    %v3775 = vld [vmem:[%s3763 + $0x58] sm:$0xff]
    %v3776 = vld [vmem:[%s3763 + $0x60] sm:$0xff]
    %v3777 = vld [vmem:[%s3763 + $0x68] sm:$0xff]
    %v3778 = vld [vmem:[%s3763 + $0x70] sm:$0xff]
    %v3779 = vld [vmem:[%s3763 + $0x78] sm:$0xff]
    %v3780 = vld [vmem:[%s3763 + $0x80] sm:$0xff]
    %v3781 = vld [vmem:[%s3763 + $0x88] sm:$0xff]
    %v3782 = vld [vmem:[%s3763 + $0x90] sm:$0xff]
    %v3783 = vld [vmem:[%s3763 + $0x98] sm:$0xff]
    %v3784 = vld [vmem:[%s3763 + $0xa0] sm:$0xff]
    %v3785 = vld [vmem:[%s3763 + $0xa8] sm:$0xff]
    %v3786 = vld [vmem:[%s3763 + $0xb0] sm:$0xff]
    %v3787 = vld [vmem:[%s3763 + $0xb8] sm:$0xff]
    %v3788 = vld [vmem:[%s3763 + $0xc0] sm:$0xff]
    %v3789 = vld [vmem:[%s3763 + $0xc8] sm:$0xff]
    %v3790 = vld [vmem:[%s3763 + $0xd0] sm:$0xff]
    %v3791 = vld [vmem:[%s3763 + $0xd8] sm:$0xff]
    %v3792 = vld [vmem:[%s3763 + $0xe0] sm:$0xff]
    %v3793 = vld [vmem:[%s3763 + $0xe8] sm:$0xff]
    %v3794 = vld [vmem:[%s3763 + $0xf0] sm:$0xff]
    %v3795 = vld [vmem:[%s3763 + $0xf8] sm:$0xff]
    %3796 = vmatpush.msra.mxu0 %v3794
    %3797 = vmatpush.msra.mxu0 %v3792
    %3798 = vmatpush.msra.mxu0 %v3790
    %3799 = vmatpush.msra.mxu0 %v3788
    %3800 = vmatpush.msra.mxu0 %v3786
    %3801 = vmatpush.msra.mxu0 %v3784
    %3802 = vmatpush.msra.mxu0 %v3782
    %3803 = vmatpush.msra.mxu0 %v3780
    %3804 = vmatpush.msra.mxu0 %v3778
    %3805 = vmatpush.msra.mxu0 %v3776
    %3806 = vmatpush.msra.mxu0 %v3774
    %3807 = vmatpush.msra.mxu0 %v3772
    %3808 = vmatpush.msra.mxu0 %v3770
    %3809 = vmatpush.msra.mxu0 %v3768
    %3810 = vmatpush.msra.mxu0 %v3766
    %3811 = vmatpush.msra.mxu0 %v3764
    %3812 = vmatmul.f32.gmra.mxu0 %v3762
    %v3813 = vpop.f32.mrf.mxu0
    %v3814 = vadd.f32 0.0, %v3813
    %3815 = vdwg.mxu0
    %3816 = vmatpush.msra.mxu0 %v3795
    %3817 = vmatpush.msra.mxu0 %v3793
    %3818 = vmatpush.msra.mxu0 %v3791
    %3819 = vmatpush.msra.mxu0 %v3789
    %3820 = vmatpush.msra.mxu0 %v3787
    %3821 = vmatpush.msra.mxu0 %v3785
    %3822 = vmatpush.msra.mxu0 %v3783
    %3823 = vmatpush.msra.mxu0 %v3781
    %3824 = vmatpush.msra.mxu0 %v3779
    %3825 = vmatpush.msra.mxu0 %v3777
    %3826 = vmatpush.msra.mxu0 %v3775
    %3827 = vmatpush.msra.mxu0 %v3773
    %3828 = vmatpush.msra.mxu0 %v3771
    %3829 = vmatpush.msra.mxu0 %v3769
    %3830 = vmatpush.msra.mxu0 %v3767
    %3831 = vmatpush.msra.mxu0 %v3765
    %3832 = vmatmul.f32.gmra.mxu0 %v3762
    %v3833 = vpop.f32.mrf.mxu0
    %v3834 = vadd.f32 0.0, %v3833
    %3835 = vdwg.mxu0
    %v3836 = vadd.f32 %v3760, %v3814
    %v3837 = vadd.f32 %v3761, %v3834
    %3838 = vst [vmem:[#allocation4] sm:$0xff] %v3836
    %3839 = vst [vmem:[#allocation4 + $0x8] sm:$0xff] %v3837
    %v3840 = vld [vmem:[%s1304] sm:$0xff]
    %v3841 = vld [vmem:[%s1304 + $0x8] sm:$0xff]
    %v3842 = vld [vmem:[%s1304 + $0x10] sm:$0xff]
    %v3843 = vld [vmem:[%s1304 + $0x18] sm:$0xff]
    %3844 = vmatpush.msra.mxu0 %v2533
    %3845 = vmatpush.msra.mxu0 %v2529
    %3846 = vmatpush.msra.mxu0 %v2525
    %3847 = vmatpush.msra.mxu0 %v2521
    %3848 = vmatpush.msra.mxu0 %v2517
    %3849 = vmatpush.msra.mxu0 %v2513
    %3850 = vmatpush.msra.mxu0 %v2509
    %3851 = vmatpush.msra.mxu0 %v2505
    %3852 = vmatpush.msra.mxu0 %v2501
    %3853 = vmatpush.msra.mxu0 %v2497
    %3854 = vmatpush.msra.mxu0 %v2493
    %3855 = vmatpush.msra.mxu0 %v2489
    %3856 = vmatpush.msra.mxu0 %v2485
    %3857 = vmatpush.msra.mxu0 %v2481
    %3858 = vmatpush.msra.mxu0 %v2477
    %3859 = vmatpush.msra.mxu0 %v2473
    %3860 = vmatmul.f32.gmra.mxu0 %v3759
    %v3861 = vpop.f32.mrf.mxu0
    %v3862 = vadd.f32 0.0, %v3861
    %3863 = vdwg.mxu0
    %3864 = vmatpush.msra.mxu0 %v2534
    %3865 = vmatpush.msra.mxu0 %v2530
    %3866 = vmatpush.msra.mxu0 %v2526
    %3867 = vmatpush.msra.mxu0 %v2522
    %3868 = vmatpush.msra.mxu0 %v2518
    %3869 = vmatpush.msra.mxu0 %v2514
    %3870 = vmatpush.msra.mxu0 %v2510
    %3871 = vmatpush.msra.mxu0 %v2506
    %3872 = vmatpush.msra.mxu0 %v2502
    %3873 = vmatpush.msra.mxu0 %v2498
    %3874 = vmatpush.msra.mxu0 %v2494
    %3875 = vmatpush.msra.mxu0 %v2490
    %3876 = vmatpush.msra.mxu0 %v2486
    %3877 = vmatpush.msra.mxu0 %v2482
    %3878 = vmatpush.msra.mxu0 %v2478
    %3879 = vmatpush.msra.mxu0 %v2474
    %3880 = vmatmul.f32.gmra.mxu0 %v3759
    %v3881 = vpop.f32.mrf.mxu0
    %v3882 = vadd.f32 0.0, %v3881
    %3883 = vdwg.mxu0
    %3884 = vmatpush.msra.mxu0 %v2535
    %3885 = vmatpush.msra.mxu0 %v2531
    %3886 = vmatpush.msra.mxu0 %v2527
    %3887 = vmatpush.msra.mxu0 %v2523
    %3888 = vmatpush.msra.mxu0 %v2519
    %3889 = vmatpush.msra.mxu0 %v2515
    %3890 = vmatpush.msra.mxu0 %v2511
    %3891 = vmatpush.msra.mxu0 %v2507
    %3892 = vmatpush.msra.mxu0 %v2503
    %3893 = vmatpush.msra.mxu0 %v2499
    %3894 = vmatpush.msra.mxu0 %v2495
    %3895 = vmatpush.msra.mxu0 %v2491
    %3896 = vmatpush.msra.mxu0 %v2487
    %3897 = vmatpush.msra.mxu0 %v2483
    %3898 = vmatpush.msra.mxu0 %v2479
    %3899 = vmatpush.msra.mxu0 %v2475
    %3900 = vmatmul.f32.gmra.mxu0 %v3759
    %v3901 = vpop.f32.mrf.mxu0
    %v3902 = vadd.f32 0.0, %v3901
    %3903 = vdwg.mxu0
    %3904 = vmatpush.msra.mxu0 %v2536
    %3905 = vmatpush.msra.mxu0 %v2532
    %3906 = vmatpush.msra.mxu0 %v2528
    %3907 = vmatpush.msra.mxu0 %v2524
    %3908 = vmatpush.msra.mxu0 %v2520
    %3909 = vmatpush.msra.mxu0 %v2516
    %3910 = vmatpush.msra.mxu0 %v2512
    %3911 = vmatpush.msra.mxu0 %v2508
    %3912 = vmatpush.msra.mxu0 %v2504
    %3913 = vmatpush.msra.mxu0 %v2500
    %3914 = vmatpush.msra.mxu0 %v2496
    %3915 = vmatpush.msra.mxu0 %v2492
    %3916 = vmatpush.msra.mxu0 %v2488
    %3917 = vmatpush.msra.mxu0 %v2484
    %3918 = vmatpush.msra.mxu0 %v2480
    %3919 = vmatpush.msra.mxu0 %v2476
    %3920 = vmatmul.f32.gmra.mxu0 %v3759
    %v3921 = vpop.f32.mrf.mxu0
    %v3922 = vadd.f32 0.0, %v3921
    %3923 = vdwg.mxu0
    %v3924 = vadd.f32 %v3840, %v3862
    %v3925 = vadd.f32 %v3841, %v3882
    %v3926 = vadd.f32 %v3842, %v3902
    %v3927 = vadd.f32 %v3843, %v3922
    %v3928 = vmul.f32 %v3924, 0.5
    %v3929 = vmul.f32 %v3925, 0.5
    %v3930 = vmul.f32 %v3926, 0.5
    %v3931 = vtanh.pop %v3928
    %v3932 = vtanh.pop %v3929
    %v3933 = vtanh.pop %v3930
    %v3934 = vmul.f32 %v3931, 0.5
    %v3935 = vmul.f32 %v3932, 0.5
    %v3936 = vmul.f32 %v3933, 0.5
    %v3937 = vadd.f32 %v3934, 0.5
    %v3938 = vadd.f32 %v3935, 0.5
    %v3939 = vadd.f32 %v3936, 0.5
    %v3940 = vtanh.pop %v3927
    %v3941 = vmul.f32 %v3938, %v3757
    %v3942 = vmul.f32 %v3937, %v3940
    %v3943 = vadd.f32 %v3941, %v3942
    %v3944 = vtanh.pop %v3943
    %v3945 = vmul.f32 %v3939, %v3944
    %v3946 = vld [vmem:[#allocation4] sm:$0xff]
    %v3947 = vld [vmem:[#allocation4 + $0x8] sm:$0xff]
    %v3948 = vtanh.pop %v3945
    %s3949 = scalar_lea.vmem [#allocation14], 1792
    %v3950 = vld [vmem:[%s3949] sm:$0xff]
    %v3951 = vld [vmem:[%s3949 + $0x8] sm:$0xff]
    %v3952 = vld [vmem:[%s3949 + $0x10] sm:$0xff]
    %v3953 = vld [vmem:[%s3949 + $0x18] sm:$0xff]
    %v3954 = vld [vmem:[%s3949 + $0x20] sm:$0xff]
    %v3955 = vld [vmem:[%s3949 + $0x28] sm:$0xff]
    %v3956 = vld [vmem:[%s3949 + $0x30] sm:$0xff]
    %v3957 = vld [vmem:[%s3949 + $0x38] sm:$0xff]
    %v3958 = vld [vmem:[%s3949 + $0x40] sm:$0xff]
    %v3959 = vld [vmem:[%s3949 + $0x48] sm:$0xff]
    %v3960 = vld [vmem:[%s3949 + $0x50] sm:$0xff]
    %v3961 = vld [vmem:[%s3949 + $0x58] sm:$0xff]
    %v3962 = vld [vmem:[%s3949 + $0x60] sm:$0xff]
    %v3963 = vld [vmem:[%s3949 + $0x68] sm:$0xff]
    %v3964 = vld [vmem:[%s3949 + $0x70] sm:$0xff]
    %v3965 = vld [vmem:[%s3949 + $0x78] sm:$0xff]
    %v3966 = vld [vmem:[%s3949 + $0x80] sm:$0xff]
    %v3967 = vld [vmem:[%s3949 + $0x88] sm:$0xff]
    %v3968 = vld [vmem:[%s3949 + $0x90] sm:$0xff]
    %v3969 = vld [vmem:[%s3949 + $0x98] sm:$0xff]
    %v3970 = vld [vmem:[%s3949 + $0xa0] sm:$0xff]
    %v3971 = vld [vmem:[%s3949 + $0xa8] sm:$0xff]
    %v3972 = vld [vmem:[%s3949 + $0xb0] sm:$0xff]
    %v3973 = vld [vmem:[%s3949 + $0xb8] sm:$0xff]
    %v3974 = vld [vmem:[%s3949 + $0xc0] sm:$0xff]
    %v3975 = vld [vmem:[%s3949 + $0xc8] sm:$0xff]
    %v3976 = vld [vmem:[%s3949 + $0xd0] sm:$0xff]
    %v3977 = vld [vmem:[%s3949 + $0xd8] sm:$0xff]
    %v3978 = vld [vmem:[%s3949 + $0xe0] sm:$0xff]
    %v3979 = vld [vmem:[%s3949 + $0xe8] sm:$0xff]
    %v3980 = vld [vmem:[%s3949 + $0xf0] sm:$0xff]
    %v3981 = vld [vmem:[%s3949 + $0xf8] sm:$0xff]
    %3982 = vmatpush.msra.mxu0 %v3980
    %3983 = vmatpush.msra.mxu0 %v3978
    %3984 = vmatpush.msra.mxu0 %v3976
    %3985 = vmatpush.msra.mxu0 %v3974
    %3986 = vmatpush.msra.mxu0 %v3972
    %3987 = vmatpush.msra.mxu0 %v3970
    %3988 = vmatpush.msra.mxu0 %v3968
    %3989 = vmatpush.msra.mxu0 %v3966
    %3990 = vmatpush.msra.mxu0 %v3964
    %3991 = vmatpush.msra.mxu0 %v3962
    %3992 = vmatpush.msra.mxu0 %v3960
    %3993 = vmatpush.msra.mxu0 %v3958
    %3994 = vmatpush.msra.mxu0 %v3956
    %3995 = vmatpush.msra.mxu0 %v3954
    %3996 = vmatpush.msra.mxu0 %v3952
    %3997 = vmatpush.msra.mxu0 %v3950
    %3998 = vmatmul.f32.gmra.mxu0 %v3948
    %v3999 = vpop.f32.mrf.mxu0
    %v4000 = vadd.f32 0.0, %v3999
    %4001 = vdwg.mxu0
    %4002 = vmatpush.msra.mxu0 %v3981
    %4003 = vmatpush.msra.mxu0 %v3979
    %4004 = vmatpush.msra.mxu0 %v3977
    %4005 = vmatpush.msra.mxu0 %v3975
    %4006 = vmatpush.msra.mxu0 %v3973
    %4007 = vmatpush.msra.mxu0 %v3971
    %4008 = vmatpush.msra.mxu0 %v3969
    %4009 = vmatpush.msra.mxu0 %v3967
    %4010 = vmatpush.msra.mxu0 %v3965
    %4011 = vmatpush.msra.mxu0 %v3963
    %4012 = vmatpush.msra.mxu0 %v3961
    %4013 = vmatpush.msra.mxu0 %v3959
    %4014 = vmatpush.msra.mxu0 %v3957
    %4015 = vmatpush.msra.mxu0 %v3955
    %4016 = vmatpush.msra.mxu0 %v3953
    %4017 = vmatpush.msra.mxu0 %v3951
    %4018 = vmatmul.f32.gmra.mxu0 %v3948
    %v4019 = vpop.f32.mrf.mxu0
    %v4020 = vadd.f32 0.0, %v4019
    %4021 = vdwg.mxu0
    %v4022 = vadd.f32 %v3946, %v4000
    %v4023 = vadd.f32 %v3947, %v4020
    %4024 = vst [vmem:[#allocation4] sm:$0xff] %v4022
    %4025 = vst [vmem:[#allocation4 + $0x8] sm:$0xff] %v4023
    %v4026 = vld [vmem:[%s1413] sm:$0xff]
    %v4027 = vld [vmem:[%s1413 + $0x8] sm:$0xff]
    %v4028 = vld [vmem:[%s1413 + $0x10] sm:$0xff]
    %v4029 = vld [vmem:[%s1413 + $0x18] sm:$0xff]
    %4030 = vmatpush.msra.mxu0 %v2533
    %4031 = vmatpush.msra.mxu0 %v2529
    %4032 = vmatpush.msra.mxu0 %v2525
    %4033 = vmatpush.msra.mxu0 %v2521
    %4034 = vmatpush.msra.mxu0 %v2517
    %4035 = vmatpush.msra.mxu0 %v2513
    %4036 = vmatpush.msra.mxu0 %v2509
    %4037 = vmatpush.msra.mxu0 %v2505
    %4038 = vmatpush.msra.mxu0 %v2501
    %4039 = vmatpush.msra.mxu0 %v2497
    %4040 = vmatpush.msra.mxu0 %v2493
    %4041 = vmatpush.msra.mxu0 %v2489
    %4042 = vmatpush.msra.mxu0 %v2485
    %4043 = vmatpush.msra.mxu0 %v2481
    %4044 = vmatpush.msra.mxu0 %v2477
    %4045 = vmatpush.msra.mxu0 %v2473
    %4046 = vmatmul.f32.gmra.mxu0 %v3945
    %v4047 = vpop.f32.mrf.mxu0
    %v4048 = vadd.f32 0.0, %v4047
    %4049 = vdwg.mxu0
    %4050 = vmatpush.msra.mxu0 %v2534
    %4051 = vmatpush.msra.mxu0 %v2530
    %4052 = vmatpush.msra.mxu0 %v2526
    %4053 = vmatpush.msra.mxu0 %v2522
    %4054 = vmatpush.msra.mxu0 %v2518
    %4055 = vmatpush.msra.mxu0 %v2514
    %4056 = vmatpush.msra.mxu0 %v2510
    %4057 = vmatpush.msra.mxu0 %v2506
    %4058 = vmatpush.msra.mxu0 %v2502
    %4059 = vmatpush.msra.mxu0 %v2498
    %4060 = vmatpush.msra.mxu0 %v2494
    %4061 = vmatpush.msra.mxu0 %v2490
    %4062 = vmatpush.msra.mxu0 %v2486
    %4063 = vmatpush.msra.mxu0 %v2482
    %4064 = vmatpush.msra.mxu0 %v2478
    %4065 = vmatpush.msra.mxu0 %v2474
    %4066 = vmatmul.f32.gmra.mxu0 %v3945
    %v4067 = vpop.f32.mrf.mxu0
    %v4068 = vadd.f32 0.0, %v4067
    %4069 = vdwg.mxu0
    %4070 = vmatpush.msra.mxu0 %v2535
    %4071 = vmatpush.msra.mxu0 %v2531
    %4072 = vmatpush.msra.mxu0 %v2527
    %4073 = vmatpush.msra.mxu0 %v2523
    %4074 = vmatpush.msra.mxu0 %v2519
    %4075 = vmatpush.msra.mxu0 %v2515
    %4076 = vmatpush.msra.mxu0 %v2511
    %4077 = vmatpush.msra.mxu0 %v2507
    %4078 = vmatpush.msra.mxu0 %v2503
    %4079 = vmatpush.msra.mxu0 %v2499
    %4080 = vmatpush.msra.mxu0 %v2495
    %4081 = vmatpush.msra.mxu0 %v2491
    %4082 = vmatpush.msra.mxu0 %v2487
    %4083 = vmatpush.msra.mxu0 %v2483
    %4084 = vmatpush.msra.mxu0 %v2479
    %4085 = vmatpush.msra.mxu0 %v2475
    %4086 = vmatmul.f32.gmra.mxu0 %v3945
    %v4087 = vpop.f32.mrf.mxu0
    %v4088 = vadd.f32 0.0, %v4087
    %4089 = vdwg.mxu0
    %4090 = vmatpush.msra.mxu0 %v2536
    %4091 = vmatpush.msra.mxu0 %v2532
    %4092 = vmatpush.msra.mxu0 %v2528
    %4093 = vmatpush.msra.mxu0 %v2524
    %4094 = vmatpush.msra.mxu0 %v2520
    %4095 = vmatpush.msra.mxu0 %v2516
    %4096 = vmatpush.msra.mxu0 %v2512
    %4097 = vmatpush.msra.mxu0 %v2508
    %4098 = vmatpush.msra.mxu0 %v2504
    %4099 = vmatpush.msra.mxu0 %v2500
    %4100 = vmatpush.msra.mxu0 %v2496
    %4101 = vmatpush.msra.mxu0 %v2492
    %4102 = vmatpush.msra.mxu0 %v2488
    %4103 = vmatpush.msra.mxu0 %v2484
    %4104 = vmatpush.msra.mxu0 %v2480
    %4105 = vmatpush.msra.mxu0 %v2476
    %4106 = vmatmul.f32.gmra.mxu0 %v3945
    %v4107 = vpop.f32.mrf.mxu0
    %v4108 = vadd.f32 0.0, %v4107
    %4109 = vdwg.mxu0
    %v4110 = vadd.f32 %v4026, %v4048
    %v4111 = vadd.f32 %v4027, %v4068
    %v4112 = vadd.f32 %v4028, %v4088
    %v4113 = vadd.f32 %v4029, %v4108
    %v4114 = vmul.f32 %v4110, 0.5
    %v4115 = vmul.f32 %v4111, 0.5
    %v4116 = vmul.f32 %v4112, 0.5
    %v4117 = vtanh.pop %v4114
    %v4118 = vtanh.pop %v4115
    %v4119 = vtanh.pop %v4116
    %v4120 = vmul.f32 %v4117, 0.5
    %v4121 = vmul.f32 %v4118, 0.5
    %v4122 = vmul.f32 %v4119, 0.5
    %v4123 = vadd.f32 %v4120, 0.5
    %v4124 = vadd.f32 %v4121, 0.5
    %v4125 = vadd.f32 %v4122, 0.5
    %v4126 = vtanh.pop %v4113
    %v4127 = vmul.f32 %v4124, %v3943
    %v4128 = vmul.f32 %v4123, %v4126
    %v4129 = vadd.f32 %v4127, %v4128
    %v4130 = vtanh.pop %v4129
    %v4131 = vmul.f32 %v4125, %v4130
    %v4132 = vld [vmem:[#allocation4] sm:$0xff]
    %v4133 = vld [vmem:[#allocation4 + $0x8] sm:$0xff]
    %v4134 = vtanh.pop %v4131
    %s4135 = scalar_lea.vmem [#allocation14], 2048
    %v4136 = vld [vmem:[%s4135] sm:$0xff]
    %v4137 = vld [vmem:[%s4135 + $0x8] sm:$0xff]
    %v4138 = vld [vmem:[%s4135 + $0x10] sm:$0xff]
    %v4139 = vld [vmem:[%s4135 + $0x18] sm:$0xff]
    %v4140 = vld [vmem:[%s4135 + $0x20] sm:$0xff]
    %v4141 = vld [vmem:[%s4135 + $0x28] sm:$0xff]
    %v4142 = vld [vmem:[%s4135 + $0x30] sm:$0xff]
    %v4143 = vld [vmem:[%s4135 + $0x38] sm:$0xff]
    %v4144 = vld [vmem:[%s4135 + $0x40] sm:$0xff]
    %v4145 = vld [vmem:[%s4135 + $0x48] sm:$0xff]
    %v4146 = vld [vmem:[%s4135 + $0x50] sm:$0xff]
    %v4147 = vld [vmem:[%s4135 + $0x58] sm:$0xff]
    %v4148 = vld [vmem:[%s4135 + $0x60] sm:$0xff]
    %v4149 = vld [vmem:[%s4135 + $0x68] sm:$0xff]
    %v4150 = vld [vmem:[%s4135 + $0x70] sm:$0xff]
    %v4151 = vld [vmem:[%s4135 + $0x78] sm:$0xff]
    %v4152 = vld [vmem:[%s4135 + $0x80] sm:$0xff]
    %v4153 = vld [vmem:[%s4135 + $0x88] sm:$0xff]
    %v4154 = vld [vmem:[%s4135 + $0x90] sm:$0xff]
    %v4155 = vld [vmem:[%s4135 + $0x98] sm:$0xff]
    %v4156 = vld [vmem:[%s4135 + $0xa0] sm:$0xff]
    %v4157 = vld [vmem:[%s4135 + $0xa8] sm:$0xff]
    %v4158 = vld [vmem:[%s4135 + $0xb0] sm:$0xff]
    %v4159 = vld [vmem:[%s4135 + $0xb8] sm:$0xff]
    %v4160 = vld [vmem:[%s4135 + $0xc0] sm:$0xff]
    %v4161 = vld [vmem:[%s4135 + $0xc8] sm:$0xff]
    %v4162 = vld [vmem:[%s4135 + $0xd0] sm:$0xff]
    %v4163 = vld [vmem:[%s4135 + $0xd8] sm:$0xff]
    %v4164 = vld [vmem:[%s4135 + $0xe0] sm:$0xff]
    %v4165 = vld [vmem:[%s4135 + $0xe8] sm:$0xff]
    %v4166 = vld [vmem:[%s4135 + $0xf0] sm:$0xff]
    %v4167 = vld [vmem:[%s4135 + $0xf8] sm:$0xff]
    %4168 = vmatpush.msra.mxu0 %v4166
    %4169 = vmatpush.msra.mxu0 %v4164
    %4170 = vmatpush.msra.mxu0 %v4162
    %4171 = vmatpush.msra.mxu0 %v4160
    %4172 = vmatpush.msra.mxu0 %v4158
    %4173 = vmatpush.msra.mxu0 %v4156
    %4174 = vmatpush.msra.mxu0 %v4154
    %4175 = vmatpush.msra.mxu0 %v4152
    %4176 = vmatpush.msra.mxu0 %v4150
    %4177 = vmatpush.msra.mxu0 %v4148
    %4178 = vmatpush.msra.mxu0 %v4146
    %4179 = vmatpush.msra.mxu0 %v4144
    %4180 = vmatpush.msra.mxu0 %v4142
    %4181 = vmatpush.msra.mxu0 %v4140
    %4182 = vmatpush.msra.mxu0 %v4138
    %4183 = vmatpush.msra.mxu0 %v4136
    %4184 = vmatmul.f32.gmra.mxu0 %v4134
    %v4185 = vpop.f32.mrf.mxu0
    %v4186 = vadd.f32 0.0, %v4185
    %4187 = vdwg.mxu0
    %4188 = vmatpush.msra.mxu0 %v4167
    %4189 = vmatpush.msra.mxu0 %v4165
    %4190 = vmatpush.msra.mxu0 %v4163
    %4191 = vmatpush.msra.mxu0 %v4161
    %4192 = vmatpush.msra.mxu0 %v4159
    %4193 = vmatpush.msra.mxu0 %v4157
    %4194 = vmatpush.msra.mxu0 %v4155
    %4195 = vmatpush.msra.mxu0 %v4153
    %4196 = vmatpush.msra.mxu0 %v4151
    %4197 = vmatpush.msra.mxu0 %v4149
    %4198 = vmatpush.msra.mxu0 %v4147
    %4199 = vmatpush.msra.mxu0 %v4145
    %4200 = vmatpush.msra.mxu0 %v4143
    %4201 = vmatpush.msra.mxu0 %v4141
    %4202 = vmatpush.msra.mxu0 %v4139
    %4203 = vmatpush.msra.mxu0 %v4137
    %4204 = vmatmul.f32.gmra.mxu0 %v4134
    %v4205 = vpop.f32.mrf.mxu0
    %v4206 = vadd.f32 0.0, %v4205
    %4207 = vdwg.mxu0
    %v4208 = vadd.f32 %v4132, %v4186
    %v4209 = vadd.f32 %v4133, %v4206
    %4210 = vst [vmem:[#allocation4] sm:$0xff] %v4208
    %4211 = vst [vmem:[#allocation4 + $0x8] sm:$0xff] %v4209
    %v4212 = vld [vmem:[%s1522] sm:$0xff]
    %v4213 = vld [vmem:[%s1522 + $0x8] sm:$0xff]
    %v4214 = vld [vmem:[%s1522 + $0x10] sm:$0xff]
    %v4215 = vld [vmem:[%s1522 + $0x18] sm:$0xff]
    %4216 = vmatpush.msra.mxu0 %v2533
    %4217 = vmatpush.msra.mxu0 %v2529
    %4218 = vmatpush.msra.mxu0 %v2525
    %4219 = vmatpush.msra.mxu0 %v2521
    %4220 = vmatpush.msra.mxu0 %v2517
    %4221 = vmatpush.msra.mxu0 %v2513
    %4222 = vmatpush.msra.mxu0 %v2509
    %4223 = vmatpush.msra.mxu0 %v2505
    %4224 = vmatpush.msra.mxu0 %v2501
    %4225 = vmatpush.msra.mxu0 %v2497
    %4226 = vmatpush.msra.mxu0 %v2493
    %4227 = vmatpush.msra.mxu0 %v2489
    %4228 = vmatpush.msra.mxu0 %v2485
    %4229 = vmatpush.msra.mxu0 %v2481
    %4230 = vmatpush.msra.mxu0 %v2477
    %4231 = vmatpush.msra.mxu0 %v2473
    %4232 = vmatmul.f32.gmra.mxu0 %v4131
    %v4233 = vpop.f32.mrf.mxu0
    %v4234 = vadd.f32 0.0, %v4233
    %4235 = vdwg.mxu0
    %4236 = vmatpush.msra.mxu0 %v2534
    %4237 = vmatpush.msra.mxu0 %v2530
    %4238 = vmatpush.msra.mxu0 %v2526
    %4239 = vmatpush.msra.mxu0 %v2522
    %4240 = vmatpush.msra.mxu0 %v2518
    %4241 = vmatpush.msra.mxu0 %v2514
    %4242 = vmatpush.msra.mxu0 %v2510
    %4243 = vmatpush.msra.mxu0 %v2506
    %4244 = vmatpush.msra.mxu0 %v2502
    %4245 = vmatpush.msra.mxu0 %v2498
    %4246 = vmatpush.msra.mxu0 %v2494
    %4247 = vmatpush.msra.mxu0 %v2490
    %4248 = vmatpush.msra.mxu0 %v2486
    %4249 = vmatpush.msra.mxu0 %v2482
    %4250 = vmatpush.msra.mxu0 %v2478
    %4251 = vmatpush.msra.mxu0 %v2474
    %4252 = vmatmul.f32.gmra.mxu0 %v4131
    %v4253 = vpop.f32.mrf.mxu0
    %v4254 = vadd.f32 0.0, %v4253
    %4255 = vdwg.mxu0
    %4256 = vmatpush.msra.mxu0 %v2535
    %4257 = vmatpush.msra.mxu0 %v2531
    %4258 = vmatpush.msra.mxu0 %v2527
    %4259 = vmatpush.msra.mxu0 %v2523
    %4260 = vmatpush.msra.mxu0 %v2519
    %4261 = vmatpush.msra.mxu0 %v2515
    %4262 = vmatpush.msra.mxu0 %v2511
    %4263 = vmatpush.msra.mxu0 %v2507
    %4264 = vmatpush.msra.mxu0 %v2503
    %4265 = vmatpush.msra.mxu0 %v2499
    %4266 = vmatpush.msra.mxu0 %v2495
    %4267 = vmatpush.msra.mxu0 %v2491
    %4268 = vmatpush.msra.mxu0 %v2487
    %4269 = vmatpush.msra.mxu0 %v2483
    %4270 = vmatpush.msra.mxu0 %v2479
    %4271 = vmatpush.msra.mxu0 %v2475
    %4272 = vmatmul.f32.gmra.mxu0 %v4131
    %v4273 = vpop.f32.mrf.mxu0
    %v4274 = vadd.f32 0.0, %v4273
    %4275 = vdwg.mxu0
    %4276 = vmatpush.msra.mxu0 %v2536
    %4277 = vmatpush.msra.mxu0 %v2532
    %4278 = vmatpush.msra.mxu0 %v2528
    %4279 = vmatpush.msra.mxu0 %v2524
    %4280 = vmatpush.msra.mxu0 %v2520
    %4281 = vmatpush.msra.mxu0 %v2516
    %4282 = vmatpush.msra.mxu0 %v2512
    %4283 = vmatpush.msra.mxu0 %v2508
    %4284 = vmatpush.msra.mxu0 %v2504
    %4285 = vmatpush.msra.mxu0 %v2500
    %4286 = vmatpush.msra.mxu0 %v2496
    %4287 = vmatpush.msra.mxu0 %v2492
    %4288 = vmatpush.msra.mxu0 %v2488
    %4289 = vmatpush.msra.mxu0 %v2484
    %4290 = vmatpush.msra.mxu0 %v2480
    %4291 = vmatpush.msra.mxu0 %v2476
    %4292 = vmatmul.f32.gmra.mxu0 %v4131
    %v4293 = vpop.f32.mrf.mxu0
    %v4294 = vadd.f32 0.0, %v4293
    %4295 = vdwg.mxu0
    %v4296 = vadd.f32 %v4212, %v4234
    %v4297 = vadd.f32 %v4213, %v4254
    %v4298 = vadd.f32 %v4214, %v4274
    %v4299 = vadd.f32 %v4215, %v4294
    %v4300 = vmul.f32 %v4296, 0.5
    %v4301 = vmul.f32 %v4297, 0.5
    %v4302 = vmul.f32 %v4298, 0.5
    %v4303 = vtanh.pop %v4300
    %v4304 = vtanh.pop %v4301
    %v4305 = vtanh.pop %v4302
    %v4306 = vmul.f32 %v4303, 0.5
    %v4307 = vmul.f32 %v4304, 0.5
    %v4308 = vmul.f32 %v4305, 0.5
    %v4309 = vadd.f32 %v4306, 0.5
    %v4310 = vadd.f32 %v4307, 0.5
    %v4311 = vadd.f32 %v4308, 0.5
    %v4312 = vtanh.pop %v4299
    %v4313 = vmul.f32 %v4310, %v4129
    %v4314 = vmul.f32 %v4309, %v4312
    %v4315 = vadd.f32 %v4313, %v4314
    %v4316 = vtanh.pop %v4315
    %v4317 = vmul.f32 %v4311, %v4316
    %v4318 = vld [vmem:[#allocation4] sm:$0xff]
    %v4319 = vld [vmem:[#allocation4 + $0x8] sm:$0xff]
    %v4320 = vtanh.pop %v4317
    %s4321 = scalar_lea.vmem [#allocation14], 2304
    %v4322 = vld [vmem:[%s4321] sm:$0xff]
    %v4323 = vld [vmem:[%s4321 + $0x8] sm:$0xff]
    %v4324 = vld [vmem:[%s4321 + $0x10] sm:$0xff]
    %v4325 = vld [vmem:[%s4321 + $0x18] sm:$0xff]
    %v4326 = vld [vmem:[%s4321 + $0x20] sm:$0xff]
    %v4327 = vld [vmem:[%s4321 + $0x28] sm:$0xff]
    %v4328 = vld [vmem:[%s4321 + $0x30] sm:$0xff]
    %v4329 = vld [vmem:[%s4321 + $0x38] sm:$0xff]
    %v4330 = vld [vmem:[%s4321 + $0x40] sm:$0xff]
    %v4331 = vld [vmem:[%s4321 + $0x48] sm:$0xff]
    %v4332 = vld [vmem:[%s4321 + $0x50] sm:$0xff]
    %v4333 = vld [vmem:[%s4321 + $0x58] sm:$0xff]
    %v4334 = vld [vmem:[%s4321 + $0x60] sm:$0xff]
    %v4335 = vld [vmem:[%s4321 + $0x68] sm:$0xff]
    %v4336 = vld [vmem:[%s4321 + $0x70] sm:$0xff]
    %v4337 = vld [vmem:[%s4321 + $0x78] sm:$0xff]
    %v4338 = vld [vmem:[%s4321 + $0x80] sm:$0xff]
    %v4339 = vld [vmem:[%s4321 + $0x88] sm:$0xff]
    %v4340 = vld [vmem:[%s4321 + $0x90] sm:$0xff]
    %v4341 = vld [vmem:[%s4321 + $0x98] sm:$0xff]
    %v4342 = vld [vmem:[%s4321 + $0xa0] sm:$0xff]
    %v4343 = vld [vmem:[%s4321 + $0xa8] sm:$0xff]
    %v4344 = vld [vmem:[%s4321 + $0xb0] sm:$0xff]
    %v4345 = vld [vmem:[%s4321 + $0xb8] sm:$0xff]
    %v4346 = vld [vmem:[%s4321 + $0xc0] sm:$0xff]
    %v4347 = vld [vmem:[%s4321 + $0xc8] sm:$0xff]
    %v4348 = vld [vmem:[%s4321 + $0xd0] sm:$0xff]
    %v4349 = vld [vmem:[%s4321 + $0xd8] sm:$0xff]
    %v4350 = vld [vmem:[%s4321 + $0xe0] sm:$0xff]
    %v4351 = vld [vmem:[%s4321 + $0xe8] sm:$0xff]
    %v4352 = vld [vmem:[%s4321 + $0xf0] sm:$0xff]
    %v4353 = vld [vmem:[%s4321 + $0xf8] sm:$0xff]
    %4354 = vmatpush.msra.mxu0 %v4352
    %4355 = vmatpush.msra.mxu0 %v4350
    %4356 = vmatpush.msra.mxu0 %v4348
    %4357 = vmatpush.msra.mxu0 %v4346
    %4358 = vmatpush.msra.mxu0 %v4344
    %4359 = vmatpush.msra.mxu0 %v4342
    %4360 = vmatpush.msra.mxu0 %v4340
    %4361 = vmatpush.msra.mxu0 %v4338
    %4362 = vmatpush.msra.mxu0 %v4336
    %4363 = vmatpush.msra.mxu0 %v4334
    %4364 = vmatpush.msra.mxu0 %v4332
    %4365 = vmatpush.msra.mxu0 %v4330
    %4366 = vmatpush.msra.mxu0 %v4328
    %4367 = vmatpush.msra.mxu0 %v4326
    %4368 = vmatpush.msra.mxu0 %v4324
    %4369 = vmatpush.msra.mxu0 %v4322
    %4370 = vmatmul.f32.gmra.mxu0 %v4320
    %v4371 = vpop.f32.mrf.mxu0
    %v4372 = vadd.f32 0.0, %v4371
    %4373 = vdwg.mxu0
    %4374 = vmatpush.msra.mxu0 %v4353
    %4375 = vmatpush.msra.mxu0 %v4351
    %4376 = vmatpush.msra.mxu0 %v4349
    %4377 = vmatpush.msra.mxu0 %v4347
    %4378 = vmatpush.msra.mxu0 %v4345
    %4379 = vmatpush.msra.mxu0 %v4343
    %4380 = vmatpush.msra.mxu0 %v4341
    %4381 = vmatpush.msra.mxu0 %v4339
    %4382 = vmatpush.msra.mxu0 %v4337
    %4383 = vmatpush.msra.mxu0 %v4335
    %4384 = vmatpush.msra.mxu0 %v4333
    %4385 = vmatpush.msra.mxu0 %v4331
    %4386 = vmatpush.msra.mxu0 %v4329
    %4387 = vmatpush.msra.mxu0 %v4327
    %4388 = vmatpush.msra.mxu0 %v4325
    %4389 = vmatpush.msra.mxu0 %v4323
    %4390 = vmatmul.f32.gmra.mxu0 %v4320
    %v4391 = vpop.f32.mrf.mxu0
    %v4392 = vadd.f32 0.0, %v4391
    %4393 = vdwg.mxu0
    %v4394 = vadd.f32 %v4318, %v4372
    %v4395 = vadd.f32 %v4319, %v4392
    %4396 = vst [vmem:[#allocation4] sm:$0xff] %v4394
    %4397 = vst [vmem:[#allocation4 + $0x8] sm:$0xff] %v4395
    %v4398 = vld [vmem:[%s1631] sm:$0xff]
    %v4399 = vld [vmem:[%s1631 + $0x8] sm:$0xff]
    %v4400 = vld [vmem:[%s1631 + $0x10] sm:$0xff]
    %v4401 = vld [vmem:[%s1631 + $0x18] sm:$0xff]
    %4402 = vmatpush.msra.mxu0 %v2533
    %4403 = vmatpush.msra.mxu0 %v2529
    %4404 = vmatpush.msra.mxu0 %v2525
    %4405 = vmatpush.msra.mxu0 %v2521
    %4406 = vmatpush.msra.mxu0 %v2517
    %4407 = vmatpush.msra.mxu0 %v2513
    %4408 = vmatpush.msra.mxu0 %v2509
    %4409 = vmatpush.msra.mxu0 %v2505
    %4410 = vmatpush.msra.mxu0 %v2501
    %4411 = vmatpush.msra.mxu0 %v2497
    %4412 = vmatpush.msra.mxu0 %v2493
    %4413 = vmatpush.msra.mxu0 %v2489
    %4414 = vmatpush.msra.mxu0 %v2485
    %4415 = vmatpush.msra.mxu0 %v2481
    %4416 = vmatpush.msra.mxu0 %v2477
    %4417 = vmatpush.msra.mxu0 %v2473
    %4418 = vmatmul.f32.gmra.mxu0 %v4317
    %v4419 = vpop.f32.mrf.mxu0
    %v4420 = vadd.f32 0.0, %v4419
    %4421 = vdwg.mxu0
    %4422 = vmatpush.msra.mxu0 %v2534
    %4423 = vmatpush.msra.mxu0 %v2530
    %4424 = vmatpush.msra.mxu0 %v2526
    %4425 = vmatpush.msra.mxu0 %v2522
    %4426 = vmatpush.msra.mxu0 %v2518
    %4427 = vmatpush.msra.mxu0 %v2514
    %4428 = vmatpush.msra.mxu0 %v2510
    %4429 = vmatpush.msra.mxu0 %v2506
    %4430 = vmatpush.msra.mxu0 %v2502
    %4431 = vmatpush.msra.mxu0 %v2498
    %4432 = vmatpush.msra.mxu0 %v2494
    %4433 = vmatpush.msra.mxu0 %v2490
    %4434 = vmatpush.msra.mxu0 %v2486
    %4435 = vmatpush.msra.mxu0 %v2482
    %4436 = vmatpush.msra.mxu0 %v2478
    %4437 = vmatpush.msra.mxu0 %v2474
    %4438 = vmatmul.f32.gmra.mxu0 %v4317
    %v4439 = vpop.f32.mrf.mxu0
    %v4440 = vadd.f32 0.0, %v4439
    %4441 = vdwg.mxu0
    %4442 = vmatpush.msra.mxu0 %v2535
    %4443 = vmatpush.msra.mxu0 %v2531
    %4444 = vmatpush.msra.mxu0 %v2527
    %4445 = vmatpush.msra.mxu0 %v2523
    %4446 = vmatpush.msra.mxu0 %v2519
    %4447 = vmatpush.msra.mxu0 %v2515
    %4448 = vmatpush.msra.mxu0 %v2511
    %4449 = vmatpush.msra.mxu0 %v2507
    %4450 = vmatpush.msra.mxu0 %v2503
    %4451 = vmatpush.msra.mxu0 %v2499
    %4452 = vmatpush.msra.mxu0 %v2495
    %4453 = vmatpush.msra.mxu0 %v2491
    %4454 = vmatpush.msra.mxu0 %v2487
    %4455 = vmatpush.msra.mxu0 %v2483
    %4456 = vmatpush.msra.mxu0 %v2479
    %4457 = vmatpush.msra.mxu0 %v2475
    %4458 = vmatmul.f32.gmra.mxu0 %v4317
    %v4459 = vpop.f32.mrf.mxu0
    %v4460 = vadd.f32 0.0, %v4459
    %4461 = vdwg.mxu0
    %4462 = vmatpush.msra.mxu0 %v2536
    %4463 = vmatpush.msra.mxu0 %v2532
    %4464 = vmatpush.msra.mxu0 %v2528
    %4465 = vmatpush.msra.mxu0 %v2524
    %4466 = vmatpush.msra.mxu0 %v2520
    %4467 = vmatpush.msra.mxu0 %v2516
    %4468 = vmatpush.msra.mxu0 %v2512
    %4469 = vmatpush.msra.mxu0 %v2508
    %4470 = vmatpush.msra.mxu0 %v2504
    %4471 = vmatpush.msra.mxu0 %v2500
    %4472 = vmatpush.msra.mxu0 %v2496
    %4473 = vmatpush.msra.mxu0 %v2492
    %4474 = vmatpush.msra.mxu0 %v2488
    %4475 = vmatpush.msra.mxu0 %v2484
    %4476 = vmatpush.msra.mxu0 %v2480
    %4477 = vmatpush.msra.mxu0 %v2476
    %4478 = vmatmul.f32.gmra.mxu0 %v4317
    %v4479 = vpop.f32.mrf.mxu0
    %v4480 = vadd.f32 0.0, %v4479
    %4481 = vdwg.mxu0
    %v4482 = vadd.f32 %v4398, %v4420
    %v4483 = vadd.f32 %v4399, %v4440
    %v4484 = vadd.f32 %v4400, %v4460
    %v4485 = vadd.f32 %v4401, %v4480
    %v4486 = vmul.f32 %v4482, 0.5
    %v4487 = vmul.f32 %v4483, 0.5
    %v4488 = vmul.f32 %v4484, 0.5
    %v4489 = vtanh.pop %v4486
    %v4490 = vtanh.pop %v4487
    %v4491 = vtanh.pop %v4488
    %v4492 = vmul.f32 %v4489, 0.5
    %v4493 = vmul.f32 %v4490, 0.5
    %v4494 = vmul.f32 %v4491, 0.5
    %v4495 = vadd.f32 %v4492, 0.5
    %v4496 = vadd.f32 %v4493, 0.5
    %v4497 = vadd.f32 %v4494, 0.5
    %v4498 = vtanh.pop %v4485
    %v4499 = vmul.f32 %v4496, %v4315
    %v4500 = vmul.f32 %v4495, %v4498
    %v4501 = vadd.f32 %v4499, %v4500
    %v4502 = vtanh.pop %v4501
    %v4503 = vmul.f32 %v4497, %v4502
    %v4504 = vld [vmem:[#allocation4] sm:$0xff]
    %v4505 = vld [vmem:[#allocation4 + $0x8] sm:$0xff]
    %v4506 = vtanh.pop %v4503
    %s4507 = scalar_lea.vmem [#allocation14], 2560
    %v4508 = vld [vmem:[%s4507] sm:$0xff]
    %v4509 = vld [vmem:[%s4507 + $0x8] sm:$0xff]
    %v4510 = vld [vmem:[%s4507 + $0x10] sm:$0xff]
    %v4511 = vld [vmem:[%s4507 + $0x18] sm:$0xff]
    %v4512 = vld [vmem:[%s4507 + $0x20] sm:$0xff]
    %v4513 = vld [vmem:[%s4507 + $0x28] sm:$0xff]
    %v4514 = vld [vmem:[%s4507 + $0x30] sm:$0xff]
    %v4515 = vld [vmem:[%s4507 + $0x38] sm:$0xff]
    %v4516 = vld [vmem:[%s4507 + $0x40] sm:$0xff]
    %v4517 = vld [vmem:[%s4507 + $0x48] sm:$0xff]
    %v4518 = vld [vmem:[%s4507 + $0x50] sm:$0xff]
    %v4519 = vld [vmem:[%s4507 + $0x58] sm:$0xff]
    %v4520 = vld [vmem:[%s4507 + $0x60] sm:$0xff]
    %v4521 = vld [vmem:[%s4507 + $0x68] sm:$0xff]
    %v4522 = vld [vmem:[%s4507 + $0x70] sm:$0xff]
    %v4523 = vld [vmem:[%s4507 + $0x78] sm:$0xff]
    %v4524 = vld [vmem:[%s4507 + $0x80] sm:$0xff]
    %v4525 = vld [vmem:[%s4507 + $0x88] sm:$0xff]
    %v4526 = vld [vmem:[%s4507 + $0x90] sm:$0xff]
    %v4527 = vld [vmem:[%s4507 + $0x98] sm:$0xff]
    %v4528 = vld [vmem:[%s4507 + $0xa0] sm:$0xff]
    %v4529 = vld [vmem:[%s4507 + $0xa8] sm:$0xff]
    %v4530 = vld [vmem:[%s4507 + $0xb0] sm:$0xff]
    %v4531 = vld [vmem:[%s4507 + $0xb8] sm:$0xff]
    %v4532 = vld [vmem:[%s4507 + $0xc0] sm:$0xff]
    %v4533 = vld [vmem:[%s4507 + $0xc8] sm:$0xff]
    %v4534 = vld [vmem:[%s4507 + $0xd0] sm:$0xff]
    %v4535 = vld [vmem:[%s4507 + $0xd8] sm:$0xff]
    %v4536 = vld [vmem:[%s4507 + $0xe0] sm:$0xff]
    %v4537 = vld [vmem:[%s4507 + $0xe8] sm:$0xff]
    %v4538 = vld [vmem:[%s4507 + $0xf0] sm:$0xff]
    %v4539 = vld [vmem:[%s4507 + $0xf8] sm:$0xff]
    %4540 = vmatpush.msra.mxu0 %v4538
    %4541 = vmatpush.msra.mxu0 %v4536
    %4542 = vmatpush.msra.mxu0 %v4534
    %4543 = vmatpush.msra.mxu0 %v4532
    %4544 = vmatpush.msra.mxu0 %v4530
    %4545 = vmatpush.msra.mxu0 %v4528
    %4546 = vmatpush.msra.mxu0 %v4526
    %4547 = vmatpush.msra.mxu0 %v4524
    %4548 = vmatpush.msra.mxu0 %v4522
    %4549 = vmatpush.msra.mxu0 %v4520
    %4550 = vmatpush.msra.mxu0 %v4518
    %4551 = vmatpush.msra.mxu0 %v4516
    %4552 = vmatpush.msra.mxu0 %v4514
    %4553 = vmatpush.msra.mxu0 %v4512
    %4554 = vmatpush.msra.mxu0 %v4510
    %4555 = vmatpush.msra.mxu0 %v4508
    %4556 = vmatmul.f32.gmra.mxu0 %v4506
    %v4557 = vpop.f32.mrf.mxu0
    %v4558 = vadd.f32 0.0, %v4557
    %4559 = vdwg.mxu0
    %4560 = vmatpush.msra.mxu0 %v4539
    %4561 = vmatpush.msra.mxu0 %v4537
    %4562 = vmatpush.msra.mxu0 %v4535
    %4563 = vmatpush.msra.mxu0 %v4533
    %4564 = vmatpush.msra.mxu0 %v4531
    %4565 = vmatpush.msra.mxu0 %v4529
    %4566 = vmatpush.msra.mxu0 %v4527
    %4567 = vmatpush.msra.mxu0 %v4525
    %4568 = vmatpush.msra.mxu0 %v4523
    %4569 = vmatpush.msra.mxu0 %v4521
    %4570 = vmatpush.msra.mxu0 %v4519
    %4571 = vmatpush.msra.mxu0 %v4517
    %4572 = vmatpush.msra.mxu0 %v4515
    %4573 = vmatpush.msra.mxu0 %v4513
    %4574 = vmatpush.msra.mxu0 %v4511
    %4575 = vmatpush.msra.mxu0 %v4509
    %4576 = vmatmul.f32.gmra.mxu0 %v4506
    %v4577 = vpop.f32.mrf.mxu0
    %v4578 = vadd.f32 0.0, %v4577
    %4579 = vdwg.mxu0
    %v4580 = vadd.f32 %v4504, %v4558
    %v4581 = vadd.f32 %v4505, %v4578
    %4582 = vst [vmem:[#allocation4] sm:$0xff] %v4580
    %4583 = vst [vmem:[#allocation4 + $0x8] sm:$0xff] %v4581
    %v4584 = vld [vmem:[%s1740] sm:$0xff]
    %v4585 = vld [vmem:[%s1740 + $0x8] sm:$0xff]
    %v4586 = vld [vmem:[%s1740 + $0x10] sm:$0xff]
    %v4587 = vld [vmem:[%s1740 + $0x18] sm:$0xff]
    %4588 = vmatpush.msra.mxu0 %v2533
    %4589 = vmatpush.msra.mxu0 %v2529
    %4590 = vmatpush.msra.mxu0 %v2525
    %4591 = vmatpush.msra.mxu0 %v2521
    %4592 = vmatpush.msra.mxu0 %v2517
    %4593 = vmatpush.msra.mxu0 %v2513
    %4594 = vmatpush.msra.mxu0 %v2509
    %4595 = vmatpush.msra.mxu0 %v2505
    %4596 = vmatpush.msra.mxu0 %v2501
    %4597 = vmatpush.msra.mxu0 %v2497
    %4598 = vmatpush.msra.mxu0 %v2493
    %4599 = vmatpush.msra.mxu0 %v2489
    %4600 = vmatpush.msra.mxu0 %v2485
    %4601 = vmatpush.msra.mxu0 %v2481
    %4602 = vmatpush.msra.mxu0 %v2477
    %4603 = vmatpush.msra.mxu0 %v2473
    %4604 = vmatmul.f32.gmra.mxu0 %v4503
    %v4605 = vpop.f32.mrf.mxu0
    %v4606 = vadd.f32 0.0, %v4605
    %4607 = vdwg.mxu0
    %4608 = vmatpush.msra.mxu0 %v2534
    %4609 = vmatpush.msra.mxu0 %v2530
    %4610 = vmatpush.msra.mxu0 %v2526
    %4611 = vmatpush.msra.mxu0 %v2522
    %4612 = vmatpush.msra.mxu0 %v2518
    %4613 = vmatpush.msra.mxu0 %v2514
    %4614 = vmatpush.msra.mxu0 %v2510
    %4615 = vmatpush.msra.mxu0 %v2506
    %4616 = vmatpush.msra.mxu0 %v2502
    %4617 = vmatpush.msra.mxu0 %v2498
    %4618 = vmatpush.msra.mxu0 %v2494
    %4619 = vmatpush.msra.mxu0 %v2490
    %4620 = vmatpush.msra.mxu0 %v2486
    %4621 = vmatpush.msra.mxu0 %v2482
    %4622 = vmatpush.msra.mxu0 %v2478
    %4623 = vmatpush.msra.mxu0 %v2474
    %4624 = vmatmul.f32.gmra.mxu0 %v4503
    %v4625 = vpop.f32.mrf.mxu0
    %v4626 = vadd.f32 0.0, %v4625
    %4627 = vdwg.mxu0
    %4628 = vmatpush.msra.mxu0 %v2535
    %4629 = vmatpush.msra.mxu0 %v2531
    %4630 = vmatpush.msra.mxu0 %v2527
    %4631 = vmatpush.msra.mxu0 %v2523
    %4632 = vmatpush.msra.mxu0 %v2519
    %4633 = vmatpush.msra.mxu0 %v2515
    %4634 = vmatpush.msra.mxu0 %v2511
    %4635 = vmatpush.msra.mxu0 %v2507
    %4636 = vmatpush.msra.mxu0 %v2503
    %4637 = vmatpush.msra.mxu0 %v2499
    %4638 = vmatpush.msra.mxu0 %v2495
    %4639 = vmatpush.msra.mxu0 %v2491
    %4640 = vmatpush.msra.mxu0 %v2487
    %4641 = vmatpush.msra.mxu0 %v2483
    %4642 = vmatpush.msra.mxu0 %v2479
    %4643 = vmatpush.msra.mxu0 %v2475
    %4644 = vmatmul.f32.gmra.mxu0 %v4503
    %v4645 = vpop.f32.mrf.mxu0
    %v4646 = vadd.f32 0.0, %v4645
    %4647 = vdwg.mxu0
    %4648 = vmatpush.msra.mxu0 %v2536
    %4649 = vmatpush.msra.mxu0 %v2532
    %4650 = vmatpush.msra.mxu0 %v2528
    %4651 = vmatpush.msra.mxu0 %v2524
    %4652 = vmatpush.msra.mxu0 %v2520
    %4653 = vmatpush.msra.mxu0 %v2516
    %4654 = vmatpush.msra.mxu0 %v2512
    %4655 = vmatpush.msra.mxu0 %v2508
    %4656 = vmatpush.msra.mxu0 %v2504
    %4657 = vmatpush.msra.mxu0 %v2500
    %4658 = vmatpush.msra.mxu0 %v2496
    %4659 = vmatpush.msra.mxu0 %v2492
    %4660 = vmatpush.msra.mxu0 %v2488
    %4661 = vmatpush.msra.mxu0 %v2484
    %4662 = vmatpush.msra.mxu0 %v2480
    %4663 = vmatpush.msra.mxu0 %v2476
    %4664 = vmatmul.f32.gmra.mxu0 %v4503
    %v4665 = vpop.f32.mrf.mxu0
    %v4666 = vadd.f32 0.0, %v4665
    %4667 = vdwg.mxu0
    %v4668 = vadd.f32 %v4584, %v4606
    %v4669 = vadd.f32 %v4585, %v4626
    %v4670 = vadd.f32 %v4586, %v4646
    %v4671 = vadd.f32 %v4587, %v4666
    %v4672 = vmul.f32 %v4668, 0.5
    %v4673 = vmul.f32 %v4669, 0.5
    %v4674 = vmul.f32 %v4670, 0.5
    %v4675 = vtanh.pop %v4672
    %v4676 = vtanh.pop %v4673
    %v4677 = vtanh.pop %v4674
    %v4678 = vmul.f32 %v4675, 0.5
    %v4679 = vmul.f32 %v4676, 0.5
    %v4680 = vmul.f32 %v4677, 0.5
    %v4681 = vadd.f32 %v4678, 0.5
    %v4682 = vadd.f32 %v4679, 0.5
    %v4683 = vadd.f32 %v4680, 0.5
    %v4684 = vtanh.pop %v4671
    %v4685 = vmul.f32 %v4682, %v4501
    %v4686 = vmul.f32 %v4681, %v4684
    %v4687 = vadd.f32 %v4685, %v4686
    %v4688 = vtanh.pop %v4687
    %v4689 = vmul.f32 %v4683, %v4688
    %v4690 = vld [vmem:[#allocation4] sm:$0xff]
    %v4691 = vld [vmem:[#allocation4 + $0x8] sm:$0xff]
    %v4692 = vtanh.pop %v4689
    %s4693 = scalar_lea.vmem [#allocation14], 2816
    %v4694 = vld [vmem:[%s4693] sm:$0xff]
    %v4695 = vld [vmem:[%s4693 + $0x8] sm:$0xff]
    %v4696 = vld [vmem:[%s4693 + $0x10] sm:$0xff]
    %v4697 = vld [vmem:[%s4693 + $0x18] sm:$0xff]
    %v4698 = vld [vmem:[%s4693 + $0x20] sm:$0xff]
    %v4699 = vld [vmem:[%s4693 + $0x28] sm:$0xff]
    %v4700 = vld [vmem:[%s4693 + $0x30] sm:$0xff]
    %v4701 = vld [vmem:[%s4693 + $0x38] sm:$0xff]
    %v4702 = vld [vmem:[%s4693 + $0x40] sm:$0xff]
    %v4703 = vld [vmem:[%s4693 + $0x48] sm:$0xff]
    %v4704 = vld [vmem:[%s4693 + $0x50] sm:$0xff]
    %v4705 = vld [vmem:[%s4693 + $0x58] sm:$0xff]
    %v4706 = vld [vmem:[%s4693 + $0x60] sm:$0xff]
    %v4707 = vld [vmem:[%s4693 + $0x68] sm:$0xff]
    %v4708 = vld [vmem:[%s4693 + $0x70] sm:$0xff]
    %v4709 = vld [vmem:[%s4693 + $0x78] sm:$0xff]
    %v4710 = vld [vmem:[%s4693 + $0x80] sm:$0xff]
    %v4711 = vld [vmem:[%s4693 + $0x88] sm:$0xff]
    %v4712 = vld [vmem:[%s4693 + $0x90] sm:$0xff]
    %v4713 = vld [vmem:[%s4693 + $0x98] sm:$0xff]
    %v4714 = vld [vmem:[%s4693 + $0xa0] sm:$0xff]
    %v4715 = vld [vmem:[%s4693 + $0xa8] sm:$0xff]
    %v4716 = vld [vmem:[%s4693 + $0xb0] sm:$0xff]
    %v4717 = vld [vmem:[%s4693 + $0xb8] sm:$0xff]
    %v4718 = vld [vmem:[%s4693 + $0xc0] sm:$0xff]
    %v4719 = vld [vmem:[%s4693 + $0xc8] sm:$0xff]
    %v4720 = vld [vmem:[%s4693 + $0xd0] sm:$0xff]
    %v4721 = vld [vmem:[%s4693 + $0xd8] sm:$0xff]
    %v4722 = vld [vmem:[%s4693 + $0xe0] sm:$0xff]
    %v4723 = vld [vmem:[%s4693 + $0xe8] sm:$0xff]
    %v4724 = vld [vmem:[%s4693 + $0xf0] sm:$0xff]
    %v4725 = vld [vmem:[%s4693 + $0xf8] sm:$0xff]
    %4726 = vmatpush.msra.mxu0 %v4724
    %4727 = vmatpush.msra.mxu0 %v4722
    %4728 = vmatpush.msra.mxu0 %v4720
    %4729 = vmatpush.msra.mxu0 %v4718
    %4730 = vmatpush.msra.mxu0 %v4716
    %4731 = vmatpush.msra.mxu0 %v4714
    %4732 = vmatpush.msra.mxu0 %v4712
    %4733 = vmatpush.msra.mxu0 %v4710
    %4734 = vmatpush.msra.mxu0 %v4708
    %4735 = vmatpush.msra.mxu0 %v4706
    %4736 = vmatpush.msra.mxu0 %v4704
    %4737 = vmatpush.msra.mxu0 %v4702
    %4738 = vmatpush.msra.mxu0 %v4700
    %4739 = vmatpush.msra.mxu0 %v4698
    %4740 = vmatpush.msra.mxu0 %v4696
    %4741 = vmatpush.msra.mxu0 %v4694
    %4742 = vmatmul.f32.gmra.mxu0 %v4692
    %v4743 = vpop.f32.mrf.mxu0
    %v4744 = vadd.f32 0.0, %v4743
    %4745 = vdwg.mxu0
    %4746 = vmatpush.msra.mxu0 %v4725
    %4747 = vmatpush.msra.mxu0 %v4723
    %4748 = vmatpush.msra.mxu0 %v4721
    %4749 = vmatpush.msra.mxu0 %v4719
    %4750 = vmatpush.msra.mxu0 %v4717
    %4751 = vmatpush.msra.mxu0 %v4715
    %4752 = vmatpush.msra.mxu0 %v4713
    %4753 = vmatpush.msra.mxu0 %v4711
    %4754 = vmatpush.msra.mxu0 %v4709
    %4755 = vmatpush.msra.mxu0 %v4707
    %4756 = vmatpush.msra.mxu0 %v4705
    %4757 = vmatpush.msra.mxu0 %v4703
    %4758 = vmatpush.msra.mxu0 %v4701
    %4759 = vmatpush.msra.mxu0 %v4699
    %4760 = vmatpush.msra.mxu0 %v4697
    %4761 = vmatpush.msra.mxu0 %v4695
    %4762 = vmatmul.f32.gmra.mxu0 %v4692
    %v4763 = vpop.f32.mrf.mxu0
    %v4764 = vadd.f32 0.0, %v4763
    %4765 = vdwg.mxu0
    %v4766 = vadd.f32 %v4690, %v4744
    %v4767 = vadd.f32 %v4691, %v4764
    %4768 = vst [vmem:[#allocation4] sm:$0xff] %v4766
    %4769 = vst [vmem:[#allocation4 + $0x8] sm:$0xff] %v4767
    %v4770 = vld [vmem:[#allocation4] sm:$0xff]
    %v4771 = vld [vmem:[#allocation4 + $0x8] sm:$0xff]
    %v4772 = vld [vmem:[#allocation15] sm:$0x3]
    %v4774 = vperm.slane %v4772, 0
    %v4775 = vperm.slane %v4772, 1
    %v4778 = vadd.f32 %v4770, %v4774
    %v4779 = vadd.f32 %v4771, %v4775
    %v4780 = vmax.f32 %v4778, 0.0
    %v4781 = vmax.f32 %v4779, 0.0
    %v4782 = vld [vmem:[#allocation17] sm:$0x3]
    %v4784 = vperm.slane %v4782, 0
    %v4785 = vperm.slane %v4782, 1
    %v4788 = vmul.f32 %v4780, %v4784
    %v4789 = vmul.f32 %v4781, %v4785
    %v4790 = vadd.f32 %v4788, %v4789
    %4791 = vadd.xlane.f32.xlu0 %v4790
    %v4792 = vpop.xlane.xlu0 %4791
    %v4793 = vld [vmem:[#allocation5] sm:$0x1]
    %v4795 = vperm.slane %v4793, 0
    %v4797 = vadd.f32 %v4792, %v4795
    %4799 = vset.pattern.permute.xlu0 0
    %4800 = vperm.xlu0 %4799, %v4797
    %v4801 = vpop.permute.xlu0 %4800
    %4803 = vst [vmem:[#allocation18] sm:$0xff] %v4801
    // Predicated region
    $region66: #{tpu_custom_call.1} parent=1 // pred_check
      _
    $region67: #{tpu_custom_call.1} parent=1 // pred_check_branch
      %4805 = sbr.rel (0) target = $region69
    $region68: #{tpu_custom_call.1} parent=1 // pred_region
      %4807 = vsyncadd [#allocation8], 0
      %s4809 = sshll.u32 [#allocation18], 4
      %s4810 = int_to_ptr.vmem [resolvable:$true] %s4809
      %s4811 = sshll.u32 %s9, 4
      %s4812 = int_to_ptr.hbm [resolvable:$true] %s4811
      %4814 = dma.vmem_to_hbm [thread:$0]  %s4810, 128, %s4812, [#allocation8]
    $region69: #{tpu_custom_call.1} parent=1 // pred_fallthru
      _
    // Predicated region
    $region70: #{tpu_custom_call.1} parent=1 // pred_check
      _
    $region71: #{tpu_custom_call.1} parent=1 // pred_check_branch
      %4816 = sbr.rel (0) target = $region73
    $region72: #{tpu_custom_call.1} parent=1 // pred_region
      %4818 = dma.done [#allocation8], 128
    $region73: #{tpu_custom_call.1} parent=1 // pred_fallthru
      _
    %4819 = vsyncpa [#allocation7], 1
    %4820 = vsyncpa [#allocation10], 1
    %4821 = vsyncpa [#allocation13], 1
    %4822 = vsyncpa [#allocation16], 1
    %4823 = vsyncpa [#allocation8], 1

</llo_original>
